<compile_context>
chip_gen: v7x
topology: tpu7x:2x2x1
jax: 0.10.0
libtpu: 0.0.40
codegen_flags: <defaults>
</compile_context>

<pallas_src>
import jax
import jax.numpy as jnp
from jax import lax
from jax.experimental import pallas as pl
from jax.experimental.pallas import tpu as pltpu


def _block_kernel(xcol_ref, w1_ref, b1_ref, w2_ref, b2_ref, w34_ref, b34_ref,
                  out_ref, pad2_ref):
    # xcol_ref : (TH+2, W, 9*Cin) bf16  im2col'd conv1 input for this row strip
    #                                    (includes the strip's 1-row conv2 halo)
    # w1_ref   : (9*Cin, 256)     bf16  conv1 weight with BN1 scale folded in
    # b1_ref   : (1, 256)         f32   BN1 shift (beta - mean*scale)
    # w2_ref   : (3, 3, 256, 256) bf16  conv2 weight with BN2 scale folded in
    # b2_ref   : (1, 256)         f32   BN2 shift
    # w34_ref  : (256, 128)       bf16  fused 1x1 tail: col j<96 = w3*w4[j], col 96 = w3
    # b34_ref  : (1, 128)         f32   b3 * [w4 | 1 | 0]
    # out_ref  : (TH, W, 128)     f32   lane-dense slab: ch 0..95 = x1, ch 96 = x
    # pad2_ref : (TH+2, W+2, 256) bf16  scratch: conv2 input strip incl. 1-px halo
    TH, W, _ = out_ref.shape
    C = w2_ref.shape[3]
    K1 = w1_ref.shape[0]
    r = pl.program_id(1)
    nr = pl.num_programs(1)
    f32, bf16 = jnp.float32, jnp.bfloat16

    # Zero only the 1-px left/right halo columns (not the whole scratch).  Done every
    # step so it stays correct when the parallel grid is split across TensorCores.
    zcol = jnp.zeros((TH + 2, 1, C), bf16)
    pad2_ref[:, pl.ds(0, 1), :] = zcol
    pad2_ref[:, pl.ds(W + 1, 1), :] = zcol

    # ---- conv_block1: single bf16 matmul (K = 9*Cin), f32 accumulation.
    # Computes TH+2 rows (strip plus conv2's 1-row halo, recomputed locally).
    xc = xcol_ref[...].reshape((TH + 2) * W, K1)
    acc1 = jnp.dot(xc, w1_ref[...], preferred_element_type=f32)
    h1 = jnp.maximum(acc1 + b1_ref[...], 0.0)           # BN shift + ReLU; Dropout = id
    # ReLU'd result goes straight into the bf16 scratch interior (no separate buffer).
    pad2_ref[:, pl.ds(1, W), :] = h1.astype(bf16).reshape(TH + 2, W, C)

    # At the image boundary the halo rows are conv2's zero padding, not conv1 output.
    @pl.when(r == 0)
    def _():
        pad2_ref[pl.ds(0, 1), :, :] = jnp.zeros((1, W + 2, C), bf16)

    @pl.when(r == nr - 1)
    def _():
        pad2_ref[pl.ds(TH + 1, 1), :, :] = jnp.zeros((1, W + 2, C), bf16)

    # ---- conv_block2: 3x3 conv as 9 shifted bf16 matmuls, f32 accumulation.
    # Taps are loaded directly from the bf16 scratch (lower vreg pressure than
    # re-slicing an in-register band); single running f32 accumulator.
    acc2 = None
    for kh in range(3):
        for kw in range(3):
            patch = pad2_ref[pl.ds(kh, TH), pl.ds(kw, W), :].reshape(TH * W, C)
            d = jnp.dot(patch, w2_ref[kh, kw], preferred_element_type=f32)
            acc2 = d if acc2 is None else acc2 + d
    h2 = jnp.maximum(acc2 + b2_ref[...], 0.0).astype(bf16)   # BN shift + ReLU; Dropout = id

    # ---- fused conv2 (1x1, 256->1, +bias) and conv3 (1x1, 1->96): one N=128 matmul.
    # Column 96 of the fused weight is w3 itself, so the lane-dense slab also carries x.
    out = jnp.dot(h2, w34_ref[...], preferred_element_type=f32) + b34_ref[...]
    out_ref[...] = out.reshape(TH, W, 128)


def _prepare_params(params):
    """Fold eval-mode BN into conv weights, cast matmul weights to bf16, fuse the
    conv2(1x1)+conv3(1x1) tail into one (256, 128) weight / (1, 128) bias."""
    (w1, s1, t1, w2, s2, t2, w3, b3, w4) = params
    cin = w1.shape[2]
    w1f = (w1 * s1.reshape(1, 1, 1, -1)).reshape(9 * cin, 256).astype(jnp.bfloat16)
    b1 = t1.reshape(1, 256).astype(jnp.float32)
    w2f = (w2 * s2.reshape(1, 1, 1, -1)).astype(jnp.bfloat16)
    b2 = t2.reshape(1, 256).astype(jnp.float32)
    # [w4 (96 lanes) | 1.0 (x passthrough at lane 96) | zero pad] -> 128-lane slab.
    w4pad = jnp.concatenate(
        [w4.astype(jnp.float32).reshape(1, 96),
         jnp.ones((1, 1), jnp.float32),
         jnp.zeros((1, 31), jnp.float32)], axis=1)                       # (1, 128)
    # Fused tail: out = h2 @ (w3 * w4pad) + b3 * w4pad (product kept in f32, then bf16).
    w34 = (w3.astype(jnp.float32).reshape(256, 1) * w4pad).astype(jnp.bfloat16)
    b34 = b3.astype(jnp.float32).reshape(1, 1) * w4pad                   # (1, 128) f32
    return (w1f, b1, w2f, b2, w34, b34)


def _im2col_conv1_strips(x_nhwc, th):
    """Per-strip im2col patches for conv1, with each strip carrying its own 1-row
    conv2 halo (rows r*th-1 .. r*th+th of conv1 output).  Non-overlapping Blocked
    indexing in the kernel; boundary halo rows are zeroed inside the kernel."""
    N, H, W, Cin = x_nhwc.shape
    xp = jnp.pad(x_nhwc, ((0, 0), (2, 2), (1, 1), (0, 0)))
    taps = [xp[:, kh:kh + H + 2, kw:kw + W, :]
            for kh in range(3) for kw in range(3)]
    xcol = jnp.concatenate(taps, axis=-1).astype(jnp.bfloat16)   # (N, H+2, W, 9*Cin)
    nr = H // th
    strips = [xcol[:, r * th: r * th + th + 2] for r in range(nr)]
    return jnp.stack(strips, axis=1)                             # (N, nr, th+2, W, 9*Cin)


def _vmem_capacity_bytes():
    """Physical VMEM per TensorCore; conservative fallback if the query fails."""
    try:
        info = pltpu.get_tpu_info()
        for attr in ("vmem_capacity_bytes", "vmem_size_bytes", "vmem_bytes"):
            v = getattr(info, attr, None)
            if v:
                return int(v)
    except Exception:
        pass
    return 64 * 1024 * 1024   # v7x per-TC size: safe lower bound


def _pick_strip_height(H, W, K1, vmem_bytes):
    """Row-strip height: aim for M = TH*W >= ~512 (amortize the 256-wide MXU weight
    push / per-step overhead) while keeping the per-step VMEM footprint bounded."""
    def ru(x, m):
        return ((x + m - 1) // m) * m

    def est(th):                                          # rough per-step VMEM bytes
        xcol = (th + 2) * ru(W, 16) * ru(K1, 128) * 2 * 2       # bf16 block, 2 buffers
        out = th * ru(W, 8) * 128 * 4 * 2                       # f32 block, 2 buffers
        scratch = (th + 2) * ru(W + 2, 16) * 256 * 2            # bf16 pad2 scratch
        temps = 3 * th * W * 256 * 4                            # acc2/h1/h2-scale temps
        weights = (3 * 3 * 256 * 256 + ru(K1, 16) * 256 + 256 * 128) * 2 * 2
        return xcol + out + scratch + temps + weights

    budget = max(6 * 1024 * 1024, int(0.45 * vmem_bytes))
    divisors = [d for d in range(1, H + 1) if H % d == 0]
    fits = [d for d in divisors if est(d) <= budget] or [divisors[0]]
    big_enough = [d for d in fits if d * W >= 512]
    return min(big_enough) if big_enough else max(fits)


def block_with_one_input_forward(x_nchw, params):
    """NCHW input (like PyTorch); returns (x, x1) in NCHW. Eval-mode semantics."""
    w1f, b1, w2f, b2, w34, b34 = _prepare_params(params)
    N, Cin, H, W = x_nchw.shape
    K1 = 9 * Cin
    x_nhwc = jnp.transpose(x_nchw, (0, 2, 3, 1)).astype(jnp.float32)

    vmem_bytes = _vmem_capacity_bytes()
    TH = _pick_strip_height(H, W, K1, vmem_bytes)
    nr = H // TH
    xcol = _im2col_conv1_strips(x_nhwc, TH)      # (N, nr, TH+2, W, 9*Cin) bf16

    # ~96 MB on v5e/v6e (128 MiB VMEM), ~48 MB on v7x (64 MiB VMEM).
    vmem_limit = max(32 * 1024 * 1024, min(int(0.75 * vmem_bytes), 96 * 1024 * 1024))

    # Weight/bias blocks have constant index_maps -> DMA'd once across the whole grid.
    const = lambda shape: pl.BlockSpec(shape, lambda n, r: (0,) * len(shape))

    slab = pl.pallas_call(
        _block_kernel,
        grid=(N, nr),
        in_specs=[
            # Per-strip xcol block (batch and strip dims squeezed out of the kernel).
            pl.BlockSpec((None, None, TH + 2, W, K1), lambda n, r: (n, r, 0, 0, 0)),
            const((K1, 256)),
            const((1, 256)),
            const((3, 3, 256, 256)),
            const((1, 256)),
            const((256, 128)),
            const((1, 128)),
        ],
        out_specs=pl.BlockSpec((None, TH, W, 128), lambda n, r: (n, r, 0, 0)),
        out_shape=jax.ShapeDtypeStruct((N, H, W, 128), jnp.float32),
        scratch_shapes=[pltpu.VMEM((TH + 2, W + 2, 256), jnp.bfloat16)],
        compiler_params=pltpu.CompilerParams(
            dimension_semantics=("parallel", "parallel"),
            vmem_limit_bytes=vmem_limit),
    )(xcol, w1f, b1, w2f, b2, w34, b34)

    # NOTE: consumers that can take NHWC should use `slab` directly (ch 96 = x,
    # ch 0..95 = x1) and skip these transposes (they cost an extra HBM round trip).
    x = jnp.transpose(slab[..., 96:97], (0, 3, 1, 2))    # (N, 1, H, W)
    x1 = jnp.transpose(slab[..., :96], (0, 3, 1, 2))     # (N, 96, H, W)
    return x, x1


def _reference_forward_nhwc(x_nhwc, prepped):
    """Pure-JAX reference at matched precision (bf16 operands, f32 accumulation)."""
    w1f, b1, w2f, b2, w34, b34 = prepped
    N, H, W, Cin = x_nhwc.shape
    dn = ("NHWC", "HWIO", "NHWC")
    w1 = w1f.reshape(3, 3, Cin, 256)
    h = lax.conv_general_dilated(x_nhwc.astype(jnp.bfloat16), w1, (1, 1), "SAME",
                                 dimension_numbers=dn,
                                 preferred_element_type=jnp.float32)
    h = jnp.maximum(h + b1.reshape(1, 1, 1, -1), 0.0)
    h = lax.conv_general_dilated(h.astype(jnp.bfloat16), w2f, (1, 1), "SAME",
                                 dimension_numbers=dn,
                                 preferred_element_type=jnp.float32)
    h = jnp.maximum(h + b2.reshape(1, 1, 1, -1), 0.0)
    slab = jnp.dot(h.astype(jnp.bfloat16).reshape(-1, 256), w34,
                   preferred_element_type=jnp.float32).reshape(N, H, W, 128)
    slab = slab + b34.reshape(1, 1, 1, 128)
    return slab[..., 96:97], slab[..., :96]


def make_params(key, input_dim):
    """Deterministic params mirroring the PyTorch module's _init_weight (eval BN)."""
    k1, k2, k3, k3b, k4 = jax.random.split(key, 5)
    eps = 1e-5

    def kaiming(k, shape, fan_in):
        return jax.random.normal(k, shape, jnp.float32) * jnp.sqrt(2.0 / fan_in)

    w1 = kaiming(k1, (3, 3, input_dim, 256), input_dim * 9)      # HWIO
    w2 = kaiming(k2, (3, 3, 256, 256), 256 * 9)                  # HWIO
    w3 = kaiming(k3, (256, 1), 256)                              # 1x1: 256 -> 1
    b3 = jax.random.uniform(k3b, (1,), jnp.float32,
                            -1.0 / jnp.sqrt(256.0), 1.0 / jnp.sqrt(256.0))
    w4 = kaiming(k4, (1, 96), 1)                                 # 1x1: 1 -> 96
    # Eval-mode BN: gamma=1, beta=0, running_mean=0, running_var=1.
    gamma = jnp.ones((256,), jnp.float32)
    beta = jnp.zeros((256,), jnp.float32)
    mean = jnp.zeros((256,), jnp.float32)
    var = jnp.ones((256,), jnp.float32)
    s = gamma / jnp.sqrt(var + eps)      # per-channel scale
    t = beta - mean * s                  # per-channel shift
    return (w1, s, t, w2, s, t, w3, b3, w4)


if __name__ == "__main__":
    key = jax.random.PRNGKey(0)
    k_x, k_p = jax.random.split(key)

    N, Cin, H, W = 2, 4, 16, 16
    x_nchw = jax.random.normal(k_x, (N, Cin, H, W), jnp.float32)
    params = make_params(k_p, Cin)

    x_out, x1_out = block_with_one_input_forward(x_nchw, params)
    jax.block_until_ready((x_out, x1_out))

    # Correctness check vs pure-JAX reference at matched precision.
    x_nhwc = jnp.transpose(x_nchw, (0, 2, 3, 1))
    xr, x1r = _reference_forward_nhwc(x_nhwc, _prepare_params(params))
    xr = jnp.transpose(xr, (0, 3, 1, 2))
    x1r = jnp.transpose(x1r, (0, 3, 1, 2))
    assert x_out.shape == (N, 1, H, W) and x1_out.shape == (N, 96, H, W)
    assert jnp.allclose(x_out, xr, atol=2e-3, rtol=2e-3), \
        float(jnp.max(jnp.abs(x_out - xr)))
    assert jnp.allclose(x1_out, x1r, atol=2e-3, rtol=2e-3), \
        float(jnp.max(jnp.abs(x1_out - x1r)))

    print("KERNEL_OK")
</pallas_src>

<mosaic_0001>
module attributes {stable_mosaic.version = 11 : i64} {
  func.func @_block_kernel(%arg0: i32, %arg1: i32, %arg2: memref<1x1x18x16x36xbf16, #tpu.memory_space<vmem>>, %arg3: memref<36x256xbf16, #tpu.memory_space<vmem>>, %arg4: memref<1x256xf32, #tpu.memory_space<vmem>>, %arg5: memref<3x3x256x256xbf16, #tpu.memory_space<vmem>>, %arg6: memref<1x256xf32, #tpu.memory_space<vmem>>, %arg7: memref<256x128xbf16, #tpu.memory_space<vmem>>, %arg8: memref<1x128xf32, #tpu.memory_space<vmem>>, %arg9: memref<1x16x16x128xf32, #tpu.memory_space<vmem>>, %arg10: memref<18x18x256xbf16, #tpu.memory_space<vmem>>) attributes {dimension_semantics = [#tpu.dimension_semantics<parallel>, #tpu.dimension_semantics<parallel>], iteration_bounds = array<i64: 2, 1>, scalar_prefetch = 0 : i64, scratch_operands = 1 : i64, tpu.core_type = #tpu.core_type<tc>, window_params = [{transform_indices = @transform_0, window_bounds = array<i64: 1, 1, 18, 16, 36>}, {pipeline_mode = #tpu.pipeline_mode<synchronous>, transform_indices = @transform_1, window_bounds = array<i64: 36, 256>}, {pipeline_mode = #tpu.pipeline_mode<synchronous>, transform_indices = @transform_2, window_bounds = array<i64: 1, 256>}, {pipeline_mode = #tpu.pipeline_mode<synchronous>, transform_indices = @transform_3, window_bounds = array<i64: 3, 3, 256, 256>}, {pipeline_mode = #tpu.pipeline_mode<synchronous>, transform_indices = @transform_4, window_bounds = array<i64: 1, 256>}, {pipeline_mode = #tpu.pipeline_mode<synchronous>, transform_indices = @transform_5, window_bounds = array<i64: 256, 128>}, {pipeline_mode = #tpu.pipeline_mode<synchronous>, transform_indices = @transform_6, window_bounds = array<i64: 1, 128>}, {transform_indices = @transform_7, window_bounds = array<i64: 1, 16, 16, 128>}]} {
    %cst = arith.constant 0.000000e+00 : bf16
    %0 = vector.broadcast %cst : bf16 to vector<18x1x256xbf16>
    %c0 = arith.constant 0 : index
    %c0_0 = arith.constant 0 : index
    %c0_1 = arith.constant 0 : index
    %1 = vector.load %arg10[%c0, %c0_0, %c0_1] : memref<18x18x256xbf16, #tpu.memory_space<vmem>>, vector<18x1x256xbf16>
    tpu.vector_store %arg10[%c0, %c0_0, %c0_1], %0 {strides = array<i32>} : memref<18x18x256xbf16, #tpu.memory_space<vmem>>, vector<18x1x256xbf16>,
    %c0_2 = arith.constant 0 : index
    %c17 = arith.constant 17 : index
    %c0_3 = arith.constant 0 : index
    %2 = vector.load %arg10[%c0_2, %c17, %c0_3] : memref<18x18x256xbf16, #tpu.memory_space<vmem>>, vector<18x1x256xbf16>
    tpu.vector_store %arg10[%c0_2, %c17, %c0_3], %0 {strides = array<i32>} : memref<18x18x256xbf16, #tpu.memory_space<vmem>>, vector<18x1x256xbf16>,
    %c0_4 = arith.constant 0 : index
    %c0_5 = arith.constant 0 : index
    %c0_6 = arith.constant 0 : index
    %c0_7 = arith.constant 0 : index
    %c0_8 = arith.constant 0 : index
    %3 = vector.load %arg2[%c0_4, %c0_5, %c0_6, %c0_7, %c0_8] : memref<1x1x18x16x36xbf16, #tpu.memory_space<vmem>>, vector<1x1x18x16x36xbf16>
    %4 = vector.shape_cast %3 : vector<1x1x18x16x36xbf16> to vector<18x16x36xbf16>
    %5 = vector.shape_cast %4 : vector<18x16x36xbf16> to vector<288x36xbf16>
    %c0_9 = arith.constant 0 : index
    %c0_10 = arith.constant 0 : index
    %6 = vector.load %arg3[%c0_9, %c0_10] : memref<36x256xbf16, #tpu.memory_space<vmem>>, vector<36x256xbf16>
    %cst_11 = arith.constant dense<0.000000e+00> : vector<288x256xf32>
    %7 = tpu.matmul %5, %6, %cst_11 {dimension_numbers = #tpu.dot_dimension_numbers<[1], [0], [0], [1], [0, 0, 1, 1], [], []>} : vector<288x36xbf16>, vector<36x256xbf16>, vector<288x256xf32> -> vector<288x256xf32>
    %c0_12 = arith.constant 0 : index
    %c0_13 = arith.constant 0 : index
    %8 = vector.load %arg4[%c0_12, %c0_13] : memref<1x256xf32, #tpu.memory_space<vmem>>, vector<1x256xf32>
    %9 = vector.broadcast %8 : vector<1x256xf32> to vector<288x256xf32>
    %10 = arith.addf %7, %9 : vector<288x256xf32>
    %cst_14 = arith.constant 0.000000e+00 : f32
    %11 = vector.broadcast %cst_14 : f32 to vector<288x256xf32>
    %12 = arith.maximumf %10, %11 : vector<288x256xf32>
    %13 = arith.truncf %12 : vector<288x256xf32> to vector<288x256xbf16>
    %14 = vector.shape_cast %13 : vector<288x256xbf16> to vector<18x16x256xbf16>
    %c0_15 = arith.constant 0 : index
    %c1 = arith.constant 1 : index
    %c0_16 = arith.constant 0 : index
    %15 = vector.load %arg10[%c0_15, %c1, %c0_16] : memref<18x18x256xbf16, #tpu.memory_space<vmem>>, vector<18x16x256xbf16>
    tpu.vector_store %arg10[%c0_15, %c1, %c0_16], %14 {strides = array<i32>} : memref<18x18x256xbf16, #tpu.memory_space<vmem>>, vector<18x16x256xbf16>,
    %c0_i32 = arith.constant 0 : i32
    %16 = arith.cmpi eq, %arg1, %c0_i32 : i32
    %17 = arith.extui %16 : i1 to i32
    %c0_i32_17 = arith.constant 0 : i32
    %18 = arith.cmpi ne, %17, %c0_i32_17 : i32
    scf.if %18 {
      %cst_103 = arith.constant 0.000000e+00 : bf16
      %90 = vector.broadcast %cst_103 : bf16 to vector<1x18x256xbf16>
      %c0_104 = arith.constant 0 : index
      %c0_105 = arith.constant 0 : index
      %c0_106 = arith.constant 0 : index
      %91 = vector.load %arg10[%c0_104, %c0_105, %c0_106] : memref<18x18x256xbf16, #tpu.memory_space<vmem>>, vector<1x18x256xbf16>
      tpu.vector_store %arg10[%c0_104, %c0_105, %c0_106], %90 {strides = array<i32>} : memref<18x18x256xbf16, #tpu.memory_space<vmem>>, vector<1x18x256xbf16>,
    } else {
    }
    %c0_i32_18 = arith.constant 0 : i32
    %19 = arith.cmpi eq, %arg1, %c0_i32_18 : i32
    %20 = arith.extui %19 : i1 to i32
    %c0_i32_19 = arith.constant 0 : i32
    %21 = arith.cmpi ne, %20, %c0_i32_19 : i32
    scf.if %21 {
      %cst_103 = arith.constant 0.000000e+00 : bf16
      %90 = vector.broadcast %cst_103 : bf16 to vector<1x18x256xbf16>
      %c17_104 = arith.constant 17 : index
      %c0_105 = arith.constant 0 : index
      %c0_106 = arith.constant 0 : index
      %91 = vector.load %arg10[%c17_104, %c0_105, %c0_106] : memref<18x18x256xbf16, #tpu.memory_space<vmem>>, vector<1x18x256xbf16>
      tpu.vector_store %arg10[%c17_104, %c0_105, %c0_106], %90 {strides = array<i32>} : memref<18x18x256xbf16, #tpu.memory_space<vmem>>, vector<1x18x256xbf16>,
    } else {
    }
    %c0_20 = arith.constant 0 : index
    %c0_21 = arith.constant 0 : index
    %c0_22 = arith.constant 0 : index
    %22 = vector.load %arg10[%c0_20, %c0_21, %c0_22] : memref<18x18x256xbf16, #tpu.memory_space<vmem>>, vector<16x16x256xbf16>
    %23 = vector.shape_cast %22 : vector<16x16x256xbf16> to vector<256x256xbf16>
    %c0_23 = arith.constant 0 : index
    %c0_24 = arith.constant 0 : index
    %c0_25 = arith.constant 0 : index
    %c0_26 = arith.constant 0 : index
    %24 = vector.load %arg5[%c0_23, %c0_24, %c0_25, %c0_26] : memref<3x3x256x256xbf16, #tpu.memory_space<vmem>>, vector<1x1x256x256xbf16>
    %25 = vector.shape_cast %24 : vector<1x1x256x256xbf16> to vector<256x256xbf16>
    %cst_27 = arith.constant dense<0.000000e+00> : vector<256x256xf32>
    %26 = tpu.matmul %23, %25, %cst_27 {dimension_numbers = #tpu.dot_dimension_numbers<[1], [0], [0], [1], [0, 0, 1, 1], [], []>} : vector<256x256xbf16>, vector<256x256xbf16>, vector<256x256xf32> -> vector<256x256xf32>
    %c0_28 = arith.constant 0 : index
    %c1_29 = arith.constant 1 : index
    %c0_30 = arith.constant 0 : index
    %27 = vector.load %arg10[%c0_28, %c1_29, %c0_30] : memref<18x18x256xbf16, #tpu.memory_space<vmem>>, vector<16x16x256xbf16>
    %28 = vector.shape_cast %27 : vector<16x16x256xbf16> to vector<256x256xbf16>
    %c0_31 = arith.constant 0 : index
    %c1_32 = arith.constant 1 : index
    %c0_33 = arith.constant 0 : index
    %c0_34 = arith.constant 0 : index
    %29 = vector.load %arg5[%c0_31, %c1_32, %c0_33, %c0_34] : memref<3x3x256x256xbf16, #tpu.memory_space<vmem>>, vector<1x1x256x256xbf16>
    %30 = vector.shape_cast %29 : vector<1x1x256x256xbf16> to vector<256x256xbf16>
    %cst_35 = arith.constant dense<0.000000e+00> : vector<256x256xf32>
    %31 = tpu.matmul %28, %30, %cst_35 {dimension_numbers = #tpu.dot_dimension_numbers<[1], [0], [0], [1], [0, 0, 1, 1], [], []>} : vector<256x256xbf16>, vector<256x256xbf16>, vector<256x256xf32> -> vector<256x256xf32>
    %32 = arith.addf %26, %31 : vector<256x256xf32>
    %c0_36 = arith.constant 0 : index
    %c2 = arith.constant 2 : index
    %c0_37 = arith.constant 0 : index
    %33 = vector.load %arg10[%c0_36, %c2, %c0_37] : memref<18x18x256xbf16, #tpu.memory_space<vmem>>, vector<16x16x256xbf16>
    %34 = vector.shape_cast %33 : vector<16x16x256xbf16> to vector<256x256xbf16>
    %c0_38 = arith.constant 0 : index
    %c2_39 = arith.constant 2 : index
    %c0_40 = arith.constant 0 : index
    %c0_41 = arith.constant 0 : index
    %35 = vector.load %arg5[%c0_38, %c2_39, %c0_40, %c0_41] : memref<3x3x256x256xbf16, #tpu.memory_space<vmem>>, vector<1x1x256x256xbf16>
    %36 = vector.shape_cast %35 : vector<1x1x256x256xbf16> to vector<256x256xbf16>
    %cst_42 = arith.constant dense<0.000000e+00> : vector<256x256xf32>
    %37 = tpu.matmul %34, %36, %cst_42 {dimension_numbers = #tpu.dot_dimension_numbers<[1], [0], [0], [1], [0, 0, 1, 1], [], []>} : vector<256x256xbf16>, vector<256x256xbf16>, vector<256x256xf32> -> vector<256x256xf32>
    %38 = arith.addf %32, %37 : vector<256x256xf32>
    %c1_43 = arith.constant 1 : index
    %c0_44 = arith.constant 0 : index
    %c0_45 = arith.constant 0 : index
    %39 = vector.load %arg10[%c1_43, %c0_44, %c0_45] : memref<18x18x256xbf16, #tpu.memory_space<vmem>>, vector<16x16x256xbf16>
    %40 = vector.shape_cast %39 : vector<16x16x256xbf16> to vector<256x256xbf16>
    %c1_46 = arith.constant 1 : index
    %c0_47 = arith.constant 0 : index
    %c0_48 = arith.constant 0 : index
    %c0_49 = arith.constant 0 : index
    %41 = vector.load %arg5[%c1_46, %c0_47, %c0_48, %c0_49] : memref<3x3x256x256xbf16, #tpu.memory_space<vmem>>, vector<1x1x256x256xbf16>
    %42 = vector.shape_cast %41 : vector<1x1x256x256xbf16> to vector<256x256xbf16>
    %cst_50 = arith.constant dense<0.000000e+00> : vector<256x256xf32>
    %43 = tpu.matmul %40, %42, %cst_50 {dimension_numbers = #tpu.dot_dimension_numbers<[1], [0], [0], [1], [0, 0, 1, 1], [], []>} : vector<256x256xbf16>, vector<256x256xbf16>, vector<256x256xf32> -> vector<256x256xf32>
    %44 = arith.addf %38, %43 : vector<256x256xf32>
    %c1_51 = arith.constant 1 : index
    %c1_52 = arith.constant 1 : index
    %c0_53 = arith.constant 0 : index
    %45 = vector.load %arg10[%c1_51, %c1_52, %c0_53] : memref<18x18x256xbf16, #tpu.memory_space<vmem>>, vector<16x16x256xbf16>
    %46 = vector.shape_cast %45 : vector<16x16x256xbf16> to vector<256x256xbf16>
    %c1_54 = arith.constant 1 : index
    %c1_55 = arith.constant 1 : index
    %c0_56 = arith.constant 0 : index
    %c0_57 = arith.constant 0 : index
    %47 = vector.load %arg5[%c1_54, %c1_55, %c0_56, %c0_57] : memref<3x3x256x256xbf16, #tpu.memory_space<vmem>>, vector<1x1x256x256xbf16>
    %48 = vector.shape_cast %47 : vector<1x1x256x256xbf16> to vector<256x256xbf16>
    %cst_58 = arith.constant dense<0.000000e+00> : vector<256x256xf32>
    %49 = tpu.matmul %46, %48, %cst_58 {dimension_numbers = #tpu.dot_dimension_numbers<[1], [0], [0], [1], [0, 0, 1, 1], [], []>} : vector<256x256xbf16>, vector<256x256xbf16>, vector<256x256xf32> -> vector<256x256xf32>
    %50 = arith.addf %44, %49 : vector<256x256xf32>
    %c1_59 = arith.constant 1 : index
    %c2_60 = arith.constant 2 : index
    %c0_61 = arith.constant 0 : index
    %51 = vector.load %arg10[%c1_59, %c2_60, %c0_61] : memref<18x18x256xbf16, #tpu.memory_space<vmem>>, vector<16x16x256xbf16>
    %52 = vector.shape_cast %51 : vector<16x16x256xbf16> to vector<256x256xbf16>
    %c1_62 = arith.constant 1 : index
    %c2_63 = arith.constant 2 : index
    %c0_64 = arith.constant 0 : index
    %c0_65 = arith.constant 0 : index
    %53 = vector.load %arg5[%c1_62, %c2_63, %c0_64, %c0_65] : memref<3x3x256x256xbf16, #tpu.memory_space<vmem>>, vector<1x1x256x256xbf16>
    %54 = vector.shape_cast %53 : vector<1x1x256x256xbf16> to vector<256x256xbf16>
    %cst_66 = arith.constant dense<0.000000e+00> : vector<256x256xf32>
    %55 = tpu.matmul %52, %54, %cst_66 {dimension_numbers = #tpu.dot_dimension_numbers<[1], [0], [0], [1], [0, 0, 1, 1], [], []>} : vector<256x256xbf16>, vector<256x256xbf16>, vector<256x256xf32> -> vector<256x256xf32>
    %56 = arith.addf %50, %55 : vector<256x256xf32>
    %c2_67 = arith.constant 2 : index
    %c0_68 = arith.constant 0 : index
    %c0_69 = arith.constant 0 : index
    %57 = vector.load %arg10[%c2_67, %c0_68, %c0_69] : memref<18x18x256xbf16, #tpu.memory_space<vmem>>, vector<16x16x256xbf16>
    %58 = vector.shape_cast %57 : vector<16x16x256xbf16> to vector<256x256xbf16>
    %c2_70 = arith.constant 2 : index
    %c0_71 = arith.constant 0 : index
    %c0_72 = arith.constant 0 : index
    %c0_73 = arith.constant 0 : index
    %59 = vector.load %arg5[%c2_70, %c0_71, %c0_72, %c0_73] : memref<3x3x256x256xbf16, #tpu.memory_space<vmem>>, vector<1x1x256x256xbf16>
    %60 = vector.shape_cast %59 : vector<1x1x256x256xbf16> to vector<256x256xbf16>
    %cst_74 = arith.constant dense<0.000000e+00> : vector<256x256xf32>
    %61 = tpu.matmul %58, %60, %cst_74 {dimension_numbers = #tpu.dot_dimension_numbers<[1], [0], [0], [1], [0, 0, 1, 1], [], []>} : vector<256x256xbf16>, vector<256x256xbf16>, vector<256x256xf32> -> vector<256x256xf32>
    %62 = arith.addf %56, %61 : vector<256x256xf32>
    %c2_75 = arith.constant 2 : index
    %c1_76 = arith.constant 1 : index
    %c0_77 = arith.constant 0 : index
    %63 = vector.load %arg10[%c2_75, %c1_76, %c0_77] : memref<18x18x256xbf16, #tpu.memory_space<vmem>>, vector<16x16x256xbf16>
    %64 = vector.shape_cast %63 : vector<16x16x256xbf16> to vector<256x256xbf16>
    %c2_78 = arith.constant 2 : index
    %c1_79 = arith.constant 1 : index
    %c0_80 = arith.constant 0 : index
    %c0_81 = arith.constant 0 : index
    %65 = vector.load %arg5[%c2_78, %c1_79, %c0_80, %c0_81] : memref<3x3x256x256xbf16, #tpu.memory_space<vmem>>, vector<1x1x256x256xbf16>
    %66 = vector.shape_cast %65 : vector<1x1x256x256xbf16> to vector<256x256xbf16>
    %cst_82 = arith.constant dense<0.000000e+00> : vector<256x256xf32>
    %67 = tpu.matmul %64, %66, %cst_82 {dimension_numbers = #tpu.dot_dimension_numbers<[1], [0], [0], [1], [0, 0, 1, 1], [], []>} : vector<256x256xbf16>, vector<256x256xbf16>, vector<256x256xf32> -> vector<256x256xf32>
    %68 = arith.addf %62, %67 : vector<256x256xf32>
    %c2_83 = arith.constant 2 : index
    %c2_84 = arith.constant 2 : index
    %c0_85 = arith.constant 0 : index
    %69 = vector.load %arg10[%c2_83, %c2_84, %c0_85] : memref<18x18x256xbf16, #tpu.memory_space<vmem>>, vector<16x16x256xbf16>
    %70 = vector.shape_cast %69 : vector<16x16x256xbf16> to vector<256x256xbf16>
    %c2_86 = arith.constant 2 : index
    %c2_87 = arith.constant 2 : index
    %c0_88 = arith.constant 0 : index
    %c0_89 = arith.constant 0 : index
    %71 = vector.load %arg5[%c2_86, %c2_87, %c0_88, %c0_89] : memref<3x3x256x256xbf16, #tpu.memory_space<vmem>>, vector<1x1x256x256xbf16>
    %72 = vector.shape_cast %71 : vector<1x1x256x256xbf16> to vector<256x256xbf16>
    %cst_90 = arith.constant dense<0.000000e+00> : vector<256x256xf32>
    %73 = tpu.matmul %70, %72, %cst_90 {dimension_numbers = #tpu.dot_dimension_numbers<[1], [0], [0], [1], [0, 0, 1, 1], [], []>} : vector<256x256xbf16>, vector<256x256xbf16>, vector<256x256xf32> -> vector<256x256xf32>
    %74 = arith.addf %68, %73 : vector<256x256xf32>
    %c0_91 = arith.constant 0 : index
    %c0_92 = arith.constant 0 : index
    %75 = vector.load %arg6[%c0_91, %c0_92] : memref<1x256xf32, #tpu.memory_space<vmem>>, vector<1x256xf32>
    %76 = vector.broadcast %75 : vector<1x256xf32> to vector<256x256xf32>
    %77 = arith.addf %74, %76 : vector<256x256xf32>
    %cst_93 = arith.constant 0.000000e+00 : f32
    %78 = vector.broadcast %cst_93 : f32 to vector<256x256xf32>
    %79 = arith.maximumf %77, %78 : vector<256x256xf32>
    %80 = arith.truncf %79 : vector<256x256xf32> to vector<256x256xbf16>
    %c0_94 = arith.constant 0 : index
    %c0_95 = arith.constant 0 : index
    %81 = vector.load %arg7[%c0_94, %c0_95] : memref<256x128xbf16, #tpu.memory_space<vmem>>, vector<256x128xbf16>
    %cst_96 = arith.constant dense<0.000000e+00> : vector<256x128xf32>
    %82 = tpu.matmul %80, %81, %cst_96 {dimension_numbers = #tpu.dot_dimension_numbers<[1], [0], [0], [1], [0, 0, 1, 1], [], []>} : vector<256x256xbf16>, vector<256x128xbf16>, vector<256x128xf32> -> vector<256x128xf32>
    %c0_97 = arith.constant 0 : index
    %c0_98 = arith.constant 0 : index
    %83 = vector.load %arg8[%c0_97, %c0_98] : memref<1x128xf32, #tpu.memory_space<vmem>>, vector<1x128xf32>
    %84 = vector.broadcast %83 : vector<1x128xf32> to vector<256x128xf32>
    %85 = arith.addf %82, %84 : vector<256x128xf32>
    %86 = vector.shape_cast %85 : vector<256x128xf32> to vector<16x16x128xf32>
    %c0_99 = arith.constant 0 : index
    %c0_100 = arith.constant 0 : index
    %c0_101 = arith.constant 0 : index
    %c0_102 = arith.constant 0 : index
    %87 = vector.load %arg9[%c0_99, %c0_100, %c0_101, %c0_102] : memref<1x16x16x128xf32, #tpu.memory_space<vmem>>, vector<1x16x16x128xf32>
    %88 = vector.shape_cast %87 : vector<1x16x16x128xf32> to vector<16x16x128xf32>
    %89 = vector.shape_cast %86 : vector<16x16x128xf32> to vector<1x16x16x128xf32>
    tpu.vector_store %arg9[%c0_99, %c0_100, %c0_101, %c0_102], %89 {strides = array<i32>} : memref<1x16x16x128xf32, #tpu.memory_space<vmem>>, vector<1x16x16x128xf32>,
    return
  }
  func.func @transform_0(%arg0: i32, %arg1: i32) -> (i32, i32, i32, i32, i32) {
    %c0_i32 = arith.constant 0 : i32
    %c0_i32_0 = arith.constant 0 : i32
    %c0_i32_1 = arith.constant 0 : i32
    %c0_i32_2 = arith.constant 0 : i32
    return %arg0, %arg1, %c0_i32, %c0_i32_0, %c0_i32_1 : i32, i32, i32, i32, i32
  }
  func.func @transform_1(%arg0: i32, %arg1: i32) -> (i32, i32) {
    %c0_i32 = arith.constant 0 : i32
    %c0_i32_0 = arith.constant 0 : i32
    %c0_i32_1 = arith.constant 0 : i32
    return %c0_i32, %c0_i32_0 : i32, i32
  }
  func.func @transform_2(%arg0: i32, %arg1: i32) -> (i32, i32) {
    %c0_i32 = arith.constant 0 : i32
    %c0_i32_0 = arith.constant 0 : i32
    %c0_i32_1 = arith.constant 0 : i32
    return %c0_i32, %c0_i32_0 : i32, i32
  }
  func.func @transform_3(%arg0: i32, %arg1: i32) -> (i32, i32, i32, i32) {
    %c0_i32 = arith.constant 0 : i32
    %c0_i32_0 = arith.constant 0 : i32
    %c0_i32_1 = arith.constant 0 : i32
    %c0_i32_2 = arith.constant 0 : i32
    %c0_i32_3 = arith.constant 0 : i32
    return %c0_i32, %c0_i32_0, %c0_i32_1, %c0_i32_2 : i32, i32, i32, i32
  }
  func.func @transform_4(%arg0: i32, %arg1: i32) -> (i32, i32) {
    %c0_i32 = arith.constant 0 : i32
    %c0_i32_0 = arith.constant 0 : i32
    %c0_i32_1 = arith.constant 0 : i32
    return %c0_i32, %c0_i32_0 : i32, i32
  }
  func.func @transform_5(%arg0: i32, %arg1: i32) -> (i32, i32) {
    %c0_i32 = arith.constant 0 : i32
    %c0_i32_0 = arith.constant 0 : i32
    %c0_i32_1 = arith.constant 0 : i32
    return %c0_i32, %c0_i32_0 : i32, i32
  }
  func.func @transform_6(%arg0: i32, %arg1: i32) -> (i32, i32) {
    %c0_i32 = arith.constant 0 : i32
    %c0_i32_0 = arith.constant 0 : i32
    %c0_i32_1 = arith.constant 0 : i32
    return %c0_i32, %c0_i32_0 : i32, i32
  }
  func.func @transform_7(%arg0: i32, %arg1: i32) -> (i32, i32, i32, i32) {
    %c0_i32 = arith.constant 0 : i32
    %c0_i32_0 = arith.constant 0 : i32
    %c0_i32_1 = arith.constant 0 : i32
    return %arg0, %arg1, %c0_i32, %c0_i32_0 : i32, i32, i32, i32
  }
}

</mosaic_0001>

<llo_original>
// kernel: tpu_custom_call.1
$region0: #{tpu_custom_call.1}
  #allocation0 [shape = 'u32[]', space=smem, size = 0x4, offset = 0x4, fixed_abs, tag = 'smem constant byte address 0x4 - core index']
  #allocation1 [shape = 'u32[144,128]{1,0:T(1,128)}', space=vmem, size = 0x12000, scoped, tag = 'internal scratch']
  #allocation2 [shape = 'bf16[18,18,256]{2,1,0:T(8,128)(2,1)}', space=vmem, size = 0x36000, scoped, tag = 'scratch operand']
  %s0 = inlined_call_operand.hbm [shape: bf16[2,1,18,16,36], index: 0, kind: input, shape index: {}]
  %s1 = inlined_call_operand.hbm [shape: bf16[36,256], index: 1, kind: input, shape index: {}]
  %s2 = inlined_call_operand.hbm [shape: f32[1,256], index: 2, kind: input, shape index: {}]
  %s3 = inlined_call_operand.hbm [shape: bf16[3,3,256,256], index: 3, kind: input, shape index: {}]
  %s4 = inlined_call_operand.hbm [shape: f32[1,256], index: 4, kind: input, shape index: {}]
  %s5 = inlined_call_operand.hbm [shape: bf16[256,128], index: 5, kind: input, shape index: {}]
  %s6 = inlined_call_operand.hbm [shape: f32[1,128], index: 6, kind: input, shape index: {}]
  %s7 = inlined_call_operand.hbm [shape: f32[2,16,16,128], index: 7, kind: output, shape index: {}]
  %s8 = sld [smem:[#allocation0]]
  $region93: #{tpu_custom_call.1} parent=0
    _
  %s10 = ssub.s32 1, %s8
  %s11 = scalar_select 0, %s10, %s8
  $region1: #{tpu_custom_call.1} parent=0
    #allocation3 [shape = 'u8[147456]{0}', space=vmem, size = 0x24000, scoped, tag = 'input window, operand 0']
    #allocation4 [shape = 's32[2]{0}', space=sflag, size = 0x8, scoped, tag = 'scoped memory for tpu_custom_call.1']
    #allocation5 [shape = 's32[2]{0}', space=sflag, size = 0x8, scoped, tag = 'scoped memory for tpu_custom_call.1']
    #allocation6 [shape = 'u8[20480]{0}', space=vmem, size = 0x5000, scoped, tag = 'input window, operand 1, single buffered']
    #allocation7 [shape = 's32[1]{0}', space=sflag, size = 0x4, scoped, tag = 'scoped memory for tpu_custom_call.1']
    #allocation8 [shape = 'u8[1024]{0}', space=vmem, size = 0x400, scoped, tag = 'input window, operand 2, single buffered']
    #allocation9 [shape = 'u8[1179648]{0}', space=vmem, size = 0x120000, scoped, tag = 'input window, operand 3, single buffered']
    #allocation10 [shape = 's32[1]{0}', space=sflag, size = 0x4, scoped, tag = 'scoped memory for tpu_custom_call.1']
    #allocation11 [shape = 'u8[1024]{0}', space=vmem, size = 0x400, scoped, tag = 'input window, operand 4, single buffered']
    #allocation12 [shape = 'u8[65536]{0}', space=vmem, size = 0x10000, scoped, tag = 'input window, operand 5, single buffered']
    #allocation13 [shape = 's32[1]{0}', space=sflag, size = 0x4, scoped, tag = 'scoped memory for tpu_custom_call.1']
    #allocation14 [shape = 'u8[512]{0}', space=vmem, size = 0x400, scoped, tag = 'input window, operand 6, single buffered']
    #allocation15 [shape = 'u8[262144]{0}', space=vmem, size = 0x40000, scoped, tag = 'output window, operand 0']
    %12 = vsyncpa [#allocation4], 0
    %s13 = scalar_lea.sflag [#allocation4], 1
    %14 = vsyncpa %s13, 0
    %15 = vsyncpa [#allocation7], 0
    %16 = vsyncpa [#allocation10], 0
    %17 = vsyncpa [#allocation13], 0
    %18 = vsyncpa [#allocation5], 0
    %s19 = scalar_lea.sflag [#allocation5], 1
    %20 = vsyncpa %s19, 0
    loop: start=0, step=1, limit=4
    $region2: #{tpu_custom_call.1} parent=1 // loop_pre_header
      _
    $region3: #{tpu_custom_call.1} parent=1 // loop_header
      %s22 = sphi 0, %s26
      %p23 = scmp.ge.s32.totalorder %s22, 4
      %s29 = sphi 0, %s41
      %s30 = sphi 0, %s37
      %s31 = sphi 0, %s29
      %s32 = sphi 0, %s30
      %s33 = sphi 0, %s31
      %s34 = sphi 0, %s32
      %s46 = sphi 0, %s48
      %s49 = sphi 0, %s46
      %s50 = sphi 0, %s49
      %s66 = sphi 0, %s50
      %s70 = sphi 0, %s70
      %s72 = sphi 0, %s70
      %s73 = sphi 0, %s72
      %s87 = sphi 0, %s73
      %s91 = sphi 0, %s91
      %s93 = sphi 0, %s91
      %s94 = sphi 0, %s93
      %s108 = sphi 0, %s94
      %s112 = sphi 0, %s112
      %s114 = sphi 0, %s112
      %s115 = sphi 0, %s114
      %s129 = sphi 0, %s115
      %s133 = sphi 0, %s133
      %s135 = sphi 0, %s133
      %s136 = sphi 0, %s135
      %s150 = sphi 0, %s136
      %s154 = sphi 0, %s154
      %s156 = sphi 0, %s154
      %s157 = sphi 0, %s156
      %s171 = sphi 0, %s157
      %s175 = sphi 0, %s175
      %s177 = sphi 0, %s175
      %s178 = sphi 0, %s177
      %s192 = sphi 0, %s178
      %s200 = sphi 0, %s202
      %s203 = sphi 0, %s200
      %s204 = sphi 0, %s203
      %s220 = sphi 0, %s204
    $region4: #{tpu_custom_call.1} parent=1 // loop_header_branch
      %25 = sbr.rel (%p23) target = $region8
    $region5: #{tpu_custom_call.1} parent=1 // loop_body
      %s27 = ssub.s32 %s22, 1
      %s28 = ssub.s32 %s22, 2
      %s35 = sadd.s32 1, %s30
      %p36 = scmp.ge.s32.totalorder %s35, 1
      %s37 = scalar_select %p36, 0, %s35
      %s38 = sadd.s32 1, %s29
      %s39 = scalar_select %p36, %s38, %s29
      %p40 = scmp.ge.s32.totalorder %s39, 2
      %s41 = scalar_select %p40, 0, %s39
      %s42 = ssub.s32 %s29, %s41
      %s43 = ssub.s32 %s30, %s37
      %s44 = sor.u32 %s42, %s43
      %p45 = scmp.eq.s32.totalorder %s44, 0
      %s47 = sadd.s32 %s46, 1
      %s48 = scalar_select %p45, %s46, %s47
      %p51 = pneg %p45
      %p52 = scmp.eq.s32.totalorder %s22, 1
      %p53 = por %p51, %p52
      %p54 = scmp.ne.s32.totalorder %s46, %s49
      %p55 = scmp.eq.s32.totalorder %s22, 0
      %p56 = por %p54, %p55
      %p57 = scmp.ne.s32.totalorder %s46, %s49
      %p58 = scmp.eq.s32.totalorder %s27, 1
      %p59 = por %p57, %p58
      %p60 = scmp.ne.s32.totalorder %s49, %s50
      %p61 = scmp.eq.s32.totalorder %s27, 0
      %p62 = por %p60, %p61
      %p63 = scmp.ne.s32.totalorder %s49, %s50
      %p64 = scmp.eq.s32.totalorder %s28, 1
      %p65 = por %p63, %p64
      %p67 = scmp.ne.s32.totalorder %s50, %s66
      %p68 = scmp.eq.s32.totalorder %s28, 0
      %p69 = por %p67, %p68
      %s71 = sadd.s32 %s70, 1
      %p74 = scmp.eq.s32.totalorder %s22, 1
      %p75 = scmp.ne.s32.totalorder %s70, %s72
      %p76 = scmp.eq.s32.totalorder %s22, 0
      %p77 = por %p75, %p76
      %p78 = scmp.ne.s32.totalorder %s70, %s72
      %p79 = scmp.eq.s32.totalorder %s27, 1
      %p80 = por %p78, %p79
      %p81 = scmp.ne.s32.totalorder %s72, %s73
      %p82 = scmp.eq.s32.totalorder %s27, 0
      %p83 = por %p81, %p82
      %p84 = scmp.ne.s32.totalorder %s72, %s73
      %p85 = scmp.eq.s32.totalorder %s28, 1
      %p86 = por %p84, %p85
      %p88 = scmp.ne.s32.totalorder %s73, %s87
      %p89 = scmp.eq.s32.totalorder %s28, 0
      %p90 = por %p88, %p89
      %s92 = sadd.s32 %s91, 1
      %p95 = scmp.eq.s32.totalorder %s22, 1
      %p96 = scmp.ne.s32.totalorder %s91, %s93
      %p97 = scmp.eq.s32.totalorder %s22, 0
      %p98 = por %p96, %p97
      %p99 = scmp.ne.s32.totalorder %s91, %s93
      %p100 = scmp.eq.s32.totalorder %s27, 1
      %p101 = por %p99, %p100
      %p102 = scmp.ne.s32.totalorder %s93, %s94
      %p103 = scmp.eq.s32.totalorder %s27, 0
      %p104 = por %p102, %p103
      %p105 = scmp.ne.s32.totalorder %s93, %s94
      %p106 = scmp.eq.s32.totalorder %s28, 1
      %p107 = por %p105, %p106
      %p109 = scmp.ne.s32.totalorder %s94, %s108
      %p110 = scmp.eq.s32.totalorder %s28, 0
      %p111 = por %p109, %p110
      %s113 = sadd.s32 %s112, 1
      %p116 = scmp.eq.s32.totalorder %s22, 1
      %p117 = scmp.ne.s32.totalorder %s112, %s114
      %p118 = scmp.eq.s32.totalorder %s22, 0
      %p119 = por %p117, %p118
      %p120 = scmp.ne.s32.totalorder %s112, %s114
      %p121 = scmp.eq.s32.totalorder %s27, 1
      %p122 = por %p120, %p121
      %p123 = scmp.ne.s32.totalorder %s114, %s115
      %p124 = scmp.eq.s32.totalorder %s27, 0
      %p125 = por %p123, %p124
      %p126 = scmp.ne.s32.totalorder %s114, %s115
      %p127 = scmp.eq.s32.totalorder %s28, 1
      %p128 = por %p126, %p127
      %p130 = scmp.ne.s32.totalorder %s115, %s129
      %p131 = scmp.eq.s32.totalorder %s28, 0
      %p132 = por %p130, %p131
      %s134 = sadd.s32 %s133, 1
      %p137 = scmp.eq.s32.totalorder %s22, 1
      %p138 = scmp.ne.s32.totalorder %s133, %s135
      %p139 = scmp.eq.s32.totalorder %s22, 0
      %p140 = por %p138, %p139
      %p141 = scmp.ne.s32.totalorder %s133, %s135
      %p142 = scmp.eq.s32.totalorder %s27, 1
      %p143 = por %p141, %p142
      %p144 = scmp.ne.s32.totalorder %s135, %s136
      %p145 = scmp.eq.s32.totalorder %s27, 0
      %p146 = por %p144, %p145
      %p147 = scmp.ne.s32.totalorder %s135, %s136
      %p148 = scmp.eq.s32.totalorder %s28, 1
      %p149 = por %p147, %p148
      %p151 = scmp.ne.s32.totalorder %s136, %s150
      %p152 = scmp.eq.s32.totalorder %s28, 0
      %p153 = por %p151, %p152
      %s155 = sadd.s32 %s154, 1
      %p158 = scmp.eq.s32.totalorder %s22, 1
      %p159 = scmp.ne.s32.totalorder %s154, %s156
      %p160 = scmp.eq.s32.totalorder %s22, 0
      %p161 = por %p159, %p160
      %p162 = scmp.ne.s32.totalorder %s154, %s156
      %p163 = scmp.eq.s32.totalorder %s27, 1
      %p164 = por %p162, %p163
      %p165 = scmp.ne.s32.totalorder %s156, %s157
      %p166 = scmp.eq.s32.totalorder %s27, 0
      %p167 = por %p165, %p166
      %p168 = scmp.ne.s32.totalorder %s156, %s157
      %p169 = scmp.eq.s32.totalorder %s28, 1
      %p170 = por %p168, %p169
      %p172 = scmp.ne.s32.totalorder %s157, %s171
      %p173 = scmp.eq.s32.totalorder %s28, 0
      %p174 = por %p172, %p173
      %s176 = sadd.s32 %s175, 1
      %p179 = scmp.eq.s32.totalorder %s22, 1
      %p180 = scmp.ne.s32.totalorder %s175, %s177
      %p181 = scmp.eq.s32.totalorder %s22, 0
      %p182 = por %p180, %p181
      %p183 = scmp.ne.s32.totalorder %s175, %s177
      %p184 = scmp.eq.s32.totalorder %s27, 1
      %p185 = por %p183, %p184
      %p186 = scmp.ne.s32.totalorder %s177, %s178
      %p187 = scmp.eq.s32.totalorder %s27, 0
      %p188 = por %p186, %p187
      %p189 = scmp.ne.s32.totalorder %s177, %s178
      %p190 = scmp.eq.s32.totalorder %s28, 1
      %p191 = por %p189, %p190
      %p193 = scmp.ne.s32.totalorder %s178, %s192
      %p194 = scmp.eq.s32.totalorder %s28, 0
      %p195 = por %p193, %p194
      %s196 = ssub.s32 %s29, %s41
      %s197 = ssub.s32 %s30, %s37
      %s198 = sor.u32 %s196, %s197
      %p199 = scmp.eq.s32.totalorder %s198, 0
      %s201 = sadd.s32 %s200, 1
      %s202 = scalar_select %p199, %s200, %s201
      %p205 = pneg %p199
      %p206 = scmp.eq.s32.totalorder %s22, 1
      %p207 = por %p205, %p206
      %p208 = scmp.ne.s32.totalorder %s200, %s203
      %p209 = scmp.eq.s32.totalorder %s22, 0
      %p210 = por %p208, %p209
      %p211 = scmp.ne.s32.totalorder %s200, %s203
      %p212 = scmp.eq.s32.totalorder %s27, 1
      %p213 = por %p211, %p212
      %p214 = scmp.ne.s32.totalorder %s203, %s204
      %p215 = scmp.eq.s32.totalorder %s27, 0
      %p216 = por %p214, %p215
      %p217 = scmp.ne.s32.totalorder %s203, %s204
      %p218 = scmp.eq.s32.totalorder %s28, 1
      %p219 = por %p217, %p218
      %p221 = scmp.ne.s32.totalorder %s204, %s220
      %p222 = scmp.eq.s32.totalorder %s28, 0
      %p223 = por %p221, %p222
      %p224 = scmp.le.s32.totalorder 1, %s22
      %p225 = scmp.lt.s32.totalorder %s22, 3
      %p226 = pnand %p224, %p225
      %p227 = pneg %p226
      // Predicated region
      $region9: #{tpu_custom_call.1} parent=5 // pred_check
        _
      $region10: #{tpu_custom_call.1} parent=5 // pred_check_branch
        %229 = sbr.rel (%p226) target = $region12
      $region11: #{tpu_custom_call.1} parent=5 // pred_region
        %s230 = ssub.s32 %s22, 1
        // Predicated region
        $region13: #{tpu_custom_call.1} parent=11 // pred_check
          %p231 = pneg %p83
        $region14: #{tpu_custom_call.1} parent=11 // pred_check_branch
          %233 = sbr.rel (%p231) target = $region16
        $region15: #{tpu_custom_call.1} parent=11 // pred_region
          %s235 = ssub.s32 640, 640
          %236 = vsyncadd [#allocation7], %s235
          %s237 = sshll.u32 [#allocation6], 4
          %s238 = int_to_ptr.vmem [resolvable:$true] %s237
          %243 = dma.hbm_to_vmem [thread:$0]  %s1, 640, %s238, [#allocation7], 128, 128, 8
        $region16: #{tpu_custom_call.1} parent=11 // pred_fallthru
          _
        // Predicated region
        $region17: #{tpu_custom_call.1} parent=11 // pred_check
          %p244 = pneg %p104
        $region18: #{tpu_custom_call.1} parent=11 // pred_check_branch
          %246 = sbr.rel (%p244) target = $region20
        $region19: #{tpu_custom_call.1} parent=11 // pred_region
          %s248 = ssub.s32 32, 32
          %249 = vsyncadd [#allocation7], %s248
          %s251 = sshll.u32 [#allocation8], 4
          %s252 = int_to_ptr.vmem [resolvable:$true] %s251
          %254 = dma.hbm_to_vmem [thread:$0]  %s2, 32, %s252, [#allocation7]
        $region20: #{tpu_custom_call.1} parent=11 // pred_fallthru
          _
        // Predicated region
        $region21: #{tpu_custom_call.1} parent=11 // pred_check
          %p255 = pneg %p125
        $region22: #{tpu_custom_call.1} parent=11 // pred_check_branch
          %257 = sbr.rel (%p255) target = $region24
        $region23: #{tpu_custom_call.1} parent=11 // pred_region
          %s259 = ssub.s32 36864, 36864
          %260 = vsyncadd [#allocation10], %s259
          %s261 = sshll.u32 [#allocation9], 4
          %s262 = int_to_ptr.vmem [resolvable:$true] %s261
          %267 = dma.hbm_to_vmem [thread:$0]  %s3, 36864, %s262, [#allocation10], 128, 128, 8
        $region24: #{tpu_custom_call.1} parent=11 // pred_fallthru
          _
        // Predicated region
        $region25: #{tpu_custom_call.1} parent=11 // pred_check
          %p268 = pneg %p146
        $region26: #{tpu_custom_call.1} parent=11 // pred_check_branch
          %270 = sbr.rel (%p268) target = $region28
        $region27: #{tpu_custom_call.1} parent=11 // pred_region
          %s272 = ssub.s32 32, 32
          %273 = vsyncadd [#allocation10], %s272
          %s275 = sshll.u32 [#allocation11], 4
          %s276 = int_to_ptr.vmem [resolvable:$true] %s275
          %278 = dma.hbm_to_vmem [thread:$0]  %s4, 32, %s276, [#allocation10]
        $region28: #{tpu_custom_call.1} parent=11 // pred_fallthru
          _
        // Predicated region
        $region29: #{tpu_custom_call.1} parent=11 // pred_check
          %p279 = pneg %p167
        $region30: #{tpu_custom_call.1} parent=11 // pred_check_branch
          %281 = sbr.rel (%p279) target = $region32
        $region31: #{tpu_custom_call.1} parent=11 // pred_region
          %s283 = ssub.s32 2048, 2048
          %284 = vsyncadd [#allocation13], %s283
          %s285 = sshll.u32 [#allocation12], 4
          %s286 = int_to_ptr.vmem [resolvable:$true] %s285
          %291 = dma.hbm_to_vmem [thread:$0]  %s5, 2048, %s286, [#allocation13], 64, 64, 4
        $region32: #{tpu_custom_call.1} parent=11 // pred_fallthru
          _
        // Predicated region
        $region33: #{tpu_custom_call.1} parent=11 // pred_check
          %p292 = pneg %p188
        $region34: #{tpu_custom_call.1} parent=11 // pred_check_branch
          %294 = sbr.rel (%p292) target = $region36
        $region35: #{tpu_custom_call.1} parent=11 // pred_region
          %s296 = ssub.s32 16, 16
          %297 = vsyncadd [#allocation13], %s296
          %s299 = sshll.u32 [#allocation14], 4
          %s300 = int_to_ptr.vmem [resolvable:$true] %s299
          %302 = dma.hbm_to_vmem [thread:$0]  %s6, 16, %s300, [#allocation13]
        $region36: #{tpu_custom_call.1} parent=11 // pred_fallthru
          _
      $region12: #{tpu_custom_call.1} parent=5 // pred_fallthru
        _
      %p303 = scmp.lt.s32.totalorder %s22, 2
      // Predicated region
      $region37: #{tpu_custom_call.1} parent=5 // pred_check
        %p304 = pneg %p303
      $region38: #{tpu_custom_call.1} parent=5 // pred_check_branch
        %306 = sbr.rel (%p304) target = $region40
      $region39: #{tpu_custom_call.1} parent=5 // pred_region
        // Predicated region
        $region41: #{tpu_custom_call.1} parent=39 // pred_check
          %p307 = pneg %p56
        $region42: #{tpu_custom_call.1} parent=39 // pred_check_branch
          %309 = sbr.rel (%p307) target = $region44
        $region43: #{tpu_custom_call.1} parent=39 // pred_region
          %s310 = sand.u32 %s46, 1
          %s311 = scalar_lea.sflag [#allocation4], %s310
          %s312 = sand.u32 %s46, 1
          %s313 = smul.addr %s312, 144
          %s314 = scalar_lea.vmem [#allocation3], %s313
          %s316 = ssub.s32 2304, 2304
          %317 = vsyncadd %s311, %s316
          %s318 = smul.addr %s30, 36
          %s319 = smul.addr %s29, 36
          %s320 = sadd.s32 %s318, %s319
          %s321 = smul.addr %s320, 64
          %s322 = scalar_lea.hbm %s0, %s321
          %s323 = sshll.u32 %s314, 4
          %s324 = int_to_ptr.vmem [resolvable:$true] %s323
          %329 = dma.hbm_to_vmem [thread:$0]  %s322, 2304, %s324, %s311, 64, 64, 4
        $region44: #{tpu_custom_call.1} parent=39 // pred_fallthru
          _
      $region40: #{tpu_custom_call.1} parent=5 // pred_fallthru
        _
      %p330 = scmp.le.s32.totalorder 1, %s22
      %p331 = scmp.lt.s32.totalorder %s22, 3
      %p332 = pnand %p330, %p331
      %p333 = pneg %p332
      // Predicated region
      $region45: #{tpu_custom_call.1} parent=5 // pred_check
        _
      $region46: #{tpu_custom_call.1} parent=5 // pred_check_branch
        %335 = sbr.rel (%p332) target = $region48
      $region47: #{tpu_custom_call.1} parent=5 // pred_region
        %s336 = ssub.s32 %s22, 1
        %s337 = sand.u32 %s49, 1
        %s338 = scalar_lea.sflag [#allocation4], %s337
        %s339 = sand.u32 %s49, 1
        %s340 = smul.addr %s339, 144
        %s341 = scalar_lea.vmem [#allocation3], %s340
        // Predicated region
        $region49: #{tpu_custom_call.1} parent=47 // pred_check
          %p342 = pneg %p62
        $region50: #{tpu_custom_call.1} parent=47 // pred_check_branch
          %344 = sbr.rel (%p342) target = $region52
        $region51: #{tpu_custom_call.1} parent=47 // pred_region
          %345 = dma.done %s338, 2304
        $region52: #{tpu_custom_call.1} parent=47 // pred_fallthru
          _
        // Predicated region
        $region53: #{tpu_custom_call.1} parent=47 // pred_check
          %p346 = pneg %p83
        $region54: #{tpu_custom_call.1} parent=47 // pred_check_branch
          %348 = sbr.rel (%p346) target = $region56
        $region55: #{tpu_custom_call.1} parent=47 // pred_region
          %349 = dma.done [#allocation7], 640
        $region56: #{tpu_custom_call.1} parent=47 // pred_fallthru
          _
        // Predicated region
        $region57: #{tpu_custom_call.1} parent=47 // pred_check
          %p350 = pneg %p104
        $region58: #{tpu_custom_call.1} parent=47 // pred_check_branch
          %352 = sbr.rel (%p350) target = $region60
        $region59: #{tpu_custom_call.1} parent=47 // pred_region
          %353 = dma.done [#allocation7], 32
        $region60: #{tpu_custom_call.1} parent=47 // pred_fallthru
          _
        // Predicated region
        $region61: #{tpu_custom_call.1} parent=47 // pred_check
          %p354 = pneg %p125
        $region62: #{tpu_custom_call.1} parent=47 // pred_check_branch
          %356 = sbr.rel (%p354) target = $region64
        $region63: #{tpu_custom_call.1} parent=47 // pred_region
          %357 = dma.done [#allocation10], 36864
        $region64: #{tpu_custom_call.1} parent=47 // pred_fallthru
          _
        // Predicated region
        $region65: #{tpu_custom_call.1} parent=47 // pred_check
          %p358 = pneg %p146
        $region66: #{tpu_custom_call.1} parent=47 // pred_check_branch
          %360 = sbr.rel (%p358) target = $region68
        $region67: #{tpu_custom_call.1} parent=47 // pred_region
          %361 = dma.done [#allocation10], 32
        $region68: #{tpu_custom_call.1} parent=47 // pred_fallthru
          _
        // Predicated region
        $region69: #{tpu_custom_call.1} parent=47 // pred_check
          %p362 = pneg %p167
        $region70: #{tpu_custom_call.1} parent=47 // pred_check_branch
          %364 = sbr.rel (%p362) target = $region72
        $region71: #{tpu_custom_call.1} parent=47 // pred_region
          %365 = dma.done [#allocation13], 2048
        $region72: #{tpu_custom_call.1} parent=47 // pred_fallthru
          _
        // Predicated region
        $region73: #{tpu_custom_call.1} parent=47 // pred_check
          %p366 = pneg %p188
        $region74: #{tpu_custom_call.1} parent=47 // pred_check_branch
          %368 = sbr.rel (%p366) target = $region76
        $region75: #{tpu_custom_call.1} parent=47 // pred_region
          %369 = dma.done [#allocation13], 16
        $region76: #{tpu_custom_call.1} parent=47 // pred_fallthru
          _
        %s370 = sand.u32 %s49, 1
        %s371 = scalar_lea.sflag [#allocation4], %s370
        %s372 = sand.u32 %s49, 1
        %s373 = smul.addr %s372, 144
        %s374 = scalar_lea.vmem [#allocation3], %s373
        %p375 = pneg %p62
        %p376 = pneg %p59
        %p377 = pneg %p83
        %p378 = pneg %p80
        %p379 = pneg %p104
        %p380 = pneg %p101
        %p381 = pneg %p125
        %p382 = pneg %p122
        %p383 = pneg %p146
        %p384 = pneg %p143
        %p385 = pneg %p167
        %p386 = pneg %p164
        %p387 = pneg %p188
        %p388 = pneg %p185
        %p389 = pneg %p216
        %p390 = pneg %p213
        %s391 = sand.u32 %s203, 1
        %s392 = scalar_lea.sflag [#allocation5], %s391
        %s393 = sand.u32 %s203, 1
        %s394 = smul.addr %s393, 256
        %s395 = scalar_lea.vmem [#allocation15], %s394
        %s396 = smul.u32 16, %s32
        %vm398 = vcmask 1040384
        %vm399 = vsmask.f32 256
        %vm400 = vmand %vm398, %vm399
        %vm401 = vcmask 1044484
        %vm402 = vsmask.f32 4352
        %vm403 = vmand %vm401, %vm402
        %vm404 = vmor %vm403, %vm400
        %v405 = vld [vmem:[#allocation2] sm:$0x11]
        %v406 = vsel %vm404, 0, %v405
        %407 = vst [vmem:[#allocation2] sm:$0x11] %v406
        %v408 = vld [vmem:[#allocation2 + $0x18] sm:$0x11]
        %v409 = vsel %vm404, 0, %v408
        %410 = vst [vmem:[#allocation2 + $0x18] sm:$0x11] %v409
        %v411 = vld [vmem:[#allocation2 + $0x30] sm:$0x11]
        %v412 = vsel %vm404, 0, %v411
        %413 = vst [vmem:[#allocation2 + $0x30] sm:$0x11] %v412
        %v414 = vld [vmem:[#allocation2 + $0x48] sm:$0x11]
        %v415 = vsel %vm404, 0, %v414
        %416 = vst [vmem:[#allocation2 + $0x48] sm:$0x11] %v415
        %v417 = vld [vmem:[#allocation2 + $0x60] sm:$0x11]
        %v418 = vsel %vm404, 0, %v417
        %419 = vst [vmem:[#allocation2 + $0x60] sm:$0x11] %v418
        %v420 = vld [vmem:[#allocation2 + $0x78] sm:$0x11]
        %v421 = vsel %vm404, 0, %v420
        %422 = vst [vmem:[#allocation2 + $0x78] sm:$0x11] %v421
        %v423 = vld [vmem:[#allocation2 + $0x90] sm:$0x11]
        %v424 = vsel %vm404, 0, %v423
        %425 = vst [vmem:[#allocation2 + $0x90] sm:$0x11] %v424
        %v426 = vld [vmem:[#allocation2 + $0xa8] sm:$0x11]
        %v427 = vsel %vm404, 0, %v426
        %428 = vst [vmem:[#allocation2 + $0xa8] sm:$0x11] %v427
        %v429 = vld [vmem:[#allocation2 + $0xc0] sm:$0x11]
        %v430 = vsel %vm404, 0, %v429
        %431 = vst [vmem:[#allocation2 + $0xc0] sm:$0x11] %v430
        %v432 = vld [vmem:[#allocation2 + $0xd8] sm:$0x11]
        %v433 = vsel %vm404, 0, %v432
        %434 = vst [vmem:[#allocation2 + $0xd8] sm:$0x11] %v433
        %v435 = vld [vmem:[#allocation2 + $0xf0] sm:$0x11]
        %v436 = vsel %vm404, 0, %v435
        %437 = vst [vmem:[#allocation2 + $0xf0] sm:$0x11] %v436
        %v438 = vld [vmem:[#allocation2 + $0x108] sm:$0x11]
        %v439 = vsel %vm404, 0, %v438
        %440 = vst [vmem:[#allocation2 + $0x108] sm:$0x11] %v439
        %v441 = vld [vmem:[#allocation2 + $0x120] sm:$0x11]
        %v442 = vsel %vm404, 0, %v441
        %443 = vst [vmem:[#allocation2 + $0x120] sm:$0x11] %v442
        %v444 = vld [vmem:[#allocation2 + $0x138] sm:$0x11]
        %v445 = vsel %vm404, 0, %v444
        %446 = vst [vmem:[#allocation2 + $0x138] sm:$0x11] %v445
        %v447 = vld [vmem:[#allocation2 + $0x150] sm:$0x11]
        %v448 = vsel %vm404, 0, %v447
        %449 = vst [vmem:[#allocation2 + $0x150] sm:$0x11] %v448
        %v450 = vld [vmem:[#allocation2 + $0x168] sm:$0x11]
        %v451 = vsel %vm404, 0, %v450
        %452 = vst [vmem:[#allocation2 + $0x168] sm:$0x11] %v451
        %v453 = vld [vmem:[#allocation2 + $0x180] sm:$0x11]
        %v454 = vsel %vm404, 0, %v453
        %455 = vst [vmem:[#allocation2 + $0x180] sm:$0x11] %v454
        %v456 = vld [vmem:[#allocation2 + $0x198] sm:$0x11]
        %v457 = vsel %vm404, 0, %v456
        %458 = vst [vmem:[#allocation2 + $0x198] sm:$0x11] %v457
        %vm459 = vsmask.f32 7938
        %vm460 = vmand %vm398, %vm459
        %vm461 = vsmask.f32 7954
        %vm462 = vmand %vm401, %vm461
        %vm463 = vmor %vm462, %vm460
        %v464 = vld [vmem:[#allocation2 + $0x10] sm:$0x11]
        %v465 = vsel %vm463, 0, %v464
        %466 = vst [vmem:[#allocation2 + $0x10] sm:$0x11] %v465
        %v467 = vld [vmem:[#allocation2 + $0x28] sm:$0x11]
        %v468 = vsel %vm463, 0, %v467
        %469 = vst [vmem:[#allocation2 + $0x28] sm:$0x11] %v468
        %v470 = vld [vmem:[#allocation2 + $0x40] sm:$0x11]
        %v471 = vsel %vm463, 0, %v470
        %472 = vst [vmem:[#allocation2 + $0x40] sm:$0x11] %v471
        %v473 = vld [vmem:[#allocation2 + $0x58] sm:$0x11]
        %v474 = vsel %vm463, 0, %v473
        %475 = vst [vmem:[#allocation2 + $0x58] sm:$0x11] %v474
        %v476 = vld [vmem:[#allocation2 + $0x70] sm:$0x11]
        %v477 = vsel %vm463, 0, %v476
        %478 = vst [vmem:[#allocation2 + $0x70] sm:$0x11] %v477
        %v479 = vld [vmem:[#allocation2 + $0x88] sm:$0x11]
        %v480 = vsel %vm463, 0, %v479
        %481 = vst [vmem:[#allocation2 + $0x88] sm:$0x11] %v480
        %v482 = vld [vmem:[#allocation2 + $0xa0] sm:$0x11]
        %v483 = vsel %vm463, 0, %v482
        %484 = vst [vmem:[#allocation2 + $0xa0] sm:$0x11] %v483
        %v485 = vld [vmem:[#allocation2 + $0xb8] sm:$0x11]
        %v486 = vsel %vm463, 0, %v485
        %487 = vst [vmem:[#allocation2 + $0xb8] sm:$0x11] %v486
        %v488 = vld [vmem:[#allocation2 + $0xd0] sm:$0x11]
        %v489 = vsel %vm463, 0, %v488
        %490 = vst [vmem:[#allocation2 + $0xd0] sm:$0x11] %v489
        %v491 = vld [vmem:[#allocation2 + $0xe8] sm:$0x11]
        %v492 = vsel %vm463, 0, %v491
        %493 = vst [vmem:[#allocation2 + $0xe8] sm:$0x11] %v492
        %v494 = vld [vmem:[#allocation2 + $0x100] sm:$0x11]
        %v495 = vsel %vm463, 0, %v494
        %496 = vst [vmem:[#allocation2 + $0x100] sm:$0x11] %v495
        %v497 = vld [vmem:[#allocation2 + $0x118] sm:$0x11]
        %v498 = vsel %vm463, 0, %v497
        %499 = vst [vmem:[#allocation2 + $0x118] sm:$0x11] %v498
        %v500 = vld [vmem:[#allocation2 + $0x130] sm:$0x11]
        %v501 = vsel %vm463, 0, %v500
        %502 = vst [vmem:[#allocation2 + $0x130] sm:$0x11] %v501
        %v503 = vld [vmem:[#allocation2 + $0x148] sm:$0x11]
        %v504 = vsel %vm463, 0, %v503
        %505 = vst [vmem:[#allocation2 + $0x148] sm:$0x11] %v504
        %v506 = vld [vmem:[#allocation2 + $0x160] sm:$0x11]
        %v507 = vsel %vm463, 0, %v506
        %508 = vst [vmem:[#allocation2 + $0x160] sm:$0x11] %v507
        %v509 = vld [vmem:[#allocation2 + $0x178] sm:$0x11]
        %v510 = vsel %vm463, 0, %v509
        %511 = vst [vmem:[#allocation2 + $0x178] sm:$0x11] %v510
        %v512 = vld [vmem:[#allocation2 + $0x190] sm:$0x11]
        %v513 = vsel %vm463, 0, %v512
        %514 = vst [vmem:[#allocation2 + $0x190] sm:$0x11] %v513
        %v515 = vld [vmem:[#allocation2 + $0x1a8] sm:$0x11]
        %v516 = vsel %vm463, 0, %v515
        %517 = vst [vmem:[#allocation2 + $0x1a8] sm:$0x11] %v516
        %v518 = vld [vmem:[%s341] sm:$0xf]
        %v519 = vld [vmem:[%s341 + $0x4] sm:$0xf]
        %v520 = vld [vmem:[%s341 + $0x8] sm:$0xf]
        %v521 = vld [vmem:[%s341 + $0xc] sm:$0xf]
        %v522 = vld [vmem:[%s341 + $0x10] sm:$0xf]
        %v523 = vld [vmem:[%s341 + $0x14] sm:$0xf]
        %v524 = vld [vmem:[%s341 + $0x18] sm:$0xf]
        %v525 = vld [vmem:[%s341 + $0x1c] sm:$0xf]
        %v526 = vld [vmem:[%s341 + $0x20] sm:$0xf]
        %v527 = vld [vmem:[%s341 + $0x24] sm:$0xf]
        %v528 = vld [vmem:[%s341 + $0x28] sm:$0xf]
        %v529 = vld [vmem:[%s341 + $0x2c] sm:$0xf]
        %v530 = vld [vmem:[%s341 + $0x30] sm:$0xf]
        %v531 = vld [vmem:[%s341 + $0x34] sm:$0xf]
        %v532 = vld [vmem:[%s341 + $0x38] sm:$0xf]
        %v533 = vld [vmem:[%s341 + $0x3c] sm:$0xf]
        %v534 = vld [vmem:[%s341 + $0x40] sm:$0xf]
        %v535 = vld [vmem:[%s341 + $0x44] sm:$0xf]
        %v536 = vld [vmem:[%s341 + $0x48] sm:$0xf]
        %v537 = vld [vmem:[%s341 + $0x4c] sm:$0xf]
        %v538 = vld [vmem:[%s341 + $0x50] sm:$0xf]
        %v539 = vld [vmem:[%s341 + $0x54] sm:$0xf]
        %v540 = vld [vmem:[%s341 + $0x58] sm:$0xf]
        %v541 = vld [vmem:[%s341 + $0x5c] sm:$0xf]
        %v542 = vld [vmem:[%s341 + $0x60] sm:$0xf]
        %v543 = vld [vmem:[%s341 + $0x64] sm:$0xf]
        %v544 = vld [vmem:[%s341 + $0x68] sm:$0xf]
        %v545 = vld [vmem:[%s341 + $0x6c] sm:$0xf]
        %v546 = vld [vmem:[%s341 + $0x70] sm:$0xf]
        %v547 = vld [vmem:[%s341 + $0x74] sm:$0xf]
        %v548 = vld [vmem:[%s341 + $0x78] sm:$0xf]
        %v549 = vld [vmem:[%s341 + $0x7c] sm:$0xf]
        %v550 = vld [vmem:[%s341 + $0x80] sm:$0xf]
        %v551 = vld [vmem:[%s341 + $0x84] sm:$0xf]
        %v552 = vld [vmem:[%s341 + $0x88] sm:$0xf]
        %v553 = vld [vmem:[%s341 + $0x8c] sm:$0xf]
        %v554 = vld [vmem:[#allocation6] sm:$0xff]
        %v555 = vld [vmem:[#allocation6 + $0x8] sm:$0xff]
        %v556 = vld [vmem:[#allocation6 + $0x10] sm:$0xff]
        %v557 = vld [vmem:[#allocation6 + $0x18] sm:$0xff]
        %v558 = vld [vmem:[#allocation6 + $0x20] sm:$0x33]
        %v559 = vld [vmem:[#allocation8] sm:$0x3]
        %v561 = vlaneseq
        %v562 = vshrl.u32 %v561, 7
        %v563 = vsub.s32 0, %v562
        %v564 = vrot.slane %v559, %v563
        %v565 = vlaneseq
        %v566 = vshrl.u32 %v565, 7
        %v567 = vsub.s32 1, %v566
        %v568 = vrot.slane %v559, %v567
        %v607 = vunpack.c.l.b16 %v518
        %v608 = vunpack.c.l.b16 %v519
        %v609 = vunpack.c.l.b16 %v520
        %v610 = vunpack.c.l.b16 %v521
        %v611 = vunpack.c.l.b16 %v522
        %v612 = vunpack.c.l.b16 %v523
        %v613 = vunpack.c.l.b16 %v524
        %v614 = vunpack.c.l.b16 %v525
        %v615 = vunpack.c.l.b16 %v526
        %v616 = vunpack.c.l.b16 %v527
        %v617 = vunpack.c.l.b16 %v528
        %v618 = vunpack.c.l.b16 %v529
        %v619 = vunpack.c.l.b16 %v530
        %v620 = vunpack.c.l.b16 %v531
        %v621 = vunpack.c.l.b16 %v532
        %v622 = vunpack.c.l.b16 %v533
        %v623 = vunpack.c.l.b16 %v534
        %v624 = vunpack.c.l.b16 %v535
        %v625 = vunpack.c.l.b16 %v536
        %v626 = vunpack.c.l.b16 %v537
        %v627 = vunpack.c.l.b16 %v538
        %v628 = vunpack.c.l.b16 %v539
        %v629 = vunpack.c.l.b16 %v540
        %v630 = vunpack.c.l.b16 %v541
        %v631 = vunpack.c.l.b16 %v542
        %v632 = vunpack.c.l.b16 %v543
        %v633 = vunpack.c.l.b16 %v544
        %v634 = vunpack.c.l.b16 %v545
        %v635 = vunpack.c.l.b16 %v546
        %v636 = vunpack.c.l.b16 %v547
        %v637 = vunpack.c.l.b16 %v548
        %v638 = vunpack.c.l.b16 %v549
        %v639 = vunpack.c.l.b16 %v550
        %v640 = vunpack.c.l.b16 %v551
        %v641 = vunpack.c.l.b16 %v552
        %v642 = vunpack.c.l.b16 %v553
        %v643 = vpack.c.b16 %v608, %v607
        %v644 = vpack.c.b16 %v610, %v609
        %v645 = vpack.c.b16 %v612, %v611
        %v646 = vpack.c.b16 %v614, %v613
        %v647 = vpack.c.b16 %v616, %v615
        %v648 = vpack.c.b16 %v618, %v617
        %v649 = vpack.c.b16 %v620, %v619
        %v650 = vpack.c.b16 %v622, %v621
        %v651 = vpack.c.b16 %v624, %v623
        %v652 = vpack.c.b16 %v626, %v625
        %v653 = vpack.c.b16 %v628, %v627
        %v654 = vpack.c.b16 %v630, %v629
        %v655 = vpack.c.b16 %v632, %v631
        %v656 = vpack.c.b16 %v634, %v633
        %v657 = vpack.c.b16 %v636, %v635
        %v658 = vpack.c.b16 %v638, %v637
        %v659 = vpack.c.b16 %v640, %v639
        %v660 = vpack.c.b16 %v642, %v641
        %v666 = vunpack.c.l.b16 %v554
        %v667 = vunpack.c.h.b16 %v554
        %v668 = vunpack.c.l.b16 %v555
        %v669 = vunpack.c.h.b16 %v555
        %v670 = vunpack.c.l.b16 %v556
        %v671 = vunpack.c.h.b16 %v556
        %v672 = vunpack.c.l.b16 %v557
        %v673 = vunpack.c.h.b16 %v557
        %v674 = vunpack.c.l.b16 %v558
        %v675 = vunpack.c.h.b16 %v558
        %v676 = vpack.c.b16 %v668, %v666
        %v677 = vpack.c.b16 %v669, %v667
        %v678 = vpack.c.b16 %v672, %v670
        %v679 = vpack.c.b16 %v673, %v671
        %v680 = vpack.c.b16 %v674, %v674
        %v681 = vpack.c.b16 %v675, %v675
        %vm686 = vcmask 293888
        %v688 = vsel %vm686, %v643, 0
        %v691 = vsel %vm686, %v644, 0
        %v694 = vsel %vm686, %v645, 0
        %v697 = vsel %vm686, %v646, 0
        %v700 = vsel %vm686, %v647, 0
        %v703 = vsel %vm686, %v648, 0
        %v706 = vsel %vm686, %v649, 0
        %v709 = vsel %vm686, %v650, 0
        %v712 = vsel %vm686, %v651, 0
        %v715 = vsel %vm686, %v652, 0
        %v718 = vsel %vm686, %v653, 0
        %v721 = vsel %vm686, %v654, 0
        %v724 = vsel %vm686, %v655, 0
        %v727 = vsel %vm686, %v656, 0
        %v730 = vsel %vm686, %v657, 0
        %v733 = vsel %vm686, %v658, 0
        %v736 = vsel %vm686, %v659, 0
        %v739 = vsel %vm686, %v660, 0
        %vm741 = vcmask 1041408
        %v743 = vsel %vm741, %v680, 0
        %v746 = vsel %vm741, %v681, 0
        %748 = vmatprep.subr.bf16.mxu0 %v677
        %749 = vmatpush1.bf16.msra.mxu0 %v676
        %750 = vmatprep.subr.bf16.mxu0 %v679
        %751 = vmatpush1.bf16.msra.mxu0 %v678
        %752 = vmatprep.subr.bf16.mxu0 %v746
        %753 = vmatpush1.bf16.msra.mxu0 %v743
        %754 = vmatprep.subr.bf16.mxu0 0
        %755 = vmatpush1.bf16.msra.mxu0 0
        %756 = vmatprep.subr.bf16.mxu0 0
        %757 = vmatpush1.bf16.msra.mxu0 0
        %758 = vmatprep.subr.bf16.mxu0 0
        %759 = vmatpush1.bf16.msra.mxu0 0
        %760 = vmatprep.subr.bf16.mxu0 0
        %761 = vmatpush1.bf16.msra.mxu0 0
        %762 = vmatprep.subr.bf16.mxu0 0
        %763 = vmatpush1.bf16.msra.mxu0 0
        %764 = vmatprep.subr.bf16.mxu0 0
        %765 = vmatpush1.bf16.msra.mxu0 0
        %766 = vmatprep.subr.bf16.mxu0 0
        %767 = vmatpush1.bf16.msra.mxu0 0
        %768 = vmatprep.subr.bf16.mxu0 0
        %769 = vmatpush1.bf16.msra.mxu0 0
        %770 = vmatprep.subr.bf16.mxu0 0
        %771 = vmatpush1.bf16.msra.mxu0 0
        %772 = vmatprep.subr.bf16.mxu0 0
        %773 = vmatpush1.bf16.msra.mxu0 0
        %774 = vmatprep.subr.bf16.mxu0 0
        %775 = vmatpush1.bf16.msra.mxu0 0
        %776 = vmatprep.subr.bf16.mxu0 0
        %777 = vmatpush1.bf16.msra.mxu0 0
        %778 = vmatprep.subr.bf16.mxu0 0
        %779 = vmatpush1.bf16.msra.mxu0 0
        %780 = vmatprep.mubr.bf16.mxu0 0
        %781 = vmatmul.mubr.bf16.gmra.mrb[0].mxu0 %v688
        %v782 = vpop.f32.mrb[0].mxu0
        %v783 = vadd.f32 %v564, %v782
        %v784 = vpop.f32.mrb[0].mxu0
        %v785 = vadd.f32 %v568, %v784
        %v786 = vpop.f32.mrb[0].mxu0
        %v787 = vadd.f32 %v564, %v786
        %v788 = vpop.f32.mrb[0].mxu0
        %v789 = vadd.f32 %v568, %v788
        %790 = vmatprep.mubr.bf16.mxu0 0
        %791 = vmatmul.mubr.bf16.gmra.mrb[0].mxu0 %v691
        %v792 = vpop.f32.mrb[0].mxu0
        %v793 = vadd.f32 %v564, %v792
        %v794 = vpop.f32.mrb[0].mxu0
        %v795 = vadd.f32 %v568, %v794
        %v796 = vpop.f32.mrb[0].mxu0
        %v797 = vadd.f32 %v564, %v796
        %v798 = vpop.f32.mrb[0].mxu0
        %v799 = vadd.f32 %v568, %v798
        %800 = vmatprep.mubr.bf16.mxu0 0
        %801 = vmatmul.mubr.bf16.gmra.mrb[0].mxu0 %v694
        %v802 = vpop.f32.mrb[0].mxu0
        %v803 = vadd.f32 %v564, %v802
        %v804 = vpop.f32.mrb[0].mxu0
        %v805 = vadd.f32 %v568, %v804
        %v806 = vpop.f32.mrb[0].mxu0
        %v807 = vadd.f32 %v564, %v806
        %v808 = vpop.f32.mrb[0].mxu0
        %v809 = vadd.f32 %v568, %v808
        %810 = vmatprep.mubr.bf16.mxu0 0
        %811 = vmatmul.mubr.bf16.gmra.mrb[0].mxu0 %v697
        %v812 = vpop.f32.mrb[0].mxu0
        %v813 = vadd.f32 %v564, %v812
        %v814 = vpop.f32.mrb[0].mxu0
        %v815 = vadd.f32 %v568, %v814
        %v816 = vpop.f32.mrb[0].mxu0
        %v817 = vadd.f32 %v564, %v816
        %v818 = vpop.f32.mrb[0].mxu0
        %v819 = vadd.f32 %v568, %v818
        %820 = vmatprep.mubr.bf16.mxu0 0
        %821 = vmatmul.mubr.bf16.gmra.mrb[0].mxu0 %v700
        %v822 = vpop.f32.mrb[0].mxu0
        %v823 = vadd.f32 %v564, %v822
        %v824 = vpop.f32.mrb[0].mxu0
        %v825 = vadd.f32 %v568, %v824
        %v826 = vpop.f32.mrb[0].mxu0
        %v827 = vadd.f32 %v564, %v826
        %v828 = vpop.f32.mrb[0].mxu0
        %v829 = vadd.f32 %v568, %v828
        %830 = vmatprep.mubr.bf16.mxu0 0
        %831 = vmatmul.mubr.bf16.gmra.mrb[0].mxu0 %v703
        %v832 = vpop.f32.mrb[0].mxu0
        %v833 = vadd.f32 %v564, %v832
        %v834 = vpop.f32.mrb[0].mxu0
        %v835 = vadd.f32 %v568, %v834
        %v836 = vpop.f32.mrb[0].mxu0
        %v837 = vadd.f32 %v564, %v836
        %v838 = vpop.f32.mrb[0].mxu0
        %v839 = vadd.f32 %v568, %v838
        %840 = vmatprep.mubr.bf16.mxu0 0
        %841 = vmatmul.mubr.bf16.gmra.mrb[0].mxu0 %v706
        %v842 = vpop.f32.mrb[0].mxu0
        %v843 = vadd.f32 %v564, %v842
        %v844 = vpop.f32.mrb[0].mxu0
        %v845 = vadd.f32 %v568, %v844
        %v846 = vpop.f32.mrb[0].mxu0
        %v847 = vadd.f32 %v564, %v846
        %v848 = vpop.f32.mrb[0].mxu0
        %v849 = vadd.f32 %v568, %v848
        %850 = vmatprep.mubr.bf16.mxu0 0
        %851 = vmatmul.mubr.bf16.gmra.mrb[0].mxu0 %v709
        %v852 = vpop.f32.mrb[0].mxu0
        %v853 = vadd.f32 %v564, %v852
        %v854 = vpop.f32.mrb[0].mxu0
        %v855 = vadd.f32 %v568, %v854
        %v856 = vpop.f32.mrb[0].mxu0
        %v857 = vadd.f32 %v564, %v856
        %v858 = vpop.f32.mrb[0].mxu0
        %v859 = vadd.f32 %v568, %v858
        %860 = vmatprep.mubr.bf16.mxu0 0
        %861 = vmatmul.mubr.bf16.gmra.mrb[0].mxu0 %v712
        %v862 = vpop.f32.mrb[0].mxu0
        %v863 = vadd.f32 %v564, %v862
        %v864 = vpop.f32.mrb[0].mxu0
        %v865 = vadd.f32 %v568, %v864
        %v866 = vpop.f32.mrb[0].mxu0
        %v867 = vadd.f32 %v564, %v866
        %v868 = vpop.f32.mrb[0].mxu0
        %v869 = vadd.f32 %v568, %v868
        %870 = vmatprep.mubr.bf16.mxu0 0
        %871 = vmatmul.mubr.bf16.gmra.mrb[0].mxu0 %v715
        %v872 = vpop.f32.mrb[0].mxu0
        %v873 = vadd.f32 %v564, %v872
        %v874 = vpop.f32.mrb[0].mxu0
        %v875 = vadd.f32 %v568, %v874
        %v876 = vpop.f32.mrb[0].mxu0
        %v877 = vadd.f32 %v564, %v876
        %v878 = vpop.f32.mrb[0].mxu0
        %v879 = vadd.f32 %v568, %v878
        %880 = vmatprep.mubr.bf16.mxu0 0
        %881 = vmatmul.mubr.bf16.gmra.mrb[0].mxu0 %v718
        %v882 = vpop.f32.mrb[0].mxu0
        %v883 = vadd.f32 %v564, %v882
        %v884 = vpop.f32.mrb[0].mxu0
        %v885 = vadd.f32 %v568, %v884
        %v886 = vpop.f32.mrb[0].mxu0
        %v887 = vadd.f32 %v564, %v886
        %v888 = vpop.f32.mrb[0].mxu0
        %v889 = vadd.f32 %v568, %v888
        %890 = vmatprep.mubr.bf16.mxu0 0
        %891 = vmatmul.mubr.bf16.gmra.mrb[0].mxu0 %v721
        %v892 = vpop.f32.mrb[0].mxu0
        %v893 = vadd.f32 %v564, %v892
        %v894 = vpop.f32.mrb[0].mxu0
        %v895 = vadd.f32 %v568, %v894
        %v896 = vpop.f32.mrb[0].mxu0
        %v897 = vadd.f32 %v564, %v896
        %v898 = vpop.f32.mrb[0].mxu0
        %v899 = vadd.f32 %v568, %v898
        %900 = vmatprep.mubr.bf16.mxu0 0
        %901 = vmatmul.mubr.bf16.gmra.mrb[0].mxu0 %v724
        %v902 = vpop.f32.mrb[0].mxu0
        %v903 = vadd.f32 %v564, %v902
        %v904 = vpop.f32.mrb[0].mxu0
        %v905 = vadd.f32 %v568, %v904
        %v906 = vpop.f32.mrb[0].mxu0
        %v907 = vadd.f32 %v564, %v906
        %v908 = vpop.f32.mrb[0].mxu0
        %v909 = vadd.f32 %v568, %v908
        %910 = vmatprep.mubr.bf16.mxu0 0
        %911 = vmatmul.mubr.bf16.gmra.mrb[0].mxu0 %v727
        %v912 = vpop.f32.mrb[0].mxu0
        %v913 = vadd.f32 %v564, %v912
        %v914 = vpop.f32.mrb[0].mxu0
        %v915 = vadd.f32 %v568, %v914
        %v916 = vpop.f32.mrb[0].mxu0
        %v917 = vadd.f32 %v564, %v916
        %v918 = vpop.f32.mrb[0].mxu0
        %v919 = vadd.f32 %v568, %v918
        %920 = vmatprep.mubr.bf16.mxu0 0
        %921 = vmatmul.mubr.bf16.gmra.mrb[0].mxu0 %v730
        %v922 = vpop.f32.mrb[0].mxu0
        %v923 = vadd.f32 %v564, %v922
        %v924 = vpop.f32.mrb[0].mxu0
        %v925 = vadd.f32 %v568, %v924
        %v926 = vpop.f32.mrb[0].mxu0
        %v927 = vadd.f32 %v564, %v926
        %v928 = vpop.f32.mrb[0].mxu0
        %v929 = vadd.f32 %v568, %v928
        %930 = vmatprep.mubr.bf16.mxu0 0
        %931 = vmatmul.mubr.bf16.gmra.mrb[0].mxu0 %v733
        %v932 = vpop.f32.mrb[0].mxu0
        %v933 = vadd.f32 %v564, %v932
        %v934 = vpop.f32.mrb[0].mxu0
        %v935 = vadd.f32 %v568, %v934
        %v936 = vpop.f32.mrb[0].mxu0
        %v937 = vadd.f32 %v564, %v936
        %v938 = vpop.f32.mrb[0].mxu0
        %v939 = vadd.f32 %v568, %v938
        %940 = vmatprep.mubr.bf16.mxu0 0
        %941 = vmatmul.mubr.bf16.gmra.mrb[0].mxu0 %v736
        %v942 = vpop.f32.mrb[0].mxu0
        %v943 = vadd.f32 %v564, %v942
        %v944 = vpop.f32.mrb[0].mxu0
        %v945 = vadd.f32 %v568, %v944
        %v946 = vpop.f32.mrb[0].mxu0
        %v947 = vadd.f32 %v564, %v946
        %v948 = vpop.f32.mrb[0].mxu0
        %v949 = vadd.f32 %v568, %v948
        %950 = vmatprep.mubr.bf16.mxu0 0
        %951 = vmatmul.mubr.bf16.gmra.mrb[0].mxu0 %v739
        %v952 = vpop.f32.mrb[0].mxu0
        %v953 = vadd.f32 %v564, %v952
        %v954 = vpop.f32.mrb[0].mxu0
        %v955 = vadd.f32 %v568, %v954
        %v956 = vpop.f32.mrb[0].mxu0
        %v957 = vadd.f32 %v564, %v956
        %v958 = vpop.f32.mrb[0].mxu0
        %v959 = vadd.f32 %v568, %v958
        %960 = vdwg.mxu0
        %v961 = vmax.f32 %v783, 0.0
        %v962 = vmax.f32 %v785, 0.0
        %v963 = vmax.f32 %v787, 0.0
        %v964 = vmax.f32 %v789, 0.0
        %v965 = vmax.f32 %v793, 0.0
        %v966 = vmax.f32 %v795, 0.0
        %v967 = vmax.f32 %v797, 0.0
        %v968 = vmax.f32 %v799, 0.0
        %v969 = vmax.f32 %v803, 0.0
        %v970 = vmax.f32 %v805, 0.0
        %v971 = vmax.f32 %v807, 0.0
        %v972 = vmax.f32 %v809, 0.0
        %v973 = vmax.f32 %v813, 0.0
        %v974 = vmax.f32 %v815, 0.0
        %v975 = vmax.f32 %v817, 0.0
        %v976 = vmax.f32 %v819, 0.0
        %v977 = vmax.f32 %v823, 0.0
        %v978 = vmax.f32 %v825, 0.0
        %v979 = vmax.f32 %v827, 0.0
        %v980 = vmax.f32 %v829, 0.0
        %v981 = vmax.f32 %v833, 0.0
        %v982 = vmax.f32 %v835, 0.0
        %v983 = vmax.f32 %v837, 0.0
        %v984 = vmax.f32 %v839, 0.0
        %v985 = vmax.f32 %v843, 0.0
        %v986 = vmax.f32 %v845, 0.0
        %v987 = vmax.f32 %v847, 0.0
        %v988 = vmax.f32 %v849, 0.0
        %v989 = vmax.f32 %v853, 0.0
        %v990 = vmax.f32 %v855, 0.0
        %v991 = vmax.f32 %v857, 0.0
        %v992 = vmax.f32 %v859, 0.0
        %v993 = vmax.f32 %v863, 0.0
        %v994 = vmax.f32 %v865, 0.0
        %v995 = vmax.f32 %v867, 0.0
        %v996 = vmax.f32 %v869, 0.0
        %v997 = vmax.f32 %v873, 0.0
        %v998 = vmax.f32 %v875, 0.0
        %v999 = vmax.f32 %v877, 0.0
        %v1000 = vmax.f32 %v879, 0.0
        %v1001 = vmax.f32 %v883, 0.0
        %v1002 = vmax.f32 %v885, 0.0
        %v1003 = vmax.f32 %v887, 0.0
        %v1004 = vmax.f32 %v889, 0.0
        %v1005 = vmax.f32 %v893, 0.0
        %v1006 = vmax.f32 %v895, 0.0
        %v1007 = vmax.f32 %v897, 0.0
        %v1008 = vmax.f32 %v899, 0.0
        %v1009 = vmax.f32 %v903, 0.0
        %v1010 = vmax.f32 %v905, 0.0
        %v1011 = vmax.f32 %v907, 0.0
        %v1012 = vmax.f32 %v909, 0.0
        %v1013 = vmax.f32 %v913, 0.0
        %v1014 = vmax.f32 %v915, 0.0
        %v1015 = vmax.f32 %v917, 0.0
        %v1016 = vmax.f32 %v919, 0.0
        %v1017 = vmax.f32 %v923, 0.0
        %v1018 = vmax.f32 %v925, 0.0
        %v1019 = vmax.f32 %v927, 0.0
        %v1020 = vmax.f32 %v929, 0.0
        %v1021 = vmax.f32 %v933, 0.0
        %v1022 = vmax.f32 %v935, 0.0
        %v1023 = vmax.f32 %v937, 0.0
        %v1024 = vmax.f32 %v939, 0.0
        %v1025 = vmax.f32 %v943, 0.0
        %v1026 = vmax.f32 %v945, 0.0
        %v1027 = vmax.f32 %v947, 0.0
        %v1028 = vmax.f32 %v949, 0.0
        %v1029 = vmax.f32 %v953, 0.0
        %v1030 = vmax.f32 %v955, 0.0
        %v1031 = vmax.f32 %v957, 0.0
        %v1032 = vmax.f32 %v959, 0.0
        %v1033 = vpack.c.bf16 %v963, %v961
        %v1034 = vpack.c.bf16 %v964, %v962
        %v1035 = vpack.c.bf16 %v967, %v965
        %v1036 = vpack.c.bf16 %v968, %v966
        %v1037 = vpack.c.bf16 %v971, %v969
        %v1038 = vpack.c.bf16 %v972, %v970
        %v1039 = vpack.c.bf16 %v975, %v973
        %v1040 = vpack.c.bf16 %v976, %v974
        %v1041 = vpack.c.bf16 %v979, %v977
        %v1042 = vpack.c.bf16 %v980, %v978
        %v1043 = vpack.c.bf16 %v983, %v981
        %v1044 = vpack.c.bf16 %v984, %v982
        %v1045 = vpack.c.bf16 %v987, %v985
        %v1046 = vpack.c.bf16 %v988, %v986
        %v1047 = vpack.c.bf16 %v991, %v989
        %v1048 = vpack.c.bf16 %v992, %v990
        %v1049 = vpack.c.bf16 %v995, %v993
        %v1050 = vpack.c.bf16 %v996, %v994
        %v1051 = vpack.c.bf16 %v999, %v997
        %v1052 = vpack.c.bf16 %v1000, %v998
        %v1053 = vpack.c.bf16 %v1003, %v1001
        %v1054 = vpack.c.bf16 %v1004, %v1002
        %v1055 = vpack.c.bf16 %v1007, %v1005
        %v1056 = vpack.c.bf16 %v1008, %v1006
        %v1057 = vpack.c.bf16 %v1011, %v1009
        %v1058 = vpack.c.bf16 %v1012, %v1010
        %v1059 = vpack.c.bf16 %v1015, %v1013
        %v1060 = vpack.c.bf16 %v1016, %v1014
        %v1061 = vpack.c.bf16 %v1019, %v1017
        %v1062 = vpack.c.bf16 %v1020, %v1018
        %v1063 = vpack.c.bf16 %v1023, %v1021
        %v1064 = vpack.c.bf16 %v1024, %v1022
        %v1065 = vpack.c.bf16 %v1027, %v1025
        %v1066 = vpack.c.bf16 %v1028, %v1026
        %v1067 = vpack.c.bf16 %v1031, %v1029
        %v1068 = vpack.c.bf16 %v1032, %v1030
        %v1105 = vunpack.c.l.b16 %v1033
        %v1106 = vunpack.c.l.b16 %v1034
        %v1107 = vunpack.c.h.b16 %v1033
        %v1108 = vunpack.c.h.b16 %v1034
        %v1109 = vunpack.c.l.b16 %v1035
        %v1110 = vunpack.c.l.b16 %v1036
        %v1111 = vunpack.c.h.b16 %v1035
        %v1112 = vunpack.c.h.b16 %v1036
        %v1113 = vunpack.c.l.b16 %v1037
        %v1114 = vunpack.c.l.b16 %v1038
        %v1115 = vunpack.c.h.b16 %v1037
        %v1116 = vunpack.c.h.b16 %v1038
        %v1117 = vunpack.c.l.b16 %v1039
        %v1118 = vunpack.c.l.b16 %v1040
        %v1119 = vunpack.c.h.b16 %v1039
        %v1120 = vunpack.c.h.b16 %v1040
        %v1121 = vunpack.c.l.b16 %v1041
        %v1122 = vunpack.c.l.b16 %v1042
        %v1123 = vunpack.c.h.b16 %v1041
        %v1124 = vunpack.c.h.b16 %v1042
        %v1125 = vunpack.c.l.b16 %v1043
        %v1126 = vunpack.c.l.b16 %v1044
        %v1127 = vunpack.c.h.b16 %v1043
        %v1128 = vunpack.c.h.b16 %v1044
        %v1129 = vunpack.c.l.b16 %v1045
        %v1130 = vunpack.c.l.b16 %v1046
        %v1131 = vunpack.c.h.b16 %v1045
        %v1132 = vunpack.c.h.b16 %v1046
        %v1133 = vunpack.c.l.b16 %v1047
        %v1134 = vunpack.c.l.b16 %v1048
        %v1135 = vunpack.c.h.b16 %v1047
        %v1136 = vunpack.c.h.b16 %v1048
        %v1137 = vunpack.c.l.b16 %v1049
        %v1138 = vunpack.c.l.b16 %v1050
        %v1139 = vunpack.c.h.b16 %v1049
        %v1140 = vunpack.c.h.b16 %v1050
        %v1141 = vunpack.c.l.b16 %v1051
        %v1142 = vunpack.c.l.b16 %v1052
        %v1143 = vunpack.c.h.b16 %v1051
        %v1144 = vunpack.c.h.b16 %v1052
        %v1145 = vunpack.c.l.b16 %v1053
        %v1146 = vunpack.c.l.b16 %v1054
        %v1147 = vunpack.c.h.b16 %v1053
        %v1148 = vunpack.c.h.b16 %v1054
        %v1149 = vunpack.c.l.b16 %v1055
        %v1150 = vunpack.c.l.b16 %v1056
        %v1151 = vunpack.c.h.b16 %v1055
        %v1152 = vunpack.c.h.b16 %v1056
        %v1153 = vunpack.c.l.b16 %v1057
        %v1154 = vunpack.c.l.b16 %v1058
        %v1155 = vunpack.c.h.b16 %v1057
        %v1156 = vunpack.c.h.b16 %v1058
        %v1157 = vunpack.c.l.b16 %v1059
        %v1158 = vunpack.c.l.b16 %v1060
        %v1159 = vunpack.c.h.b16 %v1059
        %v1160 = vunpack.c.h.b16 %v1060
        %v1161 = vunpack.c.l.b16 %v1061
        %v1162 = vunpack.c.l.b16 %v1062
        %v1163 = vunpack.c.h.b16 %v1061
        %v1164 = vunpack.c.h.b16 %v1062
        %v1165 = vunpack.c.l.b16 %v1063
        %v1166 = vunpack.c.l.b16 %v1064
        %v1167 = vunpack.c.h.b16 %v1063
        %v1168 = vunpack.c.h.b16 %v1064
        %v1169 = vunpack.c.l.b16 %v1065
        %v1170 = vunpack.c.l.b16 %v1066
        %v1171 = vunpack.c.h.b16 %v1065
        %v1172 = vunpack.c.h.b16 %v1066
        %v1173 = vunpack.c.l.b16 %v1067
        %v1174 = vunpack.c.l.b16 %v1068
        %v1175 = vunpack.c.h.b16 %v1067
        %v1176 = vunpack.c.h.b16 %v1068
        %v1177 = vpack.c.b16 %v1106, %v1105
        %v1178 = vpack.c.b16 %v1108, %v1107
        %v1179 = vpack.c.b16 %v1110, %v1109
        %v1180 = vpack.c.b16 %v1112, %v1111
        %v1181 = vpack.c.b16 %v1114, %v1113
        %v1182 = vpack.c.b16 %v1116, %v1115
        %v1183 = vpack.c.b16 %v1118, %v1117
        %v1184 = vpack.c.b16 %v1120, %v1119
        %v1185 = vpack.c.b16 %v1122, %v1121
        %v1186 = vpack.c.b16 %v1124, %v1123
        %v1187 = vpack.c.b16 %v1126, %v1125
        %v1188 = vpack.c.b16 %v1128, %v1127
        %v1189 = vpack.c.b16 %v1130, %v1129
        %v1190 = vpack.c.b16 %v1132, %v1131
        %v1191 = vpack.c.b16 %v1134, %v1133
        %v1192 = vpack.c.b16 %v1136, %v1135
        %v1193 = vpack.c.b16 %v1138, %v1137
        %v1194 = vpack.c.b16 %v1140, %v1139
        %v1195 = vpack.c.b16 %v1142, %v1141
        %v1196 = vpack.c.b16 %v1144, %v1143
        %v1197 = vpack.c.b16 %v1146, %v1145
        %v1198 = vpack.c.b16 %v1148, %v1147
        %v1199 = vpack.c.b16 %v1150, %v1149
        %v1200 = vpack.c.b16 %v1152, %v1151
        %v1201 = vpack.c.b16 %v1154, %v1153
        %v1202 = vpack.c.b16 %v1156, %v1155
        %v1203 = vpack.c.b16 %v1158, %v1157
        %v1204 = vpack.c.b16 %v1160, %v1159
        %v1205 = vpack.c.b16 %v1162, %v1161
        %v1206 = vpack.c.b16 %v1164, %v1163
        %v1207 = vpack.c.b16 %v1166, %v1165
        %v1208 = vpack.c.b16 %v1168, %v1167
        %v1209 = vpack.c.b16 %v1170, %v1169
        %v1210 = vpack.c.b16 %v1172, %v1171
        %v1211 = vpack.c.b16 %v1174, %v1173
        %v1212 = vpack.c.b16 %v1176, %v1175
        %vm1213 = vsmask.f32 4368
        %vm1214 = vmor %vm399, %vm1213
        %v1216 = vshrl.u32 %v1177, 16
        %v1218 = vrot.slane %v1216, 7
        %v1219 = vshll.u32 %v1177, 16
        %v1221 = vor.u32 %v1218, %v1219
        %v1222 = vrot.slane %v1218, 4
        %v1224 = vshrl.u32 %v1178, 16
        %v1226 = vrot.slane %v1224, 7
        %v1227 = vshll.u32 %v1178, 16
        %v1229 = vor.u32 %v1226, %v1227
        %v1230 = vsel %vm1214, %v1222, %v1229
        %v1231 = vrot.slane %v1226, 4
        %v1233 = vshrl.u32 %v1179, 16
        %v1235 = vrot.slane %v1233, 7
        %v1236 = vshll.u32 %v1179, 16
        %v1238 = vor.u32 %v1235, %v1236
        %v1239 = vrot.slane %v1235, 4
        %v1241 = vshrl.u32 %v1180, 16
        %v1243 = vrot.slane %v1241, 7
        %v1244 = vshll.u32 %v1180, 16
        %v1246 = vor.u32 %v1243, %v1244
        %v1247 = vsel %vm1214, %v1239, %v1246
        %v1248 = vrot.slane %v1243, 4
        %v1250 = vshrl.u32 %v1181, 16
        %v1252 = vrot.slane %v1250, 7
        %v1253 = vshll.u32 %v1181, 16
        %v1255 = vor.u32 %v1252, %v1253
        %v1256 = vrot.slane %v1252, 4
        %v1258 = vshrl.u32 %v1182, 16
        %v1260 = vrot.slane %v1258, 7
        %v1261 = vshll.u32 %v1182, 16
        %v1263 = vor.u32 %v1260, %v1261
        %v1264 = vsel %vm1214, %v1256, %v1263
        %v1265 = vrot.slane %v1260, 4
        %v1267 = vshrl.u32 %v1183, 16
        %v1269 = vrot.slane %v1267, 7
        %v1270 = vshll.u32 %v1183, 16
        %v1272 = vor.u32 %v1269, %v1270
        %v1273 = vrot.slane %v1269, 4
        %v1275 = vshrl.u32 %v1184, 16
        %v1277 = vrot.slane %v1275, 7
        %v1278 = vshll.u32 %v1184, 16
        %v1280 = vor.u32 %v1277, %v1278
        %v1281 = vsel %vm1214, %v1273, %v1280
        %v1282 = vrot.slane %v1277, 4
        %v1284 = vshrl.u32 %v1185, 16
        %v1286 = vrot.slane %v1284, 7
        %v1287 = vshll.u32 %v1185, 16
        %v1289 = vor.u32 %v1286, %v1287
        %v1290 = vrot.slane %v1286, 4
        %v1292 = vshrl.u32 %v1186, 16
        %v1294 = vrot.slane %v1292, 7
        %v1295 = vshll.u32 %v1186, 16
        %v1297 = vor.u32 %v1294, %v1295
        %v1298 = vsel %vm1214, %v1290, %v1297
        %v1299 = vrot.slane %v1294, 4
        %v1301 = vshrl.u32 %v1187, 16
        %v1303 = vrot.slane %v1301, 7
        %v1304 = vshll.u32 %v1187, 16
        %v1306 = vor.u32 %v1303, %v1304
        %v1307 = vrot.slane %v1303, 4
        %v1309 = vshrl.u32 %v1188, 16
        %v1311 = vrot.slane %v1309, 7
        %v1312 = vshll.u32 %v1188, 16
        %v1314 = vor.u32 %v1311, %v1312
        %v1315 = vsel %vm1214, %v1307, %v1314
        %v1316 = vrot.slane %v1311, 4
        %v1318 = vshrl.u32 %v1189, 16
        %v1320 = vrot.slane %v1318, 7
        %v1321 = vshll.u32 %v1189, 16
        %v1323 = vor.u32 %v1320, %v1321
        %v1324 = vrot.slane %v1320, 4
        %v1326 = vshrl.u32 %v1190, 16
        %v1328 = vrot.slane %v1326, 7
        %v1329 = vshll.u32 %v1190, 16
        %v1331 = vor.u32 %v1328, %v1329
        %v1332 = vsel %vm1214, %v1324, %v1331
        %v1333 = vrot.slane %v1328, 4
        %v1335 = vshrl.u32 %v1191, 16
        %v1337 = vrot.slane %v1335, 7
        %v1338 = vshll.u32 %v1191, 16
        %v1340 = vor.u32 %v1337, %v1338
        %v1341 = vrot.slane %v1337, 4
        %v1343 = vshrl.u32 %v1192, 16
        %v1345 = vrot.slane %v1343, 7
        %v1346 = vshll.u32 %v1192, 16
        %v1348 = vor.u32 %v1345, %v1346
        %v1349 = vsel %vm1214, %v1341, %v1348
        %v1350 = vrot.slane %v1345, 4
        %v1352 = vshrl.u32 %v1193, 16
        %v1354 = vrot.slane %v1352, 7
        %v1355 = vshll.u32 %v1193, 16
        %v1357 = vor.u32 %v1354, %v1355
        %v1358 = vrot.slane %v1354, 4
        %v1360 = vshrl.u32 %v1194, 16
        %v1362 = vrot.slane %v1360, 7
        %v1363 = vshll.u32 %v1194, 16
        %v1365 = vor.u32 %v1362, %v1363
        %v1366 = vsel %vm1214, %v1358, %v1365
        %v1367 = vrot.slane %v1362, 4
        %v1369 = vshrl.u32 %v1195, 16
        %v1371 = vrot.slane %v1369, 7
        %v1372 = vshll.u32 %v1195, 16
        %v1374 = vor.u32 %v1371, %v1372
        %v1375 = vrot.slane %v1371, 4
        %v1377 = vshrl.u32 %v1196, 16
        %v1379 = vrot.slane %v1377, 7
        %v1380 = vshll.u32 %v1196, 16
        %v1382 = vor.u32 %v1379, %v1380
        %v1383 = vsel %vm1214, %v1375, %v1382
        %v1384 = vrot.slane %v1379, 4
        %v1386 = vshrl.u32 %v1197, 16
        %v1388 = vrot.slane %v1386, 7
        %v1389 = vshll.u32 %v1197, 16
        %v1391 = vor.u32 %v1388, %v1389
        %v1392 = vrot.slane %v1388, 4
        %v1394 = vshrl.u32 %v1198, 16
        %v1396 = vrot.slane %v1394, 7
        %v1397 = vshll.u32 %v1198, 16
        %v1399 = vor.u32 %v1396, %v1397
        %v1400 = vsel %vm1214, %v1392, %v1399
        %v1401 = vrot.slane %v1396, 4
        %v1403 = vshrl.u32 %v1199, 16
        %v1405 = vrot.slane %v1403, 7
        %v1406 = vshll.u32 %v1199, 16
        %v1408 = vor.u32 %v1405, %v1406
        %v1409 = vrot.slane %v1405, 4
        %v1411 = vshrl.u32 %v1200, 16
        %v1413 = vrot.slane %v1411, 7
        %v1414 = vshll.u32 %v1200, 16
        %v1416 = vor.u32 %v1413, %v1414
        %v1417 = vsel %vm1214, %v1409, %v1416
        %v1418 = vrot.slane %v1413, 4
        %v1420 = vshrl.u32 %v1201, 16
        %v1422 = vrot.slane %v1420, 7
        %v1423 = vshll.u32 %v1201, 16
        %v1425 = vor.u32 %v1422, %v1423
        %v1426 = vrot.slane %v1422, 4
        %v1428 = vshrl.u32 %v1202, 16
        %v1430 = vrot.slane %v1428, 7
        %v1431 = vshll.u32 %v1202, 16
        %v1433 = vor.u32 %v1430, %v1431
        %v1434 = vsel %vm1214, %v1426, %v1433
        %v1435 = vrot.slane %v1430, 4
        %v1437 = vshrl.u32 %v1203, 16
        %v1439 = vrot.slane %v1437, 7
        %v1440 = vshll.u32 %v1203, 16
        %v1442 = vor.u32 %v1439, %v1440
        %v1443 = vrot.slane %v1439, 4
        %v1445 = vshrl.u32 %v1204, 16
        %v1447 = vrot.slane %v1445, 7
        %v1448 = vshll.u32 %v1204, 16
        %v1450 = vor.u32 %v1447, %v1448
        %v1451 = vsel %vm1214, %v1443, %v1450
        %v1452 = vrot.slane %v1447, 4
        %v1454 = vshrl.u32 %v1205, 16
        %v1456 = vrot.slane %v1454, 7
        %v1457 = vshll.u32 %v1205, 16
        %v1459 = vor.u32 %v1456, %v1457
        %v1460 = vrot.slane %v1456, 4
        %v1462 = vshrl.u32 %v1206, 16
        %v1464 = vrot.slane %v1462, 7
        %v1465 = vshll.u32 %v1206, 16
        %v1467 = vor.u32 %v1464, %v1465
        %v1468 = vsel %vm1214, %v1460, %v1467
        %v1469 = vrot.slane %v1464, 4
        %v1471 = vshrl.u32 %v1207, 16
        %v1473 = vrot.slane %v1471, 7
        %v1474 = vshll.u32 %v1207, 16
        %v1476 = vor.u32 %v1473, %v1474
        %v1477 = vrot.slane %v1473, 4
        %v1479 = vshrl.u32 %v1208, 16
        %v1481 = vrot.slane %v1479, 7
        %v1482 = vshll.u32 %v1208, 16
        %v1484 = vor.u32 %v1481, %v1482
        %v1485 = vsel %vm1214, %v1477, %v1484
        %v1486 = vrot.slane %v1481, 4
        %v1488 = vshrl.u32 %v1209, 16
        %v1490 = vrot.slane %v1488, 7
        %v1491 = vshll.u32 %v1209, 16
        %v1493 = vor.u32 %v1490, %v1491
        %v1494 = vrot.slane %v1490, 4
        %v1496 = vshrl.u32 %v1210, 16
        %v1498 = vrot.slane %v1496, 7
        %v1499 = vshll.u32 %v1210, 16
        %v1501 = vor.u32 %v1498, %v1499
        %v1502 = vsel %vm1214, %v1494, %v1501
        %v1503 = vrot.slane %v1498, 4
        %v1505 = vshrl.u32 %v1211, 16
        %v1507 = vrot.slane %v1505, 7
        %v1508 = vshll.u32 %v1211, 16
        %v1510 = vor.u32 %v1507, %v1508
        %v1511 = vrot.slane %v1507, 4
        %v1513 = vshrl.u32 %v1212, 16
        %v1515 = vrot.slane %v1513, 7
        %v1516 = vshll.u32 %v1212, 16
        %v1518 = vor.u32 %v1515, %v1516
        %v1519 = vsel %vm1214, %v1511, %v1518
        %v1520 = vrot.slane %v1515, 4
        %vm1575 = vcmask 1043456
        %vm1576 = vmand %vm1575, %vm459
        %vm1577 = vcmask 1047556
        %vm1578 = vmand %vm1577, %vm461
        %vm1579 = vmor %vm1578, %vm1576
        %v1580 = vld [vmem:[#allocation2] sm:$0xff]
        %v1581 = vsel %vm1579, %v1221, %v1580
        %1582 = vst [vmem:[#allocation2] sm:$0xff] %v1581
        %1583 = vst [vmem:[#allocation2 + $0x8] sm:$0xff] %v1230
        %v1584 = vld [vmem:[#allocation2 + $0x10] sm:$0x11]
        %v1585 = vsel %vm404, %v1231, %v1584
        %1586 = vst [vmem:[#allocation2 + $0x10] sm:$0x11] %v1585
        %v1587 = vld [vmem:[#allocation2 + $0x18] sm:$0xff]
        %v1588 = vsel %vm1579, %v1238, %v1587
        %1589 = vst [vmem:[#allocation2 + $0x18] sm:$0xff] %v1588
        %1590 = vst [vmem:[#allocation2 + $0x20] sm:$0xff] %v1247
        %v1591 = vld [vmem:[#allocation2 + $0x28] sm:$0x11]
        %v1592 = vsel %vm404, %v1248, %v1591
        %1593 = vst [vmem:[#allocation2 + $0x28] sm:$0x11] %v1592
        %v1594 = vld [vmem:[#allocation2 + $0x30] sm:$0xff]
        %v1595 = vsel %vm1579, %v1255, %v1594
        %1596 = vst [vmem:[#allocation2 + $0x30] sm:$0xff] %v1595
        %1597 = vst [vmem:[#allocation2 + $0x38] sm:$0xff] %v1264
        %v1598 = vld [vmem:[#allocation2 + $0x40] sm:$0x11]
        %v1599 = vsel %vm404, %v1265, %v1598
        %1600 = vst [vmem:[#allocation2 + $0x40] sm:$0x11] %v1599
        %v1601 = vld [vmem:[#allocation2 + $0x48] sm:$0xff]
        %v1602 = vsel %vm1579, %v1272, %v1601
        %1603 = vst [vmem:[#allocation2 + $0x48] sm:$0xff] %v1602
        %1604 = vst [vmem:[#allocation2 + $0x50] sm:$0xff] %v1281
        %v1605 = vld [vmem:[#allocation2 + $0x58] sm:$0x11]
        %v1606 = vsel %vm404, %v1282, %v1605
        %1607 = vst [vmem:[#allocation2 + $0x58] sm:$0x11] %v1606
        %v1608 = vld [vmem:[#allocation2 + $0x60] sm:$0xff]
        %v1609 = vsel %vm1579, %v1289, %v1608
        %1610 = vst [vmem:[#allocation2 + $0x60] sm:$0xff] %v1609
        %1611 = vst [vmem:[#allocation2 + $0x68] sm:$0xff] %v1298
        %v1612 = vld [vmem:[#allocation2 + $0x70] sm:$0x11]
        %v1613 = vsel %vm404, %v1299, %v1612
        %1614 = vst [vmem:[#allocation2 + $0x70] sm:$0x11] %v1613
        %v1615 = vld [vmem:[#allocation2 + $0x78] sm:$0xff]
        %v1616 = vsel %vm1579, %v1306, %v1615
        %1617 = vst [vmem:[#allocation2 + $0x78] sm:$0xff] %v1616
        %1618 = vst [vmem:[#allocation2 + $0x80] sm:$0xff] %v1315
        %v1619 = vld [vmem:[#allocation2 + $0x88] sm:$0x11]
        %v1620 = vsel %vm404, %v1316, %v1619
        %1621 = vst [vmem:[#allocation2 + $0x88] sm:$0x11] %v1620
        %v1622 = vld [vmem:[#allocation2 + $0x90] sm:$0xff]
        %v1623 = vsel %vm1579, %v1323, %v1622
        %1624 = vst [vmem:[#allocation2 + $0x90] sm:$0xff] %v1623
        %1625 = vst [vmem:[#allocation2 + $0x98] sm:$0xff] %v1332
        %v1626 = vld [vmem:[#allocation2 + $0xa0] sm:$0x11]
        %v1627 = vsel %vm404, %v1333, %v1626
        %1628 = vst [vmem:[#allocation2 + $0xa0] sm:$0x11] %v1627
        %v1629 = vld [vmem:[#allocation2 + $0xa8] sm:$0xff]
        %v1630 = vsel %vm1579, %v1340, %v1629
        %1631 = vst [vmem:[#allocation2 + $0xa8] sm:$0xff] %v1630
        %1632 = vst [vmem:[#allocation2 + $0xb0] sm:$0xff] %v1349
        %v1633 = vld [vmem:[#allocation2 + $0xb8] sm:$0x11]
        %v1634 = vsel %vm404, %v1350, %v1633
        %1635 = vst [vmem:[#allocation2 + $0xb8] sm:$0x11] %v1634
        %v1636 = vld [vmem:[#allocation2 + $0xc0] sm:$0xff]
        %v1637 = vsel %vm1579, %v1357, %v1636
        %1638 = vst [vmem:[#allocation2 + $0xc0] sm:$0xff] %v1637
        %1639 = vst [vmem:[#allocation2 + $0xc8] sm:$0xff] %v1366
        %v1640 = vld [vmem:[#allocation2 + $0xd0] sm:$0x11]
        %v1641 = vsel %vm404, %v1367, %v1640
        %1642 = vst [vmem:[#allocation2 + $0xd0] sm:$0x11] %v1641
        %v1643 = vld [vmem:[#allocation2 + $0xd8] sm:$0xff]
        %v1644 = vsel %vm1579, %v1374, %v1643
        %1645 = vst [vmem:[#allocation2 + $0xd8] sm:$0xff] %v1644
        %1646 = vst [vmem:[#allocation2 + $0xe0] sm:$0xff] %v1383
        %v1647 = vld [vmem:[#allocation2 + $0xe8] sm:$0x11]
        %v1648 = vsel %vm404, %v1384, %v1647
        %1649 = vst [vmem:[#allocation2 + $0xe8] sm:$0x11] %v1648
        %v1650 = vld [vmem:[#allocation2 + $0xf0] sm:$0xff]
        %v1651 = vsel %vm1579, %v1391, %v1650
        %1652 = vst [vmem:[#allocation2 + $0xf0] sm:$0xff] %v1651
        %1653 = vst [vmem:[#allocation2 + $0xf8] sm:$0xff] %v1400
        %v1654 = vld [vmem:[#allocation2 + $0x100] sm:$0x11]
        %v1655 = vsel %vm404, %v1401, %v1654
        %1656 = vst [vmem:[#allocation2 + $0x100] sm:$0x11] %v1655
        %v1657 = vld [vmem:[#allocation2 + $0x108] sm:$0xff]
        %v1658 = vsel %vm1579, %v1408, %v1657
        %1659 = vst [vmem:[#allocation2 + $0x108] sm:$0xff] %v1658
        %1660 = vst [vmem:[#allocation2 + $0x110] sm:$0xff] %v1417
        %v1661 = vld [vmem:[#allocation2 + $0x118] sm:$0x11]
        %v1662 = vsel %vm404, %v1418, %v1661
        %1663 = vst [vmem:[#allocation2 + $0x118] sm:$0x11] %v1662
        %v1664 = vld [vmem:[#allocation2 + $0x120] sm:$0xff]
        %v1665 = vsel %vm1579, %v1425, %v1664
        %1666 = vst [vmem:[#allocation2 + $0x120] sm:$0xff] %v1665
        %1667 = vst [vmem:[#allocation2 + $0x128] sm:$0xff] %v1434
        %v1668 = vld [vmem:[#allocation2 + $0x130] sm:$0x11]
        %v1669 = vsel %vm404, %v1435, %v1668
        %1670 = vst [vmem:[#allocation2 + $0x130] sm:$0x11] %v1669
        %v1671 = vld [vmem:[#allocation2 + $0x138] sm:$0xff]
        %v1672 = vsel %vm1579, %v1442, %v1671
        %1673 = vst [vmem:[#allocation2 + $0x138] sm:$0xff] %v1672
        %1674 = vst [vmem:[#allocation2 + $0x140] sm:$0xff] %v1451
        %v1675 = vld [vmem:[#allocation2 + $0x148] sm:$0x11]
        %v1676 = vsel %vm404, %v1452, %v1675
        %1677 = vst [vmem:[#allocation2 + $0x148] sm:$0x11] %v1676
        %v1678 = vld [vmem:[#allocation2 + $0x150] sm:$0xff]
        %v1679 = vsel %vm1579, %v1459, %v1678
        %1680 = vst [vmem:[#allocation2 + $0x150] sm:$0xff] %v1679
        %1681 = vst [vmem:[#allocation2 + $0x158] sm:$0xff] %v1468
        %v1682 = vld [vmem:[#allocation2 + $0x160] sm:$0x11]
        %v1683 = vsel %vm404, %v1469, %v1682
        %1684 = vst [vmem:[#allocation2 + $0x160] sm:$0x11] %v1683
        %v1685 = vld [vmem:[#allocation2 + $0x168] sm:$0xff]
        %v1686 = vsel %vm1579, %v1476, %v1685
        %1687 = vst [vmem:[#allocation2 + $0x168] sm:$0xff] %v1686
        %1688 = vst [vmem:[#allocation2 + $0x170] sm:$0xff] %v1485
        %v1689 = vld [vmem:[#allocation2 + $0x178] sm:$0x11]
        %v1690 = vsel %vm404, %v1486, %v1689
        %1691 = vst [vmem:[#allocation2 + $0x178] sm:$0x11] %v1690
        %v1692 = vld [vmem:[#allocation2 + $0x180] sm:$0xff]
        %v1693 = vsel %vm1579, %v1493, %v1692
        %1694 = vst [vmem:[#allocation2 + $0x180] sm:$0xff] %v1693
        %1695 = vst [vmem:[#allocation2 + $0x188] sm:$0xff] %v1502
        %v1696 = vld [vmem:[#allocation2 + $0x190] sm:$0x11]
        %v1697 = vsel %vm404, %v1503, %v1696
        %1698 = vst [vmem:[#allocation2 + $0x190] sm:$0x11] %v1697
        %v1699 = vld [vmem:[#allocation2 + $0x198] sm:$0xff]
        %v1700 = vsel %vm1579, %v1510, %v1699
        %1701 = vst [vmem:[#allocation2 + $0x198] sm:$0xff] %v1700
        %1702 = vst [vmem:[#allocation2 + $0x1a0] sm:$0xff] %v1519
        %v1703 = vld [vmem:[#allocation2 + $0x1a8] sm:$0x11]
        %v1704 = vsel %vm404, %v1520, %v1703
        %1705 = vst [vmem:[#allocation2 + $0x1a8] sm:$0x11] %v1704
        %p1706 = scmp.eq.s32.totalorder %s32, 0
        // Predicated region
        $region77: #{tpu_custom_call.1} parent=47 // pred_check
          %p1707 = pneg %p1706
        $region78: #{tpu_custom_call.1} parent=47 // pred_check_branch
          %1709 = sbr.rel (%p1707) target = $region80
        $region79: #{tpu_custom_call.1} parent=47 // pred_region
          %1710 = vst [vmem:[#allocation2] sm:$0xff] 0
          %1711 = vst [vmem:[#allocation2 + $0x8] sm:$0xff] 0
          %1712 = vst [vmem:[#allocation2 + $0x10] sm:$0x11] 0
          %s1713 = scalar_lea.vmem [#allocation2], 408
          %1714 = vst [vmem:[%s1713] sm:$0xff] 0
          %1715 = vst [vmem:[%s1713 + $0x8] sm:$0xff] 0
          %1716 = vst [vmem:[%s1713 + $0x10] sm:$0x11] 0
        $region80: #{tpu_custom_call.1} parent=47 // pred_fallthru
          _
        %v1717 = vld [vmem:[#allocation2] sm:$0xff]
        %v1718 = vld [vmem:[#allocation2 + $0x8] sm:$0xff]
        %v1719 = vld [vmem:[#allocation2 + $0x18] sm:$0xff]
        %v1720 = vld [vmem:[#allocation2 + $0x20] sm:$0xff]
        %v1721 = vld [vmem:[#allocation2 + $0x30] sm:$0xff]
        %v1722 = vld [vmem:[#allocation2 + $0x38] sm:$0xff]
        %v1723 = vld [vmem:[#allocation2 + $0x48] sm:$0xff]
        %v1724 = vld [vmem:[#allocation2 + $0x50] sm:$0xff]
        %v1725 = vld [vmem:[#allocation2 + $0x60] sm:$0xff]
        %v1726 = vld [vmem:[#allocation2 + $0x68] sm:$0xff]
        %v1727 = vld [vmem:[#allocation2 + $0x78] sm:$0xff]
        %v1728 = vld [vmem:[#allocation2 + $0x80] sm:$0xff]
        %v1729 = vld [vmem:[#allocation2 + $0x90] sm:$0xff]
        %v1730 = vld [vmem:[#allocation2 + $0x98] sm:$0xff]
        %v1731 = vld [vmem:[#allocation2 + $0xa8] sm:$0xff]
        %v1732 = vld [vmem:[#allocation2 + $0xb0] sm:$0xff]
        %v1733 = vld [vmem:[#allocation2 + $0xc0] sm:$0xff]
        %v1734 = vld [vmem:[#allocation2 + $0xc8] sm:$0xff]
        %v1735 = vld [vmem:[#allocation2 + $0xd8] sm:$0xff]
        %v1736 = vld [vmem:[#allocation2 + $0xe0] sm:$0xff]
        %v1737 = vld [vmem:[#allocation2 + $0xf0] sm:$0xff]
        %v1738 = vld [vmem:[#allocation2 + $0xf8] sm:$0xff]
        %v1739 = vld [vmem:[#allocation2 + $0x108] sm:$0xff]
        %v1740 = vld [vmem:[#allocation2 + $0x110] sm:$0xff]
        %v1741 = vld [vmem:[#allocation2 + $0x120] sm:$0xff]
        %v1742 = vld [vmem:[#allocation2 + $0x128] sm:$0xff]
        %v1743 = vld [vmem:[#allocation2 + $0x138] sm:$0xff]
        %v1744 = vld [vmem:[#allocation2 + $0x140] sm:$0xff]
        %v1745 = vld [vmem:[#allocation2 + $0x150] sm:$0xff]
        %v1746 = vld [vmem:[#allocation2 + $0x158] sm:$0xff]
        %v1747 = vld [vmem:[#allocation2 + $0x168] sm:$0xff]
        %v1748 = vld [vmem:[#allocation2 + $0x170] sm:$0xff]
        %v1749 = vld [vmem:[#allocation9] sm:$0xff]
        %v1750 = vld [vmem:[#allocation9 + $0x8] sm:$0xff]
        %v1751 = vld [vmem:[#allocation9 + $0x10] sm:$0xff]
        %v1752 = vld [vmem:[#allocation9 + $0x18] sm:$0xff]
        %v1753 = vld [vmem:[#allocation9 + $0x20] sm:$0xff]
        %v1754 = vld [vmem:[#allocation9 + $0x28] sm:$0xff]
        %v1755 = vld [vmem:[#allocation9 + $0x30] sm:$0xff]
        %v1756 = vld [vmem:[#allocation9 + $0x38] sm:$0xff]
        %v1757 = vld [vmem:[#allocation9 + $0x40] sm:$0xff]
        %v1758 = vld [vmem:[#allocation9 + $0x48] sm:$0xff]
        %v1759 = vld [vmem:[#allocation9 + $0x50] sm:$0xff]
        %v1760 = vld [vmem:[#allocation9 + $0x58] sm:$0xff]
        %v1761 = vld [vmem:[#allocation9 + $0x60] sm:$0xff]
        %v1762 = vld [vmem:[#allocation9 + $0x68] sm:$0xff]
        %v1763 = vld [vmem:[#allocation9 + $0x70] sm:$0xff]
        %v1764 = vld [vmem:[#allocation9 + $0x78] sm:$0xff]
        %v1765 = vld [vmem:[#allocation9 + $0x80] sm:$0xff]
        %v1766 = vld [vmem:[#allocation9 + $0x88] sm:$0xff]
        %v1767 = vld [vmem:[#allocation9 + $0x90] sm:$0xff]
        %v1768 = vld [vmem:[#allocation9 + $0x98] sm:$0xff]
        %v1769 = vld [vmem:[#allocation9 + $0xa0] sm:$0xff]
        %v1770 = vld [vmem:[#allocation9 + $0xa8] sm:$0xff]
        %v1771 = vld [vmem:[#allocation9 + $0xb0] sm:$0xff]
        %v1772 = vld [vmem:[#allocation9 + $0xb8] sm:$0xff]
        %v1773 = vld [vmem:[#allocation9 + $0xc0] sm:$0xff]
        %v1774 = vld [vmem:[#allocation9 + $0xc8] sm:$0xff]
        %v1775 = vld [vmem:[#allocation9 + $0xd0] sm:$0xff]
        %v1776 = vld [vmem:[#allocation9 + $0xd8] sm:$0xff]
        %v1777 = vld [vmem:[#allocation9 + $0xe0] sm:$0xff]
        %v1778 = vld [vmem:[#allocation9 + $0xe8] sm:$0xff]
        %v1779 = vld [vmem:[#allocation9 + $0xf0] sm:$0xff]
        %v1780 = vld [vmem:[#allocation9 + $0xf8] sm:$0xff]
        %v1781 = vld [vmem:[#allocation2 + $0x10] sm:$0x11]
        %v1782 = vld [vmem:[#allocation2 + $0x28] sm:$0x11]
        %v1783 = vld [vmem:[#allocation2 + $0x40] sm:$0x11]
        %v1784 = vld [vmem:[#allocation2 + $0x58] sm:$0x11]
        %v1785 = vld [vmem:[#allocation2 + $0x70] sm:$0x11]
        %v1786 = vld [vmem:[#allocation2 + $0x88] sm:$0x11]
        %v1787 = vld [vmem:[#allocation2 + $0xa0] sm:$0x11]
        %v1788 = vld [vmem:[#allocation2 + $0xb8] sm:$0x11]
        %v1789 = vld [vmem:[#allocation2 + $0xd0] sm:$0x11]
        %v1790 = vld [vmem:[#allocation2 + $0xe8] sm:$0x11]
        %v1791 = vld [vmem:[#allocation2 + $0x100] sm:$0x11]
        %v1792 = vld [vmem:[#allocation2 + $0x118] sm:$0x11]
        %v1793 = vld [vmem:[#allocation2 + $0x130] sm:$0x11]
        %v1794 = vld [vmem:[#allocation2 + $0x148] sm:$0x11]
        %v1795 = vld [vmem:[#allocation2 + $0x160] sm:$0x11]
        %v1796 = vld [vmem:[#allocation2 + $0x178] sm:$0x11]
        %vm1797 = vsmask.f32 3328
        %vm1798 = vsmask.f32 7440
        %vm1799 = vmor %vm1797, %vm1798
        %v1801 = vshrl.u32 %v1717, 16
        %v1803 = vrot.slane %v1801, 4
        %v1804 = vshll.u32 %v1717, 16
        %v1806 = vrot.slane %v1804, 5
        %v1807 = vor.u32 %v1803, %v1806
        %v1808 = vrot.slane %v1807, 4
        %v1810 = vshll.u32 %v1718, 16
        %v1812 = vrot.slane %v1810, 5
        %v1813 = vsel %vm1799, %v1808, %v1812
        %v1814 = vshrl.u32 %v1718, 16
        %v1816 = vrot.slane %v1814, 4
        %v1817 = vor.u32 %v1816, %v1812
        %v1818 = vrot.slane %v1817, 4
        %v1820 = vshll.u32 %v1781, 16
        %v1822 = vrot.slane %v1820, 5
        %v1823 = vsel %vm1799, %v1818, %v1822
        %v1825 = vshrl.u32 %v1719, 16
        %v1827 = vrot.slane %v1825, 4
        %v1828 = vshll.u32 %v1719, 16
        %v1830 = vrot.slane %v1828, 5
        %v1831 = vor.u32 %v1827, %v1830
        %v1832 = vrot.slane %v1831, 4
        %v1834 = vshll.u32 %v1720, 16
        %v1836 = vrot.slane %v1834, 5
        %v1837 = vsel %vm1799, %v1832, %v1836
        %v1838 = vshrl.u32 %v1720, 16
        %v1840 = vrot.slane %v1838, 4
        %v1841 = vor.u32 %v1840, %v1836
        %v1842 = vrot.slane %v1841, 4
        %v1844 = vshll.u32 %v1782, 16
        %v1846 = vrot.slane %v1844, 5
        %v1847 = vsel %vm1799, %v1842, %v1846
        %v1849 = vshrl.u32 %v1721, 16
        %v1851 = vrot.slane %v1849, 4
        %v1852 = vshll.u32 %v1721, 16
        %v1854 = vrot.slane %v1852, 5
        %v1855 = vor.u32 %v1851, %v1854
        %v1856 = vrot.slane %v1855, 4
        %v1858 = vshll.u32 %v1722, 16
        %v1860 = vrot.slane %v1858, 5
        %v1861 = vsel %vm1799, %v1856, %v1860
        %v1862 = vshrl.u32 %v1722, 16
        %v1864 = vrot.slane %v1862, 4
        %v1865 = vor.u32 %v1864, %v1860
        %v1866 = vrot.slane %v1865, 4
        %v1868 = vshll.u32 %v1783, 16
        %v1870 = vrot.slane %v1868, 5
        %v1871 = vsel %vm1799, %v1866, %v1870
        %v1873 = vshrl.u32 %v1723, 16
        %v1875 = vrot.slane %v1873, 4
        %v1876 = vshll.u32 %v1723, 16
        %v1878 = vrot.slane %v1876, 5
        %v1879 = vor.u32 %v1875, %v1878
        %v1880 = vrot.slane %v1879, 4
        %v1882 = vshll.u32 %v1724, 16
        %v1884 = vrot.slane %v1882, 5
        %v1885 = vsel %vm1799, %v1880, %v1884
        %v1886 = vshrl.u32 %v1724, 16
        %v1888 = vrot.slane %v1886, 4
        %v1889 = vor.u32 %v1888, %v1884
        %v1890 = vrot.slane %v1889, 4
        %v1892 = vshll.u32 %v1784, 16
        %v1894 = vrot.slane %v1892, 5
        %v1895 = vsel %vm1799, %v1890, %v1894
        %v1897 = vshrl.u32 %v1725, 16
        %v1899 = vrot.slane %v1897, 4
        %v1900 = vshll.u32 %v1725, 16
        %v1902 = vrot.slane %v1900, 5
        %v1903 = vor.u32 %v1899, %v1902
        %v1904 = vrot.slane %v1903, 4
        %v1906 = vshll.u32 %v1726, 16
        %v1908 = vrot.slane %v1906, 5
        %v1909 = vsel %vm1799, %v1904, %v1908
        %v1910 = vshrl.u32 %v1726, 16
        %v1912 = vrot.slane %v1910, 4
        %v1913 = vor.u32 %v1912, %v1908
        %v1914 = vrot.slane %v1913, 4
        %v1916 = vshll.u32 %v1785, 16
        %v1918 = vrot.slane %v1916, 5
        %v1919 = vsel %vm1799, %v1914, %v1918
        %v1921 = vshrl.u32 %v1727, 16
        %v1923 = vrot.slane %v1921, 4
        %v1924 = vshll.u32 %v1727, 16
        %v1926 = vrot.slane %v1924, 5
        %v1927 = vor.u32 %v1923, %v1926
        %v1928 = vrot.slane %v1927, 4
        %v1930 = vshll.u32 %v1728, 16
        %v1932 = vrot.slane %v1930, 5
        %v1933 = vsel %vm1799, %v1928, %v1932
        %v1934 = vshrl.u32 %v1728, 16
        %v1936 = vrot.slane %v1934, 4
        %v1937 = vor.u32 %v1936, %v1932
        %v1938 = vrot.slane %v1937, 4
        %v1940 = vshll.u32 %v1786, 16
        %v1942 = vrot.slane %v1940, 5
        %v1943 = vsel %vm1799, %v1938, %v1942
        %v1945 = vshrl.u32 %v1729, 16
        %v1947 = vrot.slane %v1945, 4
        %v1948 = vshll.u32 %v1729, 16
        %v1950 = vrot.slane %v1948, 5
        %v1951 = vor.u32 %v1947, %v1950
        %v1952 = vrot.slane %v1951, 4
        %v1954 = vshll.u32 %v1730, 16
        %v1956 = vrot.slane %v1954, 5
        %v1957 = vsel %vm1799, %v1952, %v1956
        %v1958 = vshrl.u32 %v1730, 16
        %v1960 = vrot.slane %v1958, 4
        %v1961 = vor.u32 %v1960, %v1956
        %v1962 = vrot.slane %v1961, 4
        %v1964 = vshll.u32 %v1787, 16
        %v1966 = vrot.slane %v1964, 5
        %v1967 = vsel %vm1799, %v1962, %v1966
        %v1969 = vshrl.u32 %v1731, 16
        %v1971 = vrot.slane %v1969, 4
        %v1972 = vshll.u32 %v1731, 16
        %v1974 = vrot.slane %v1972, 5
        %v1975 = vor.u32 %v1971, %v1974
        %v1976 = vrot.slane %v1975, 4
        %v1978 = vshll.u32 %v1732, 16
        %v1980 = vrot.slane %v1978, 5
        %v1981 = vsel %vm1799, %v1976, %v1980
        %v1982 = vshrl.u32 %v1732, 16
        %v1984 = vrot.slane %v1982, 4
        %v1985 = vor.u32 %v1984, %v1980
        %v1986 = vrot.slane %v1985, 4
        %v1988 = vshll.u32 %v1788, 16
        %v1990 = vrot.slane %v1988, 5
        %v1991 = vsel %vm1799, %v1986, %v1990
        %v1993 = vshrl.u32 %v1733, 16
        %v1995 = vrot.slane %v1993, 4
        %v1996 = vshll.u32 %v1733, 16
        %v1998 = vrot.slane %v1996, 5
        %v1999 = vor.u32 %v1995, %v1998
        %v2000 = vrot.slane %v1999, 4
        %v2002 = vshll.u32 %v1734, 16
        %v2004 = vrot.slane %v2002, 5
        %v2005 = vsel %vm1799, %v2000, %v2004
        %v2006 = vshrl.u32 %v1734, 16
        %v2008 = vrot.slane %v2006, 4
        %v2009 = vor.u32 %v2008, %v2004
        %v2010 = vrot.slane %v2009, 4
        %v2012 = vshll.u32 %v1789, 16
        %v2014 = vrot.slane %v2012, 5
        %v2015 = vsel %vm1799, %v2010, %v2014
        %v2017 = vshrl.u32 %v1735, 16
        %v2019 = vrot.slane %v2017, 4
        %v2020 = vshll.u32 %v1735, 16
        %v2022 = vrot.slane %v2020, 5
        %v2023 = vor.u32 %v2019, %v2022
        %v2024 = vrot.slane %v2023, 4
        %v2026 = vshll.u32 %v1736, 16
        %v2028 = vrot.slane %v2026, 5
        %v2029 = vsel %vm1799, %v2024, %v2028
        %v2030 = vshrl.u32 %v1736, 16
        %v2032 = vrot.slane %v2030, 4
        %v2033 = vor.u32 %v2032, %v2028
        %v2034 = vrot.slane %v2033, 4
        %v2036 = vshll.u32 %v1790, 16
        %v2038 = vrot.slane %v2036, 5
        %v2039 = vsel %vm1799, %v2034, %v2038
        %v2041 = vshrl.u32 %v1737, 16
        %v2043 = vrot.slane %v2041, 4
        %v2044 = vshll.u32 %v1737, 16
        %v2046 = vrot.slane %v2044, 5
        %v2047 = vor.u32 %v2043, %v2046
        %v2048 = vrot.slane %v2047, 4
        %v2050 = vshll.u32 %v1738, 16
        %v2052 = vrot.slane %v2050, 5
        %v2053 = vsel %vm1799, %v2048, %v2052
        %v2054 = vshrl.u32 %v1738, 16
        %v2056 = vrot.slane %v2054, 4
        %v2057 = vor.u32 %v2056, %v2052
        %v2058 = vrot.slane %v2057, 4
        %v2060 = vshll.u32 %v1791, 16
        %v2062 = vrot.slane %v2060, 5
        %v2063 = vsel %vm1799, %v2058, %v2062
        %v2065 = vshrl.u32 %v1739, 16
        %v2067 = vrot.slane %v2065, 4
        %v2068 = vshll.u32 %v1739, 16
        %v2070 = vrot.slane %v2068, 5
        %v2071 = vor.u32 %v2067, %v2070
        %v2072 = vrot.slane %v2071, 4
        %v2074 = vshll.u32 %v1740, 16
        %v2076 = vrot.slane %v2074, 5
        %v2077 = vsel %vm1799, %v2072, %v2076
        %v2078 = vshrl.u32 %v1740, 16
        %v2080 = vrot.slane %v2078, 4
        %v2081 = vor.u32 %v2080, %v2076
        %v2082 = vrot.slane %v2081, 4
        %v2084 = vshll.u32 %v1792, 16
        %v2086 = vrot.slane %v2084, 5
        %v2087 = vsel %vm1799, %v2082, %v2086
        %v2089 = vshrl.u32 %v1741, 16
        %v2091 = vrot.slane %v2089, 4
        %v2092 = vshll.u32 %v1741, 16
        %v2094 = vrot.slane %v2092, 5
        %v2095 = vor.u32 %v2091, %v2094
        %v2096 = vrot.slane %v2095, 4
        %v2098 = vshll.u32 %v1742, 16
        %v2100 = vrot.slane %v2098, 5
        %v2101 = vsel %vm1799, %v2096, %v2100
        %v2102 = vshrl.u32 %v1742, 16
        %v2104 = vrot.slane %v2102, 4
        %v2105 = vor.u32 %v2104, %v2100
        %v2106 = vrot.slane %v2105, 4
        %v2108 = vshll.u32 %v1793, 16
        %v2110 = vrot.slane %v2108, 5
        %v2111 = vsel %vm1799, %v2106, %v2110
        %v2113 = vshrl.u32 %v1743, 16
        %v2115 = vrot.slane %v2113, 4
        %v2116 = vshll.u32 %v1743, 16
        %v2118 = vrot.slane %v2116, 5
        %v2119 = vor.u32 %v2115, %v2118
        %v2120 = vrot.slane %v2119, 4
        %v2122 = vshll.u32 %v1744, 16
        %v2124 = vrot.slane %v2122, 5
        %v2125 = vsel %vm1799, %v2120, %v2124
        %v2126 = vshrl.u32 %v1744, 16
        %v2128 = vrot.slane %v2126, 4
        %v2129 = vor.u32 %v2128, %v2124
        %v2130 = vrot.slane %v2129, 4
        %v2132 = vshll.u32 %v1794, 16
        %v2134 = vrot.slane %v2132, 5
        %v2135 = vsel %vm1799, %v2130, %v2134
        %v2137 = vshrl.u32 %v1745, 16
        %v2139 = vrot.slane %v2137, 4
        %v2140 = vshll.u32 %v1745, 16
        %v2142 = vrot.slane %v2140, 5
        %v2143 = vor.u32 %v2139, %v2142
        %v2144 = vrot.slane %v2143, 4
        %v2146 = vshll.u32 %v1746, 16
        %v2148 = vrot.slane %v2146, 5
        %v2149 = vsel %vm1799, %v2144, %v2148
        %v2150 = vshrl.u32 %v1746, 16
        %v2152 = vrot.slane %v2150, 4
        %v2153 = vor.u32 %v2152, %v2148
        %v2154 = vrot.slane %v2153, 4
        %v2156 = vshll.u32 %v1795, 16
        %v2158 = vrot.slane %v2156, 5
        %v2159 = vsel %vm1799, %v2154, %v2158
        %v2161 = vshrl.u32 %v1747, 16
        %v2163 = vrot.slane %v2161, 4
        %v2164 = vshll.u32 %v1747, 16
        %v2166 = vrot.slane %v2164, 5
        %v2167 = vor.u32 %v2163, %v2166
        %v2168 = vrot.slane %v2167, 4
        %v2170 = vshll.u32 %v1748, 16
        %v2172 = vrot.slane %v2170, 5
        %v2173 = vsel %vm1799, %v2168, %v2172
        %v2174 = vshrl.u32 %v1748, 16
        %v2176 = vrot.slane %v2174, 4
        %v2177 = vor.u32 %v2176, %v2172
        %v2178 = vrot.slane %v2177, 4
        %v2180 = vshll.u32 %v1796, 16
        %v2182 = vrot.slane %v2180, 5
        %v2183 = vsel %vm1799, %v2178, %v2182
        %s2184 = scalar_lea.vmem [#allocation9], 256
        %v2185 = vld [vmem:[%s2184] sm:$0xff]
        %v2186 = vld [vmem:[%s2184 + $0x8] sm:$0xff]
        %v2187 = vld [vmem:[%s2184 + $0x10] sm:$0xff]
        %v2188 = vld [vmem:[%s2184 + $0x18] sm:$0xff]
        %v2189 = vld [vmem:[%s2184 + $0x20] sm:$0xff]
        %v2190 = vld [vmem:[%s2184 + $0x28] sm:$0xff]
        %v2191 = vld [vmem:[%s2184 + $0x30] sm:$0xff]
        %v2192 = vld [vmem:[%s2184 + $0x38] sm:$0xff]
        %v2193 = vld [vmem:[%s2184 + $0x40] sm:$0xff]
        %v2194 = vld [vmem:[%s2184 + $0x48] sm:$0xff]
        %v2195 = vld [vmem:[%s2184 + $0x50] sm:$0xff]
        %v2196 = vld [vmem:[%s2184 + $0x58] sm:$0xff]
        %v2197 = vld [vmem:[%s2184 + $0x60] sm:$0xff]
        %v2198 = vld [vmem:[%s2184 + $0x68] sm:$0xff]
        %v2199 = vld [vmem:[%s2184 + $0x70] sm:$0xff]
        %v2200 = vld [vmem:[%s2184 + $0x78] sm:$0xff]
        %v2201 = vld [vmem:[%s2184 + $0x80] sm:$0xff]
        %v2202 = vld [vmem:[%s2184 + $0x88] sm:$0xff]
        %v2203 = vld [vmem:[%s2184 + $0x90] sm:$0xff]
        %v2204 = vld [vmem:[%s2184 + $0x98] sm:$0xff]
        %v2205 = vld [vmem:[%s2184 + $0xa0] sm:$0xff]
        %v2206 = vld [vmem:[%s2184 + $0xa8] sm:$0xff]
        %v2207 = vld [vmem:[%s2184 + $0xb0] sm:$0xff]
        %v2208 = vld [vmem:[%s2184 + $0xb8] sm:$0xff]
        %v2209 = vld [vmem:[%s2184 + $0xc0] sm:$0xff]
        %v2210 = vld [vmem:[%s2184 + $0xc8] sm:$0xff]
        %v2211 = vld [vmem:[%s2184 + $0xd0] sm:$0xff]
        %v2212 = vld [vmem:[%s2184 + $0xd8] sm:$0xff]
        %v2213 = vld [vmem:[%s2184 + $0xe0] sm:$0xff]
        %v2214 = vld [vmem:[%s2184 + $0xe8] sm:$0xff]
        %v2215 = vld [vmem:[%s2184 + $0xf0] sm:$0xff]
        %v2216 = vld [vmem:[%s2184 + $0xf8] sm:$0xff]
        %v2217 = vunpack.c.l.b16 %v1813
        %v2218 = vunpack.c.h.b16 %v1813
        %v2219 = vunpack.c.l.b16 %v1823
        %v2220 = vunpack.c.h.b16 %v1823
        %v2221 = vunpack.c.l.b16 %v1837
        %v2222 = vunpack.c.h.b16 %v1837
        %v2223 = vunpack.c.l.b16 %v1847
        %v2224 = vunpack.c.h.b16 %v1847
        %v2225 = vunpack.c.l.b16 %v1861
        %v2226 = vunpack.c.h.b16 %v1861
        %v2227 = vunpack.c.l.b16 %v1871
        %v2228 = vunpack.c.h.b16 %v1871
        %v2229 = vunpack.c.l.b16 %v1885
        %v2230 = vunpack.c.h.b16 %v1885
        %v2231 = vunpack.c.l.b16 %v1895
        %v2232 = vunpack.c.h.b16 %v1895
        %v2233 = vunpack.c.l.b16 %v1909
        %v2234 = vunpack.c.h.b16 %v1909
        %v2235 = vunpack.c.l.b16 %v1919
        %v2236 = vunpack.c.h.b16 %v1919
        %v2237 = vunpack.c.l.b16 %v1933
        %v2238 = vunpack.c.h.b16 %v1933
        %v2239 = vunpack.c.l.b16 %v1943
        %v2240 = vunpack.c.h.b16 %v1943
        %v2241 = vunpack.c.l.b16 %v1957
        %v2242 = vunpack.c.h.b16 %v1957
        %v2243 = vunpack.c.l.b16 %v1967
        %v2244 = vunpack.c.h.b16 %v1967
        %v2245 = vunpack.c.l.b16 %v1981
        %v2246 = vunpack.c.h.b16 %v1981
        %v2247 = vunpack.c.l.b16 %v1991
        %v2248 = vunpack.c.h.b16 %v1991
        %v2249 = vunpack.c.l.b16 %v2005
        %v2250 = vunpack.c.h.b16 %v2005
        %v2251 = vunpack.c.l.b16 %v2015
        %v2252 = vunpack.c.h.b16 %v2015
        %v2253 = vunpack.c.l.b16 %v2029
        %v2254 = vunpack.c.h.b16 %v2029
        %v2255 = vunpack.c.l.b16 %v2039
        %v2256 = vunpack.c.h.b16 %v2039
        %v2257 = vunpack.c.l.b16 %v2053
        %v2258 = vunpack.c.h.b16 %v2053
        %v2259 = vunpack.c.l.b16 %v2063
        %v2260 = vunpack.c.h.b16 %v2063
        %v2261 = vunpack.c.l.b16 %v2077
        %v2262 = vunpack.c.h.b16 %v2077
        %v2263 = vunpack.c.l.b16 %v2087
        %v2264 = vunpack.c.h.b16 %v2087
        %v2265 = vunpack.c.l.b16 %v2101
        %v2266 = vunpack.c.h.b16 %v2101
        %v2267 = vunpack.c.l.b16 %v2111
        %v2268 = vunpack.c.h.b16 %v2111
        %v2269 = vunpack.c.l.b16 %v2125
        %v2270 = vunpack.c.h.b16 %v2125
        %v2271 = vunpack.c.l.b16 %v2135
        %v2272 = vunpack.c.h.b16 %v2135
        %v2273 = vunpack.c.l.b16 %v2149
        %v2274 = vunpack.c.h.b16 %v2149
        %v2275 = vunpack.c.l.b16 %v2159
        %v2276 = vunpack.c.h.b16 %v2159
        %v2277 = vunpack.c.l.b16 %v2173
        %v2278 = vunpack.c.h.b16 %v2173
        %v2279 = vunpack.c.l.b16 %v2183
        %v2280 = vunpack.c.h.b16 %v2183
        %v2281 = vpack.c.b16 %v2219, %v2217
        %v2282 = vpack.c.b16 %v2220, %v2218
        %v2283 = vpack.c.b16 %v2223, %v2221
        %v2284 = vpack.c.b16 %v2224, %v2222
        %v2285 = vpack.c.b16 %v2227, %v2225
        %v2286 = vpack.c.b16 %v2228, %v2226
        %v2287 = vpack.c.b16 %v2231, %v2229
        %v2288 = vpack.c.b16 %v2232, %v2230
        %v2289 = vpack.c.b16 %v2235, %v2233
        %v2290 = vpack.c.b16 %v2236, %v2234
        %v2291 = vpack.c.b16 %v2239, %v2237
        %v2292 = vpack.c.b16 %v2240, %v2238
        %v2293 = vpack.c.b16 %v2243, %v2241
        %v2294 = vpack.c.b16 %v2244, %v2242
        %v2295 = vpack.c.b16 %v2247, %v2245
        %v2296 = vpack.c.b16 %v2248, %v2246
        %v2297 = vpack.c.b16 %v2251, %v2249
        %v2298 = vpack.c.b16 %v2252, %v2250
        %v2299 = vpack.c.b16 %v2255, %v2253
        %v2300 = vpack.c.b16 %v2256, %v2254
        %v2301 = vpack.c.b16 %v2259, %v2257
        %v2302 = vpack.c.b16 %v2260, %v2258
        %v2303 = vpack.c.b16 %v2263, %v2261
        %v2304 = vpack.c.b16 %v2264, %v2262
        %v2305 = vpack.c.b16 %v2267, %v2265
        %v2306 = vpack.c.b16 %v2268, %v2266
        %v2307 = vpack.c.b16 %v2271, %v2269
        %v2308 = vpack.c.b16 %v2272, %v2270
        %v2309 = vpack.c.b16 %v2275, %v2273
        %v2310 = vpack.c.b16 %v2276, %v2274
        %v2311 = vpack.c.b16 %v2279, %v2277
        %v2312 = vpack.c.b16 %v2280, %v2278
        %v2377 = vunpack.c.l.b16 %v2185
        %v2378 = vunpack.c.h.b16 %v2185
        %v2379 = vunpack.c.l.b16 %v2186
        %v2380 = vunpack.c.h.b16 %v2186
        %v2381 = vunpack.c.l.b16 %v2187
        %v2382 = vunpack.c.h.b16 %v2187
        %v2383 = vunpack.c.l.b16 %v2188
        %v2384 = vunpack.c.h.b16 %v2188
        %v2385 = vunpack.c.l.b16 %v2189
        %v2386 = vunpack.c.h.b16 %v2189
        %v2387 = vunpack.c.l.b16 %v2190
        %v2388 = vunpack.c.h.b16 %v2190
        %v2389 = vunpack.c.l.b16 %v2191
        %v2390 = vunpack.c.h.b16 %v2191
        %v2391 = vunpack.c.l.b16 %v2192
        %v2392 = vunpack.c.h.b16 %v2192
        %v2393 = vunpack.c.l.b16 %v2193
        %v2394 = vunpack.c.h.b16 %v2193
        %v2395 = vunpack.c.l.b16 %v2194
        %v2396 = vunpack.c.h.b16 %v2194
        %v2397 = vunpack.c.l.b16 %v2195
        %v2398 = vunpack.c.h.b16 %v2195
        %v2399 = vunpack.c.l.b16 %v2196
        %v2400 = vunpack.c.h.b16 %v2196
        %v2401 = vunpack.c.l.b16 %v2197
        %v2402 = vunpack.c.h.b16 %v2197
        %v2403 = vunpack.c.l.b16 %v2198
        %v2404 = vunpack.c.h.b16 %v2198
        %v2405 = vunpack.c.l.b16 %v2199
        %v2406 = vunpack.c.h.b16 %v2199
        %v2407 = vunpack.c.l.b16 %v2200
        %v2408 = vunpack.c.h.b16 %v2200
        %v2409 = vunpack.c.l.b16 %v2201
        %v2410 = vunpack.c.h.b16 %v2201
        %v2411 = vunpack.c.l.b16 %v2202
        %v2412 = vunpack.c.h.b16 %v2202
        %v2413 = vunpack.c.l.b16 %v2203
        %v2414 = vunpack.c.h.b16 %v2203
        %v2415 = vunpack.c.l.b16 %v2204
        %v2416 = vunpack.c.h.b16 %v2204
        %v2417 = vunpack.c.l.b16 %v2205
        %v2418 = vunpack.c.h.b16 %v2205
        %v2419 = vunpack.c.l.b16 %v2206
        %v2420 = vunpack.c.h.b16 %v2206
        %v2421 = vunpack.c.l.b16 %v2207
        %v2422 = vunpack.c.h.b16 %v2207
        %v2423 = vunpack.c.l.b16 %v2208
        %v2424 = vunpack.c.h.b16 %v2208
        %v2425 = vunpack.c.l.b16 %v2209
        %v2426 = vunpack.c.h.b16 %v2209
        %v2427 = vunpack.c.l.b16 %v2210
        %v2428 = vunpack.c.h.b16 %v2210
        %v2429 = vunpack.c.l.b16 %v2211
        %v2430 = vunpack.c.h.b16 %v2211
        %v2431 = vunpack.c.l.b16 %v2212
        %v2432 = vunpack.c.h.b16 %v2212
        %v2433 = vunpack.c.l.b16 %v2213
        %v2434 = vunpack.c.h.b16 %v2213
        %v2435 = vunpack.c.l.b16 %v2214
        %v2436 = vunpack.c.h.b16 %v2214
        %v2437 = vunpack.c.l.b16 %v2215
        %v2438 = vunpack.c.h.b16 %v2215
        %v2439 = vunpack.c.l.b16 %v2216
        %v2440 = vunpack.c.h.b16 %v2216
        %v2441 = vpack.c.b16 %v2379, %v2377
        %v2442 = vpack.c.b16 %v2380, %v2378
        %v2443 = vpack.c.b16 %v2383, %v2381
        %v2444 = vpack.c.b16 %v2384, %v2382
        %v2445 = vpack.c.b16 %v2387, %v2385
        %v2446 = vpack.c.b16 %v2388, %v2386
        %v2447 = vpack.c.b16 %v2391, %v2389
        %v2448 = vpack.c.b16 %v2392, %v2390
        %v2449 = vpack.c.b16 %v2395, %v2393
        %v2450 = vpack.c.b16 %v2396, %v2394
        %v2451 = vpack.c.b16 %v2399, %v2397
        %v2452 = vpack.c.b16 %v2400, %v2398
        %v2453 = vpack.c.b16 %v2403, %v2401
        %v2454 = vpack.c.b16 %v2404, %v2402
        %v2455 = vpack.c.b16 %v2407, %v2405
        %v2456 = vpack.c.b16 %v2408, %v2406
        %v2457 = vpack.c.b16 %v2411, %v2409
        %v2458 = vpack.c.b16 %v2412, %v2410
        %v2459 = vpack.c.b16 %v2415, %v2413
        %v2460 = vpack.c.b16 %v2416, %v2414
        %v2461 = vpack.c.b16 %v2419, %v2417
        %v2462 = vpack.c.b16 %v2420, %v2418
        %v2463 = vpack.c.b16 %v2423, %v2421
        %v2464 = vpack.c.b16 %v2424, %v2422
        %v2465 = vpack.c.b16 %v2427, %v2425
        %v2466 = vpack.c.b16 %v2428, %v2426
        %v2467 = vpack.c.b16 %v2431, %v2429
        %v2468 = vpack.c.b16 %v2432, %v2430
        %v2469 = vpack.c.b16 %v2435, %v2433
        %v2470 = vpack.c.b16 %v2436, %v2434
        %v2471 = vpack.c.b16 %v2439, %v2437
        %v2472 = vpack.c.b16 %v2440, %v2438
        %2505 = vmatprep.subr.bf16.mxu0 %v2442
        %2506 = vmatpush1.bf16.msra.mxu0 %v2441
        %2507 = vmatprep.subr.bf16.mxu0 %v2444
        %2508 = vmatpush1.bf16.msra.mxu0 %v2443
        %2509 = vmatprep.subr.bf16.mxu0 %v2446
        %2510 = vmatpush1.bf16.msra.mxu0 %v2445
        %2511 = vmatprep.subr.bf16.mxu0 %v2448
        %2512 = vmatpush1.bf16.msra.mxu0 %v2447
        %2513 = vmatprep.subr.bf16.mxu0 %v2450
        %2514 = vmatpush1.bf16.msra.mxu0 %v2449
        %2515 = vmatprep.subr.bf16.mxu0 %v2452
        %2516 = vmatpush1.bf16.msra.mxu0 %v2451
        %2517 = vmatprep.subr.bf16.mxu0 %v2454
        %2518 = vmatpush1.bf16.msra.mxu0 %v2453
        %2519 = vmatprep.subr.bf16.mxu0 %v2456
        %2520 = vmatpush1.bf16.msra.mxu0 %v2455
        %2521 = vmatprep.subr.bf16.mxu0 %v2458
        %2522 = vmatpush1.bf16.msra.mxu0 %v2457
        %2523 = vmatprep.subr.bf16.mxu0 %v2460
        %2524 = vmatpush1.bf16.msra.mxu0 %v2459
        %2525 = vmatprep.subr.bf16.mxu0 %v2462
        %2526 = vmatpush1.bf16.msra.mxu0 %v2461
        %2527 = vmatprep.subr.bf16.mxu0 %v2464
        %2528 = vmatpush1.bf16.msra.mxu0 %v2463
        %2529 = vmatprep.subr.bf16.mxu0 %v2466
        %2530 = vmatpush1.bf16.msra.mxu0 %v2465
        %2531 = vmatprep.subr.bf16.mxu0 %v2468
        %2532 = vmatpush1.bf16.msra.mxu0 %v2467
        %2533 = vmatprep.subr.bf16.mxu0 %v2470
        %2534 = vmatpush1.bf16.msra.mxu0 %v2469
        %2535 = vmatprep.subr.bf16.mxu0 %v2472
        %2536 = vmatpush1.bf16.msra.mxu0 %v2471
        %2537 = vmatprep.mubr.bf16.mxu0 %v2282
        %2538 = vmatmul.mubr.bf16.gmra.mrb[0].mxu0 %v2281
        %v2539 = vpop.f32.mrb[0].mxu0
        %v2540 = vadd.f32 0.0, %v2539
        %v2541 = vpop.f32.mrb[0].mxu0
        %v2542 = vadd.f32 0.0, %v2541
        %v2543 = vpop.f32.mrb[0].mxu0
        %v2544 = vadd.f32 0.0, %v2543
        %v2545 = vpop.f32.mrb[0].mxu0
        %v2546 = vadd.f32 0.0, %v2545
        %2547 = vmatprep.mubr.bf16.mxu0 %v2284
        %2548 = vmatmul.mubr.bf16.gmra.mrb[0].mxu0 %v2283
        %v2549 = vpop.f32.mrb[0].mxu0
        %v2550 = vadd.f32 0.0, %v2549
        %v2551 = vpop.f32.mrb[0].mxu0
        %v2552 = vadd.f32 0.0, %v2551
        %v2553 = vpop.f32.mrb[0].mxu0
        %v2554 = vadd.f32 0.0, %v2553
        %v2555 = vpop.f32.mrb[0].mxu0
        %v2556 = vadd.f32 0.0, %v2555
        %2557 = vmatprep.mubr.bf16.mxu0 %v2286
        %2558 = vmatmul.mubr.bf16.gmra.mrb[0].mxu0 %v2285
        %v2559 = vpop.f32.mrb[0].mxu0
        %v2560 = vadd.f32 0.0, %v2559
        %v2561 = vpop.f32.mrb[0].mxu0
        %v2562 = vadd.f32 0.0, %v2561
        %v2563 = vpop.f32.mrb[0].mxu0
        %v2564 = vadd.f32 0.0, %v2563
        %v2565 = vpop.f32.mrb[0].mxu0
        %v2566 = vadd.f32 0.0, %v2565
        %2567 = vmatprep.mubr.bf16.mxu0 %v2288
        %2568 = vmatmul.mubr.bf16.gmra.mrb[0].mxu0 %v2287
        %v2569 = vpop.f32.mrb[0].mxu0
        %v2570 = vadd.f32 0.0, %v2569
        %v2571 = vpop.f32.mrb[0].mxu0
        %v2572 = vadd.f32 0.0, %v2571
        %v2573 = vpop.f32.mrb[0].mxu0
        %v2574 = vadd.f32 0.0, %v2573
        %v2575 = vpop.f32.mrb[0].mxu0
        %v2576 = vadd.f32 0.0, %v2575
        %2577 = vmatprep.mubr.bf16.mxu0 %v2290
        %2578 = vmatmul.mubr.bf16.gmra.mrb[0].mxu0 %v2289
        %v2579 = vpop.f32.mrb[0].mxu0
        %v2580 = vadd.f32 0.0, %v2579
        %v2581 = vpop.f32.mrb[0].mxu0
        %v2582 = vadd.f32 0.0, %v2581
        %v2583 = vpop.f32.mrb[0].mxu0
        %v2584 = vadd.f32 0.0, %v2583
        %v2585 = vpop.f32.mrb[0].mxu0
        %v2586 = vadd.f32 0.0, %v2585
        %2587 = vmatprep.mubr.bf16.mxu0 %v2292
        %2588 = vmatmul.mubr.bf16.gmra.mrb[0].mxu0 %v2291
        %v2589 = vpop.f32.mrb[0].mxu0
        %v2590 = vadd.f32 0.0, %v2589
        %v2591 = vpop.f32.mrb[0].mxu0
        %v2592 = vadd.f32 0.0, %v2591
        %v2593 = vpop.f32.mrb[0].mxu0
        %v2594 = vadd.f32 0.0, %v2593
        %v2595 = vpop.f32.mrb[0].mxu0
        %v2596 = vadd.f32 0.0, %v2595
        %2597 = vmatprep.mubr.bf16.mxu0 %v2294
        %2598 = vmatmul.mubr.bf16.gmra.mrb[0].mxu0 %v2293
        %v2599 = vpop.f32.mrb[0].mxu0
        %v2600 = vadd.f32 0.0, %v2599
        %v2601 = vpop.f32.mrb[0].mxu0
        %v2602 = vadd.f32 0.0, %v2601
        %v2603 = vpop.f32.mrb[0].mxu0
        %v2604 = vadd.f32 0.0, %v2603
        %v2605 = vpop.f32.mrb[0].mxu0
        %v2606 = vadd.f32 0.0, %v2605
        %2607 = vmatprep.mubr.bf16.mxu0 %v2296
        %2608 = vmatmul.mubr.bf16.gmra.mrb[0].mxu0 %v2295
        %v2609 = vpop.f32.mrb[0].mxu0
        %v2610 = vadd.f32 0.0, %v2609
        %v2611 = vpop.f32.mrb[0].mxu0
        %v2612 = vadd.f32 0.0, %v2611
        %v2613 = vpop.f32.mrb[0].mxu0
        %v2614 = vadd.f32 0.0, %v2613
        %v2615 = vpop.f32.mrb[0].mxu0
        %v2616 = vadd.f32 0.0, %v2615
        %2617 = vmatprep.mubr.bf16.mxu0 %v2298
        %2618 = vmatmul.mubr.bf16.gmra.mrb[0].mxu0 %v2297
        %v2619 = vpop.f32.mrb[0].mxu0
        %v2620 = vadd.f32 0.0, %v2619
        %v2621 = vpop.f32.mrb[0].mxu0
        %v2622 = vadd.f32 0.0, %v2621
        %v2623 = vpop.f32.mrb[0].mxu0
        %v2624 = vadd.f32 0.0, %v2623
        %v2625 = vpop.f32.mrb[0].mxu0
        %v2626 = vadd.f32 0.0, %v2625
        %2627 = vmatprep.mubr.bf16.mxu0 %v2300
        %2628 = vmatmul.mubr.bf16.gmra.mrb[0].mxu0 %v2299
        %v2629 = vpop.f32.mrb[0].mxu0
        %v2630 = vadd.f32 0.0, %v2629
        %v2631 = vpop.f32.mrb[0].mxu0
        %v2632 = vadd.f32 0.0, %v2631
        %v2633 = vpop.f32.mrb[0].mxu0
        %v2634 = vadd.f32 0.0, %v2633
        %v2635 = vpop.f32.mrb[0].mxu0
        %v2636 = vadd.f32 0.0, %v2635
        %2637 = vmatprep.mubr.bf16.mxu0 %v2302
        %2638 = vmatmul.mubr.bf16.gmra.mrb[0].mxu0 %v2301
        %v2639 = vpop.f32.mrb[0].mxu0
        %v2640 = vadd.f32 0.0, %v2639
        %v2641 = vpop.f32.mrb[0].mxu0
        %v2642 = vadd.f32 0.0, %v2641
        %v2643 = vpop.f32.mrb[0].mxu0
        %v2644 = vadd.f32 0.0, %v2643
        %v2645 = vpop.f32.mrb[0].mxu0
        %v2646 = vadd.f32 0.0, %v2645
        %2647 = vmatprep.mubr.bf16.mxu0 %v2304
        %2648 = vmatmul.mubr.bf16.gmra.mrb[0].mxu0 %v2303
        %v2649 = vpop.f32.mrb[0].mxu0
        %v2650 = vadd.f32 0.0, %v2649
        %v2651 = vpop.f32.mrb[0].mxu0
        %v2652 = vadd.f32 0.0, %v2651
        %v2653 = vpop.f32.mrb[0].mxu0
        %v2654 = vadd.f32 0.0, %v2653
        %v2655 = vpop.f32.mrb[0].mxu0
        %v2656 = vadd.f32 0.0, %v2655
        %2657 = vmatprep.mubr.bf16.mxu0 %v2306
        %2658 = vmatmul.mubr.bf16.gmra.mrb[0].mxu0 %v2305
        %v2659 = vpop.f32.mrb[0].mxu0
        %v2660 = vadd.f32 0.0, %v2659
        %v2661 = vpop.f32.mrb[0].mxu0
        %v2662 = vadd.f32 0.0, %v2661
        %v2663 = vpop.f32.mrb[0].mxu0
        %v2664 = vadd.f32 0.0, %v2663
        %v2665 = vpop.f32.mrb[0].mxu0
        %v2666 = vadd.f32 0.0, %v2665
        %2667 = vmatprep.mubr.bf16.mxu0 %v2308
        %2668 = vmatmul.mubr.bf16.gmra.mrb[0].mxu0 %v2307
        %v2669 = vpop.f32.mrb[0].mxu0
        %v2670 = vadd.f32 0.0, %v2669
        %v2671 = vpop.f32.mrb[0].mxu0
        %v2672 = vadd.f32 0.0, %v2671
        %v2673 = vpop.f32.mrb[0].mxu0
        %v2674 = vadd.f32 0.0, %v2673
        %v2675 = vpop.f32.mrb[0].mxu0
        %v2676 = vadd.f32 0.0, %v2675
        %2677 = vmatprep.mubr.bf16.mxu0 %v2310
        %2678 = vmatmul.mubr.bf16.gmra.mrb[0].mxu0 %v2309
        %v2679 = vpop.f32.mrb[0].mxu0
        %v2680 = vadd.f32 0.0, %v2679
        %v2681 = vpop.f32.mrb[0].mxu0
        %v2682 = vadd.f32 0.0, %v2681
        %v2683 = vpop.f32.mrb[0].mxu0
        %v2684 = vadd.f32 0.0, %v2683
        %v2685 = vpop.f32.mrb[0].mxu0
        %v2686 = vadd.f32 0.0, %v2685
        %2687 = vmatprep.mubr.bf16.mxu0 %v2312
        %2688 = vmatmul.mubr.bf16.gmra.mrb[0].mxu0 %v2311
        %v2689 = vpop.f32.mrb[0].mxu0
        %v2690 = vadd.f32 0.0, %v2689
        %v2691 = vpop.f32.mrb[0].mxu0
        %v2692 = vadd.f32 0.0, %v2691
        %v2693 = vpop.f32.mrb[0].mxu0
        %v2694 = vadd.f32 0.0, %v2693
        %v2695 = vpop.f32.mrb[0].mxu0
        %v2696 = vadd.f32 0.0, %v2695
        %2697 = vdwg.mxu0
        %v2730 = vunpack.c.l.b16 %v1717
        %v2731 = vunpack.c.h.b16 %v1717
        %v2732 = vunpack.c.l.b16 %v1718
        %v2733 = vunpack.c.h.b16 %v1718
        %v2734 = vunpack.c.l.b16 %v1719
        %v2735 = vunpack.c.h.b16 %v1719
        %v2736 = vunpack.c.l.b16 %v1720
        %v2737 = vunpack.c.h.b16 %v1720
        %v2738 = vunpack.c.l.b16 %v1721
        %v2739 = vunpack.c.h.b16 %v1721
        %v2740 = vunpack.c.l.b16 %v1722
        %v2741 = vunpack.c.h.b16 %v1722
        %v2742 = vunpack.c.l.b16 %v1723
        %v2743 = vunpack.c.h.b16 %v1723
        %v2744 = vunpack.c.l.b16 %v1724
        %v2745 = vunpack.c.h.b16 %v1724
        %v2746 = vunpack.c.l.b16 %v1725
        %v2747 = vunpack.c.h.b16 %v1725
        %v2748 = vunpack.c.l.b16 %v1726
        %v2749 = vunpack.c.h.b16 %v1726
        %v2750 = vunpack.c.l.b16 %v1727
        %v2751 = vunpack.c.h.b16 %v1727
        %v2752 = vunpack.c.l.b16 %v1728
        %v2753 = vunpack.c.h.b16 %v1728
        %v2754 = vunpack.c.l.b16 %v1729
        %v2755 = vunpack.c.h.b16 %v1729
        %v2756 = vunpack.c.l.b16 %v1730
        %v2757 = vunpack.c.h.b16 %v1730
        %v2758 = vunpack.c.l.b16 %v1731
        %v2759 = vunpack.c.h.b16 %v1731
        %v2760 = vunpack.c.l.b16 %v1732
        %v2761 = vunpack.c.h.b16 %v1732
        %v2762 = vunpack.c.l.b16 %v1733
        %v2763 = vunpack.c.h.b16 %v1733
        %v2764 = vunpack.c.l.b16 %v1734
        %v2765 = vunpack.c.h.b16 %v1734
        %v2766 = vunpack.c.l.b16 %v1735
        %v2767 = vunpack.c.h.b16 %v1735
        %v2768 = vunpack.c.l.b16 %v1736
        %v2769 = vunpack.c.h.b16 %v1736
        %v2770 = vunpack.c.l.b16 %v1737
        %v2771 = vunpack.c.h.b16 %v1737
        %v2772 = vunpack.c.l.b16 %v1738
        %v2773 = vunpack.c.h.b16 %v1738
        %v2774 = vunpack.c.l.b16 %v1739
        %v2775 = vunpack.c.h.b16 %v1739
        %v2776 = vunpack.c.l.b16 %v1740
        %v2777 = vunpack.c.h.b16 %v1740
        %v2778 = vunpack.c.l.b16 %v1741
        %v2779 = vunpack.c.h.b16 %v1741
        %v2780 = vunpack.c.l.b16 %v1742
        %v2781 = vunpack.c.h.b16 %v1742
        %v2782 = vunpack.c.l.b16 %v1743
        %v2783 = vunpack.c.h.b16 %v1743
        %v2784 = vunpack.c.l.b16 %v1744
        %v2785 = vunpack.c.h.b16 %v1744
        %v2786 = vunpack.c.l.b16 %v1745
        %v2787 = vunpack.c.h.b16 %v1745
        %v2788 = vunpack.c.l.b16 %v1746
        %v2789 = vunpack.c.h.b16 %v1746
        %v2790 = vunpack.c.l.b16 %v1747
        %v2791 = vunpack.c.h.b16 %v1747
        %v2792 = vunpack.c.l.b16 %v1748
        %v2793 = vunpack.c.h.b16 %v1748
        %v2794 = vpack.c.b16 %v2732, %v2730
        %v2795 = vpack.c.b16 %v2733, %v2731
        %v2796 = vpack.c.b16 %v2736, %v2734
        %v2797 = vpack.c.b16 %v2737, %v2735
        %v2798 = vpack.c.b16 %v2740, %v2738
        %v2799 = vpack.c.b16 %v2741, %v2739
        %v2800 = vpack.c.b16 %v2744, %v2742
        %v2801 = vpack.c.b16 %v2745, %v2743
        %v2802 = vpack.c.b16 %v2748, %v2746
        %v2803 = vpack.c.b16 %v2749, %v2747
        %v2804 = vpack.c.b16 %v2752, %v2750
        %v2805 = vpack.c.b16 %v2753, %v2751
        %v2806 = vpack.c.b16 %v2756, %v2754
        %v2807 = vpack.c.b16 %v2757, %v2755
        %v2808 = vpack.c.b16 %v2760, %v2758
        %v2809 = vpack.c.b16 %v2761, %v2759
        %v2810 = vpack.c.b16 %v2764, %v2762
        %v2811 = vpack.c.b16 %v2765, %v2763
        %v2812 = vpack.c.b16 %v2768, %v2766
        %v2813 = vpack.c.b16 %v2769, %v2767
        %v2814 = vpack.c.b16 %v2772, %v2770
        %v2815 = vpack.c.b16 %v2773, %v2771
        %v2816 = vpack.c.b16 %v2776, %v2774
        %v2817 = vpack.c.b16 %v2777, %v2775
        %v2818 = vpack.c.b16 %v2780, %v2778
        %v2819 = vpack.c.b16 %v2781, %v2779
        %v2820 = vpack.c.b16 %v2784, %v2782
        %v2821 = vpack.c.b16 %v2785, %v2783
        %v2822 = vpack.c.b16 %v2788, %v2786
        %v2823 = vpack.c.b16 %v2789, %v2787
        %v2824 = vpack.c.b16 %v2792, %v2790
        %v2825 = vpack.c.b16 %v2793, %v2791
        %v2890 = vunpack.c.l.b16 %v1749
        %v2891 = vunpack.c.h.b16 %v1749
        %v2892 = vunpack.c.l.b16 %v1750
        %v2893 = vunpack.c.h.b16 %v1750
        %v2894 = vunpack.c.l.b16 %v1751
        %v2895 = vunpack.c.h.b16 %v1751
        %v2896 = vunpack.c.l.b16 %v1752
        %v2897 = vunpack.c.h.b16 %v1752
        %v2898 = vunpack.c.l.b16 %v1753
        %v2899 = vunpack.c.h.b16 %v1753
        %v2900 = vunpack.c.l.b16 %v1754
        %v2901 = vunpack.c.h.b16 %v1754
        %v2902 = vunpack.c.l.b16 %v1755
        %v2903 = vunpack.c.h.b16 %v1755
        %v2904 = vunpack.c.l.b16 %v1756
        %v2905 = vunpack.c.h.b16 %v1756
        %v2906 = vunpack.c.l.b16 %v1757
        %v2907 = vunpack.c.h.b16 %v1757
        %v2908 = vunpack.c.l.b16 %v1758
        %v2909 = vunpack.c.h.b16 %v1758
        %v2910 = vunpack.c.l.b16 %v1759
        %v2911 = vunpack.c.h.b16 %v1759
        %v2912 = vunpack.c.l.b16 %v1760
        %v2913 = vunpack.c.h.b16 %v1760
        %v2914 = vunpack.c.l.b16 %v1761
        %v2915 = vunpack.c.h.b16 %v1761
        %v2916 = vunpack.c.l.b16 %v1762
        %v2917 = vunpack.c.h.b16 %v1762
        %v2918 = vunpack.c.l.b16 %v1763
        %v2919 = vunpack.c.h.b16 %v1763
        %v2920 = vunpack.c.l.b16 %v1764
        %v2921 = vunpack.c.h.b16 %v1764
        %v2922 = vunpack.c.l.b16 %v1765
        %v2923 = vunpack.c.h.b16 %v1765
        %v2924 = vunpack.c.l.b16 %v1766
        %v2925 = vunpack.c.h.b16 %v1766
        %v2926 = vunpack.c.l.b16 %v1767
        %v2927 = vunpack.c.h.b16 %v1767
        %v2928 = vunpack.c.l.b16 %v1768
        %v2929 = vunpack.c.h.b16 %v1768
        %v2930 = vunpack.c.l.b16 %v1769
        %v2931 = vunpack.c.h.b16 %v1769
        %v2932 = vunpack.c.l.b16 %v1770
        %v2933 = vunpack.c.h.b16 %v1770
        %v2934 = vunpack.c.l.b16 %v1771
        %v2935 = vunpack.c.h.b16 %v1771
        %v2936 = vunpack.c.l.b16 %v1772
        %v2937 = vunpack.c.h.b16 %v1772
        %v2938 = vunpack.c.l.b16 %v1773
        %v2939 = vunpack.c.h.b16 %v1773
        %v2940 = vunpack.c.l.b16 %v1774
        %v2941 = vunpack.c.h.b16 %v1774
        %v2942 = vunpack.c.l.b16 %v1775
        %v2943 = vunpack.c.h.b16 %v1775
        %v2944 = vunpack.c.l.b16 %v1776
        %v2945 = vunpack.c.h.b16 %v1776
        %v2946 = vunpack.c.l.b16 %v1777
        %v2947 = vunpack.c.h.b16 %v1777
        %v2948 = vunpack.c.l.b16 %v1778
        %v2949 = vunpack.c.h.b16 %v1778
        %v2950 = vunpack.c.l.b16 %v1779
        %v2951 = vunpack.c.h.b16 %v1779
        %v2952 = vunpack.c.l.b16 %v1780
        %v2953 = vunpack.c.h.b16 %v1780
        %v2954 = vpack.c.b16 %v2892, %v2890
        %v2955 = vpack.c.b16 %v2893, %v2891
        %v2956 = vpack.c.b16 %v2896, %v2894
        %v2957 = vpack.c.b16 %v2897, %v2895
        %v2958 = vpack.c.b16 %v2900, %v2898
        %v2959 = vpack.c.b16 %v2901, %v2899
        %v2960 = vpack.c.b16 %v2904, %v2902
        %v2961 = vpack.c.b16 %v2905, %v2903
        %v2962 = vpack.c.b16 %v2908, %v2906
        %v2963 = vpack.c.b16 %v2909, %v2907
        %v2964 = vpack.c.b16 %v2912, %v2910
        %v2965 = vpack.c.b16 %v2913, %v2911
        %v2966 = vpack.c.b16 %v2916, %v2914
        %v2967 = vpack.c.b16 %v2917, %v2915
        %v2968 = vpack.c.b16 %v2920, %v2918
        %v2969 = vpack.c.b16 %v2921, %v2919
        %v2970 = vpack.c.b16 %v2924, %v2922
        %v2971 = vpack.c.b16 %v2925, %v2923
        %v2972 = vpack.c.b16 %v2928, %v2926
        %v2973 = vpack.c.b16 %v2929, %v2927
        %v2974 = vpack.c.b16 %v2932, %v2930
        %v2975 = vpack.c.b16 %v2933, %v2931
        %v2976 = vpack.c.b16 %v2936, %v2934
        %v2977 = vpack.c.b16 %v2937, %v2935
        %v2978 = vpack.c.b16 %v2940, %v2938
        %v2979 = vpack.c.b16 %v2941, %v2939
        %v2980 = vpack.c.b16 %v2944, %v2942
        %v2981 = vpack.c.b16 %v2945, %v2943
        %v2982 = vpack.c.b16 %v2948, %v2946
        %v2983 = vpack.c.b16 %v2949, %v2947
        %v2984 = vpack.c.b16 %v2952, %v2950
        %v2985 = vpack.c.b16 %v2953, %v2951
        %3018 = vmatprep.subr.bf16.mxu0 %v2955
        %3019 = vmatpush1.bf16.msra.mxu0 %v2954
        %3020 = vmatprep.subr.bf16.mxu0 %v2957
        %3021 = vmatpush1.bf16.msra.mxu0 %v2956
        %3022 = vmatprep.subr.bf16.mxu0 %v2959
        %3023 = vmatpush1.bf16.msra.mxu0 %v2958
        %3024 = vmatprep.subr.bf16.mxu0 %v2961
        %3025 = vmatpush1.bf16.msra.mxu0 %v2960
        %3026 = vmatprep.subr.bf16.mxu0 %v2963
        %3027 = vmatpush1.bf16.msra.mxu0 %v2962
        %3028 = vmatprep.subr.bf16.mxu0 %v2965
        %3029 = vmatpush1.bf16.msra.mxu0 %v2964
        %3030 = vmatprep.subr.bf16.mxu0 %v2967
        %3031 = vmatpush1.bf16.msra.mxu0 %v2966
        %3032 = vmatprep.subr.bf16.mxu0 %v2969
        %3033 = vmatpush1.bf16.msra.mxu0 %v2968
        %3034 = vmatprep.subr.bf16.mxu0 %v2971
        %3035 = vmatpush1.bf16.msra.mxu0 %v2970
        %3036 = vmatprep.subr.bf16.mxu0 %v2973
        %3037 = vmatpush1.bf16.msra.mxu0 %v2972
        %3038 = vmatprep.subr.bf16.mxu0 %v2975
        %3039 = vmatpush1.bf16.msra.mxu0 %v2974
        %3040 = vmatprep.subr.bf16.mxu0 %v2977
        %3041 = vmatpush1.bf16.msra.mxu0 %v2976
        %3042 = vmatprep.subr.bf16.mxu0 %v2979
        %3043 = vmatpush1.bf16.msra.mxu0 %v2978
        %3044 = vmatprep.subr.bf16.mxu0 %v2981
        %3045 = vmatpush1.bf16.msra.mxu0 %v2980
        %3046 = vmatprep.subr.bf16.mxu0 %v2983
        %3047 = vmatpush1.bf16.msra.mxu0 %v2982
        %3048 = vmatprep.subr.bf16.mxu0 %v2985
        %3049 = vmatpush1.bf16.msra.mxu0 %v2984
        %3050 = vmatprep.mubr.bf16.mxu0 %v2795
        %3051 = vmatmul.mubr.bf16.gmra.mrb[0].mxu0 %v2794
        %v3052 = vpop.f32.mrb[0].mxu0
        %v3053 = vadd.f32 %v2540, %v3052
        %v3054 = vpop.f32.mrb[0].mxu0
        %v3055 = vadd.f32 %v2542, %v3054
        %v3056 = vpop.f32.mrb[0].mxu0
        %v3057 = vadd.f32 %v2544, %v3056
        %v3058 = vpop.f32.mrb[0].mxu0
        %v3059 = vadd.f32 %v2546, %v3058
        %3060 = vmatprep.mubr.bf16.mxu0 %v2797
        %3061 = vmatmul.mubr.bf16.gmra.mrb[0].mxu0 %v2796
        %v3062 = vpop.f32.mrb[0].mxu0
        %v3063 = vadd.f32 %v2550, %v3062
        %v3064 = vpop.f32.mrb[0].mxu0
        %v3065 = vadd.f32 %v2552, %v3064
        %v3066 = vpop.f32.mrb[0].mxu0
        %v3067 = vadd.f32 %v2554, %v3066
        %v3068 = vpop.f32.mrb[0].mxu0
        %v3069 = vadd.f32 %v2556, %v3068
        %3070 = vmatprep.mubr.bf16.mxu0 %v2799
        %3071 = vmatmul.mubr.bf16.gmra.mrb[0].mxu0 %v2798
        %v3072 = vpop.f32.mrb[0].mxu0
        %v3073 = vadd.f32 %v2560, %v3072
        %v3074 = vpop.f32.mrb[0].mxu0
        %v3075 = vadd.f32 %v2562, %v3074
        %v3076 = vpop.f32.mrb[0].mxu0
        %v3077 = vadd.f32 %v2564, %v3076
        %v3078 = vpop.f32.mrb[0].mxu0
        %v3079 = vadd.f32 %v2566, %v3078
        %3080 = vmatprep.mubr.bf16.mxu0 %v2801
        %3081 = vmatmul.mubr.bf16.gmra.mrb[0].mxu0 %v2800
        %v3082 = vpop.f32.mrb[0].mxu0
        %v3083 = vadd.f32 %v2570, %v3082
        %v3084 = vpop.f32.mrb[0].mxu0
        %v3085 = vadd.f32 %v2572, %v3084
        %v3086 = vpop.f32.mrb[0].mxu0
        %v3087 = vadd.f32 %v2574, %v3086
        %v3088 = vpop.f32.mrb[0].mxu0
        %v3089 = vadd.f32 %v2576, %v3088
        %3090 = vmatprep.mubr.bf16.mxu0 %v2803
        %3091 = vmatmul.mubr.bf16.gmra.mrb[0].mxu0 %v2802
        %v3092 = vpop.f32.mrb[0].mxu0
        %v3093 = vadd.f32 %v2580, %v3092
        %v3094 = vpop.f32.mrb[0].mxu0
        %v3095 = vadd.f32 %v2582, %v3094
        %v3096 = vpop.f32.mrb[0].mxu0
        %v3097 = vadd.f32 %v2584, %v3096
        %v3098 = vpop.f32.mrb[0].mxu0
        %v3099 = vadd.f32 %v2586, %v3098
        %3100 = vmatprep.mubr.bf16.mxu0 %v2805
        %3101 = vmatmul.mubr.bf16.gmra.mrb[0].mxu0 %v2804
        %v3102 = vpop.f32.mrb[0].mxu0
        %v3103 = vadd.f32 %v2590, %v3102
        %v3104 = vpop.f32.mrb[0].mxu0
        %v3105 = vadd.f32 %v2592, %v3104
        %v3106 = vpop.f32.mrb[0].mxu0
        %v3107 = vadd.f32 %v2594, %v3106
        %v3108 = vpop.f32.mrb[0].mxu0
        %v3109 = vadd.f32 %v2596, %v3108
        %3110 = vmatprep.mubr.bf16.mxu0 %v2807
        %3111 = vmatmul.mubr.bf16.gmra.mrb[0].mxu0 %v2806
        %v3112 = vpop.f32.mrb[0].mxu0
        %v3113 = vadd.f32 %v2600, %v3112
        %v3114 = vpop.f32.mrb[0].mxu0
        %v3115 = vadd.f32 %v2602, %v3114
        %v3116 = vpop.f32.mrb[0].mxu0
        %v3117 = vadd.f32 %v2604, %v3116
        %v3118 = vpop.f32.mrb[0].mxu0
        %v3119 = vadd.f32 %v2606, %v3118
        %3120 = vmatprep.mubr.bf16.mxu0 %v2809
        %3121 = vmatmul.mubr.bf16.gmra.mrb[0].mxu0 %v2808
        %v3122 = vpop.f32.mrb[0].mxu0
        %v3123 = vadd.f32 %v2610, %v3122
        %v3124 = vpop.f32.mrb[0].mxu0
        %v3125 = vadd.f32 %v2612, %v3124
        %v3126 = vpop.f32.mrb[0].mxu0
        %v3127 = vadd.f32 %v2614, %v3126
        %v3128 = vpop.f32.mrb[0].mxu0
        %v3129 = vadd.f32 %v2616, %v3128
        %3130 = vmatprep.mubr.bf16.mxu0 %v2811
        %3131 = vmatmul.mubr.bf16.gmra.mrb[0].mxu0 %v2810
        %v3132 = vpop.f32.mrb[0].mxu0
        %v3133 = vadd.f32 %v2620, %v3132
        %v3134 = vpop.f32.mrb[0].mxu0
        %v3135 = vadd.f32 %v2622, %v3134
        %v3136 = vpop.f32.mrb[0].mxu0
        %v3137 = vadd.f32 %v2624, %v3136
        %v3138 = vpop.f32.mrb[0].mxu0
        %v3139 = vadd.f32 %v2626, %v3138
        %3140 = vmatprep.mubr.bf16.mxu0 %v2813
        %3141 = vmatmul.mubr.bf16.gmra.mrb[0].mxu0 %v2812
        %v3142 = vpop.f32.mrb[0].mxu0
        %v3143 = vadd.f32 %v2630, %v3142
        %v3144 = vpop.f32.mrb[0].mxu0
        %v3145 = vadd.f32 %v2632, %v3144
        %v3146 = vpop.f32.mrb[0].mxu0
        %v3147 = vadd.f32 %v2634, %v3146
        %v3148 = vpop.f32.mrb[0].mxu0
        %v3149 = vadd.f32 %v2636, %v3148
        %3150 = vmatprep.mubr.bf16.mxu0 %v2815
        %3151 = vmatmul.mubr.bf16.gmra.mrb[0].mxu0 %v2814
        %v3152 = vpop.f32.mrb[0].mxu0
        %v3153 = vadd.f32 %v2640, %v3152
        %v3154 = vpop.f32.mrb[0].mxu0
        %v3155 = vadd.f32 %v2642, %v3154
        %v3156 = vpop.f32.mrb[0].mxu0
        %v3157 = vadd.f32 %v2644, %v3156
        %v3158 = vpop.f32.mrb[0].mxu0
        %v3159 = vadd.f32 %v2646, %v3158
        %3160 = vmatprep.mubr.bf16.mxu0 %v2817
        %3161 = vmatmul.mubr.bf16.gmra.mrb[0].mxu0 %v2816
        %v3162 = vpop.f32.mrb[0].mxu0
        %v3163 = vadd.f32 %v2650, %v3162
        %v3164 = vpop.f32.mrb[0].mxu0
        %v3165 = vadd.f32 %v2652, %v3164
        %v3166 = vpop.f32.mrb[0].mxu0
        %v3167 = vadd.f32 %v2654, %v3166
        %v3168 = vpop.f32.mrb[0].mxu0
        %v3169 = vadd.f32 %v2656, %v3168
        %3170 = vmatprep.mubr.bf16.mxu0 %v2819
        %3171 = vmatmul.mubr.bf16.gmra.mrb[0].mxu0 %v2818
        %v3172 = vpop.f32.mrb[0].mxu0
        %v3173 = vadd.f32 %v2660, %v3172
        %v3174 = vpop.f32.mrb[0].mxu0
        %v3175 = vadd.f32 %v2662, %v3174
        %v3176 = vpop.f32.mrb[0].mxu0
        %v3177 = vadd.f32 %v2664, %v3176
        %v3178 = vpop.f32.mrb[0].mxu0
        %v3179 = vadd.f32 %v2666, %v3178
        %3180 = vmatprep.mubr.bf16.mxu0 %v2821
        %3181 = vmatmul.mubr.bf16.gmra.mrb[0].mxu0 %v2820
        %v3182 = vpop.f32.mrb[0].mxu0
        %v3183 = vadd.f32 %v2670, %v3182
        %v3184 = vpop.f32.mrb[0].mxu0
        %v3185 = vadd.f32 %v2672, %v3184
        %v3186 = vpop.f32.mrb[0].mxu0
        %v3187 = vadd.f32 %v2674, %v3186
        %v3188 = vpop.f32.mrb[0].mxu0
        %v3189 = vadd.f32 %v2676, %v3188
        %3190 = vmatprep.mubr.bf16.mxu0 %v2823
        %3191 = vmatmul.mubr.bf16.gmra.mrb[0].mxu0 %v2822
        %v3192 = vpop.f32.mrb[0].mxu0
        %v3193 = vadd.f32 %v2680, %v3192
        %v3194 = vpop.f32.mrb[0].mxu0
        %v3195 = vadd.f32 %v2682, %v3194
        %v3196 = vpop.f32.mrb[0].mxu0
        %v3197 = vadd.f32 %v2684, %v3196
        %v3198 = vpop.f32.mrb[0].mxu0
        %v3199 = vadd.f32 %v2686, %v3198
        %3200 = vmatprep.mubr.bf16.mxu0 %v2825
        %3201 = vmatmul.mubr.bf16.gmra.mrb[0].mxu0 %v2824
        %v3202 = vpop.f32.mrb[0].mxu0
        %v3203 = vadd.f32 %v2690, %v3202
        %v3204 = vpop.f32.mrb[0].mxu0
        %v3205 = vadd.f32 %v2692, %v3204
        %v3206 = vpop.f32.mrb[0].mxu0
        %v3207 = vadd.f32 %v2694, %v3206
        %v3208 = vpop.f32.mrb[0].mxu0
        %v3209 = vadd.f32 %v2696, %v3208
        %3210 = vdwg.mxu0
        %v3211 = vld [vmem:[#allocation2] sm:$0xee]
        %v3212 = vld [vmem:[#allocation2 + $0x18] sm:$0xee]
        %v3213 = vld [vmem:[#allocation2 + $0x30] sm:$0xee]
        %v3214 = vld [vmem:[#allocation2 + $0x48] sm:$0xee]
        %v3215 = vld [vmem:[#allocation2 + $0x60] sm:$0xee]
        %v3216 = vld [vmem:[#allocation2 + $0x78] sm:$0xee]
        %v3217 = vld [vmem:[#allocation2 + $0x90] sm:$0xee]
        %v3218 = vld [vmem:[#allocation2 + $0xa8] sm:$0xee]
        %v3219 = vld [vmem:[#allocation2 + $0xc0] sm:$0xee]
        %v3220 = vld [vmem:[#allocation2 + $0xd8] sm:$0xee]
        %v3221 = vld [vmem:[#allocation2 + $0xf0] sm:$0xee]
        %v3222 = vld [vmem:[#allocation2 + $0x108] sm:$0xee]
        %v3223 = vld [vmem:[#allocation2 + $0x120] sm:$0xee]
        %v3224 = vld [vmem:[#allocation2 + $0x138] sm:$0xee]
        %v3225 = vld [vmem:[#allocation2 + $0x150] sm:$0xee]
        %v3226 = vld [vmem:[#allocation2 + $0x168] sm:$0xee]
        %vm3259 = vcmask 1042432
        %vm3260 = vcmask 1046532
        %vm3261 = vmor %vm3259, %vm3260
        %v3262 = vrot.slane %v3211, 5
        %v3263 = vrot.slane %v3262, 4
        %v3264 = vrot.slane %v1718, 5
        %v3265 = vsel %vm3261, %v3263, %v3264
        %v3266 = vrot.slane %v3264, 4
        %v3267 = vrot.slane %v1781, 5
        %v3268 = vsel %vm3261, %v3266, %v3267
        %v3269 = vrot.slane %v3212, 5
        %v3270 = vrot.slane %v3269, 4
        %v3271 = vrot.slane %v1720, 5
        %v3272 = vsel %vm3261, %v3270, %v3271
        %v3273 = vrot.slane %v3271, 4
        %v3274 = vrot.slane %v1782, 5
        %v3275 = vsel %vm3261, %v3273, %v3274
        %v3276 = vrot.slane %v3213, 5
        %v3277 = vrot.slane %v3276, 4
        %v3278 = vrot.slane %v1722, 5
        %v3279 = vsel %vm3261, %v3277, %v3278
        %v3280 = vrot.slane %v3278, 4
        %v3281 = vrot.slane %v1783, 5
        %v3282 = vsel %vm3261, %v3280, %v3281
        %v3283 = vrot.slane %v3214, 5
        %v3284 = vrot.slane %v3283, 4
        %v3285 = vrot.slane %v1724, 5
        %v3286 = vsel %vm3261, %v3284, %v3285
        %v3287 = vrot.slane %v3285, 4
        %v3288 = vrot.slane %v1784, 5
        %v3289 = vsel %vm3261, %v3287, %v3288
        %v3290 = vrot.slane %v3215, 5
        %v3291 = vrot.slane %v3290, 4
        %v3292 = vrot.slane %v1726, 5
        %v3293 = vsel %vm3261, %v3291, %v3292
        %v3294 = vrot.slane %v3292, 4
        %v3295 = vrot.slane %v1785, 5
        %v3296 = vsel %vm3261, %v3294, %v3295
        %v3297 = vrot.slane %v3216, 5
        %v3298 = vrot.slane %v3297, 4
        %v3299 = vrot.slane %v1728, 5
        %v3300 = vsel %vm3261, %v3298, %v3299
        %v3301 = vrot.slane %v3299, 4
        %v3302 = vrot.slane %v1786, 5
        %v3303 = vsel %vm3261, %v3301, %v3302
        %v3304 = vrot.slane %v3217, 5
        %v3305 = vrot.slane %v3304, 4
        %v3306 = vrot.slane %v1730, 5
        %v3307 = vsel %vm3261, %v3305, %v3306
        %v3308 = vrot.slane %v3306, 4
        %v3309 = vrot.slane %v1787, 5
        %v3310 = vsel %vm3261, %v3308, %v3309
        %v3311 = vrot.slane %v3218, 5
        %v3312 = vrot.slane %v3311, 4
        %v3313 = vrot.slane %v1732, 5
        %v3314 = vsel %vm3261, %v3312, %v3313
        %v3315 = vrot.slane %v3313, 4
        %v3316 = vrot.slane %v1788, 5
        %v3317 = vsel %vm3261, %v3315, %v3316
        %v3318 = vrot.slane %v3219, 5
        %v3319 = vrot.slane %v3318, 4
        %v3320 = vrot.slane %v1734, 5
        %v3321 = vsel %vm3261, %v3319, %v3320
        %v3322 = vrot.slane %v3320, 4
        %v3323 = vrot.slane %v1789, 5
        %v3324 = vsel %vm3261, %v3322, %v3323
        %v3325 = vrot.slane %v3220, 5
        %v3326 = vrot.slane %v3325, 4
        %v3327 = vrot.slane %v1736, 5
        %v3328 = vsel %vm3261, %v3326, %v3327
        %v3329 = vrot.slane %v3327, 4
        %v3330 = vrot.slane %v1790, 5
        %v3331 = vsel %vm3261, %v3329, %v3330
        %v3332 = vrot.slane %v3221, 5
        %v3333 = vrot.slane %v3332, 4
        %v3334 = vrot.slane %v1738, 5
        %v3335 = vsel %vm3261, %v3333, %v3334
        %v3336 = vrot.slane %v3334, 4
        %v3337 = vrot.slane %v1791, 5
        %v3338 = vsel %vm3261, %v3336, %v3337
        %v3339 = vrot.slane %v3222, 5
        %v3340 = vrot.slane %v3339, 4
        %v3341 = vrot.slane %v1740, 5
        %v3342 = vsel %vm3261, %v3340, %v3341
        %v3343 = vrot.slane %v3341, 4
        %v3344 = vrot.slane %v1792, 5
        %v3345 = vsel %vm3261, %v3343, %v3344
        %v3346 = vrot.slane %v3223, 5
        %v3347 = vrot.slane %v3346, 4
        %v3348 = vrot.slane %v1742, 5
        %v3349 = vsel %vm3261, %v3347, %v3348
        %v3350 = vrot.slane %v3348, 4
        %v3351 = vrot.slane %v1793, 5
        %v3352 = vsel %vm3261, %v3350, %v3351
        %v3353 = vrot.slane %v3224, 5
        %v3354 = vrot.slane %v3353, 4
        %v3355 = vrot.slane %v1744, 5
        %v3356 = vsel %vm3261, %v3354, %v3355
        %v3357 = vrot.slane %v3355, 4
        %v3358 = vrot.slane %v1794, 5
        %v3359 = vsel %vm3261, %v3357, %v3358
        %v3360 = vrot.slane %v3225, 5
        %v3361 = vrot.slane %v3360, 4
        %v3362 = vrot.slane %v1746, 5
        %v3363 = vsel %vm3261, %v3361, %v3362
        %v3364 = vrot.slane %v3362, 4
        %v3365 = vrot.slane %v1795, 5
        %v3366 = vsel %vm3261, %v3364, %v3365
        %v3367 = vrot.slane %v3226, 5
        %v3368 = vrot.slane %v3367, 4
        %v3369 = vrot.slane %v1748, 5
        %v3370 = vsel %vm3261, %v3368, %v3369
        %v3371 = vrot.slane %v3369, 4
        %v3372 = vrot.slane %v1796, 5
        %v3373 = vsel %vm3261, %v3371, %v3372
        %s3374 = scalar_lea.vmem [#allocation9], 512
        %v3375 = vld [vmem:[%s3374] sm:$0xff]
        %v3376 = vld [vmem:[%s3374 + $0x8] sm:$0xff]
        %v3377 = vld [vmem:[%s3374 + $0x10] sm:$0xff]
        %v3378 = vld [vmem:[%s3374 + $0x18] sm:$0xff]
        %v3379 = vld [vmem:[%s3374 + $0x20] sm:$0xff]
        %v3380 = vld [vmem:[%s3374 + $0x28] sm:$0xff]
        %v3381 = vld [vmem:[%s3374 + $0x30] sm:$0xff]
        %v3382 = vld [vmem:[%s3374 + $0x38] sm:$0xff]
        %v3383 = vld [vmem:[%s3374 + $0x40] sm:$0xff]
        %v3384 = vld [vmem:[%s3374 + $0x48] sm:$0xff]
        %v3385 = vld [vmem:[%s3374 + $0x50] sm:$0xff]
        %v3386 = vld [vmem:[%s3374 + $0x58] sm:$0xff]
        %v3387 = vld [vmem:[%s3374 + $0x60] sm:$0xff]
        %v3388 = vld [vmem:[%s3374 + $0x68] sm:$0xff]
        %v3389 = vld [vmem:[%s3374 + $0x70] sm:$0xff]
        %v3390 = vld [vmem:[%s3374 + $0x78] sm:$0xff]
        %v3391 = vld [vmem:[%s3374 + $0x80] sm:$0xff]
        %v3392 = vld [vmem:[%s3374 + $0x88] sm:$0xff]
        %v3393 = vld [vmem:[%s3374 + $0x90] sm:$0xff]
        %v3394 = vld [vmem:[%s3374 + $0x98] sm:$0xff]
        %v3395 = vld [vmem:[%s3374 + $0xa0] sm:$0xff]
        %v3396 = vld [vmem:[%s3374 + $0xa8] sm:$0xff]
        %v3397 = vld [vmem:[%s3374 + $0xb0] sm:$0xff]
        %v3398 = vld [vmem:[%s3374 + $0xb8] sm:$0xff]
        %v3399 = vld [vmem:[%s3374 + $0xc0] sm:$0xff]
        %v3400 = vld [vmem:[%s3374 + $0xc8] sm:$0xff]
        %v3401 = vld [vmem:[%s3374 + $0xd0] sm:$0xff]
        %v3402 = vld [vmem:[%s3374 + $0xd8] sm:$0xff]
        %v3403 = vld [vmem:[%s3374 + $0xe0] sm:$0xff]
        %v3404 = vld [vmem:[%s3374 + $0xe8] sm:$0xff]
        %v3405 = vld [vmem:[%s3374 + $0xf0] sm:$0xff]
        %v3406 = vld [vmem:[%s3374 + $0xf8] sm:$0xff]
        %v3407 = vunpack.c.l.b16 %v3265
        %v3408 = vunpack.c.h.b16 %v3265
        %v3409 = vunpack.c.l.b16 %v3268
        %v3410 = vunpack.c.h.b16 %v3268
        %v3411 = vunpack.c.l.b16 %v3272
        %v3412 = vunpack.c.h.b16 %v3272
        %v3413 = vunpack.c.l.b16 %v3275
        %v3414 = vunpack.c.h.b16 %v3275
        %v3415 = vunpack.c.l.b16 %v3279
        %v3416 = vunpack.c.h.b16 %v3279
        %v3417 = vunpack.c.l.b16 %v3282
        %v3418 = vunpack.c.h.b16 %v3282
        %v3419 = vunpack.c.l.b16 %v3286
        %v3420 = vunpack.c.h.b16 %v3286
        %v3421 = vunpack.c.l.b16 %v3289
        %v3422 = vunpack.c.h.b16 %v3289
        %v3423 = vunpack.c.l.b16 %v3293
        %v3424 = vunpack.c.h.b16 %v3293
        %v3425 = vunpack.c.l.b16 %v3296
        %v3426 = vunpack.c.h.b16 %v3296
        %v3427 = vunpack.c.l.b16 %v3300
        %v3428 = vunpack.c.h.b16 %v3300
        %v3429 = vunpack.c.l.b16 %v3303
        %v3430 = vunpack.c.h.b16 %v3303
        %v3431 = vunpack.c.l.b16 %v3307
        %v3432 = vunpack.c.h.b16 %v3307
        %v3433 = vunpack.c.l.b16 %v3310
        %v3434 = vunpack.c.h.b16 %v3310
        %v3435 = vunpack.c.l.b16 %v3314
        %v3436 = vunpack.c.h.b16 %v3314
        %v3437 = vunpack.c.l.b16 %v3317
        %v3438 = vunpack.c.h.b16 %v3317
        %v3439 = vunpack.c.l.b16 %v3321
        %v3440 = vunpack.c.h.b16 %v3321
        %v3441 = vunpack.c.l.b16 %v3324
        %v3442 = vunpack.c.h.b16 %v3324
        %v3443 = vunpack.c.l.b16 %v3328
        %v3444 = vunpack.c.h.b16 %v3328
        %v3445 = vunpack.c.l.b16 %v3331
        %v3446 = vunpack.c.h.b16 %v3331
        %v3447 = vunpack.c.l.b16 %v3335
        %v3448 = vunpack.c.h.b16 %v3335
        %v3449 = vunpack.c.l.b16 %v3338
        %v3450 = vunpack.c.h.b16 %v3338
        %v3451 = vunpack.c.l.b16 %v3342
        %v3452 = vunpack.c.h.b16 %v3342
        %v3453 = vunpack.c.l.b16 %v3345
        %v3454 = vunpack.c.h.b16 %v3345
        %v3455 = vunpack.c.l.b16 %v3349
        %v3456 = vunpack.c.h.b16 %v3349
        %v3457 = vunpack.c.l.b16 %v3352
        %v3458 = vunpack.c.h.b16 %v3352
        %v3459 = vunpack.c.l.b16 %v3356
        %v3460 = vunpack.c.h.b16 %v3356
        %v3461 = vunpack.c.l.b16 %v3359
        %v3462 = vunpack.c.h.b16 %v3359
        %v3463 = vunpack.c.l.b16 %v3363
        %v3464 = vunpack.c.h.b16 %v3363
        %v3465 = vunpack.c.l.b16 %v3366
        %v3466 = vunpack.c.h.b16 %v3366
        %v3467 = vunpack.c.l.b16 %v3370
        %v3468 = vunpack.c.h.b16 %v3370
        %v3469 = vunpack.c.l.b16 %v3373
        %v3470 = vunpack.c.h.b16 %v3373
        %v3471 = vpack.c.b16 %v3409, %v3407
        %v3472 = vpack.c.b16 %v3410, %v3408
        %v3473 = vpack.c.b16 %v3413, %v3411
        %v3474 = vpack.c.b16 %v3414, %v3412
        %v3475 = vpack.c.b16 %v3417, %v3415
        %v3476 = vpack.c.b16 %v3418, %v3416
        %v3477 = vpack.c.b16 %v3421, %v3419
        %v3478 = vpack.c.b16 %v3422, %v3420
        %v3479 = vpack.c.b16 %v3425, %v3423
        %v3480 = vpack.c.b16 %v3426, %v3424
        %v3481 = vpack.c.b16 %v3429, %v3427
        %v3482 = vpack.c.b16 %v3430, %v3428
        %v3483 = vpack.c.b16 %v3433, %v3431
        %v3484 = vpack.c.b16 %v3434, %v3432
        %v3485 = vpack.c.b16 %v3437, %v3435
        %v3486 = vpack.c.b16 %v3438, %v3436
        %v3487 = vpack.c.b16 %v3441, %v3439
        %v3488 = vpack.c.b16 %v3442, %v3440
        %v3489 = vpack.c.b16 %v3445, %v3443
        %v3490 = vpack.c.b16 %v3446, %v3444
        %v3491 = vpack.c.b16 %v3449, %v3447
        %v3492 = vpack.c.b16 %v3450, %v3448
        %v3493 = vpack.c.b16 %v3453, %v3451
        %v3494 = vpack.c.b16 %v3454, %v3452
        %v3495 = vpack.c.b16 %v3457, %v3455
        %v3496 = vpack.c.b16 %v3458, %v3456
        %v3497 = vpack.c.b16 %v3461, %v3459
        %v3498 = vpack.c.b16 %v3462, %v3460
        %v3499 = vpack.c.b16 %v3465, %v3463
        %v3500 = vpack.c.b16 %v3466, %v3464
        %v3501 = vpack.c.b16 %v3469, %v3467
        %v3502 = vpack.c.b16 %v3470, %v3468
        %v3567 = vunpack.c.l.b16 %v3375
        %v3568 = vunpack.c.h.b16 %v3375
        %v3569 = vunpack.c.l.b16 %v3376
        %v3570 = vunpack.c.h.b16 %v3376
        %v3571 = vunpack.c.l.b16 %v3377
        %v3572 = vunpack.c.h.b16 %v3377
        %v3573 = vunpack.c.l.b16 %v3378
        %v3574 = vunpack.c.h.b16 %v3378
        %v3575 = vunpack.c.l.b16 %v3379
        %v3576 = vunpack.c.h.b16 %v3379
        %v3577 = vunpack.c.l.b16 %v3380
        %v3578 = vunpack.c.h.b16 %v3380
        %v3579 = vunpack.c.l.b16 %v3381
        %v3580 = vunpack.c.h.b16 %v3381
        %v3581 = vunpack.c.l.b16 %v3382
        %v3582 = vunpack.c.h.b16 %v3382
        %v3583 = vunpack.c.l.b16 %v3383
        %v3584 = vunpack.c.h.b16 %v3383
        %v3585 = vunpack.c.l.b16 %v3384
        %v3586 = vunpack.c.h.b16 %v3384
        %v3587 = vunpack.c.l.b16 %v3385
        %v3588 = vunpack.c.h.b16 %v3385
        %v3589 = vunpack.c.l.b16 %v3386
        %v3590 = vunpack.c.h.b16 %v3386
        %v3591 = vunpack.c.l.b16 %v3387
        %v3592 = vunpack.c.h.b16 %v3387
        %v3593 = vunpack.c.l.b16 %v3388
        %v3594 = vunpack.c.h.b16 %v3388
        %v3595 = vunpack.c.l.b16 %v3389
        %v3596 = vunpack.c.h.b16 %v3389
        %v3597 = vunpack.c.l.b16 %v3390
        %v3598 = vunpack.c.h.b16 %v3390
        %v3599 = vunpack.c.l.b16 %v3391
        %v3600 = vunpack.c.h.b16 %v3391
        %v3601 = vunpack.c.l.b16 %v3392
        %v3602 = vunpack.c.h.b16 %v3392
        %v3603 = vunpack.c.l.b16 %v3393
        %v3604 = vunpack.c.h.b16 %v3393
        %v3605 = vunpack.c.l.b16 %v3394
        %v3606 = vunpack.c.h.b16 %v3394
        %v3607 = vunpack.c.l.b16 %v3395
        %v3608 = vunpack.c.h.b16 %v3395
        %v3609 = vunpack.c.l.b16 %v3396
        %v3610 = vunpack.c.h.b16 %v3396
        %v3611 = vunpack.c.l.b16 %v3397
        %v3612 = vunpack.c.h.b16 %v3397
        %v3613 = vunpack.c.l.b16 %v3398
        %v3614 = vunpack.c.h.b16 %v3398
        %v3615 = vunpack.c.l.b16 %v3399
        %v3616 = vunpack.c.h.b16 %v3399
        %v3617 = vunpack.c.l.b16 %v3400
        %v3618 = vunpack.c.h.b16 %v3400
        %v3619 = vunpack.c.l.b16 %v3401
        %v3620 = vunpack.c.h.b16 %v3401
        %v3621 = vunpack.c.l.b16 %v3402
        %v3622 = vunpack.c.h.b16 %v3402
        %v3623 = vunpack.c.l.b16 %v3403
        %v3624 = vunpack.c.h.b16 %v3403
        %v3625 = vunpack.c.l.b16 %v3404
        %v3626 = vunpack.c.h.b16 %v3404
        %v3627 = vunpack.c.l.b16 %v3405
        %v3628 = vunpack.c.h.b16 %v3405
        %v3629 = vunpack.c.l.b16 %v3406
        %v3630 = vunpack.c.h.b16 %v3406
        %v3631 = vpack.c.b16 %v3569, %v3567
        %v3632 = vpack.c.b16 %v3570, %v3568
        %v3633 = vpack.c.b16 %v3573, %v3571
        %v3634 = vpack.c.b16 %v3574, %v3572
        %v3635 = vpack.c.b16 %v3577, %v3575
        %v3636 = vpack.c.b16 %v3578, %v3576
        %v3637 = vpack.c.b16 %v3581, %v3579
        %v3638 = vpack.c.b16 %v3582, %v3580
        %v3639 = vpack.c.b16 %v3585, %v3583
        %v3640 = vpack.c.b16 %v3586, %v3584
        %v3641 = vpack.c.b16 %v3589, %v3587
        %v3642 = vpack.c.b16 %v3590, %v3588
        %v3643 = vpack.c.b16 %v3593, %v3591
        %v3644 = vpack.c.b16 %v3594, %v3592
        %v3645 = vpack.c.b16 %v3597, %v3595
        %v3646 = vpack.c.b16 %v3598, %v3596
        %v3647 = vpack.c.b16 %v3601, %v3599
        %v3648 = vpack.c.b16 %v3602, %v3600
        %v3649 = vpack.c.b16 %v3605, %v3603
        %v3650 = vpack.c.b16 %v3606, %v3604
        %v3651 = vpack.c.b16 %v3609, %v3607
        %v3652 = vpack.c.b16 %v3610, %v3608
        %v3653 = vpack.c.b16 %v3613, %v3611
        %v3654 = vpack.c.b16 %v3614, %v3612
        %v3655 = vpack.c.b16 %v3617, %v3615
        %v3656 = vpack.c.b16 %v3618, %v3616
        %v3657 = vpack.c.b16 %v3621, %v3619
        %v3658 = vpack.c.b16 %v3622, %v3620
        %v3659 = vpack.c.b16 %v3625, %v3623
        %v3660 = vpack.c.b16 %v3626, %v3624
        %v3661 = vpack.c.b16 %v3629, %v3627
        %v3662 = vpack.c.b16 %v3630, %v3628
        %3695 = vmatprep.subr.bf16.mxu0 %v3632
        %3696 = vmatpush1.bf16.msra.mxu0 %v3631
        %3697 = vmatprep.subr.bf16.mxu0 %v3634
        %3698 = vmatpush1.bf16.msra.mxu0 %v3633
        %3699 = vmatprep.subr.bf16.mxu0 %v3636
        %3700 = vmatpush1.bf16.msra.mxu0 %v3635
        %3701 = vmatprep.subr.bf16.mxu0 %v3638
        %3702 = vmatpush1.bf16.msra.mxu0 %v3637
        %3703 = vmatprep.subr.bf16.mxu0 %v3640
        %3704 = vmatpush1.bf16.msra.mxu0 %v3639
        %3705 = vmatprep.subr.bf16.mxu0 %v3642
        %3706 = vmatpush1.bf16.msra.mxu0 %v3641
        %3707 = vmatprep.subr.bf16.mxu0 %v3644
        %3708 = vmatpush1.bf16.msra.mxu0 %v3643
        %3709 = vmatprep.subr.bf16.mxu0 %v3646
        %3710 = vmatpush1.bf16.msra.mxu0 %v3645
        %3711 = vmatprep.subr.bf16.mxu0 %v3648
        %3712 = vmatpush1.bf16.msra.mxu0 %v3647
        %3713 = vmatprep.subr.bf16.mxu0 %v3650
        %3714 = vmatpush1.bf16.msra.mxu0 %v3649
        %3715 = vmatprep.subr.bf16.mxu0 %v3652
        %3716 = vmatpush1.bf16.msra.mxu0 %v3651
        %3717 = vmatprep.subr.bf16.mxu0 %v3654
        %3718 = vmatpush1.bf16.msra.mxu0 %v3653
        %3719 = vmatprep.subr.bf16.mxu0 %v3656
        %3720 = vmatpush1.bf16.msra.mxu0 %v3655
        %3721 = vmatprep.subr.bf16.mxu0 %v3658
        %3722 = vmatpush1.bf16.msra.mxu0 %v3657
        %3723 = vmatprep.subr.bf16.mxu0 %v3660
        %3724 = vmatpush1.bf16.msra.mxu0 %v3659
        %3725 = vmatprep.subr.bf16.mxu0 %v3662
        %3726 = vmatpush1.bf16.msra.mxu0 %v3661
        %3727 = vmatprep.mubr.bf16.mxu0 %v3472
        %3728 = vmatmul.mubr.bf16.gmra.mrb[0].mxu0 %v3471
        %v3729 = vpop.f32.mrb[0].mxu0
        %v3730 = vadd.f32 0.0, %v3729
        %v3731 = vpop.f32.mrb[0].mxu0
        %v3732 = vadd.f32 0.0, %v3731
        %v3733 = vpop.f32.mrb[0].mxu0
        %v3734 = vadd.f32 0.0, %v3733
        %v3735 = vpop.f32.mrb[0].mxu0
        %v3736 = vadd.f32 0.0, %v3735
        %3737 = vmatprep.mubr.bf16.mxu0 %v3474
        %3738 = vmatmul.mubr.bf16.gmra.mrb[0].mxu0 %v3473
        %v3739 = vpop.f32.mrb[0].mxu0
        %v3740 = vadd.f32 0.0, %v3739
        %v3741 = vpop.f32.mrb[0].mxu0
        %v3742 = vadd.f32 0.0, %v3741
        %v3743 = vpop.f32.mrb[0].mxu0
        %v3744 = vadd.f32 0.0, %v3743
        %v3745 = vpop.f32.mrb[0].mxu0
        %v3746 = vadd.f32 0.0, %v3745
        %3747 = vmatprep.mubr.bf16.mxu0 %v3476
        %3748 = vmatmul.mubr.bf16.gmra.mrb[0].mxu0 %v3475
        %v3749 = vpop.f32.mrb[0].mxu0
        %v3750 = vadd.f32 0.0, %v3749
        %v3751 = vpop.f32.mrb[0].mxu0
        %v3752 = vadd.f32 0.0, %v3751
        %v3753 = vpop.f32.mrb[0].mxu0
        %v3754 = vadd.f32 0.0, %v3753
        %v3755 = vpop.f32.mrb[0].mxu0
        %v3756 = vadd.f32 0.0, %v3755
        %3757 = vmatprep.mubr.bf16.mxu0 %v3478
        %3758 = vmatmul.mubr.bf16.gmra.mrb[0].mxu0 %v3477
        %v3759 = vpop.f32.mrb[0].mxu0
        %v3760 = vadd.f32 0.0, %v3759
        %v3761 = vpop.f32.mrb[0].mxu0
        %v3762 = vadd.f32 0.0, %v3761
        %v3763 = vpop.f32.mrb[0].mxu0
        %v3764 = vadd.f32 0.0, %v3763
        %v3765 = vpop.f32.mrb[0].mxu0
        %v3766 = vadd.f32 0.0, %v3765
        %3767 = vmatprep.mubr.bf16.mxu0 %v3480
        %3768 = vmatmul.mubr.bf16.gmra.mrb[0].mxu0 %v3479
        %v3769 = vpop.f32.mrb[0].mxu0
        %v3770 = vadd.f32 0.0, %v3769
        %v3771 = vpop.f32.mrb[0].mxu0
        %v3772 = vadd.f32 0.0, %v3771
        %v3773 = vpop.f32.mrb[0].mxu0
        %v3774 = vadd.f32 0.0, %v3773
        %v3775 = vpop.f32.mrb[0].mxu0
        %v3776 = vadd.f32 0.0, %v3775
        %3777 = vmatprep.mubr.bf16.mxu0 %v3482
        %3778 = vmatmul.mubr.bf16.gmra.mrb[0].mxu0 %v3481
        %v3779 = vpop.f32.mrb[0].mxu0
        %v3780 = vadd.f32 0.0, %v3779
        %v3781 = vpop.f32.mrb[0].mxu0
        %v3782 = vadd.f32 0.0, %v3781
        %v3783 = vpop.f32.mrb[0].mxu0
        %v3784 = vadd.f32 0.0, %v3783
        %v3785 = vpop.f32.mrb[0].mxu0
        %v3786 = vadd.f32 0.0, %v3785
        %3787 = vmatprep.mubr.bf16.mxu0 %v3484
        %3788 = vmatmul.mubr.bf16.gmra.mrb[0].mxu0 %v3483
        %v3789 = vpop.f32.mrb[0].mxu0
        %v3790 = vadd.f32 0.0, %v3789
        %v3791 = vpop.f32.mrb[0].mxu0
        %v3792 = vadd.f32 0.0, %v3791
        %v3793 = vpop.f32.mrb[0].mxu0
        %v3794 = vadd.f32 0.0, %v3793
        %v3795 = vpop.f32.mrb[0].mxu0
        %v3796 = vadd.f32 0.0, %v3795
        %3797 = vmatprep.mubr.bf16.mxu0 %v3486
        %3798 = vmatmul.mubr.bf16.gmra.mrb[0].mxu0 %v3485
        %v3799 = vpop.f32.mrb[0].mxu0
        %v3800 = vadd.f32 0.0, %v3799
        %v3801 = vpop.f32.mrb[0].mxu0
        %v3802 = vadd.f32 0.0, %v3801
        %v3803 = vpop.f32.mrb[0].mxu0
        %v3804 = vadd.f32 0.0, %v3803
        %v3805 = vpop.f32.mrb[0].mxu0
        %v3806 = vadd.f32 0.0, %v3805
        %3807 = vmatprep.mubr.bf16.mxu0 %v3488
        %3808 = vmatmul.mubr.bf16.gmra.mrb[0].mxu0 %v3487
        %v3809 = vpop.f32.mrb[0].mxu0
        %v3810 = vadd.f32 0.0, %v3809
        %v3811 = vpop.f32.mrb[0].mxu0
        %v3812 = vadd.f32 0.0, %v3811
        %v3813 = vpop.f32.mrb[0].mxu0
        %v3814 = vadd.f32 0.0, %v3813
        %v3815 = vpop.f32.mrb[0].mxu0
        %v3816 = vadd.f32 0.0, %v3815
        %3817 = vmatprep.mubr.bf16.mxu0 %v3490
        %3818 = vmatmul.mubr.bf16.gmra.mrb[0].mxu0 %v3489
        %v3819 = vpop.f32.mrb[0].mxu0
        %v3820 = vadd.f32 0.0, %v3819
        %v3821 = vpop.f32.mrb[0].mxu0
        %v3822 = vadd.f32 0.0, %v3821
        %v3823 = vpop.f32.mrb[0].mxu0
        %v3824 = vadd.f32 0.0, %v3823
        %v3825 = vpop.f32.mrb[0].mxu0
        %v3826 = vadd.f32 0.0, %v3825
        %3827 = vmatprep.mubr.bf16.mxu0 %v3492
        %3828 = vmatmul.mubr.bf16.gmra.mrb[0].mxu0 %v3491
        %v3829 = vpop.f32.mrb[0].mxu0
        %v3830 = vadd.f32 0.0, %v3829
        %v3831 = vpop.f32.mrb[0].mxu0
        %v3832 = vadd.f32 0.0, %v3831
        %v3833 = vpop.f32.mrb[0].mxu0
        %v3834 = vadd.f32 0.0, %v3833
        %v3835 = vpop.f32.mrb[0].mxu0
        %v3836 = vadd.f32 0.0, %v3835
        %3837 = vmatprep.mubr.bf16.mxu0 %v3494
        %3838 = vmatmul.mubr.bf16.gmra.mrb[0].mxu0 %v3493
        %v3839 = vpop.f32.mrb[0].mxu0
        %v3840 = vadd.f32 0.0, %v3839
        %v3841 = vpop.f32.mrb[0].mxu0
        %v3842 = vadd.f32 0.0, %v3841
        %v3843 = vpop.f32.mrb[0].mxu0
        %v3844 = vadd.f32 0.0, %v3843
        %v3845 = vpop.f32.mrb[0].mxu0
        %v3846 = vadd.f32 0.0, %v3845
        %3847 = vmatprep.mubr.bf16.mxu0 %v3496
        %3848 = vmatmul.mubr.bf16.gmra.mrb[0].mxu0 %v3495
        %v3849 = vpop.f32.mrb[0].mxu0
        %v3850 = vadd.f32 0.0, %v3849
        %v3851 = vpop.f32.mrb[0].mxu0
        %v3852 = vadd.f32 0.0, %v3851
        %v3853 = vpop.f32.mrb[0].mxu0
        %v3854 = vadd.f32 0.0, %v3853
        %v3855 = vpop.f32.mrb[0].mxu0
        %v3856 = vadd.f32 0.0, %v3855
        %3857 = vmatprep.mubr.bf16.mxu0 %v3498
        %3858 = vmatmul.mubr.bf16.gmra.mrb[0].mxu0 %v3497
        %v3859 = vpop.f32.mrb[0].mxu0
        %v3860 = vadd.f32 0.0, %v3859
        %v3861 = vpop.f32.mrb[0].mxu0
        %v3862 = vadd.f32 0.0, %v3861
        %v3863 = vpop.f32.mrb[0].mxu0
        %v3864 = vadd.f32 0.0, %v3863
        %v3865 = vpop.f32.mrb[0].mxu0
        %v3866 = vadd.f32 0.0, %v3865
        %3867 = vmatprep.mubr.bf16.mxu0 %v3500
        %3868 = vmatmul.mubr.bf16.gmra.mrb[0].mxu0 %v3499
        %v3869 = vpop.f32.mrb[0].mxu0
        %v3870 = vadd.f32 0.0, %v3869
        %v3871 = vpop.f32.mrb[0].mxu0
        %v3872 = vadd.f32 0.0, %v3871
        %v3873 = vpop.f32.mrb[0].mxu0
        %v3874 = vadd.f32 0.0, %v3873
        %v3875 = vpop.f32.mrb[0].mxu0
        %v3876 = vadd.f32 0.0, %v3875
        %3877 = vmatprep.mubr.bf16.mxu0 %v3502
        %3878 = vmatmul.mubr.bf16.gmra.mrb[0].mxu0 %v3501
        %v3879 = vpop.f32.mrb[0].mxu0
        %v3880 = vadd.f32 0.0, %v3879
        %v3881 = vpop.f32.mrb[0].mxu0
        %v3882 = vadd.f32 0.0, %v3881
        %v3883 = vpop.f32.mrb[0].mxu0
        %v3884 = vadd.f32 0.0, %v3883
        %v3885 = vpop.f32.mrb[0].mxu0
        %v3886 = vadd.f32 0.0, %v3885
        %3887 = vdwg.mxu0
        %v3888 = vadd.f32 %v3053, %v3730
        %v3889 = vadd.f32 %v3055, %v3732
        %v3890 = vadd.f32 %v3057, %v3734
        %v3891 = vadd.f32 %v3059, %v3736
        %v3892 = vadd.f32 %v3063, %v3740
        %v3893 = vadd.f32 %v3065, %v3742
        %v3894 = vadd.f32 %v3067, %v3744
        %v3895 = vadd.f32 %v3069, %v3746
        %v3896 = vadd.f32 %v3073, %v3750
        %v3897 = vadd.f32 %v3075, %v3752
        %v3898 = vadd.f32 %v3077, %v3754
        %v3899 = vadd.f32 %v3079, %v3756
        %v3900 = vadd.f32 %v3083, %v3760
        %v3901 = vadd.f32 %v3085, %v3762
        %v3902 = vadd.f32 %v3087, %v3764
        %v3903 = vadd.f32 %v3089, %v3766
        %v3904 = vadd.f32 %v3093, %v3770
        %v3905 = vadd.f32 %v3095, %v3772
        %v3906 = vadd.f32 %v3097, %v3774
        %v3907 = vadd.f32 %v3099, %v3776
        %v3908 = vadd.f32 %v3103, %v3780
        %v3909 = vadd.f32 %v3105, %v3782
        %v3910 = vadd.f32 %v3107, %v3784
        %v3911 = vadd.f32 %v3109, %v3786
        %v3912 = vadd.f32 %v3113, %v3790
        %v3913 = vadd.f32 %v3115, %v3792
        %v3914 = vadd.f32 %v3117, %v3794
        %v3915 = vadd.f32 %v3119, %v3796
        %v3916 = vadd.f32 %v3123, %v3800
        %v3917 = vadd.f32 %v3125, %v3802
        %v3918 = vadd.f32 %v3127, %v3804
        %v3919 = vadd.f32 %v3129, %v3806
        %v3920 = vadd.f32 %v3133, %v3810
        %v3921 = vadd.f32 %v3135, %v3812
        %v3922 = vadd.f32 %v3137, %v3814
        %v3923 = vadd.f32 %v3139, %v3816
        %v3924 = vadd.f32 %v3143, %v3820
        %v3925 = vadd.f32 %v3145, %v3822
        %v3926 = vadd.f32 %v3147, %v3824
        %v3927 = vadd.f32 %v3149, %v3826
        %v3928 = vadd.f32 %v3153, %v3830
        %v3929 = vadd.f32 %v3155, %v3832
        %v3930 = vadd.f32 %v3157, %v3834
        %v3931 = vadd.f32 %v3159, %v3836
        %v3932 = vadd.f32 %v3163, %v3840
        %v3933 = vadd.f32 %v3165, %v3842
        %v3934 = vadd.f32 %v3167, %v3844
        %v3935 = vadd.f32 %v3169, %v3846
        %v3936 = vadd.f32 %v3173, %v3850
        %v3937 = vadd.f32 %v3175, %v3852
        %v3938 = vadd.f32 %v3177, %v3854
        %v3939 = vadd.f32 %v3179, %v3856
        %v3940 = vadd.f32 %v3183, %v3860
        %v3941 = vadd.f32 %v3185, %v3862
        %v3942 = vadd.f32 %v3187, %v3864
        %v3943 = vadd.f32 %v3189, %v3866
        %v3944 = vadd.f32 %v3193, %v3870
        %v3945 = vadd.f32 %v3195, %v3872
        %v3946 = vadd.f32 %v3197, %v3874
        %v3947 = vadd.f32 %v3199, %v3876
        %v3948 = vadd.f32 %v3203, %v3880
        %v3949 = vadd.f32 %v3205, %v3882
        %v3950 = vadd.f32 %v3207, %v3884
        %v3951 = vadd.f32 %v3209, %v3886
        %s3952 = scalar_lea.vmem [#allocation2], 24
        %v3953 = vld [vmem:[%s3952] sm:$0xff]
        %v3954 = vld [vmem:[%s3952 + $0x8] sm:$0xff]
        %v3955 = vld [vmem:[%s3952 + $0x18] sm:$0xff]
        %v3956 = vld [vmem:[%s3952 + $0x20] sm:$0xff]
        %v3957 = vld [vmem:[%s3952 + $0x30] sm:$0xff]
        %v3958 = vld [vmem:[%s3952 + $0x38] sm:$0xff]
        %v3959 = vld [vmem:[%s3952 + $0x48] sm:$0xff]
        %v3960 = vld [vmem:[%s3952 + $0x50] sm:$0xff]
        %v3961 = vld [vmem:[%s3952 + $0x60] sm:$0xff]
        %v3962 = vld [vmem:[%s3952 + $0x68] sm:$0xff]
        %v3963 = vld [vmem:[%s3952 + $0x78] sm:$0xff]
        %v3964 = vld [vmem:[%s3952 + $0x80] sm:$0xff]
        %v3965 = vld [vmem:[%s3952 + $0x90] sm:$0xff]
        %v3966 = vld [vmem:[%s3952 + $0x98] sm:$0xff]
        %v3967 = vld [vmem:[%s3952 + $0xa8] sm:$0xff]
        %v3968 = vld [vmem:[%s3952 + $0xb0] sm:$0xff]
        %v3969 = vld [vmem:[%s3952 + $0xc0] sm:$0xff]
        %v3970 = vld [vmem:[%s3952 + $0xc8] sm:$0xff]
        %v3971 = vld [vmem:[%s3952 + $0xd8] sm:$0xff]
        %v3972 = vld [vmem:[%s3952 + $0xe0] sm:$0xff]
        %v3973 = vld [vmem:[%s3952 + $0xf0] sm:$0xff]
        %v3974 = vld [vmem:[%s3952 + $0xf8] sm:$0xff]
        %v3975 = vld [vmem:[%s3952 + $0x108] sm:$0xff]
        %v3976 = vld [vmem:[%s3952 + $0x110] sm:$0xff]
        %v3977 = vld [vmem:[%s3952 + $0x120] sm:$0xff]
        %v3978 = vld [vmem:[%s3952 + $0x128] sm:$0xff]
        %v3979 = vld [vmem:[%s3952 + $0x138] sm:$0xff]
        %v3980 = vld [vmem:[%s3952 + $0x140] sm:$0xff]
        %v3981 = vld [vmem:[%s3952 + $0x150] sm:$0xff]
        %v3982 = vld [vmem:[%s3952 + $0x158] sm:$0xff]
        %v3983 = vld [vmem:[%s3952 + $0x168] sm:$0xff]
        %v3984 = vld [vmem:[%s3952 + $0x170] sm:$0xff]
        %s3985 = scalar_lea.vmem [#allocation9], 768
        %v3986 = vld [vmem:[%s3985] sm:$0xff]
        %v3987 = vld [vmem:[%s3985 + $0x8] sm:$0xff]
        %v3988 = vld [vmem:[%s3985 + $0x10] sm:$0xff]
        %v3989 = vld [vmem:[%s3985 + $0x18] sm:$0xff]
        %v3990 = vld [vmem:[%s3985 + $0x20] sm:$0xff]
        %v3991 = vld [vmem:[%s3985 + $0x28] sm:$0xff]
        %v3992 = vld [vmem:[%s3985 + $0x30] sm:$0xff]
        %v3993 = vld [vmem:[%s3985 + $0x38] sm:$0xff]
        %v3994 = vld [vmem:[%s3985 + $0x40] sm:$0xff]
        %v3995 = vld [vmem:[%s3985 + $0x48] sm:$0xff]
        %v3996 = vld [vmem:[%s3985 + $0x50] sm:$0xff]
        %v3997 = vld [vmem:[%s3985 + $0x58] sm:$0xff]
        %v3998 = vld [vmem:[%s3985 + $0x60] sm:$0xff]
        %v3999 = vld [vmem:[%s3985 + $0x68] sm:$0xff]
        %v4000 = vld [vmem:[%s3985 + $0x70] sm:$0xff]
        %v4001 = vld [vmem:[%s3985 + $0x78] sm:$0xff]
        %v4002 = vld [vmem:[%s3985 + $0x80] sm:$0xff]
        %v4003 = vld [vmem:[%s3985 + $0x88] sm:$0xff]
        %v4004 = vld [vmem:[%s3985 + $0x90] sm:$0xff]
        %v4005 = vld [vmem:[%s3985 + $0x98] sm:$0xff]
        %v4006 = vld [vmem:[%s3985 + $0xa0] sm:$0xff]
        %v4007 = vld [vmem:[%s3985 + $0xa8] sm:$0xff]
        %v4008 = vld [vmem:[%s3985 + $0xb0] sm:$0xff]
        %v4009 = vld [vmem:[%s3985 + $0xb8] sm:$0xff]
        %v4010 = vld [vmem:[%s3985 + $0xc0] sm:$0xff]
        %v4011 = vld [vmem:[%s3985 + $0xc8] sm:$0xff]
        %v4012 = vld [vmem:[%s3985 + $0xd0] sm:$0xff]
        %v4013 = vld [vmem:[%s3985 + $0xd8] sm:$0xff]
        %v4014 = vld [vmem:[%s3985 + $0xe0] sm:$0xff]
        %v4015 = vld [vmem:[%s3985 + $0xe8] sm:$0xff]
        %v4016 = vld [vmem:[%s3985 + $0xf0] sm:$0xff]
        %v4017 = vld [vmem:[%s3985 + $0xf8] sm:$0xff]
        %v4050 = vunpack.c.l.b16 %v3953
        %v4051 = vunpack.c.h.b16 %v3953
        %v4052 = vunpack.c.l.b16 %v3954
        %v4053 = vunpack.c.h.b16 %v3954
        %v4054 = vunpack.c.l.b16 %v3955
        %v4055 = vunpack.c.h.b16 %v3955
        %v4056 = vunpack.c.l.b16 %v3956
        %v4057 = vunpack.c.h.b16 %v3956
        %v4058 = vunpack.c.l.b16 %v3957
        %v4059 = vunpack.c.h.b16 %v3957
        %v4060 = vunpack.c.l.b16 %v3958
        %v4061 = vunpack.c.h.b16 %v3958
        %v4062 = vunpack.c.l.b16 %v3959
        %v4063 = vunpack.c.h.b16 %v3959
        %v4064 = vunpack.c.l.b16 %v3960
        %v4065 = vunpack.c.h.b16 %v3960
        %v4066 = vunpack.c.l.b16 %v3961
        %v4067 = vunpack.c.h.b16 %v3961
        %v4068 = vunpack.c.l.b16 %v3962
        %v4069 = vunpack.c.h.b16 %v3962
        %v4070 = vunpack.c.l.b16 %v3963
        %v4071 = vunpack.c.h.b16 %v3963
        %v4072 = vunpack.c.l.b16 %v3964
        %v4073 = vunpack.c.h.b16 %v3964
        %v4074 = vunpack.c.l.b16 %v3965
        %v4075 = vunpack.c.h.b16 %v3965
        %v4076 = vunpack.c.l.b16 %v3966
        %v4077 = vunpack.c.h.b16 %v3966
        %v4078 = vunpack.c.l.b16 %v3967
        %v4079 = vunpack.c.h.b16 %v3967
        %v4080 = vunpack.c.l.b16 %v3968
        %v4081 = vunpack.c.h.b16 %v3968
        %v4082 = vunpack.c.l.b16 %v3969
        %v4083 = vunpack.c.h.b16 %v3969
        %v4084 = vunpack.c.l.b16 %v3970
        %v4085 = vunpack.c.h.b16 %v3970
        %v4086 = vunpack.c.l.b16 %v3971
        %v4087 = vunpack.c.h.b16 %v3971
        %v4088 = vunpack.c.l.b16 %v3972
        %v4089 = vunpack.c.h.b16 %v3972
        %v4090 = vunpack.c.l.b16 %v3973
        %v4091 = vunpack.c.h.b16 %v3973
        %v4092 = vunpack.c.l.b16 %v3974
        %v4093 = vunpack.c.h.b16 %v3974
        %v4094 = vunpack.c.l.b16 %v3975
        %v4095 = vunpack.c.h.b16 %v3975
        %v4096 = vunpack.c.l.b16 %v3976
        %v4097 = vunpack.c.h.b16 %v3976
        %v4098 = vunpack.c.l.b16 %v3977
        %v4099 = vunpack.c.h.b16 %v3977
        %v4100 = vunpack.c.l.b16 %v3978
        %v4101 = vunpack.c.h.b16 %v3978
        %v4102 = vunpack.c.l.b16 %v3979
        %v4103 = vunpack.c.h.b16 %v3979
        %v4104 = vunpack.c.l.b16 %v3980
        %v4105 = vunpack.c.h.b16 %v3980
        %v4106 = vunpack.c.l.b16 %v3981
        %v4107 = vunpack.c.h.b16 %v3981
        %v4108 = vunpack.c.l.b16 %v3982
        %v4109 = vunpack.c.h.b16 %v3982
        %v4110 = vunpack.c.l.b16 %v3983
        %v4111 = vunpack.c.h.b16 %v3983
        %v4112 = vunpack.c.l.b16 %v3984
        %v4113 = vunpack.c.h.b16 %v3984
        %v4114 = vpack.c.b16 %v4052, %v4050
        %v4115 = vpack.c.b16 %v4053, %v4051
        %v4116 = vpack.c.b16 %v4056, %v4054
        %v4117 = vpack.c.b16 %v4057, %v4055
        %v4118 = vpack.c.b16 %v4060, %v4058
        %v4119 = vpack.c.b16 %v4061, %v4059
        %v4120 = vpack.c.b16 %v4064, %v4062
        %v4121 = vpack.c.b16 %v4065, %v4063
        %v4122 = vpack.c.b16 %v4068, %v4066
        %v4123 = vpack.c.b16 %v4069, %v4067
        %v4124 = vpack.c.b16 %v4072, %v4070
        %v4125 = vpack.c.b16 %v4073, %v4071
        %v4126 = vpack.c.b16 %v4076, %v4074
        %v4127 = vpack.c.b16 %v4077, %v4075
        %v4128 = vpack.c.b16 %v4080, %v4078
        %v4129 = vpack.c.b16 %v4081, %v4079
        %v4130 = vpack.c.b16 %v4084, %v4082
        %v4131 = vpack.c.b16 %v4085, %v4083
        %v4132 = vpack.c.b16 %v4088, %v4086
        %v4133 = vpack.c.b16 %v4089, %v4087
        %v4134 = vpack.c.b16 %v4092, %v4090
        %v4135 = vpack.c.b16 %v4093, %v4091
        %v4136 = vpack.c.b16 %v4096, %v4094
        %v4137 = vpack.c.b16 %v4097, %v4095
        %v4138 = vpack.c.b16 %v4100, %v4098
        %v4139 = vpack.c.b16 %v4101, %v4099
        %v4140 = vpack.c.b16 %v4104, %v4102
        %v4141 = vpack.c.b16 %v4105, %v4103
        %v4142 = vpack.c.b16 %v4108, %v4106
        %v4143 = vpack.c.b16 %v4109, %v4107
        %v4144 = vpack.c.b16 %v4112, %v4110
        %v4145 = vpack.c.b16 %v4113, %v4111
        %v4210 = vunpack.c.l.b16 %v3986
        %v4211 = vunpack.c.h.b16 %v3986
        %v4212 = vunpack.c.l.b16 %v3987
        %v4213 = vunpack.c.h.b16 %v3987
        %v4214 = vunpack.c.l.b16 %v3988
        %v4215 = vunpack.c.h.b16 %v3988
        %v4216 = vunpack.c.l.b16 %v3989
        %v4217 = vunpack.c.h.b16 %v3989
        %v4218 = vunpack.c.l.b16 %v3990
        %v4219 = vunpack.c.h.b16 %v3990
        %v4220 = vunpack.c.l.b16 %v3991
        %v4221 = vunpack.c.h.b16 %v3991
        %v4222 = vunpack.c.l.b16 %v3992
        %v4223 = vunpack.c.h.b16 %v3992
        %v4224 = vunpack.c.l.b16 %v3993
        %v4225 = vunpack.c.h.b16 %v3993
        %v4226 = vunpack.c.l.b16 %v3994
        %v4227 = vunpack.c.h.b16 %v3994
        %v4228 = vunpack.c.l.b16 %v3995
        %v4229 = vunpack.c.h.b16 %v3995
        %v4230 = vunpack.c.l.b16 %v3996
        %v4231 = vunpack.c.h.b16 %v3996
        %v4232 = vunpack.c.l.b16 %v3997
        %v4233 = vunpack.c.h.b16 %v3997
        %v4234 = vunpack.c.l.b16 %v3998
        %v4235 = vunpack.c.h.b16 %v3998
        %v4236 = vunpack.c.l.b16 %v3999
        %v4237 = vunpack.c.h.b16 %v3999
        %v4238 = vunpack.c.l.b16 %v4000
        %v4239 = vunpack.c.h.b16 %v4000
        %v4240 = vunpack.c.l.b16 %v4001
        %v4241 = vunpack.c.h.b16 %v4001
        %v4242 = vunpack.c.l.b16 %v4002
        %v4243 = vunpack.c.h.b16 %v4002
        %v4244 = vunpack.c.l.b16 %v4003
        %v4245 = vunpack.c.h.b16 %v4003
        %v4246 = vunpack.c.l.b16 %v4004
        %v4247 = vunpack.c.h.b16 %v4004
        %v4248 = vunpack.c.l.b16 %v4005
        %v4249 = vunpack.c.h.b16 %v4005
        %v4250 = vunpack.c.l.b16 %v4006
        %v4251 = vunpack.c.h.b16 %v4006
        %v4252 = vunpack.c.l.b16 %v4007
        %v4253 = vunpack.c.h.b16 %v4007
        %v4254 = vunpack.c.l.b16 %v4008
        %v4255 = vunpack.c.h.b16 %v4008
        %v4256 = vunpack.c.l.b16 %v4009
        %v4257 = vunpack.c.h.b16 %v4009
        %v4258 = vunpack.c.l.b16 %v4010
        %v4259 = vunpack.c.h.b16 %v4010
        %v4260 = vunpack.c.l.b16 %v4011
        %v4261 = vunpack.c.h.b16 %v4011
        %v4262 = vunpack.c.l.b16 %v4012
        %v4263 = vunpack.c.h.b16 %v4012
        %v4264 = vunpack.c.l.b16 %v4013
        %v4265 = vunpack.c.h.b16 %v4013
        %v4266 = vunpack.c.l.b16 %v4014
        %v4267 = vunpack.c.h.b16 %v4014
        %v4268 = vunpack.c.l.b16 %v4015
        %v4269 = vunpack.c.h.b16 %v4015
        %v4270 = vunpack.c.l.b16 %v4016
        %v4271 = vunpack.c.h.b16 %v4016
        %v4272 = vunpack.c.l.b16 %v4017
        %v4273 = vunpack.c.h.b16 %v4017
        %v4274 = vpack.c.b16 %v4212, %v4210
        %v4275 = vpack.c.b16 %v4213, %v4211
        %v4276 = vpack.c.b16 %v4216, %v4214
        %v4277 = vpack.c.b16 %v4217, %v4215
        %v4278 = vpack.c.b16 %v4220, %v4218
        %v4279 = vpack.c.b16 %v4221, %v4219
        %v4280 = vpack.c.b16 %v4224, %v4222
        %v4281 = vpack.c.b16 %v4225, %v4223
        %v4282 = vpack.c.b16 %v4228, %v4226
        %v4283 = vpack.c.b16 %v4229, %v4227
        %v4284 = vpack.c.b16 %v4232, %v4230
        %v4285 = vpack.c.b16 %v4233, %v4231
        %v4286 = vpack.c.b16 %v4236, %v4234
        %v4287 = vpack.c.b16 %v4237, %v4235
        %v4288 = vpack.c.b16 %v4240, %v4238
        %v4289 = vpack.c.b16 %v4241, %v4239
        %v4290 = vpack.c.b16 %v4244, %v4242
        %v4291 = vpack.c.b16 %v4245, %v4243
        %v4292 = vpack.c.b16 %v4248, %v4246
        %v4293 = vpack.c.b16 %v4249, %v4247
        %v4294 = vpack.c.b16 %v4252, %v4250
        %v4295 = vpack.c.b16 %v4253, %v4251
        %v4296 = vpack.c.b16 %v4256, %v4254
        %v4297 = vpack.c.b16 %v4257, %v4255
        %v4298 = vpack.c.b16 %v4260, %v4258
        %v4299 = vpack.c.b16 %v4261, %v4259
        %v4300 = vpack.c.b16 %v4264, %v4262
        %v4301 = vpack.c.b16 %v4265, %v4263
        %v4302 = vpack.c.b16 %v4268, %v4266
        %v4303 = vpack.c.b16 %v4269, %v4267
        %v4304 = vpack.c.b16 %v4272, %v4270
        %v4305 = vpack.c.b16 %v4273, %v4271
        %4338 = vmatprep.subr.bf16.mxu0 %v4275
        %4339 = vmatpush1.bf16.msra.mxu0 %v4274
        %4340 = vmatprep.subr.bf16.mxu0 %v4277
        %4341 = vmatpush1.bf16.msra.mxu0 %v4276
        %4342 = vmatprep.subr.bf16.mxu0 %v4279
        %4343 = vmatpush1.bf16.msra.mxu0 %v4278
        %4344 = vmatprep.subr.bf16.mxu0 %v4281
        %4345 = vmatpush1.bf16.msra.mxu0 %v4280
        %4346 = vmatprep.subr.bf16.mxu0 %v4283
        %4347 = vmatpush1.bf16.msra.mxu0 %v4282
        %4348 = vmatprep.subr.bf16.mxu0 %v4285
        %4349 = vmatpush1.bf16.msra.mxu0 %v4284
        %4350 = vmatprep.subr.bf16.mxu0 %v4287
        %4351 = vmatpush1.bf16.msra.mxu0 %v4286
        %4352 = vmatprep.subr.bf16.mxu0 %v4289
        %4353 = vmatpush1.bf16.msra.mxu0 %v4288
        %4354 = vmatprep.subr.bf16.mxu0 %v4291
        %4355 = vmatpush1.bf16.msra.mxu0 %v4290
        %4356 = vmatprep.subr.bf16.mxu0 %v4293
        %4357 = vmatpush1.bf16.msra.mxu0 %v4292
        %4358 = vmatprep.subr.bf16.mxu0 %v4295
        %4359 = vmatpush1.bf16.msra.mxu0 %v4294
        %4360 = vmatprep.subr.bf16.mxu0 %v4297
        %4361 = vmatpush1.bf16.msra.mxu0 %v4296
        %4362 = vmatprep.subr.bf16.mxu0 %v4299
        %4363 = vmatpush1.bf16.msra.mxu0 %v4298
        %4364 = vmatprep.subr.bf16.mxu0 %v4301
        %4365 = vmatpush1.bf16.msra.mxu0 %v4300
        %4366 = vmatprep.subr.bf16.mxu0 %v4303
        %4367 = vmatpush1.bf16.msra.mxu0 %v4302
        %4368 = vmatprep.subr.bf16.mxu0 %v4305
        %4369 = vmatpush1.bf16.msra.mxu0 %v4304
        %4370 = vmatprep.mubr.bf16.mxu0 %v4115
        %4371 = vmatmul.mubr.bf16.gmra.mrb[0].mxu0 %v4114
        %v4372 = vpop.f32.mrb[0].mxu0
        %v4373 = vadd.f32 0.0, %v4372
        %v4374 = vpop.f32.mrb[0].mxu0
        %v4375 = vadd.f32 0.0, %v4374
        %v4376 = vpop.f32.mrb[0].mxu0
        %v4377 = vadd.f32 0.0, %v4376
        %v4378 = vpop.f32.mrb[0].mxu0
        %v4379 = vadd.f32 0.0, %v4378
        %4380 = vmatprep.mubr.bf16.mxu0 %v4117
        %4381 = vmatmul.mubr.bf16.gmra.mrb[0].mxu0 %v4116
        %v4382 = vpop.f32.mrb[0].mxu0
        %v4383 = vadd.f32 0.0, %v4382
        %v4384 = vpop.f32.mrb[0].mxu0
        %v4385 = vadd.f32 0.0, %v4384
        %v4386 = vpop.f32.mrb[0].mxu0
        %v4387 = vadd.f32 0.0, %v4386
        %v4388 = vpop.f32.mrb[0].mxu0
        %v4389 = vadd.f32 0.0, %v4388
        %4390 = vmatprep.mubr.bf16.mxu0 %v4119
        %4391 = vmatmul.mubr.bf16.gmra.mrb[0].mxu0 %v4118
        %v4392 = vpop.f32.mrb[0].mxu0
        %v4393 = vadd.f32 0.0, %v4392
        %v4394 = vpop.f32.mrb[0].mxu0
        %v4395 = vadd.f32 0.0, %v4394
        %v4396 = vpop.f32.mrb[0].mxu0
        %v4397 = vadd.f32 0.0, %v4396
        %v4398 = vpop.f32.mrb[0].mxu0
        %v4399 = vadd.f32 0.0, %v4398
        %4400 = vmatprep.mubr.bf16.mxu0 %v4121
        %4401 = vmatmul.mubr.bf16.gmra.mrb[0].mxu0 %v4120
        %v4402 = vpop.f32.mrb[0].mxu0
        %v4403 = vadd.f32 0.0, %v4402
        %v4404 = vpop.f32.mrb[0].mxu0
        %v4405 = vadd.f32 0.0, %v4404
        %v4406 = vpop.f32.mrb[0].mxu0
        %v4407 = vadd.f32 0.0, %v4406
        %v4408 = vpop.f32.mrb[0].mxu0
        %v4409 = vadd.f32 0.0, %v4408
        %4410 = vmatprep.mubr.bf16.mxu0 %v4123
        %4411 = vmatmul.mubr.bf16.gmra.mrb[0].mxu0 %v4122
        %v4412 = vpop.f32.mrb[0].mxu0
        %v4413 = vadd.f32 0.0, %v4412
        %v4414 = vpop.f32.mrb[0].mxu0
        %v4415 = vadd.f32 0.0, %v4414
        %v4416 = vpop.f32.mrb[0].mxu0
        %v4417 = vadd.f32 0.0, %v4416
        %v4418 = vpop.f32.mrb[0].mxu0
        %v4419 = vadd.f32 0.0, %v4418
        %4420 = vmatprep.mubr.bf16.mxu0 %v4125
        %4421 = vmatmul.mubr.bf16.gmra.mrb[0].mxu0 %v4124
        %v4422 = vpop.f32.mrb[0].mxu0
        %v4423 = vadd.f32 0.0, %v4422
        %v4424 = vpop.f32.mrb[0].mxu0
        %v4425 = vadd.f32 0.0, %v4424
        %v4426 = vpop.f32.mrb[0].mxu0
        %v4427 = vadd.f32 0.0, %v4426
        %v4428 = vpop.f32.mrb[0].mxu0
        %v4429 = vadd.f32 0.0, %v4428
        %4430 = vmatprep.mubr.bf16.mxu0 %v4127
        %4431 = vmatmul.mubr.bf16.gmra.mrb[0].mxu0 %v4126
        %v4432 = vpop.f32.mrb[0].mxu0
        %v4433 = vadd.f32 0.0, %v4432
        %v4434 = vpop.f32.mrb[0].mxu0
        %v4435 = vadd.f32 0.0, %v4434
        %v4436 = vpop.f32.mrb[0].mxu0
        %v4437 = vadd.f32 0.0, %v4436
        %v4438 = vpop.f32.mrb[0].mxu0
        %v4439 = vadd.f32 0.0, %v4438
        %4440 = vmatprep.mubr.bf16.mxu0 %v4129
        %4441 = vmatmul.mubr.bf16.gmra.mrb[0].mxu0 %v4128
        %v4442 = vpop.f32.mrb[0].mxu0
        %v4443 = vadd.f32 0.0, %v4442
        %v4444 = vpop.f32.mrb[0].mxu0
        %v4445 = vadd.f32 0.0, %v4444
        %v4446 = vpop.f32.mrb[0].mxu0
        %v4447 = vadd.f32 0.0, %v4446
        %v4448 = vpop.f32.mrb[0].mxu0
        %v4449 = vadd.f32 0.0, %v4448
        %4450 = vmatprep.mubr.bf16.mxu0 %v4131
        %4451 = vmatmul.mubr.bf16.gmra.mrb[0].mxu0 %v4130
        %v4452 = vpop.f32.mrb[0].mxu0
        %v4453 = vadd.f32 0.0, %v4452
        %v4454 = vpop.f32.mrb[0].mxu0
        %v4455 = vadd.f32 0.0, %v4454
        %v4456 = vpop.f32.mrb[0].mxu0
        %v4457 = vadd.f32 0.0, %v4456
        %v4458 = vpop.f32.mrb[0].mxu0
        %v4459 = vadd.f32 0.0, %v4458
        %4460 = vmatprep.mubr.bf16.mxu0 %v4133
        %4461 = vmatmul.mubr.bf16.gmra.mrb[0].mxu0 %v4132
        %v4462 = vpop.f32.mrb[0].mxu0
        %v4463 = vadd.f32 0.0, %v4462
        %v4464 = vpop.f32.mrb[0].mxu0
        %v4465 = vadd.f32 0.0, %v4464
        %v4466 = vpop.f32.mrb[0].mxu0
        %v4467 = vadd.f32 0.0, %v4466
        %v4468 = vpop.f32.mrb[0].mxu0
        %v4469 = vadd.f32 0.0, %v4468
        %4470 = vmatprep.mubr.bf16.mxu0 %v4135
        %4471 = vmatmul.mubr.bf16.gmra.mrb[0].mxu0 %v4134
        %v4472 = vpop.f32.mrb[0].mxu0
        %v4473 = vadd.f32 0.0, %v4472
        %v4474 = vpop.f32.mrb[0].mxu0
        %v4475 = vadd.f32 0.0, %v4474
        %v4476 = vpop.f32.mrb[0].mxu0
        %v4477 = vadd.f32 0.0, %v4476
        %v4478 = vpop.f32.mrb[0].mxu0
        %v4479 = vadd.f32 0.0, %v4478
        %4480 = vmatprep.mubr.bf16.mxu0 %v4137
        %4481 = vmatmul.mubr.bf16.gmra.mrb[0].mxu0 %v4136
        %v4482 = vpop.f32.mrb[0].mxu0
        %v4483 = vadd.f32 0.0, %v4482
        %v4484 = vpop.f32.mrb[0].mxu0
        %v4485 = vadd.f32 0.0, %v4484
        %v4486 = vpop.f32.mrb[0].mxu0
        %v4487 = vadd.f32 0.0, %v4486
        %v4488 = vpop.f32.mrb[0].mxu0
        %v4489 = vadd.f32 0.0, %v4488
        %4490 = vmatprep.mubr.bf16.mxu0 %v4139
        %4491 = vmatmul.mubr.bf16.gmra.mrb[0].mxu0 %v4138
        %v4492 = vpop.f32.mrb[0].mxu0
        %v4493 = vadd.f32 0.0, %v4492
        %v4494 = vpop.f32.mrb[0].mxu0
        %v4495 = vadd.f32 0.0, %v4494
        %v4496 = vpop.f32.mrb[0].mxu0
        %v4497 = vadd.f32 0.0, %v4496
        %v4498 = vpop.f32.mrb[0].mxu0
        %v4499 = vadd.f32 0.0, %v4498
        %4500 = vmatprep.mubr.bf16.mxu0 %v4141
        %4501 = vmatmul.mubr.bf16.gmra.mrb[0].mxu0 %v4140
        %v4502 = vpop.f32.mrb[0].mxu0
        %v4503 = vadd.f32 0.0, %v4502
        %v4504 = vpop.f32.mrb[0].mxu0
        %v4505 = vadd.f32 0.0, %v4504
        %v4506 = vpop.f32.mrb[0].mxu0
        %v4507 = vadd.f32 0.0, %v4506
        %v4508 = vpop.f32.mrb[0].mxu0
        %v4509 = vadd.f32 0.0, %v4508
        %4510 = vmatprep.mubr.bf16.mxu0 %v4143
        %4511 = vmatmul.mubr.bf16.gmra.mrb[0].mxu0 %v4142
        %v4512 = vpop.f32.mrb[0].mxu0
        %v4513 = vadd.f32 0.0, %v4512
        %v4514 = vpop.f32.mrb[0].mxu0
        %v4515 = vadd.f32 0.0, %v4514
        %v4516 = vpop.f32.mrb[0].mxu0
        %v4517 = vadd.f32 0.0, %v4516
        %v4518 = vpop.f32.mrb[0].mxu0
        %v4519 = vadd.f32 0.0, %v4518
        %4520 = vmatprep.mubr.bf16.mxu0 %v4145
        %4521 = vmatmul.mubr.bf16.gmra.mrb[0].mxu0 %v4144
        %v4522 = vpop.f32.mrb[0].mxu0
        %v4523 = vadd.f32 0.0, %v4522
        %v4524 = vpop.f32.mrb[0].mxu0
        %v4525 = vadd.f32 0.0, %v4524
        %v4526 = vpop.f32.mrb[0].mxu0
        %v4527 = vadd.f32 0.0, %v4526
        %v4528 = vpop.f32.mrb[0].mxu0
        %v4529 = vadd.f32 0.0, %v4528
        %4530 = vdwg.mxu0
        %v4531 = vadd.f32 %v3888, %v4373
        %v4532 = vadd.f32 %v3889, %v4375
        %v4533 = vadd.f32 %v3890, %v4377
        %v4534 = vadd.f32 %v3891, %v4379
        %v4535 = vadd.f32 %v3892, %v4383
        %v4536 = vadd.f32 %v3893, %v4385
        %v4537 = vadd.f32 %v3894, %v4387
        %v4538 = vadd.f32 %v3895, %v4389
        %v4539 = vadd.f32 %v3896, %v4393
        %v4540 = vadd.f32 %v3897, %v4395
        %v4541 = vadd.f32 %v3898, %v4397
        %v4542 = vadd.f32 %v3899, %v4399
        %v4543 = vadd.f32 %v3900, %v4403
        %v4544 = vadd.f32 %v3901, %v4405
        %v4545 = vadd.f32 %v3902, %v4407
        %v4546 = vadd.f32 %v3903, %v4409
        %v4547 = vadd.f32 %v3904, %v4413
        %v4548 = vadd.f32 %v3905, %v4415
        %v4549 = vadd.f32 %v3906, %v4417
        %v4550 = vadd.f32 %v3907, %v4419
        %v4551 = vadd.f32 %v3908, %v4423
        %v4552 = vadd.f32 %v3909, %v4425
        %v4553 = vadd.f32 %v3910, %v4427
        %v4554 = vadd.f32 %v3911, %v4429
        %v4555 = vadd.f32 %v3912, %v4433
        %v4556 = vadd.f32 %v3913, %v4435
        %v4557 = vadd.f32 %v3914, %v4437
        %v4558 = vadd.f32 %v3915, %v4439
        %v4559 = vadd.f32 %v3916, %v4443
        %v4560 = vadd.f32 %v3917, %v4445
        %v4561 = vadd.f32 %v3918, %v4447
        %v4562 = vadd.f32 %v3919, %v4449
        %v4563 = vadd.f32 %v3920, %v4453
        %v4564 = vadd.f32 %v3921, %v4455
        %v4565 = vadd.f32 %v3922, %v4457
        %v4566 = vadd.f32 %v3923, %v4459
        %v4567 = vadd.f32 %v3924, %v4463
        %v4568 = vadd.f32 %v3925, %v4465
        %v4569 = vadd.f32 %v3926, %v4467
        %v4570 = vadd.f32 %v3927, %v4469
        %v4571 = vadd.f32 %v3928, %v4473
        %v4572 = vadd.f32 %v3929, %v4475
        %v4573 = vadd.f32 %v3930, %v4477
        %v4574 = vadd.f32 %v3931, %v4479
        %v4575 = vadd.f32 %v3932, %v4483
        %v4576 = vadd.f32 %v3933, %v4485
        %v4577 = vadd.f32 %v3934, %v4487
        %v4578 = vadd.f32 %v3935, %v4489
        %v4579 = vadd.f32 %v3936, %v4493
        %v4580 = vadd.f32 %v3937, %v4495
        %v4581 = vadd.f32 %v3938, %v4497
        %v4582 = vadd.f32 %v3939, %v4499
        %v4583 = vadd.f32 %v3940, %v4503
        %v4584 = vadd.f32 %v3941, %v4505
        %v4585 = vadd.f32 %v3942, %v4507
        %v4586 = vadd.f32 %v3943, %v4509
        %v4587 = vadd.f32 %v3944, %v4513
        %v4588 = vadd.f32 %v3945, %v4515
        %v4589 = vadd.f32 %v3946, %v4517
        %v4590 = vadd.f32 %v3947, %v4519
        %v4591 = vadd.f32 %v3948, %v4523
        %v4592 = vadd.f32 %v3949, %v4525
        %v4593 = vadd.f32 %v3950, %v4527
        %v4594 = vadd.f32 %v3951, %v4529
        %v4595 = vld [vmem:[%s3952] sm:$0xff]
        %v4596 = vld [vmem:[%s3952 + $0x8] sm:$0xff]
        %v4597 = vld [vmem:[%s3952 + $0x10] sm:$0x11]
        %v4598 = vld [vmem:[%s3952 + $0x18] sm:$0xff]
        %v4599 = vld [vmem:[%s3952 + $0x20] sm:$0xff]
        %v4600 = vld [vmem:[%s3952 + $0x28] sm:$0x11]
        %v4601 = vld [vmem:[%s3952 + $0x30] sm:$0xff]
        %v4602 = vld [vmem:[%s3952 + $0x38] sm:$0xff]
        %v4603 = vld [vmem:[%s3952 + $0x40] sm:$0x11]
        %v4604 = vld [vmem:[%s3952 + $0x48] sm:$0xff]
        %v4605 = vld [vmem:[%s3952 + $0x50] sm:$0xff]
        %v4606 = vld [vmem:[%s3952 + $0x58] sm:$0x11]
        %v4607 = vld [vmem:[%s3952 + $0x60] sm:$0xff]
        %v4608 = vld [vmem:[%s3952 + $0x68] sm:$0xff]
        %v4609 = vld [vmem:[%s3952 + $0x70] sm:$0x11]
        %v4610 = vld [vmem:[%s3952 + $0x78] sm:$0xff]
        %v4611 = vld [vmem:[%s3952 + $0x80] sm:$0xff]
        %v4612 = vld [vmem:[%s3952 + $0x88] sm:$0x11]
        %v4613 = vld [vmem:[%s3952 + $0x90] sm:$0xff]
        %v4614 = vld [vmem:[%s3952 + $0x98] sm:$0xff]
        %v4615 = vld [vmem:[%s3952 + $0xa0] sm:$0x11]
        %v4616 = vld [vmem:[%s3952 + $0xa8] sm:$0xff]
        %v4617 = vld [vmem:[%s3952 + $0xb0] sm:$0xff]
        %v4618 = vld [vmem:[%s3952 + $0xb8] sm:$0x11]
        %v4619 = vld [vmem:[%s3952 + $0xc0] sm:$0xff]
        %v4620 = vld [vmem:[%s3952 + $0xc8] sm:$0xff]
        %v4621 = vld [vmem:[%s3952 + $0xd0] sm:$0x11]
        %v4622 = vld [vmem:[%s3952 + $0xd8] sm:$0xff]
        %v4623 = vld [vmem:[%s3952 + $0xe0] sm:$0xff]
        %v4624 = vld [vmem:[%s3952 + $0xe8] sm:$0x11]
        %v4625 = vld [vmem:[%s3952 + $0xf0] sm:$0xff]
        %v4626 = vld [vmem:[%s3952 + $0xf8] sm:$0xff]
        %v4627 = vld [vmem:[%s3952 + $0x100] sm:$0x11]
        %v4628 = vld [vmem:[%s3952 + $0x108] sm:$0xff]
        %v4629 = vld [vmem:[%s3952 + $0x110] sm:$0xff]
        %v4630 = vld [vmem:[%s3952 + $0x118] sm:$0x11]
        %v4631 = vld [vmem:[%s3952 + $0x120] sm:$0xff]
        %v4632 = vld [vmem:[%s3952 + $0x128] sm:$0xff]
        %v4633 = vld [vmem:[%s3952 + $0x130] sm:$0x11]
        %v4634 = vld [vmem:[%s3952 + $0x138] sm:$0xff]
        %v4635 = vld [vmem:[%s3952 + $0x140] sm:$0xff]
        %v4636 = vld [vmem:[%s3952 + $0x148] sm:$0x11]
        %v4637 = vld [vmem:[%s3952 + $0x150] sm:$0xff]
        %v4638 = vld [vmem:[%s3952 + $0x158] sm:$0xff]
        %v4639 = vld [vmem:[%s3952 + $0x160] sm:$0x11]
        %v4640 = vld [vmem:[%s3952 + $0x168] sm:$0xff]
        %v4641 = vld [vmem:[%s3952 + $0x170] sm:$0xff]
        %v4642 = vld [vmem:[%s3952 + $0x178] sm:$0x11]
        %v4644 = vshrl.u32 %v4595, 16
        %v4646 = vrot.slane %v4644, 4
        %v4647 = vshll.u32 %v4595, 16
        %v4649 = vrot.slane %v4647, 5
        %v4650 = vor.u32 %v4646, %v4649
        %v4651 = vrot.slane %v4650, 4
        %v4653 = vshll.u32 %v4596, 16
        %v4655 = vrot.slane %v4653, 5
        %v4656 = vsel %vm1799, %v4651, %v4655
        %v4657 = vshrl.u32 %v4596, 16
        %v4659 = vrot.slane %v4657, 4
        %v4660 = vor.u32 %v4659, %v4655
        %v4661 = vrot.slane %v4660, 4
        %v4663 = vshll.u32 %v4597, 16
        %v4665 = vrot.slane %v4663, 5
        %v4666 = vsel %vm1799, %v4661, %v4665
        %v4668 = vshrl.u32 %v4598, 16
        %v4670 = vrot.slane %v4668, 4
        %v4671 = vshll.u32 %v4598, 16
        %v4673 = vrot.slane %v4671, 5
        %v4674 = vor.u32 %v4670, %v4673
        %v4675 = vrot.slane %v4674, 4
        %v4677 = vshll.u32 %v4599, 16
        %v4679 = vrot.slane %v4677, 5
        %v4680 = vsel %vm1799, %v4675, %v4679
        %v4681 = vshrl.u32 %v4599, 16
        %v4683 = vrot.slane %v4681, 4
        %v4684 = vor.u32 %v4683, %v4679
        %v4685 = vrot.slane %v4684, 4
        %v4687 = vshll.u32 %v4600, 16
        %v4689 = vrot.slane %v4687, 5
        %v4690 = vsel %vm1799, %v4685, %v4689
        %v4692 = vshrl.u32 %v4601, 16
        %v4694 = vrot.slane %v4692, 4
        %v4695 = vshll.u32 %v4601, 16
        %v4697 = vrot.slane %v4695, 5
        %v4698 = vor.u32 %v4694, %v4697
        %v4699 = vrot.slane %v4698, 4
        %v4701 = vshll.u32 %v4602, 16
        %v4703 = vrot.slane %v4701, 5
        %v4704 = vsel %vm1799, %v4699, %v4703
        %v4705 = vshrl.u32 %v4602, 16
        %v4707 = vrot.slane %v4705, 4
        %v4708 = vor.u32 %v4707, %v4703
        %v4709 = vrot.slane %v4708, 4
        %v4711 = vshll.u32 %v4603, 16
        %v4713 = vrot.slane %v4711, 5
        %v4714 = vsel %vm1799, %v4709, %v4713
        %v4716 = vshrl.u32 %v4604, 16
        %v4718 = vrot.slane %v4716, 4
        %v4719 = vshll.u32 %v4604, 16
        %v4721 = vrot.slane %v4719, 5
        %v4722 = vor.u32 %v4718, %v4721
        %v4723 = vrot.slane %v4722, 4
        %v4725 = vshll.u32 %v4605, 16
        %v4727 = vrot.slane %v4725, 5
        %v4728 = vsel %vm1799, %v4723, %v4727
        %v4729 = vshrl.u32 %v4605, 16
        %v4731 = vrot.slane %v4729, 4
        %v4732 = vor.u32 %v4731, %v4727
        %v4733 = vrot.slane %v4732, 4
        %v4735 = vshll.u32 %v4606, 16
        %v4737 = vrot.slane %v4735, 5
        %v4738 = vsel %vm1799, %v4733, %v4737
        %v4740 = vshrl.u32 %v4607, 16
        %v4742 = vrot.slane %v4740, 4
        %v4743 = vshll.u32 %v4607, 16
        %v4745 = vrot.slane %v4743, 5
        %v4746 = vor.u32 %v4742, %v4745
        %v4747 = vrot.slane %v4746, 4
        %v4749 = vshll.u32 %v4608, 16
        %v4751 = vrot.slane %v4749, 5
        %v4752 = vsel %vm1799, %v4747, %v4751
        %v4753 = vshrl.u32 %v4608, 16
        %v4755 = vrot.slane %v4753, 4
        %v4756 = vor.u32 %v4755, %v4751
        %v4757 = vrot.slane %v4756, 4
        %v4759 = vshll.u32 %v4609, 16
        %v4761 = vrot.slane %v4759, 5
        %v4762 = vsel %vm1799, %v4757, %v4761
        %v4764 = vshrl.u32 %v4610, 16
        %v4766 = vrot.slane %v4764, 4
        %v4767 = vshll.u32 %v4610, 16
        %v4769 = vrot.slane %v4767, 5
        %v4770 = vor.u32 %v4766, %v4769
        %v4771 = vrot.slane %v4770, 4
        %v4773 = vshll.u32 %v4611, 16
        %v4775 = vrot.slane %v4773, 5
        %v4776 = vsel %vm1799, %v4771, %v4775
        %v4777 = vshrl.u32 %v4611, 16
        %v4779 = vrot.slane %v4777, 4
        %v4780 = vor.u32 %v4779, %v4775
        %v4781 = vrot.slane %v4780, 4
        %v4783 = vshll.u32 %v4612, 16
        %v4785 = vrot.slane %v4783, 5
        %v4786 = vsel %vm1799, %v4781, %v4785
        %v4788 = vshrl.u32 %v4613, 16
        %v4790 = vrot.slane %v4788, 4
        %v4791 = vshll.u32 %v4613, 16
        %v4793 = vrot.slane %v4791, 5
        %v4794 = vor.u32 %v4790, %v4793
        %v4795 = vrot.slane %v4794, 4
        %v4797 = vshll.u32 %v4614, 16
        %v4799 = vrot.slane %v4797, 5
        %v4800 = vsel %vm1799, %v4795, %v4799
        %v4801 = vshrl.u32 %v4614, 16
        %v4803 = vrot.slane %v4801, 4
        %v4804 = vor.u32 %v4803, %v4799
        %v4805 = vrot.slane %v4804, 4
        %v4807 = vshll.u32 %v4615, 16
        %v4809 = vrot.slane %v4807, 5
        %v4810 = vsel %vm1799, %v4805, %v4809
        %v4812 = vshrl.u32 %v4616, 16
        %v4814 = vrot.slane %v4812, 4
        %v4815 = vshll.u32 %v4616, 16
        %v4817 = vrot.slane %v4815, 5
        %v4818 = vor.u32 %v4814, %v4817
        %v4819 = vrot.slane %v4818, 4
        %v4821 = vshll.u32 %v4617, 16
        %v4823 = vrot.slane %v4821, 5
        %v4824 = vsel %vm1799, %v4819, %v4823
        %v4825 = vshrl.u32 %v4617, 16
        %v4827 = vrot.slane %v4825, 4
        %v4828 = vor.u32 %v4827, %v4823
        %v4829 = vrot.slane %v4828, 4
        %v4831 = vshll.u32 %v4618, 16
        %v4833 = vrot.slane %v4831, 5
        %v4834 = vsel %vm1799, %v4829, %v4833
        %v4836 = vshrl.u32 %v4619, 16
        %v4838 = vrot.slane %v4836, 4
        %v4839 = vshll.u32 %v4619, 16
        %v4841 = vrot.slane %v4839, 5
        %v4842 = vor.u32 %v4838, %v4841
        %v4843 = vrot.slane %v4842, 4
        %v4845 = vshll.u32 %v4620, 16
        %v4847 = vrot.slane %v4845, 5
        %v4848 = vsel %vm1799, %v4843, %v4847
        %v4849 = vshrl.u32 %v4620, 16
        %v4851 = vrot.slane %v4849, 4
        %v4852 = vor.u32 %v4851, %v4847
        %v4853 = vrot.slane %v4852, 4
        %v4855 = vshll.u32 %v4621, 16
        %v4857 = vrot.slane %v4855, 5
        %v4858 = vsel %vm1799, %v4853, %v4857
        %v4860 = vshrl.u32 %v4622, 16
        %v4862 = vrot.slane %v4860, 4
        %v4863 = vshll.u32 %v4622, 16
        %v4865 = vrot.slane %v4863, 5
        %v4866 = vor.u32 %v4862, %v4865
        %v4867 = vrot.slane %v4866, 4
        %v4869 = vshll.u32 %v4623, 16
        %v4871 = vrot.slane %v4869, 5
        %v4872 = vsel %vm1799, %v4867, %v4871
        %v4873 = vshrl.u32 %v4623, 16
        %v4875 = vrot.slane %v4873, 4
        %v4876 = vor.u32 %v4875, %v4871
        %v4877 = vrot.slane %v4876, 4
        %v4879 = vshll.u32 %v4624, 16
        %v4881 = vrot.slane %v4879, 5
        %v4882 = vsel %vm1799, %v4877, %v4881
        %v4884 = vshrl.u32 %v4625, 16
        %v4886 = vrot.slane %v4884, 4
        %v4887 = vshll.u32 %v4625, 16
        %v4889 = vrot.slane %v4887, 5
        %v4890 = vor.u32 %v4886, %v4889
        %v4891 = vrot.slane %v4890, 4
        %v4893 = vshll.u32 %v4626, 16
        %v4895 = vrot.slane %v4893, 5
        %v4896 = vsel %vm1799, %v4891, %v4895
        %v4897 = vshrl.u32 %v4626, 16
        %v4899 = vrot.slane %v4897, 4
        %v4900 = vor.u32 %v4899, %v4895
        %v4901 = vrot.slane %v4900, 4
        %v4903 = vshll.u32 %v4627, 16
        %v4905 = vrot.slane %v4903, 5
        %v4906 = vsel %vm1799, %v4901, %v4905
        %v4908 = vshrl.u32 %v4628, 16
        %v4910 = vrot.slane %v4908, 4
        %v4911 = vshll.u32 %v4628, 16
        %v4913 = vrot.slane %v4911, 5
        %v4914 = vor.u32 %v4910, %v4913
        %v4915 = vrot.slane %v4914, 4
        %v4917 = vshll.u32 %v4629, 16
        %v4919 = vrot.slane %v4917, 5
        %v4920 = vsel %vm1799, %v4915, %v4919
        %v4921 = vshrl.u32 %v4629, 16
        %v4923 = vrot.slane %v4921, 4
        %v4924 = vor.u32 %v4923, %v4919
        %v4925 = vrot.slane %v4924, 4
        %v4927 = vshll.u32 %v4630, 16
        %v4929 = vrot.slane %v4927, 5
        %v4930 = vsel %vm1799, %v4925, %v4929
        %v4932 = vshrl.u32 %v4631, 16
        %v4934 = vrot.slane %v4932, 4
        %v4935 = vshll.u32 %v4631, 16
        %v4937 = vrot.slane %v4935, 5
        %v4938 = vor.u32 %v4934, %v4937
        %v4939 = vrot.slane %v4938, 4
        %v4941 = vshll.u32 %v4632, 16
        %v4943 = vrot.slane %v4941, 5
        %v4944 = vsel %vm1799, %v4939, %v4943
        %v4945 = vshrl.u32 %v4632, 16
        %v4947 = vrot.slane %v4945, 4
        %v4948 = vor.u32 %v4947, %v4943
        %v4949 = vrot.slane %v4948, 4
        %v4951 = vshll.u32 %v4633, 16
        %v4953 = vrot.slane %v4951, 5
        %v4954 = vsel %vm1799, %v4949, %v4953
        %v4956 = vshrl.u32 %v4634, 16
        %v4958 = vrot.slane %v4956, 4
        %v4959 = vshll.u32 %v4634, 16
        %v4961 = vrot.slane %v4959, 5
        %v4962 = vor.u32 %v4958, %v4961
        %v4963 = vrot.slane %v4962, 4
        %v4965 = vshll.u32 %v4635, 16
        %v4967 = vrot.slane %v4965, 5
        %v4968 = vsel %vm1799, %v4963, %v4967
        %v4969 = vshrl.u32 %v4635, 16
        %v4971 = vrot.slane %v4969, 4
        %v4972 = vor.u32 %v4971, %v4967
        %v4973 = vrot.slane %v4972, 4
        %v4975 = vshll.u32 %v4636, 16
        %v4977 = vrot.slane %v4975, 5
        %v4978 = vsel %vm1799, %v4973, %v4977
        %v4980 = vshrl.u32 %v4637, 16
        %v4982 = vrot.slane %v4980, 4
        %v4983 = vshll.u32 %v4637, 16
        %v4985 = vrot.slane %v4983, 5
        %v4986 = vor.u32 %v4982, %v4985
        %v4987 = vrot.slane %v4986, 4
        %v4989 = vshll.u32 %v4638, 16
        %v4991 = vrot.slane %v4989, 5
        %v4992 = vsel %vm1799, %v4987, %v4991
        %v4993 = vshrl.u32 %v4638, 16
        %v4995 = vrot.slane %v4993, 4
        %v4996 = vor.u32 %v4995, %v4991
        %v4997 = vrot.slane %v4996, 4
        %v4999 = vshll.u32 %v4639, 16
        %v5001 = vrot.slane %v4999, 5
        %v5002 = vsel %vm1799, %v4997, %v5001
        %v5004 = vshrl.u32 %v4640, 16
        %v5006 = vrot.slane %v5004, 4
        %v5007 = vshll.u32 %v4640, 16
        %v5009 = vrot.slane %v5007, 5
        %v5010 = vor.u32 %v5006, %v5009
        %v5011 = vrot.slane %v5010, 4
        %v5013 = vshll.u32 %v4641, 16
        %v5015 = vrot.slane %v5013, 5
        %v5016 = vsel %vm1799, %v5011, %v5015
        %v5017 = vshrl.u32 %v4641, 16
        %v5019 = vrot.slane %v5017, 4
        %v5020 = vor.u32 %v5019, %v5015
        %v5021 = vrot.slane %v5020, 4
        %v5023 = vshll.u32 %v4642, 16
        %v5025 = vrot.slane %v5023, 5
        %v5026 = vsel %vm1799, %v5021, %v5025
        %s5027 = scalar_lea.vmem [#allocation9], 1024
        %v5028 = vld [vmem:[%s5027] sm:$0xff]
        %v5029 = vld [vmem:[%s5027 + $0x8] sm:$0xff]
        %v5030 = vld [vmem:[%s5027 + $0x10] sm:$0xff]
        %v5031 = vld [vmem:[%s5027 + $0x18] sm:$0xff]
        %v5032 = vld [vmem:[%s5027 + $0x20] sm:$0xff]
        %v5033 = vld [vmem:[%s5027 + $0x28] sm:$0xff]
        %v5034 = vld [vmem:[%s5027 + $0x30] sm:$0xff]
        %v5035 = vld [vmem:[%s5027 + $0x38] sm:$0xff]
        %v5036 = vld [vmem:[%s5027 + $0x40] sm:$0xff]
        %v5037 = vld [vmem:[%s5027 + $0x48] sm:$0xff]
        %v5038 = vld [vmem:[%s5027 + $0x50] sm:$0xff]
        %v5039 = vld [vmem:[%s5027 + $0x58] sm:$0xff]
        %v5040 = vld [vmem:[%s5027 + $0x60] sm:$0xff]
        %v5041 = vld [vmem:[%s5027 + $0x68] sm:$0xff]
        %v5042 = vld [vmem:[%s5027 + $0x70] sm:$0xff]
        %v5043 = vld [vmem:[%s5027 + $0x78] sm:$0xff]
        %v5044 = vld [vmem:[%s5027 + $0x80] sm:$0xff]
        %v5045 = vld [vmem:[%s5027 + $0x88] sm:$0xff]
        %v5046 = vld [vmem:[%s5027 + $0x90] sm:$0xff]
        %v5047 = vld [vmem:[%s5027 + $0x98] sm:$0xff]
        %v5048 = vld [vmem:[%s5027 + $0xa0] sm:$0xff]
        %v5049 = vld [vmem:[%s5027 + $0xa8] sm:$0xff]
        %v5050 = vld [vmem:[%s5027 + $0xb0] sm:$0xff]
        %v5051 = vld [vmem:[%s5027 + $0xb8] sm:$0xff]
        %v5052 = vld [vmem:[%s5027 + $0xc0] sm:$0xff]
        %v5053 = vld [vmem:[%s5027 + $0xc8] sm:$0xff]
        %v5054 = vld [vmem:[%s5027 + $0xd0] sm:$0xff]
        %v5055 = vld [vmem:[%s5027 + $0xd8] sm:$0xff]
        %v5056 = vld [vmem:[%s5027 + $0xe0] sm:$0xff]
        %v5057 = vld [vmem:[%s5027 + $0xe8] sm:$0xff]
        %v5058 = vld [vmem:[%s5027 + $0xf0] sm:$0xff]
        %v5059 = vld [vmem:[%s5027 + $0xf8] sm:$0xff]
        %v5060 = vunpack.c.l.b16 %v4656
        %v5061 = vunpack.c.h.b16 %v4656
        %v5062 = vunpack.c.l.b16 %v4666
        %v5063 = vunpack.c.h.b16 %v4666
        %v5064 = vunpack.c.l.b16 %v4680
        %v5065 = vunpack.c.h.b16 %v4680
        %v5066 = vunpack.c.l.b16 %v4690
        %v5067 = vunpack.c.h.b16 %v4690
        %v5068 = vunpack.c.l.b16 %v4704
        %v5069 = vunpack.c.h.b16 %v4704
        %v5070 = vunpack.c.l.b16 %v4714
        %v5071 = vunpack.c.h.b16 %v4714
        %v5072 = vunpack.c.l.b16 %v4728
        %v5073 = vunpack.c.h.b16 %v4728
        %v5074 = vunpack.c.l.b16 %v4738
        %v5075 = vunpack.c.h.b16 %v4738
        %v5076 = vunpack.c.l.b16 %v4752
        %v5077 = vunpack.c.h.b16 %v4752
        %v5078 = vunpack.c.l.b16 %v4762
        %v5079 = vunpack.c.h.b16 %v4762
        %v5080 = vunpack.c.l.b16 %v4776
        %v5081 = vunpack.c.h.b16 %v4776
        %v5082 = vunpack.c.l.b16 %v4786
        %v5083 = vunpack.c.h.b16 %v4786
        %v5084 = vunpack.c.l.b16 %v4800
        %v5085 = vunpack.c.h.b16 %v4800
        %v5086 = vunpack.c.l.b16 %v4810
        %v5087 = vunpack.c.h.b16 %v4810
        %v5088 = vunpack.c.l.b16 %v4824
        %v5089 = vunpack.c.h.b16 %v4824
        %v5090 = vunpack.c.l.b16 %v4834
        %v5091 = vunpack.c.h.b16 %v4834
        %v5092 = vunpack.c.l.b16 %v4848
        %v5093 = vunpack.c.h.b16 %v4848
        %v5094 = vunpack.c.l.b16 %v4858
        %v5095 = vunpack.c.h.b16 %v4858
        %v5096 = vunpack.c.l.b16 %v4872
        %v5097 = vunpack.c.h.b16 %v4872
        %v5098 = vunpack.c.l.b16 %v4882
        %v5099 = vunpack.c.h.b16 %v4882
        %v5100 = vunpack.c.l.b16 %v4896
        %v5101 = vunpack.c.h.b16 %v4896
        %v5102 = vunpack.c.l.b16 %v4906
        %v5103 = vunpack.c.h.b16 %v4906
        %v5104 = vunpack.c.l.b16 %v4920
        %v5105 = vunpack.c.h.b16 %v4920
        %v5106 = vunpack.c.l.b16 %v4930
        %v5107 = vunpack.c.h.b16 %v4930
        %v5108 = vunpack.c.l.b16 %v4944
        %v5109 = vunpack.c.h.b16 %v4944
        %v5110 = vunpack.c.l.b16 %v4954
        %v5111 = vunpack.c.h.b16 %v4954
        %v5112 = vunpack.c.l.b16 %v4968
        %v5113 = vunpack.c.h.b16 %v4968
        %v5114 = vunpack.c.l.b16 %v4978
        %v5115 = vunpack.c.h.b16 %v4978
        %v5116 = vunpack.c.l.b16 %v4992
        %v5117 = vunpack.c.h.b16 %v4992
        %v5118 = vunpack.c.l.b16 %v5002
        %v5119 = vunpack.c.h.b16 %v5002
        %v5120 = vunpack.c.l.b16 %v5016
        %v5121 = vunpack.c.h.b16 %v5016
        %v5122 = vunpack.c.l.b16 %v5026
        %v5123 = vunpack.c.h.b16 %v5026
        %v5124 = vpack.c.b16 %v5062, %v5060
        %v5125 = vpack.c.b16 %v5063, %v5061
        %v5126 = vpack.c.b16 %v5066, %v5064
        %v5127 = vpack.c.b16 %v5067, %v5065
        %v5128 = vpack.c.b16 %v5070, %v5068
        %v5129 = vpack.c.b16 %v5071, %v5069
        %v5130 = vpack.c.b16 %v5074, %v5072
        %v5131 = vpack.c.b16 %v5075, %v5073
        %v5132 = vpack.c.b16 %v5078, %v5076
        %v5133 = vpack.c.b16 %v5079, %v5077
        %v5134 = vpack.c.b16 %v5082, %v5080
        %v5135 = vpack.c.b16 %v5083, %v5081
        %v5136 = vpack.c.b16 %v5086, %v5084
        %v5137 = vpack.c.b16 %v5087, %v5085
        %v5138 = vpack.c.b16 %v5090, %v5088
        %v5139 = vpack.c.b16 %v5091, %v5089
        %v5140 = vpack.c.b16 %v5094, %v5092
        %v5141 = vpack.c.b16 %v5095, %v5093
        %v5142 = vpack.c.b16 %v5098, %v5096
        %v5143 = vpack.c.b16 %v5099, %v5097
        %v5144 = vpack.c.b16 %v5102, %v5100
        %v5145 = vpack.c.b16 %v5103, %v5101
        %v5146 = vpack.c.b16 %v5106, %v5104
        %v5147 = vpack.c.b16 %v5107, %v5105
        %v5148 = vpack.c.b16 %v5110, %v5108
        %v5149 = vpack.c.b16 %v5111, %v5109
        %v5150 = vpack.c.b16 %v5114, %v5112
        %v5151 = vpack.c.b16 %v5115, %v5113
        %v5152 = vpack.c.b16 %v5118, %v5116
        %v5153 = vpack.c.b16 %v5119, %v5117
        %v5154 = vpack.c.b16 %v5122, %v5120
        %v5155 = vpack.c.b16 %v5123, %v5121
        %v5220 = vunpack.c.l.b16 %v5028
        %v5221 = vunpack.c.h.b16 %v5028
        %v5222 = vunpack.c.l.b16 %v5029
        %v5223 = vunpack.c.h.b16 %v5029
        %v5224 = vunpack.c.l.b16 %v5030
        %v5225 = vunpack.c.h.b16 %v5030
        %v5226 = vunpack.c.l.b16 %v5031
        %v5227 = vunpack.c.h.b16 %v5031
        %v5228 = vunpack.c.l.b16 %v5032
        %v5229 = vunpack.c.h.b16 %v5032
        %v5230 = vunpack.c.l.b16 %v5033
        %v5231 = vunpack.c.h.b16 %v5033
        %v5232 = vunpack.c.l.b16 %v5034
        %v5233 = vunpack.c.h.b16 %v5034
        %v5234 = vunpack.c.l.b16 %v5035
        %v5235 = vunpack.c.h.b16 %v5035
        %v5236 = vunpack.c.l.b16 %v5036
        %v5237 = vunpack.c.h.b16 %v5036
        %v5238 = vunpack.c.l.b16 %v5037
        %v5239 = vunpack.c.h.b16 %v5037
        %v5240 = vunpack.c.l.b16 %v5038
        %v5241 = vunpack.c.h.b16 %v5038
        %v5242 = vunpack.c.l.b16 %v5039
        %v5243 = vunpack.c.h.b16 %v5039
        %v5244 = vunpack.c.l.b16 %v5040
        %v5245 = vunpack.c.h.b16 %v5040
        %v5246 = vunpack.c.l.b16 %v5041
        %v5247 = vunpack.c.h.b16 %v5041
        %v5248 = vunpack.c.l.b16 %v5042
        %v5249 = vunpack.c.h.b16 %v5042
        %v5250 = vunpack.c.l.b16 %v5043
        %v5251 = vunpack.c.h.b16 %v5043
        %v5252 = vunpack.c.l.b16 %v5044
        %v5253 = vunpack.c.h.b16 %v5044
        %v5254 = vunpack.c.l.b16 %v5045
        %v5255 = vunpack.c.h.b16 %v5045
        %v5256 = vunpack.c.l.b16 %v5046
        %v5257 = vunpack.c.h.b16 %v5046
        %v5258 = vunpack.c.l.b16 %v5047
        %v5259 = vunpack.c.h.b16 %v5047
        %v5260 = vunpack.c.l.b16 %v5048
        %v5261 = vunpack.c.h.b16 %v5048
        %v5262 = vunpack.c.l.b16 %v5049
        %v5263 = vunpack.c.h.b16 %v5049
        %v5264 = vunpack.c.l.b16 %v5050
        %v5265 = vunpack.c.h.b16 %v5050
        %v5266 = vunpack.c.l.b16 %v5051
        %v5267 = vunpack.c.h.b16 %v5051
        %v5268 = vunpack.c.l.b16 %v5052
        %v5269 = vunpack.c.h.b16 %v5052
        %v5270 = vunpack.c.l.b16 %v5053
        %v5271 = vunpack.c.h.b16 %v5053
        %v5272 = vunpack.c.l.b16 %v5054
        %v5273 = vunpack.c.h.b16 %v5054
        %v5274 = vunpack.c.l.b16 %v5055
        %v5275 = vunpack.c.h.b16 %v5055
        %v5276 = vunpack.c.l.b16 %v5056
        %v5277 = vunpack.c.h.b16 %v5056
        %v5278 = vunpack.c.l.b16 %v5057
        %v5279 = vunpack.c.h.b16 %v5057
        %v5280 = vunpack.c.l.b16 %v5058
        %v5281 = vunpack.c.h.b16 %v5058
        %v5282 = vunpack.c.l.b16 %v5059
        %v5283 = vunpack.c.h.b16 %v5059
        %v5284 = vpack.c.b16 %v5222, %v5220
        %v5285 = vpack.c.b16 %v5223, %v5221
        %v5286 = vpack.c.b16 %v5226, %v5224
        %v5287 = vpack.c.b16 %v5227, %v5225
        %v5288 = vpack.c.b16 %v5230, %v5228
        %v5289 = vpack.c.b16 %v5231, %v5229
        %v5290 = vpack.c.b16 %v5234, %v5232
        %v5291 = vpack.c.b16 %v5235, %v5233
        %v5292 = vpack.c.b16 %v5238, %v5236
        %v5293 = vpack.c.b16 %v5239, %v5237
        %v5294 = vpack.c.b16 %v5242, %v5240
        %v5295 = vpack.c.b16 %v5243, %v5241
        %v5296 = vpack.c.b16 %v5246, %v5244
        %v5297 = vpack.c.b16 %v5247, %v5245
        %v5298 = vpack.c.b16 %v5250, %v5248
        %v5299 = vpack.c.b16 %v5251, %v5249
        %v5300 = vpack.c.b16 %v5254, %v5252
        %v5301 = vpack.c.b16 %v5255, %v5253
        %v5302 = vpack.c.b16 %v5258, %v5256
        %v5303 = vpack.c.b16 %v5259, %v5257
        %v5304 = vpack.c.b16 %v5262, %v5260
        %v5305 = vpack.c.b16 %v5263, %v5261
        %v5306 = vpack.c.b16 %v5266, %v5264
        %v5307 = vpack.c.b16 %v5267, %v5265
        %v5308 = vpack.c.b16 %v5270, %v5268
        %v5309 = vpack.c.b16 %v5271, %v5269
        %v5310 = vpack.c.b16 %v5274, %v5272
        %v5311 = vpack.c.b16 %v5275, %v5273
        %v5312 = vpack.c.b16 %v5278, %v5276
        %v5313 = vpack.c.b16 %v5279, %v5277
        %v5314 = vpack.c.b16 %v5282, %v5280
        %v5315 = vpack.c.b16 %v5283, %v5281
        %5348 = vmatprep.subr.bf16.mxu0 %v5285
        %5349 = vmatpush1.bf16.msra.mxu0 %v5284
        %5350 = vmatprep.subr.bf16.mxu0 %v5287
        %5351 = vmatpush1.bf16.msra.mxu0 %v5286
        %5352 = vmatprep.subr.bf16.mxu0 %v5289
        %5353 = vmatpush1.bf16.msra.mxu0 %v5288
        %5354 = vmatprep.subr.bf16.mxu0 %v5291
        %5355 = vmatpush1.bf16.msra.mxu0 %v5290
        %5356 = vmatprep.subr.bf16.mxu0 %v5293
        %5357 = vmatpush1.bf16.msra.mxu0 %v5292
        %5358 = vmatprep.subr.bf16.mxu0 %v5295
        %5359 = vmatpush1.bf16.msra.mxu0 %v5294
        %5360 = vmatprep.subr.bf16.mxu0 %v5297
        %5361 = vmatpush1.bf16.msra.mxu0 %v5296
        %5362 = vmatprep.subr.bf16.mxu0 %v5299
        %5363 = vmatpush1.bf16.msra.mxu0 %v5298
        %5364 = vmatprep.subr.bf16.mxu0 %v5301
        %5365 = vmatpush1.bf16.msra.mxu0 %v5300
        %5366 = vmatprep.subr.bf16.mxu0 %v5303
        %5367 = vmatpush1.bf16.msra.mxu0 %v5302
        %5368 = vmatprep.subr.bf16.mxu0 %v5305
        %5369 = vmatpush1.bf16.msra.mxu0 %v5304
        %5370 = vmatprep.subr.bf16.mxu0 %v5307
        %5371 = vmatpush1.bf16.msra.mxu0 %v5306
        %5372 = vmatprep.subr.bf16.mxu0 %v5309
        %5373 = vmatpush1.bf16.msra.mxu0 %v5308
        %5374 = vmatprep.subr.bf16.mxu0 %v5311
        %5375 = vmatpush1.bf16.msra.mxu0 %v5310
        %5376 = vmatprep.subr.bf16.mxu0 %v5313
        %5377 = vmatpush1.bf16.msra.mxu0 %v5312
        %5378 = vmatprep.subr.bf16.mxu0 %v5315
        %5379 = vmatpush1.bf16.msra.mxu0 %v5314
        %5380 = vmatprep.mubr.bf16.mxu0 %v5125
        %5381 = vmatmul.mubr.bf16.gmra.mrb[0].mxu0 %v5124
        %v5382 = vpop.f32.mrb[0].mxu0
        %v5383 = vadd.f32 0.0, %v5382
        %v5384 = vpop.f32.mrb[0].mxu0
        %v5385 = vadd.f32 0.0, %v5384
        %v5386 = vpop.f32.mrb[0].mxu0
        %v5387 = vadd.f32 0.0, %v5386
        %v5388 = vpop.f32.mrb[0].mxu0
        %v5389 = vadd.f32 0.0, %v5388
        %5390 = vmatprep.mubr.bf16.mxu0 %v5127
        %5391 = vmatmul.mubr.bf16.gmra.mrb[0].mxu0 %v5126
        %v5392 = vpop.f32.mrb[0].mxu0
        %v5393 = vadd.f32 0.0, %v5392
        %v5394 = vpop.f32.mrb[0].mxu0
        %v5395 = vadd.f32 0.0, %v5394
        %v5396 = vpop.f32.mrb[0].mxu0
        %v5397 = vadd.f32 0.0, %v5396
        %v5398 = vpop.f32.mrb[0].mxu0
        %v5399 = vadd.f32 0.0, %v5398
        %5400 = vmatprep.mubr.bf16.mxu0 %v5129
        %5401 = vmatmul.mubr.bf16.gmra.mrb[0].mxu0 %v5128
        %v5402 = vpop.f32.mrb[0].mxu0
        %v5403 = vadd.f32 0.0, %v5402
        %v5404 = vpop.f32.mrb[0].mxu0
        %v5405 = vadd.f32 0.0, %v5404
        %v5406 = vpop.f32.mrb[0].mxu0
        %v5407 = vadd.f32 0.0, %v5406
        %v5408 = vpop.f32.mrb[0].mxu0
        %v5409 = vadd.f32 0.0, %v5408
        %5410 = vmatprep.mubr.bf16.mxu0 %v5131
        %5411 = vmatmul.mubr.bf16.gmra.mrb[0].mxu0 %v5130
        %v5412 = vpop.f32.mrb[0].mxu0
        %v5413 = vadd.f32 0.0, %v5412
        %v5414 = vpop.f32.mrb[0].mxu0
        %v5415 = vadd.f32 0.0, %v5414
        %v5416 = vpop.f32.mrb[0].mxu0
        %v5417 = vadd.f32 0.0, %v5416
        %v5418 = vpop.f32.mrb[0].mxu0
        %v5419 = vadd.f32 0.0, %v5418
        %5420 = vmatprep.mubr.bf16.mxu0 %v5133
        %5421 = vmatmul.mubr.bf16.gmra.mrb[0].mxu0 %v5132
        %v5422 = vpop.f32.mrb[0].mxu0
        %v5423 = vadd.f32 0.0, %v5422
        %v5424 = vpop.f32.mrb[0].mxu0
        %v5425 = vadd.f32 0.0, %v5424
        %v5426 = vpop.f32.mrb[0].mxu0
        %v5427 = vadd.f32 0.0, %v5426
        %v5428 = vpop.f32.mrb[0].mxu0
        %v5429 = vadd.f32 0.0, %v5428
        %5430 = vmatprep.mubr.bf16.mxu0 %v5135
        %5431 = vmatmul.mubr.bf16.gmra.mrb[0].mxu0 %v5134
        %v5432 = vpop.f32.mrb[0].mxu0
        %v5433 = vadd.f32 0.0, %v5432
        %v5434 = vpop.f32.mrb[0].mxu0
        %v5435 = vadd.f32 0.0, %v5434
        %v5436 = vpop.f32.mrb[0].mxu0
        %v5437 = vadd.f32 0.0, %v5436
        %v5438 = vpop.f32.mrb[0].mxu0
        %v5439 = vadd.f32 0.0, %v5438
        %5440 = vmatprep.mubr.bf16.mxu0 %v5137
        %5441 = vmatmul.mubr.bf16.gmra.mrb[0].mxu0 %v5136
        %v5442 = vpop.f32.mrb[0].mxu0
        %v5443 = vadd.f32 0.0, %v5442
        %v5444 = vpop.f32.mrb[0].mxu0
        %v5445 = vadd.f32 0.0, %v5444
        %v5446 = vpop.f32.mrb[0].mxu0
        %v5447 = vadd.f32 0.0, %v5446
        %v5448 = vpop.f32.mrb[0].mxu0
        %v5449 = vadd.f32 0.0, %v5448
        %5450 = vmatprep.mubr.bf16.mxu0 %v5139
        %5451 = vmatmul.mubr.bf16.gmra.mrb[0].mxu0 %v5138
        %v5452 = vpop.f32.mrb[0].mxu0
        %v5453 = vadd.f32 0.0, %v5452
        %v5454 = vpop.f32.mrb[0].mxu0
        %v5455 = vadd.f32 0.0, %v5454
        %v5456 = vpop.f32.mrb[0].mxu0
        %v5457 = vadd.f32 0.0, %v5456
        %v5458 = vpop.f32.mrb[0].mxu0
        %v5459 = vadd.f32 0.0, %v5458
        %5460 = vmatprep.mubr.bf16.mxu0 %v5141
        %5461 = vmatmul.mubr.bf16.gmra.mrb[0].mxu0 %v5140
        %v5462 = vpop.f32.mrb[0].mxu0
        %v5463 = vadd.f32 0.0, %v5462
        %v5464 = vpop.f32.mrb[0].mxu0
        %v5465 = vadd.f32 0.0, %v5464
        %v5466 = vpop.f32.mrb[0].mxu0
        %v5467 = vadd.f32 0.0, %v5466
        %v5468 = vpop.f32.mrb[0].mxu0
        %v5469 = vadd.f32 0.0, %v5468
        %5470 = vmatprep.mubr.bf16.mxu0 %v5143
        %5471 = vmatmul.mubr.bf16.gmra.mrb[0].mxu0 %v5142
        %v5472 = vpop.f32.mrb[0].mxu0
        %v5473 = vadd.f32 0.0, %v5472
        %v5474 = vpop.f32.mrb[0].mxu0
        %v5475 = vadd.f32 0.0, %v5474
        %v5476 = vpop.f32.mrb[0].mxu0
        %v5477 = vadd.f32 0.0, %v5476
        %v5478 = vpop.f32.mrb[0].mxu0
        %v5479 = vadd.f32 0.0, %v5478
        %5480 = vmatprep.mubr.bf16.mxu0 %v5145
        %5481 = vmatmul.mubr.bf16.gmra.mrb[0].mxu0 %v5144
        %v5482 = vpop.f32.mrb[0].mxu0
        %v5483 = vadd.f32 0.0, %v5482
        %v5484 = vpop.f32.mrb[0].mxu0
        %v5485 = vadd.f32 0.0, %v5484
        %v5486 = vpop.f32.mrb[0].mxu0
        %v5487 = vadd.f32 0.0, %v5486
        %v5488 = vpop.f32.mrb[0].mxu0
        %v5489 = vadd.f32 0.0, %v5488
        %5490 = vmatprep.mubr.bf16.mxu0 %v5147
        %5491 = vmatmul.mubr.bf16.gmra.mrb[0].mxu0 %v5146
        %v5492 = vpop.f32.mrb[0].mxu0
        %v5493 = vadd.f32 0.0, %v5492
        %v5494 = vpop.f32.mrb[0].mxu0
        %v5495 = vadd.f32 0.0, %v5494
        %v5496 = vpop.f32.mrb[0].mxu0
        %v5497 = vadd.f32 0.0, %v5496
        %v5498 = vpop.f32.mrb[0].mxu0
        %v5499 = vadd.f32 0.0, %v5498
        %5500 = vmatprep.mubr.bf16.mxu0 %v5149
        %5501 = vmatmul.mubr.bf16.gmra.mrb[0].mxu0 %v5148
        %v5502 = vpop.f32.mrb[0].mxu0
        %v5503 = vadd.f32 0.0, %v5502
        %v5504 = vpop.f32.mrb[0].mxu0
        %v5505 = vadd.f32 0.0, %v5504
        %v5506 = vpop.f32.mrb[0].mxu0
        %v5507 = vadd.f32 0.0, %v5506
        %v5508 = vpop.f32.mrb[0].mxu0
        %v5509 = vadd.f32 0.0, %v5508
        %5510 = vmatprep.mubr.bf16.mxu0 %v5151
        %5511 = vmatmul.mubr.bf16.gmra.mrb[0].mxu0 %v5150
        %v5512 = vpop.f32.mrb[0].mxu0
        %v5513 = vadd.f32 0.0, %v5512
        %v5514 = vpop.f32.mrb[0].mxu0
        %v5515 = vadd.f32 0.0, %v5514
        %v5516 = vpop.f32.mrb[0].mxu0
        %v5517 = vadd.f32 0.0, %v5516
        %v5518 = vpop.f32.mrb[0].mxu0
        %v5519 = vadd.f32 0.0, %v5518
        %5520 = vmatprep.mubr.bf16.mxu0 %v5153
        %5521 = vmatmul.mubr.bf16.gmra.mrb[0].mxu0 %v5152
        %v5522 = vpop.f32.mrb[0].mxu0
        %v5523 = vadd.f32 0.0, %v5522
        %v5524 = vpop.f32.mrb[0].mxu0
        %v5525 = vadd.f32 0.0, %v5524
        %v5526 = vpop.f32.mrb[0].mxu0
        %v5527 = vadd.f32 0.0, %v5526
        %v5528 = vpop.f32.mrb[0].mxu0
        %v5529 = vadd.f32 0.0, %v5528
        %5530 = vmatprep.mubr.bf16.mxu0 %v5155
        %5531 = vmatmul.mubr.bf16.gmra.mrb[0].mxu0 %v5154
        %v5532 = vpop.f32.mrb[0].mxu0
        %v5533 = vadd.f32 0.0, %v5532
        %v5534 = vpop.f32.mrb[0].mxu0
        %v5535 = vadd.f32 0.0, %v5534
        %v5536 = vpop.f32.mrb[0].mxu0
        %v5537 = vadd.f32 0.0, %v5536
        %v5538 = vpop.f32.mrb[0].mxu0
        %v5539 = vadd.f32 0.0, %v5538
        %5540 = vdwg.mxu0
        %v5541 = vadd.f32 %v4531, %v5383
        %v5542 = vadd.f32 %v4532, %v5385
        %v5543 = vadd.f32 %v4533, %v5387
        %v5544 = vadd.f32 %v4534, %v5389
        %v5545 = vadd.f32 %v4535, %v5393
        %v5546 = vadd.f32 %v4536, %v5395
        %v5547 = vadd.f32 %v4537, %v5397
        %v5548 = vadd.f32 %v4538, %v5399
        %v5549 = vadd.f32 %v4539, %v5403
        %v5550 = vadd.f32 %v4540, %v5405
        %v5551 = vadd.f32 %v4541, %v5407
        %v5552 = vadd.f32 %v4542, %v5409
        %v5553 = vadd.f32 %v4543, %v5413
        %v5554 = vadd.f32 %v4544, %v5415
        %v5555 = vadd.f32 %v4545, %v5417
        %v5556 = vadd.f32 %v4546, %v5419
        %v5557 = vadd.f32 %v4547, %v5423
        %v5558 = vadd.f32 %v4548, %v5425
        %v5559 = vadd.f32 %v4549, %v5427
        %v5560 = vadd.f32 %v4550, %v5429
        %v5561 = vadd.f32 %v4551, %v5433
        %v5562 = vadd.f32 %v4552, %v5435
        %v5563 = vadd.f32 %v4553, %v5437
        %v5564 = vadd.f32 %v4554, %v5439
        %v5565 = vadd.f32 %v4555, %v5443
        %v5566 = vadd.f32 %v4556, %v5445
        %v5567 = vadd.f32 %v4557, %v5447
        %v5568 = vadd.f32 %v4558, %v5449
        %v5569 = vadd.f32 %v4559, %v5453
        %v5570 = vadd.f32 %v4560, %v5455
        %v5571 = vadd.f32 %v4561, %v5457
        %v5572 = vadd.f32 %v4562, %v5459
        %v5573 = vadd.f32 %v4563, %v5463
        %v5574 = vadd.f32 %v4564, %v5465
        %v5575 = vadd.f32 %v4565, %v5467
        %v5576 = vadd.f32 %v4566, %v5469
        %v5577 = vadd.f32 %v4567, %v5473
        %v5578 = vadd.f32 %v4568, %v5475
        %v5579 = vadd.f32 %v4569, %v5477
        %v5580 = vadd.f32 %v4570, %v5479
        %v5581 = vadd.f32 %v4571, %v5483
        %v5582 = vadd.f32 %v4572, %v5485
        %v5583 = vadd.f32 %v4573, %v5487
        %v5584 = vadd.f32 %v4574, %v5489
        %v5585 = vadd.f32 %v4575, %v5493
        %v5586 = vadd.f32 %v4576, %v5495
        %v5587 = vadd.f32 %v4577, %v5497
        %v5588 = vadd.f32 %v4578, %v5499
        %v5589 = vadd.f32 %v4579, %v5503
        %v5590 = vadd.f32 %v4580, %v5505
        %v5591 = vadd.f32 %v4581, %v5507
        %v5592 = vadd.f32 %v4582, %v5509
        %v5593 = vadd.f32 %v4583, %v5513
        %v5594 = vadd.f32 %v4584, %v5515
        %v5595 = vadd.f32 %v4585, %v5517
        %v5596 = vadd.f32 %v4586, %v5519
        %v5597 = vadd.f32 %v4587, %v5523
        %v5598 = vadd.f32 %v4588, %v5525
        %v5599 = vadd.f32 %v4589, %v5527
        %v5600 = vadd.f32 %v4590, %v5529
        %v5601 = vadd.f32 %v4591, %v5533
        %v5602 = vadd.f32 %v4592, %v5535
        %v5603 = vadd.f32 %v4593, %v5537
        %v5604 = vadd.f32 %v4594, %v5539
        %v5605 = vld [vmem:[%s3952] sm:$0xee]
        %v5606 = vld [vmem:[%s3952 + $0x18] sm:$0xee]
        %v5607 = vld [vmem:[%s3952 + $0x30] sm:$0xee]
        %v5608 = vld [vmem:[%s3952 + $0x48] sm:$0xee]
        %v5609 = vld [vmem:[%s3952 + $0x60] sm:$0xee]
        %v5610 = vld [vmem:[%s3952 + $0x78] sm:$0xee]
        %v5611 = vld [vmem:[%s3952 + $0x90] sm:$0xee]
        %v5612 = vld [vmem:[%s3952 + $0xa8] sm:$0xee]
        %v5613 = vld [vmem:[%s3952 + $0xc0] sm:$0xee]
        %v5614 = vld [vmem:[%s3952 + $0xd8] sm:$0xee]
        %v5615 = vld [vmem:[%s3952 + $0xf0] sm:$0xee]
        %v5616 = vld [vmem:[%s3952 + $0x108] sm:$0xee]
        %v5617 = vld [vmem:[%s3952 + $0x120] sm:$0xee]
        %v5618 = vld [vmem:[%s3952 + $0x138] sm:$0xee]
        %v5619 = vld [vmem:[%s3952 + $0x150] sm:$0xee]
        %v5620 = vld [vmem:[%s3952 + $0x168] sm:$0xee]
        %v5669 = vrot.slane %v5605, 5
        %v5670 = vrot.slane %v5669, 4
        %v5671 = vrot.slane %v4596, 5
        %v5672 = vsel %vm3261, %v5670, %v5671
        %v5673 = vrot.slane %v5671, 4
        %v5674 = vrot.slane %v4597, 5
        %v5675 = vsel %vm3261, %v5673, %v5674
        %v5676 = vrot.slane %v5606, 5
        %v5677 = vrot.slane %v5676, 4
        %v5678 = vrot.slane %v4599, 5
        %v5679 = vsel %vm3261, %v5677, %v5678
        %v5680 = vrot.slane %v5678, 4
        %v5681 = vrot.slane %v4600, 5
        %v5682 = vsel %vm3261, %v5680, %v5681
        %v5683 = vrot.slane %v5607, 5
        %v5684 = vrot.slane %v5683, 4
        %v5685 = vrot.slane %v4602, 5
        %v5686 = vsel %vm3261, %v5684, %v5685
        %v5687 = vrot.slane %v5685, 4
        %v5688 = vrot.slane %v4603, 5
        %v5689 = vsel %vm3261, %v5687, %v5688
        %v5690 = vrot.slane %v5608, 5
        %v5691 = vrot.slane %v5690, 4
        %v5692 = vrot.slane %v4605, 5
        %v5693 = vsel %vm3261, %v5691, %v5692
        %v5694 = vrot.slane %v5692, 4
        %v5695 = vrot.slane %v4606, 5
        %v5696 = vsel %vm3261, %v5694, %v5695
        %v5697 = vrot.slane %v5609, 5
        %v5698 = vrot.slane %v5697, 4
        %v5699 = vrot.slane %v4608, 5
        %v5700 = vsel %vm3261, %v5698, %v5699
        %v5701 = vrot.slane %v5699, 4
        %v5702 = vrot.slane %v4609, 5
        %v5703 = vsel %vm3261, %v5701, %v5702
        %v5704 = vrot.slane %v5610, 5
        %v5705 = vrot.slane %v5704, 4
        %v5706 = vrot.slane %v4611, 5
        %v5707 = vsel %vm3261, %v5705, %v5706
        %v5708 = vrot.slane %v5706, 4
        %v5709 = vrot.slane %v4612, 5
        %v5710 = vsel %vm3261, %v5708, %v5709
        %v5711 = vrot.slane %v5611, 5
        %v5712 = vrot.slane %v5711, 4
        %v5713 = vrot.slane %v4614, 5
        %v5714 = vsel %vm3261, %v5712, %v5713
        %v5715 = vrot.slane %v5713, 4
        %v5716 = vrot.slane %v4615, 5
        %v5717 = vsel %vm3261, %v5715, %v5716
        %v5718 = vrot.slane %v5612, 5
        %v5719 = vrot.slane %v5718, 4
        %v5720 = vrot.slane %v4617, 5
        %v5721 = vsel %vm3261, %v5719, %v5720
        %v5722 = vrot.slane %v5720, 4
        %v5723 = vrot.slane %v4618, 5
        %v5724 = vsel %vm3261, %v5722, %v5723
        %v5725 = vrot.slane %v5613, 5
        %v5726 = vrot.slane %v5725, 4
        %v5727 = vrot.slane %v4620, 5
        %v5728 = vsel %vm3261, %v5726, %v5727
        %v5729 = vrot.slane %v5727, 4
        %v5730 = vrot.slane %v4621, 5
        %v5731 = vsel %vm3261, %v5729, %v5730
        %v5732 = vrot.slane %v5614, 5
        %v5733 = vrot.slane %v5732, 4
        %v5734 = vrot.slane %v4623, 5
        %v5735 = vsel %vm3261, %v5733, %v5734
        %v5736 = vrot.slane %v5734, 4
        %v5737 = vrot.slane %v4624, 5
        %v5738 = vsel %vm3261, %v5736, %v5737
        %v5739 = vrot.slane %v5615, 5
        %v5740 = vrot.slane %v5739, 4
        %v5741 = vrot.slane %v4626, 5
        %v5742 = vsel %vm3261, %v5740, %v5741
        %v5743 = vrot.slane %v5741, 4
        %v5744 = vrot.slane %v4627, 5
        %v5745 = vsel %vm3261, %v5743, %v5744
        %v5746 = vrot.slane %v5616, 5
        %v5747 = vrot.slane %v5746, 4
        %v5748 = vrot.slane %v4629, 5
        %v5749 = vsel %vm3261, %v5747, %v5748
        %v5750 = vrot.slane %v5748, 4
        %v5751 = vrot.slane %v4630, 5
        %v5752 = vsel %vm3261, %v5750, %v5751
        %v5753 = vrot.slane %v5617, 5
        %v5754 = vrot.slane %v5753, 4
        %v5755 = vrot.slane %v4632, 5
        %v5756 = vsel %vm3261, %v5754, %v5755
        %v5757 = vrot.slane %v5755, 4
        %v5758 = vrot.slane %v4633, 5
        %v5759 = vsel %vm3261, %v5757, %v5758
        %v5760 = vrot.slane %v5618, 5
        %v5761 = vrot.slane %v5760, 4
        %v5762 = vrot.slane %v4635, 5
        %v5763 = vsel %vm3261, %v5761, %v5762
        %v5764 = vrot.slane %v5762, 4
        %v5765 = vrot.slane %v4636, 5
        %v5766 = vsel %vm3261, %v5764, %v5765
        %v5767 = vrot.slane %v5619, 5
        %v5768 = vrot.slane %v5767, 4
        %v5769 = vrot.slane %v4638, 5
        %v5770 = vsel %vm3261, %v5768, %v5769
        %v5771 = vrot.slane %v5769, 4
        %v5772 = vrot.slane %v4639, 5
        %v5773 = vsel %vm3261, %v5771, %v5772
        %v5774 = vrot.slane %v5620, 5
        %v5775 = vrot.slane %v5774, 4
        %v5776 = vrot.slane %v4641, 5
        %v5777 = vsel %vm3261, %v5775, %v5776
        %v5778 = vrot.slane %v5776, 4
        %v5779 = vrot.slane %v4642, 5
        %v5780 = vsel %vm3261, %v5778, %v5779
        %s5781 = scalar_lea.vmem [#allocation9], 1280
        %v5782 = vld [vmem:[%s5781] sm:$0xff]
        %v5783 = vld [vmem:[%s5781 + $0x8] sm:$0xff]
        %v5784 = vld [vmem:[%s5781 + $0x10] sm:$0xff]
        %v5785 = vld [vmem:[%s5781 + $0x18] sm:$0xff]
        %v5786 = vld [vmem:[%s5781 + $0x20] sm:$0xff]
        %v5787 = vld [vmem:[%s5781 + $0x28] sm:$0xff]
        %v5788 = vld [vmem:[%s5781 + $0x30] sm:$0xff]
        %v5789 = vld [vmem:[%s5781 + $0x38] sm:$0xff]
        %v5790 = vld [vmem:[%s5781 + $0x40] sm:$0xff]
        %v5791 = vld [vmem:[%s5781 + $0x48] sm:$0xff]
        %v5792 = vld [vmem:[%s5781 + $0x50] sm:$0xff]
        %v5793 = vld [vmem:[%s5781 + $0x58] sm:$0xff]
        %v5794 = vld [vmem:[%s5781 + $0x60] sm:$0xff]
        %v5795 = vld [vmem:[%s5781 + $0x68] sm:$0xff]
        %v5796 = vld [vmem:[%s5781 + $0x70] sm:$0xff]
        %v5797 = vld [vmem:[%s5781 + $0x78] sm:$0xff]
        %v5798 = vld [vmem:[%s5781 + $0x80] sm:$0xff]
        %v5799 = vld [vmem:[%s5781 + $0x88] sm:$0xff]
        %v5800 = vld [vmem:[%s5781 + $0x90] sm:$0xff]
        %v5801 = vld [vmem:[%s5781 + $0x98] sm:$0xff]
        %v5802 = vld [vmem:[%s5781 + $0xa0] sm:$0xff]
        %v5803 = vld [vmem:[%s5781 + $0xa8] sm:$0xff]
        %v5804 = vld [vmem:[%s5781 + $0xb0] sm:$0xff]
        %v5805 = vld [vmem:[%s5781 + $0xb8] sm:$0xff]
        %v5806 = vld [vmem:[%s5781 + $0xc0] sm:$0xff]
        %v5807 = vld [vmem:[%s5781 + $0xc8] sm:$0xff]
        %v5808 = vld [vmem:[%s5781 + $0xd0] sm:$0xff]
        %v5809 = vld [vmem:[%s5781 + $0xd8] sm:$0xff]
        %v5810 = vld [vmem:[%s5781 + $0xe0] sm:$0xff]
        %v5811 = vld [vmem:[%s5781 + $0xe8] sm:$0xff]
        %v5812 = vld [vmem:[%s5781 + $0xf0] sm:$0xff]
        %v5813 = vld [vmem:[%s5781 + $0xf8] sm:$0xff]
        %v5814 = vunpack.c.l.b16 %v5672
        %v5815 = vunpack.c.h.b16 %v5672
        %v5816 = vunpack.c.l.b16 %v5675
        %v5817 = vunpack.c.h.b16 %v5675
        %v5818 = vunpack.c.l.b16 %v5679
        %v5819 = vunpack.c.h.b16 %v5679
        %v5820 = vunpack.c.l.b16 %v5682
        %v5821 = vunpack.c.h.b16 %v5682
        %v5822 = vunpack.c.l.b16 %v5686
        %v5823 = vunpack.c.h.b16 %v5686
        %v5824 = vunpack.c.l.b16 %v5689
        %v5825 = vunpack.c.h.b16 %v5689
        %v5826 = vunpack.c.l.b16 %v5693
        %v5827 = vunpack.c.h.b16 %v5693
        %v5828 = vunpack.c.l.b16 %v5696
        %v5829 = vunpack.c.h.b16 %v5696
        %v5830 = vunpack.c.l.b16 %v5700
        %v5831 = vunpack.c.h.b16 %v5700
        %v5832 = vunpack.c.l.b16 %v5703
        %v5833 = vunpack.c.h.b16 %v5703
        %v5834 = vunpack.c.l.b16 %v5707
        %v5835 = vunpack.c.h.b16 %v5707
        %v5836 = vunpack.c.l.b16 %v5710
        %v5837 = vunpack.c.h.b16 %v5710
        %v5838 = vunpack.c.l.b16 %v5714
        %v5839 = vunpack.c.h.b16 %v5714
        %v5840 = vunpack.c.l.b16 %v5717
        %v5841 = vunpack.c.h.b16 %v5717
        %v5842 = vunpack.c.l.b16 %v5721
        %v5843 = vunpack.c.h.b16 %v5721
        %v5844 = vunpack.c.l.b16 %v5724
        %v5845 = vunpack.c.h.b16 %v5724
        %v5846 = vunpack.c.l.b16 %v5728
        %v5847 = vunpack.c.h.b16 %v5728
        %v5848 = vunpack.c.l.b16 %v5731
        %v5849 = vunpack.c.h.b16 %v5731
        %v5850 = vunpack.c.l.b16 %v5735
        %v5851 = vunpack.c.h.b16 %v5735
        %v5852 = vunpack.c.l.b16 %v5738
        %v5853 = vunpack.c.h.b16 %v5738
        %v5854 = vunpack.c.l.b16 %v5742
        %v5855 = vunpack.c.h.b16 %v5742
        %v5856 = vunpack.c.l.b16 %v5745
        %v5857 = vunpack.c.h.b16 %v5745
        %v5858 = vunpack.c.l.b16 %v5749
        %v5859 = vunpack.c.h.b16 %v5749
        %v5860 = vunpack.c.l.b16 %v5752
        %v5861 = vunpack.c.h.b16 %v5752
        %v5862 = vunpack.c.l.b16 %v5756
        %v5863 = vunpack.c.h.b16 %v5756
        %v5864 = vunpack.c.l.b16 %v5759
        %v5865 = vunpack.c.h.b16 %v5759
        %v5866 = vunpack.c.l.b16 %v5763
        %v5867 = vunpack.c.h.b16 %v5763
        %v5868 = vunpack.c.l.b16 %v5766
        %v5869 = vunpack.c.h.b16 %v5766
        %v5870 = vunpack.c.l.b16 %v5770
        %v5871 = vunpack.c.h.b16 %v5770
        %v5872 = vunpack.c.l.b16 %v5773
        %v5873 = vunpack.c.h.b16 %v5773
        %v5874 = vunpack.c.l.b16 %v5777
        %v5875 = vunpack.c.h.b16 %v5777
        %v5876 = vunpack.c.l.b16 %v5780
        %v5877 = vunpack.c.h.b16 %v5780
        %v5878 = vpack.c.b16 %v5816, %v5814
        %v5879 = vpack.c.b16 %v5817, %v5815
        %v5880 = vpack.c.b16 %v5820, %v5818
        %v5881 = vpack.c.b16 %v5821, %v5819
        %v5882 = vpack.c.b16 %v5824, %v5822
        %v5883 = vpack.c.b16 %v5825, %v5823
        %v5884 = vpack.c.b16 %v5828, %v5826
        %v5885 = vpack.c.b16 %v5829, %v5827
        %v5886 = vpack.c.b16 %v5832, %v5830
        %v5887 = vpack.c.b16 %v5833, %v5831
        %v5888 = vpack.c.b16 %v5836, %v5834
        %v5889 = vpack.c.b16 %v5837, %v5835
        %v5890 = vpack.c.b16 %v5840, %v5838
        %v5891 = vpack.c.b16 %v5841, %v5839
        %v5892 = vpack.c.b16 %v5844, %v5842
        %v5893 = vpack.c.b16 %v5845, %v5843
        %v5894 = vpack.c.b16 %v5848, %v5846
        %v5895 = vpack.c.b16 %v5849, %v5847
        %v5896 = vpack.c.b16 %v5852, %v5850
        %v5897 = vpack.c.b16 %v5853, %v5851
        %v5898 = vpack.c.b16 %v5856, %v5854
        %v5899 = vpack.c.b16 %v5857, %v5855
        %v5900 = vpack.c.b16 %v5860, %v5858
        %v5901 = vpack.c.b16 %v5861, %v5859
        %v5902 = vpack.c.b16 %v5864, %v5862
        %v5903 = vpack.c.b16 %v5865, %v5863
        %v5904 = vpack.c.b16 %v5868, %v5866
        %v5905 = vpack.c.b16 %v5869, %v5867
        %v5906 = vpack.c.b16 %v5872, %v5870
        %v5907 = vpack.c.b16 %v5873, %v5871
        %v5908 = vpack.c.b16 %v5876, %v5874
        %v5909 = vpack.c.b16 %v5877, %v5875
        %v5974 = vunpack.c.l.b16 %v5782
        %v5975 = vunpack.c.h.b16 %v5782
        %v5976 = vunpack.c.l.b16 %v5783
        %v5977 = vunpack.c.h.b16 %v5783
        %v5978 = vunpack.c.l.b16 %v5784
        %v5979 = vunpack.c.h.b16 %v5784
        %v5980 = vunpack.c.l.b16 %v5785
        %v5981 = vunpack.c.h.b16 %v5785
        %v5982 = vunpack.c.l.b16 %v5786
        %v5983 = vunpack.c.h.b16 %v5786
        %v5984 = vunpack.c.l.b16 %v5787
        %v5985 = vunpack.c.h.b16 %v5787
        %v5986 = vunpack.c.l.b16 %v5788
        %v5987 = vunpack.c.h.b16 %v5788
        %v5988 = vunpack.c.l.b16 %v5789
        %v5989 = vunpack.c.h.b16 %v5789
        %v5990 = vunpack.c.l.b16 %v5790
        %v5991 = vunpack.c.h.b16 %v5790
        %v5992 = vunpack.c.l.b16 %v5791
        %v5993 = vunpack.c.h.b16 %v5791
        %v5994 = vunpack.c.l.b16 %v5792
        %v5995 = vunpack.c.h.b16 %v5792
        %v5996 = vunpack.c.l.b16 %v5793
        %v5997 = vunpack.c.h.b16 %v5793
        %v5998 = vunpack.c.l.b16 %v5794
        %v5999 = vunpack.c.h.b16 %v5794
        %v6000 = vunpack.c.l.b16 %v5795
        %v6001 = vunpack.c.h.b16 %v5795
        %v6002 = vunpack.c.l.b16 %v5796
        %v6003 = vunpack.c.h.b16 %v5796
        %v6004 = vunpack.c.l.b16 %v5797
        %v6005 = vunpack.c.h.b16 %v5797
        %v6006 = vunpack.c.l.b16 %v5798
        %v6007 = vunpack.c.h.b16 %v5798
        %v6008 = vunpack.c.l.b16 %v5799
        %v6009 = vunpack.c.h.b16 %v5799
        %v6010 = vunpack.c.l.b16 %v5800
        %v6011 = vunpack.c.h.b16 %v5800
        %v6012 = vunpack.c.l.b16 %v5801
        %v6013 = vunpack.c.h.b16 %v5801
        %v6014 = vunpack.c.l.b16 %v5802
        %v6015 = vunpack.c.h.b16 %v5802
        %v6016 = vunpack.c.l.b16 %v5803
        %v6017 = vunpack.c.h.b16 %v5803
        %v6018 = vunpack.c.l.b16 %v5804
        %v6019 = vunpack.c.h.b16 %v5804
        %v6020 = vunpack.c.l.b16 %v5805
        %v6021 = vunpack.c.h.b16 %v5805
        %v6022 = vunpack.c.l.b16 %v5806
        %v6023 = vunpack.c.h.b16 %v5806
        %v6024 = vunpack.c.l.b16 %v5807
        %v6025 = vunpack.c.h.b16 %v5807
        %v6026 = vunpack.c.l.b16 %v5808
        %v6027 = vunpack.c.h.b16 %v5808
        %v6028 = vunpack.c.l.b16 %v5809
        %v6029 = vunpack.c.h.b16 %v5809
        %v6030 = vunpack.c.l.b16 %v5810
        %v6031 = vunpack.c.h.b16 %v5810
        %v6032 = vunpack.c.l.b16 %v5811
        %v6033 = vunpack.c.h.b16 %v5811
        %v6034 = vunpack.c.l.b16 %v5812
        %v6035 = vunpack.c.h.b16 %v5812
        %v6036 = vunpack.c.l.b16 %v5813
        %v6037 = vunpack.c.h.b16 %v5813
        %v6038 = vpack.c.b16 %v5976, %v5974
        %v6039 = vpack.c.b16 %v5977, %v5975
        %v6040 = vpack.c.b16 %v5980, %v5978
        %v6041 = vpack.c.b16 %v5981, %v5979
        %v6042 = vpack.c.b16 %v5984, %v5982
        %v6043 = vpack.c.b16 %v5985, %v5983
        %v6044 = vpack.c.b16 %v5988, %v5986
        %v6045 = vpack.c.b16 %v5989, %v5987
        %v6046 = vpack.c.b16 %v5992, %v5990
        %v6047 = vpack.c.b16 %v5993, %v5991
        %v6048 = vpack.c.b16 %v5996, %v5994
        %v6049 = vpack.c.b16 %v5997, %v5995
        %v6050 = vpack.c.b16 %v6000, %v5998
        %v6051 = vpack.c.b16 %v6001, %v5999
        %v6052 = vpack.c.b16 %v6004, %v6002
        %v6053 = vpack.c.b16 %v6005, %v6003
        %v6054 = vpack.c.b16 %v6008, %v6006
        %v6055 = vpack.c.b16 %v6009, %v6007
        %v6056 = vpack.c.b16 %v6012, %v6010
        %v6057 = vpack.c.b16 %v6013, %v6011
        %v6058 = vpack.c.b16 %v6016, %v6014
        %v6059 = vpack.c.b16 %v6017, %v6015
        %v6060 = vpack.c.b16 %v6020, %v6018
        %v6061 = vpack.c.b16 %v6021, %v6019
        %v6062 = vpack.c.b16 %v6024, %v6022
        %v6063 = vpack.c.b16 %v6025, %v6023
        %v6064 = vpack.c.b16 %v6028, %v6026
        %v6065 = vpack.c.b16 %v6029, %v6027
        %v6066 = vpack.c.b16 %v6032, %v6030
        %v6067 = vpack.c.b16 %v6033, %v6031
        %v6068 = vpack.c.b16 %v6036, %v6034
        %v6069 = vpack.c.b16 %v6037, %v6035
        %6102 = vmatprep.subr.bf16.mxu0 %v6039
        %6103 = vmatpush1.bf16.msra.mxu0 %v6038
        %6104 = vmatprep.subr.bf16.mxu0 %v6041
        %6105 = vmatpush1.bf16.msra.mxu0 %v6040
        %6106 = vmatprep.subr.bf16.mxu0 %v6043
        %6107 = vmatpush1.bf16.msra.mxu0 %v6042
        %6108 = vmatprep.subr.bf16.mxu0 %v6045
        %6109 = vmatpush1.bf16.msra.mxu0 %v6044
        %6110 = vmatprep.subr.bf16.mxu0 %v6047
        %6111 = vmatpush1.bf16.msra.mxu0 %v6046
        %6112 = vmatprep.subr.bf16.mxu0 %v6049
        %6113 = vmatpush1.bf16.msra.mxu0 %v6048
        %6114 = vmatprep.subr.bf16.mxu0 %v6051
        %6115 = vmatpush1.bf16.msra.mxu0 %v6050
        %6116 = vmatprep.subr.bf16.mxu0 %v6053
        %6117 = vmatpush1.bf16.msra.mxu0 %v6052
        %6118 = vmatprep.subr.bf16.mxu0 %v6055
        %6119 = vmatpush1.bf16.msra.mxu0 %v6054
        %6120 = vmatprep.subr.bf16.mxu0 %v6057
        %6121 = vmatpush1.bf16.msra.mxu0 %v6056
        %6122 = vmatprep.subr.bf16.mxu0 %v6059
        %6123 = vmatpush1.bf16.msra.mxu0 %v6058
        %6124 = vmatprep.subr.bf16.mxu0 %v6061
        %6125 = vmatpush1.bf16.msra.mxu0 %v6060
        %6126 = vmatprep.subr.bf16.mxu0 %v6063
        %6127 = vmatpush1.bf16.msra.mxu0 %v6062
        %6128 = vmatprep.subr.bf16.mxu0 %v6065
        %6129 = vmatpush1.bf16.msra.mxu0 %v6064
        %6130 = vmatprep.subr.bf16.mxu0 %v6067
        %6131 = vmatpush1.bf16.msra.mxu0 %v6066
        %6132 = vmatprep.subr.bf16.mxu0 %v6069
        %6133 = vmatpush1.bf16.msra.mxu0 %v6068
        %6134 = vmatprep.mubr.bf16.mxu0 %v5879
        %6135 = vmatmul.mubr.bf16.gmra.mrb[0].mxu0 %v5878
        %v6136 = vpop.f32.mrb[0].mxu0
        %v6137 = vadd.f32 0.0, %v6136
        %v6138 = vpop.f32.mrb[0].mxu0
        %v6139 = vadd.f32 0.0, %v6138
        %v6140 = vpop.f32.mrb[0].mxu0
        %v6141 = vadd.f32 0.0, %v6140
        %v6142 = vpop.f32.mrb[0].mxu0
        %v6143 = vadd.f32 0.0, %v6142
        %6144 = vmatprep.mubr.bf16.mxu0 %v5881
        %6145 = vmatmul.mubr.bf16.gmra.mrb[0].mxu0 %v5880
        %v6146 = vpop.f32.mrb[0].mxu0
        %v6147 = vadd.f32 0.0, %v6146
        %v6148 = vpop.f32.mrb[0].mxu0
        %v6149 = vadd.f32 0.0, %v6148
        %v6150 = vpop.f32.mrb[0].mxu0
        %v6151 = vadd.f32 0.0, %v6150
        %v6152 = vpop.f32.mrb[0].mxu0
        %v6153 = vadd.f32 0.0, %v6152
        %6154 = vmatprep.mubr.bf16.mxu0 %v5883
        %6155 = vmatmul.mubr.bf16.gmra.mrb[0].mxu0 %v5882
        %v6156 = vpop.f32.mrb[0].mxu0
        %v6157 = vadd.f32 0.0, %v6156
        %v6158 = vpop.f32.mrb[0].mxu0
        %v6159 = vadd.f32 0.0, %v6158
        %v6160 = vpop.f32.mrb[0].mxu0
        %v6161 = vadd.f32 0.0, %v6160
        %v6162 = vpop.f32.mrb[0].mxu0
        %v6163 = vadd.f32 0.0, %v6162
        %6164 = vmatprep.mubr.bf16.mxu0 %v5885
        %6165 = vmatmul.mubr.bf16.gmra.mrb[0].mxu0 %v5884
        %v6166 = vpop.f32.mrb[0].mxu0
        %v6167 = vadd.f32 0.0, %v6166
        %v6168 = vpop.f32.mrb[0].mxu0
        %v6169 = vadd.f32 0.0, %v6168
        %v6170 = vpop.f32.mrb[0].mxu0
        %v6171 = vadd.f32 0.0, %v6170
        %v6172 = vpop.f32.mrb[0].mxu0
        %v6173 = vadd.f32 0.0, %v6172
        %6174 = vmatprep.mubr.bf16.mxu0 %v5887
        %6175 = vmatmul.mubr.bf16.gmra.mrb[0].mxu0 %v5886
        %v6176 = vpop.f32.mrb[0].mxu0
        %v6177 = vadd.f32 0.0, %v6176
        %v6178 = vpop.f32.mrb[0].mxu0
        %v6179 = vadd.f32 0.0, %v6178
        %v6180 = vpop.f32.mrb[0].mxu0
        %v6181 = vadd.f32 0.0, %v6180
        %v6182 = vpop.f32.mrb[0].mxu0
        %v6183 = vadd.f32 0.0, %v6182
        %6184 = vmatprep.mubr.bf16.mxu0 %v5889
        %6185 = vmatmul.mubr.bf16.gmra.mrb[0].mxu0 %v5888
        %v6186 = vpop.f32.mrb[0].mxu0
        %v6187 = vadd.f32 0.0, %v6186
        %v6188 = vpop.f32.mrb[0].mxu0
        %v6189 = vadd.f32 0.0, %v6188
        %v6190 = vpop.f32.mrb[0].mxu0
        %v6191 = vadd.f32 0.0, %v6190
        %v6192 = vpop.f32.mrb[0].mxu0
        %v6193 = vadd.f32 0.0, %v6192
        %6194 = vmatprep.mubr.bf16.mxu0 %v5891
        %6195 = vmatmul.mubr.bf16.gmra.mrb[0].mxu0 %v5890
        %v6196 = vpop.f32.mrb[0].mxu0
        %v6197 = vadd.f32 0.0, %v6196
        %v6198 = vpop.f32.mrb[0].mxu0
        %v6199 = vadd.f32 0.0, %v6198
        %v6200 = vpop.f32.mrb[0].mxu0
        %v6201 = vadd.f32 0.0, %v6200
        %v6202 = vpop.f32.mrb[0].mxu0
        %v6203 = vadd.f32 0.0, %v6202
        %6204 = vmatprep.mubr.bf16.mxu0 %v5893
        %6205 = vmatmul.mubr.bf16.gmra.mrb[0].mxu0 %v5892
        %v6206 = vpop.f32.mrb[0].mxu0
        %v6207 = vadd.f32 0.0, %v6206
        %v6208 = vpop.f32.mrb[0].mxu0
        %v6209 = vadd.f32 0.0, %v6208
        %v6210 = vpop.f32.mrb[0].mxu0
        %v6211 = vadd.f32 0.0, %v6210
        %v6212 = vpop.f32.mrb[0].mxu0
        %v6213 = vadd.f32 0.0, %v6212
        %6214 = vmatprep.mubr.bf16.mxu0 %v5895
        %6215 = vmatmul.mubr.bf16.gmra.mrb[0].mxu0 %v5894
        %v6216 = vpop.f32.mrb[0].mxu0
        %v6217 = vadd.f32 0.0, %v6216
        %v6218 = vpop.f32.mrb[0].mxu0
        %v6219 = vadd.f32 0.0, %v6218
        %v6220 = vpop.f32.mrb[0].mxu0
        %v6221 = vadd.f32 0.0, %v6220
        %v6222 = vpop.f32.mrb[0].mxu0
        %v6223 = vadd.f32 0.0, %v6222
        %6224 = vmatprep.mubr.bf16.mxu0 %v5897
        %6225 = vmatmul.mubr.bf16.gmra.mrb[0].mxu0 %v5896
        %v6226 = vpop.f32.mrb[0].mxu0
        %v6227 = vadd.f32 0.0, %v6226
        %v6228 = vpop.f32.mrb[0].mxu0
        %v6229 = vadd.f32 0.0, %v6228
        %v6230 = vpop.f32.mrb[0].mxu0
        %v6231 = vadd.f32 0.0, %v6230
        %v6232 = vpop.f32.mrb[0].mxu0
        %v6233 = vadd.f32 0.0, %v6232
        %6234 = vmatprep.mubr.bf16.mxu0 %v5899
        %6235 = vmatmul.mubr.bf16.gmra.mrb[0].mxu0 %v5898
        %v6236 = vpop.f32.mrb[0].mxu0
        %v6237 = vadd.f32 0.0, %v6236
        %v6238 = vpop.f32.mrb[0].mxu0
        %v6239 = vadd.f32 0.0, %v6238
        %v6240 = vpop.f32.mrb[0].mxu0
        %v6241 = vadd.f32 0.0, %v6240
        %v6242 = vpop.f32.mrb[0].mxu0
        %v6243 = vadd.f32 0.0, %v6242
        %6244 = vmatprep.mubr.bf16.mxu0 %v5901
        %6245 = vmatmul.mubr.bf16.gmra.mrb[0].mxu0 %v5900
        %v6246 = vpop.f32.mrb[0].mxu0
        %v6247 = vadd.f32 0.0, %v6246
        %v6248 = vpop.f32.mrb[0].mxu0
        %v6249 = vadd.f32 0.0, %v6248
        %v6250 = vpop.f32.mrb[0].mxu0
        %v6251 = vadd.f32 0.0, %v6250
        %v6252 = vpop.f32.mrb[0].mxu0
        %v6253 = vadd.f32 0.0, %v6252
        %6254 = vmatprep.mubr.bf16.mxu0 %v5903
        %6255 = vmatmul.mubr.bf16.gmra.mrb[0].mxu0 %v5902
        %v6256 = vpop.f32.mrb[0].mxu0
        %v6257 = vadd.f32 0.0, %v6256
        %v6258 = vpop.f32.mrb[0].mxu0
        %v6259 = vadd.f32 0.0, %v6258
        %v6260 = vpop.f32.mrb[0].mxu0
        %v6261 = vadd.f32 0.0, %v6260
        %v6262 = vpop.f32.mrb[0].mxu0
        %v6263 = vadd.f32 0.0, %v6262
        %6264 = vmatprep.mubr.bf16.mxu0 %v5905
        %6265 = vmatmul.mubr.bf16.gmra.mrb[0].mxu0 %v5904
        %v6266 = vpop.f32.mrb[0].mxu0
        %v6267 = vadd.f32 0.0, %v6266
        %v6268 = vpop.f32.mrb[0].mxu0
        %v6269 = vadd.f32 0.0, %v6268
        %v6270 = vpop.f32.mrb[0].mxu0
        %v6271 = vadd.f32 0.0, %v6270
        %v6272 = vpop.f32.mrb[0].mxu0
        %v6273 = vadd.f32 0.0, %v6272
        %6274 = vmatprep.mubr.bf16.mxu0 %v5907
        %6275 = vmatmul.mubr.bf16.gmra.mrb[0].mxu0 %v5906
        %v6276 = vpop.f32.mrb[0].mxu0
        %v6277 = vadd.f32 0.0, %v6276
        %v6278 = vpop.f32.mrb[0].mxu0
        %v6279 = vadd.f32 0.0, %v6278
        %v6280 = vpop.f32.mrb[0].mxu0
        %v6281 = vadd.f32 0.0, %v6280
        %v6282 = vpop.f32.mrb[0].mxu0
        %v6283 = vadd.f32 0.0, %v6282
        %6284 = vmatprep.mubr.bf16.mxu0 %v5909
        %6285 = vmatmul.mubr.bf16.gmra.mrb[0].mxu0 %v5908
        %v6286 = vpop.f32.mrb[0].mxu0
        %v6287 = vadd.f32 0.0, %v6286
        %v6288 = vpop.f32.mrb[0].mxu0
        %v6289 = vadd.f32 0.0, %v6288
        %v6290 = vpop.f32.mrb[0].mxu0
        %v6291 = vadd.f32 0.0, %v6290
        %v6292 = vpop.f32.mrb[0].mxu0
        %v6293 = vadd.f32 0.0, %v6292
        %6294 = vdwg.mxu0
        %v6295 = vadd.f32 %v5541, %v6137
        %v6296 = vadd.f32 %v5542, %v6139
        %v6297 = vadd.f32 %v5543, %v6141
        %v6298 = vadd.f32 %v5544, %v6143
        %v6299 = vadd.f32 %v5545, %v6147
        %v6300 = vadd.f32 %v5546, %v6149
        %v6301 = vadd.f32 %v5547, %v6151
        %v6302 = vadd.f32 %v5548, %v6153
        %v6303 = vadd.f32 %v5549, %v6157
        %v6304 = vadd.f32 %v5550, %v6159
        %v6305 = vadd.f32 %v5551, %v6161
        %v6306 = vadd.f32 %v5552, %v6163
        %v6307 = vadd.f32 %v5553, %v6167
        %v6308 = vadd.f32 %v5554, %v6169
        %v6309 = vadd.f32 %v5555, %v6171
        %v6310 = vadd.f32 %v5556, %v6173
        %v6311 = vadd.f32 %v5557, %v6177
        %v6312 = vadd.f32 %v5558, %v6179
        %v6313 = vadd.f32 %v5559, %v6181
        %v6314 = vadd.f32 %v5560, %v6183
        %v6315 = vadd.f32 %v5561, %v6187
        %v6316 = vadd.f32 %v5562, %v6189
        %v6317 = vadd.f32 %v5563, %v6191
        %v6318 = vadd.f32 %v5564, %v6193
        %v6319 = vadd.f32 %v5565, %v6197
        %v6320 = vadd.f32 %v5566, %v6199
        %v6321 = vadd.f32 %v5567, %v6201
        %v6322 = vadd.f32 %v5568, %v6203
        %v6323 = vadd.f32 %v5569, %v6207
        %v6324 = vadd.f32 %v5570, %v6209
        %v6325 = vadd.f32 %v5571, %v6211
        %v6326 = vadd.f32 %v5572, %v6213
        %v6327 = vadd.f32 %v5573, %v6217
        %v6328 = vadd.f32 %v5574, %v6219
        %v6329 = vadd.f32 %v5575, %v6221
        %v6330 = vadd.f32 %v5576, %v6223
        %v6331 = vadd.f32 %v5577, %v6227
        %v6332 = vadd.f32 %v5578, %v6229
        %v6333 = vadd.f32 %v5579, %v6231
        %v6334 = vadd.f32 %v5580, %v6233
        %v6335 = vadd.f32 %v5581, %v6237
        %v6336 = vadd.f32 %v5582, %v6239
        %v6337 = vadd.f32 %v5583, %v6241
        %v6338 = vadd.f32 %v5584, %v6243
        %v6339 = vadd.f32 %v5585, %v6247
        %v6340 = vadd.f32 %v5586, %v6249
        %v6341 = vadd.f32 %v5587, %v6251
        %v6342 = vadd.f32 %v5588, %v6253
        %v6343 = vadd.f32 %v5589, %v6257
        %v6344 = vadd.f32 %v5590, %v6259
        %v6345 = vadd.f32 %v5591, %v6261
        %v6346 = vadd.f32 %v5592, %v6263
        %v6347 = vadd.f32 %v5593, %v6267
        %v6348 = vadd.f32 %v5594, %v6269
        %v6349 = vadd.f32 %v5595, %v6271
        %v6350 = vadd.f32 %v5596, %v6273
        %v6351 = vadd.f32 %v5597, %v6277
        %v6352 = vadd.f32 %v5598, %v6279
        %v6353 = vadd.f32 %v5599, %v6281
        %v6354 = vadd.f32 %v5600, %v6283
        %v6355 = vadd.f32 %v5601, %v6287
        %v6356 = vadd.f32 %v5602, %v6289
        %v6357 = vadd.f32 %v5603, %v6291
        %v6358 = vadd.f32 %v5604, %v6293
        %s6359 = scalar_lea.vmem [#allocation2], 48
        %v6360 = vld [vmem:[%s6359] sm:$0xff]
        %v6361 = vld [vmem:[%s6359 + $0x8] sm:$0xff]
        %v6362 = vld [vmem:[%s6359 + $0x18] sm:$0xff]
        %v6363 = vld [vmem:[%s6359 + $0x20] sm:$0xff]
        %v6364 = vld [vmem:[%s6359 + $0x30] sm:$0xff]
        %v6365 = vld [vmem:[%s6359 + $0x38] sm:$0xff]
        %v6366 = vld [vmem:[%s6359 + $0x48] sm:$0xff]
        %v6367 = vld [vmem:[%s6359 + $0x50] sm:$0xff]
        %v6368 = vld [vmem:[%s6359 + $0x60] sm:$0xff]
        %v6369 = vld [vmem:[%s6359 + $0x68] sm:$0xff]
        %v6370 = vld [vmem:[%s6359 + $0x78] sm:$0xff]
        %v6371 = vld [vmem:[%s6359 + $0x80] sm:$0xff]
        %v6372 = vld [vmem:[%s6359 + $0x90] sm:$0xff]
        %v6373 = vld [vmem:[%s6359 + $0x98] sm:$0xff]
        %v6374 = vld [vmem:[%s6359 + $0xa8] sm:$0xff]
        %v6375 = vld [vmem:[%s6359 + $0xb0] sm:$0xff]
        %v6376 = vld [vmem:[%s6359 + $0xc0] sm:$0xff]
        %v6377 = vld [vmem:[%s6359 + $0xc8] sm:$0xff]
        %v6378 = vld [vmem:[%s6359 + $0xd8] sm:$0xff]
        %v6379 = vld [vmem:[%s6359 + $0xe0] sm:$0xff]
        %v6380 = vld [vmem:[%s6359 + $0xf0] sm:$0xff]
        %v6381 = vld [vmem:[%s6359 + $0xf8] sm:$0xff]
        %v6382 = vld [vmem:[%s6359 + $0x108] sm:$0xff]
        %v6383 = vld [vmem:[%s6359 + $0x110] sm:$0xff]
        %v6384 = vld [vmem:[%s6359 + $0x120] sm:$0xff]
        %v6385 = vld [vmem:[%s6359 + $0x128] sm:$0xff]
        %v6386 = vld [vmem:[%s6359 + $0x138] sm:$0xff]
        %v6387 = vld [vmem:[%s6359 + $0x140] sm:$0xff]
        %v6388 = vld [vmem:[%s6359 + $0x150] sm:$0xff]
        %v6389 = vld [vmem:[%s6359 + $0x158] sm:$0xff]
        %v6390 = vld [vmem:[%s6359 + $0x168] sm:$0xff]
        %v6391 = vld [vmem:[%s6359 + $0x170] sm:$0xff]
        %s6392 = scalar_lea.vmem [#allocation9], 1536
        %v6393 = vld [vmem:[%s6392] sm:$0xff]
        %v6394 = vld [vmem:[%s6392 + $0x8] sm:$0xff]
        %v6395 = vld [vmem:[%s6392 + $0x10] sm:$0xff]
        %v6396 = vld [vmem:[%s6392 + $0x18] sm:$0xff]
        %v6397 = vld [vmem:[%s6392 + $0x20] sm:$0xff]
        %v6398 = vld [vmem:[%s6392 + $0x28] sm:$0xff]
        %v6399 = vld [vmem:[%s6392 + $0x30] sm:$0xff]
        %v6400 = vld [vmem:[%s6392 + $0x38] sm:$0xff]
        %v6401 = vld [vmem:[%s6392 + $0x40] sm:$0xff]
        %v6402 = vld [vmem:[%s6392 + $0x48] sm:$0xff]
        %v6403 = vld [vmem:[%s6392 + $0x50] sm:$0xff]
        %v6404 = vld [vmem:[%s6392 + $0x58] sm:$0xff]
        %v6405 = vld [vmem:[%s6392 + $0x60] sm:$0xff]
        %v6406 = vld [vmem:[%s6392 + $0x68] sm:$0xff]
        %v6407 = vld [vmem:[%s6392 + $0x70] sm:$0xff]
        %v6408 = vld [vmem:[%s6392 + $0x78] sm:$0xff]
        %v6409 = vld [vmem:[%s6392 + $0x80] sm:$0xff]
        %v6410 = vld [vmem:[%s6392 + $0x88] sm:$0xff]
        %v6411 = vld [vmem:[%s6392 + $0x90] sm:$0xff]
        %v6412 = vld [vmem:[%s6392 + $0x98] sm:$0xff]
        %v6413 = vld [vmem:[%s6392 + $0xa0] sm:$0xff]
        %v6414 = vld [vmem:[%s6392 + $0xa8] sm:$0xff]
        %v6415 = vld [vmem:[%s6392 + $0xb0] sm:$0xff]
        %v6416 = vld [vmem:[%s6392 + $0xb8] sm:$0xff]
        %v6417 = vld [vmem:[%s6392 + $0xc0] sm:$0xff]
        %v6418 = vld [vmem:[%s6392 + $0xc8] sm:$0xff]
        %v6419 = vld [vmem:[%s6392 + $0xd0] sm:$0xff]
        %v6420 = vld [vmem:[%s6392 + $0xd8] sm:$0xff]
        %v6421 = vld [vmem:[%s6392 + $0xe0] sm:$0xff]
        %v6422 = vld [vmem:[%s6392 + $0xe8] sm:$0xff]
        %v6423 = vld [vmem:[%s6392 + $0xf0] sm:$0xff]
        %v6424 = vld [vmem:[%s6392 + $0xf8] sm:$0xff]
        %v6457 = vunpack.c.l.b16 %v6360
        %v6458 = vunpack.c.h.b16 %v6360
        %v6459 = vunpack.c.l.b16 %v6361
        %v6460 = vunpack.c.h.b16 %v6361
        %v6461 = vunpack.c.l.b16 %v6362
        %v6462 = vunpack.c.h.b16 %v6362
        %v6463 = vunpack.c.l.b16 %v6363
        %v6464 = vunpack.c.h.b16 %v6363
        %v6465 = vunpack.c.l.b16 %v6364
        %v6466 = vunpack.c.h.b16 %v6364
        %v6467 = vunpack.c.l.b16 %v6365
        %v6468 = vunpack.c.h.b16 %v6365
        %v6469 = vunpack.c.l.b16 %v6366
        %v6470 = vunpack.c.h.b16 %v6366
        %v6471 = vunpack.c.l.b16 %v6367
        %v6472 = vunpack.c.h.b16 %v6367
        %v6473 = vunpack.c.l.b16 %v6368
        %v6474 = vunpack.c.h.b16 %v6368
        %v6475 = vunpack.c.l.b16 %v6369
        %v6476 = vunpack.c.h.b16 %v6369
        %v6477 = vunpack.c.l.b16 %v6370
        %v6478 = vunpack.c.h.b16 %v6370
        %v6479 = vunpack.c.l.b16 %v6371
        %v6480 = vunpack.c.h.b16 %v6371
        %v6481 = vunpack.c.l.b16 %v6372
        %v6482 = vunpack.c.h.b16 %v6372
        %v6483 = vunpack.c.l.b16 %v6373
        %v6484 = vunpack.c.h.b16 %v6373
        %v6485 = vunpack.c.l.b16 %v6374
        %v6486 = vunpack.c.h.b16 %v6374
        %v6487 = vunpack.c.l.b16 %v6375
        %v6488 = vunpack.c.h.b16 %v6375
        %v6489 = vunpack.c.l.b16 %v6376
        %v6490 = vunpack.c.h.b16 %v6376
        %v6491 = vunpack.c.l.b16 %v6377
        %v6492 = vunpack.c.h.b16 %v6377
        %v6493 = vunpack.c.l.b16 %v6378
        %v6494 = vunpack.c.h.b16 %v6378
        %v6495 = vunpack.c.l.b16 %v6379
        %v6496 = vunpack.c.h.b16 %v6379
        %v6497 = vunpack.c.l.b16 %v6380
        %v6498 = vunpack.c.h.b16 %v6380
        %v6499 = vunpack.c.l.b16 %v6381
        %v6500 = vunpack.c.h.b16 %v6381
        %v6501 = vunpack.c.l.b16 %v6382
        %v6502 = vunpack.c.h.b16 %v6382
        %v6503 = vunpack.c.l.b16 %v6383
        %v6504 = vunpack.c.h.b16 %v6383
        %v6505 = vunpack.c.l.b16 %v6384
        %v6506 = vunpack.c.h.b16 %v6384
        %v6507 = vunpack.c.l.b16 %v6385
        %v6508 = vunpack.c.h.b16 %v6385
        %v6509 = vunpack.c.l.b16 %v6386
        %v6510 = vunpack.c.h.b16 %v6386
        %v6511 = vunpack.c.l.b16 %v6387
        %v6512 = vunpack.c.h.b16 %v6387
        %v6513 = vunpack.c.l.b16 %v6388
        %v6514 = vunpack.c.h.b16 %v6388
        %v6515 = vunpack.c.l.b16 %v6389
        %v6516 = vunpack.c.h.b16 %v6389
        %v6517 = vunpack.c.l.b16 %v6390
        %v6518 = vunpack.c.h.b16 %v6390
        %v6519 = vunpack.c.l.b16 %v6391
        %v6520 = vunpack.c.h.b16 %v6391
        %v6521 = vpack.c.b16 %v6459, %v6457
        %v6522 = vpack.c.b16 %v6460, %v6458
        %v6523 = vpack.c.b16 %v6463, %v6461
        %v6524 = vpack.c.b16 %v6464, %v6462
        %v6525 = vpack.c.b16 %v6467, %v6465
        %v6526 = vpack.c.b16 %v6468, %v6466
        %v6527 = vpack.c.b16 %v6471, %v6469
        %v6528 = vpack.c.b16 %v6472, %v6470
        %v6529 = vpack.c.b16 %v6475, %v6473
        %v6530 = vpack.c.b16 %v6476, %v6474
        %v6531 = vpack.c.b16 %v6479, %v6477
        %v6532 = vpack.c.b16 %v6480, %v6478
        %v6533 = vpack.c.b16 %v6483, %v6481
        %v6534 = vpack.c.b16 %v6484, %v6482
        %v6535 = vpack.c.b16 %v6487, %v6485
        %v6536 = vpack.c.b16 %v6488, %v6486
        %v6537 = vpack.c.b16 %v6491, %v6489
        %v6538 = vpack.c.b16 %v6492, %v6490
        %v6539 = vpack.c.b16 %v6495, %v6493
        %v6540 = vpack.c.b16 %v6496, %v6494
        %v6541 = vpack.c.b16 %v6499, %v6497
        %v6542 = vpack.c.b16 %v6500, %v6498
        %v6543 = vpack.c.b16 %v6503, %v6501
        %v6544 = vpack.c.b16 %v6504, %v6502
        %v6545 = vpack.c.b16 %v6507, %v6505
        %v6546 = vpack.c.b16 %v6508, %v6506
        %v6547 = vpack.c.b16 %v6511, %v6509
        %v6548 = vpack.c.b16 %v6512, %v6510
        %v6549 = vpack.c.b16 %v6515, %v6513
        %v6550 = vpack.c.b16 %v6516, %v6514
        %v6551 = vpack.c.b16 %v6519, %v6517
        %v6552 = vpack.c.b16 %v6520, %v6518
        %v6617 = vunpack.c.l.b16 %v6393
        %v6618 = vunpack.c.h.b16 %v6393
        %v6619 = vunpack.c.l.b16 %v6394
        %v6620 = vunpack.c.h.b16 %v6394
        %v6621 = vunpack.c.l.b16 %v6395
        %v6622 = vunpack.c.h.b16 %v6395
        %v6623 = vunpack.c.l.b16 %v6396
        %v6624 = vunpack.c.h.b16 %v6396
        %v6625 = vunpack.c.l.b16 %v6397
        %v6626 = vunpack.c.h.b16 %v6397
        %v6627 = vunpack.c.l.b16 %v6398
        %v6628 = vunpack.c.h.b16 %v6398
        %v6629 = vunpack.c.l.b16 %v6399
        %v6630 = vunpack.c.h.b16 %v6399
        %v6631 = vunpack.c.l.b16 %v6400
        %v6632 = vunpack.c.h.b16 %v6400
        %v6633 = vunpack.c.l.b16 %v6401
        %v6634 = vunpack.c.h.b16 %v6401
        %v6635 = vunpack.c.l.b16 %v6402
        %v6636 = vunpack.c.h.b16 %v6402
        %v6637 = vunpack.c.l.b16 %v6403
        %v6638 = vunpack.c.h.b16 %v6403
        %v6639 = vunpack.c.l.b16 %v6404
        %v6640 = vunpack.c.h.b16 %v6404
        %v6641 = vunpack.c.l.b16 %v6405
        %v6642 = vunpack.c.h.b16 %v6405
        %v6643 = vunpack.c.l.b16 %v6406
        %v6644 = vunpack.c.h.b16 %v6406
        %v6645 = vunpack.c.l.b16 %v6407
        %v6646 = vunpack.c.h.b16 %v6407
        %v6647 = vunpack.c.l.b16 %v6408
        %v6648 = vunpack.c.h.b16 %v6408
        %v6649 = vunpack.c.l.b16 %v6409
        %v6650 = vunpack.c.h.b16 %v6409
        %v6651 = vunpack.c.l.b16 %v6410
        %v6652 = vunpack.c.h.b16 %v6410
        %v6653 = vunpack.c.l.b16 %v6411
        %v6654 = vunpack.c.h.b16 %v6411
        %v6655 = vunpack.c.l.b16 %v6412
        %v6656 = vunpack.c.h.b16 %v6412
        %v6657 = vunpack.c.l.b16 %v6413
        %v6658 = vunpack.c.h.b16 %v6413
        %v6659 = vunpack.c.l.b16 %v6414
        %v6660 = vunpack.c.h.b16 %v6414
        %v6661 = vunpack.c.l.b16 %v6415
        %v6662 = vunpack.c.h.b16 %v6415
        %v6663 = vunpack.c.l.b16 %v6416
        %v6664 = vunpack.c.h.b16 %v6416
        %v6665 = vunpack.c.l.b16 %v6417
        %v6666 = vunpack.c.h.b16 %v6417
        %v6667 = vunpack.c.l.b16 %v6418
        %v6668 = vunpack.c.h.b16 %v6418
        %v6669 = vunpack.c.l.b16 %v6419
        %v6670 = vunpack.c.h.b16 %v6419
        %v6671 = vunpack.c.l.b16 %v6420
        %v6672 = vunpack.c.h.b16 %v6420
        %v6673 = vunpack.c.l.b16 %v6421
        %v6674 = vunpack.c.h.b16 %v6421
        %v6675 = vunpack.c.l.b16 %v6422
        %v6676 = vunpack.c.h.b16 %v6422
        %v6677 = vunpack.c.l.b16 %v6423
        %v6678 = vunpack.c.h.b16 %v6423
        %v6679 = vunpack.c.l.b16 %v6424
        %v6680 = vunpack.c.h.b16 %v6424
        %v6681 = vpack.c.b16 %v6619, %v6617
        %v6682 = vpack.c.b16 %v6620, %v6618
        %v6683 = vpack.c.b16 %v6623, %v6621
        %v6684 = vpack.c.b16 %v6624, %v6622
        %v6685 = vpack.c.b16 %v6627, %v6625
        %v6686 = vpack.c.b16 %v6628, %v6626
        %v6687 = vpack.c.b16 %v6631, %v6629
        %v6688 = vpack.c.b16 %v6632, %v6630
        %v6689 = vpack.c.b16 %v6635, %v6633
        %v6690 = vpack.c.b16 %v6636, %v6634
        %v6691 = vpack.c.b16 %v6639, %v6637
        %v6692 = vpack.c.b16 %v6640, %v6638
        %v6693 = vpack.c.b16 %v6643, %v6641
        %v6694 = vpack.c.b16 %v6644, %v6642
        %v6695 = vpack.c.b16 %v6647, %v6645
        %v6696 = vpack.c.b16 %v6648, %v6646
        %v6697 = vpack.c.b16 %v6651, %v6649
        %v6698 = vpack.c.b16 %v6652, %v6650
        %v6699 = vpack.c.b16 %v6655, %v6653
        %v6700 = vpack.c.b16 %v6656, %v6654
        %v6701 = vpack.c.b16 %v6659, %v6657
        %v6702 = vpack.c.b16 %v6660, %v6658
        %v6703 = vpack.c.b16 %v6663, %v6661
        %v6704 = vpack.c.b16 %v6664, %v6662
        %v6705 = vpack.c.b16 %v6667, %v6665
        %v6706 = vpack.c.b16 %v6668, %v6666
        %v6707 = vpack.c.b16 %v6671, %v6669
        %v6708 = vpack.c.b16 %v6672, %v6670
        %v6709 = vpack.c.b16 %v6675, %v6673
        %v6710 = vpack.c.b16 %v6676, %v6674
        %v6711 = vpack.c.b16 %v6679, %v6677
        %v6712 = vpack.c.b16 %v6680, %v6678
        %6745 = vmatprep.subr.bf16.mxu0 %v6682
        %6746 = vmatpush1.bf16.msra.mxu0 %v6681
        %6747 = vmatprep.subr.bf16.mxu0 %v6684
        %6748 = vmatpush1.bf16.msra.mxu0 %v6683
        %6749 = vmatprep.subr.bf16.mxu0 %v6686
        %6750 = vmatpush1.bf16.msra.mxu0 %v6685
        %6751 = vmatprep.subr.bf16.mxu0 %v6688
        %6752 = vmatpush1.bf16.msra.mxu0 %v6687
        %6753 = vmatprep.subr.bf16.mxu0 %v6690
        %6754 = vmatpush1.bf16.msra.mxu0 %v6689
        %6755 = vmatprep.subr.bf16.mxu0 %v6692
        %6756 = vmatpush1.bf16.msra.mxu0 %v6691
        %6757 = vmatprep.subr.bf16.mxu0 %v6694
        %6758 = vmatpush1.bf16.msra.mxu0 %v6693
        %6759 = vmatprep.subr.bf16.mxu0 %v6696
        %6760 = vmatpush1.bf16.msra.mxu0 %v6695
        %6761 = vmatprep.subr.bf16.mxu0 %v6698
        %6762 = vmatpush1.bf16.msra.mxu0 %v6697
        %6763 = vmatprep.subr.bf16.mxu0 %v6700
        %6764 = vmatpush1.bf16.msra.mxu0 %v6699
        %6765 = vmatprep.subr.bf16.mxu0 %v6702
        %6766 = vmatpush1.bf16.msra.mxu0 %v6701
        %6767 = vmatprep.subr.bf16.mxu0 %v6704
        %6768 = vmatpush1.bf16.msra.mxu0 %v6703
        %6769 = vmatprep.subr.bf16.mxu0 %v6706
        %6770 = vmatpush1.bf16.msra.mxu0 %v6705
        %6771 = vmatprep.subr.bf16.mxu0 %v6708
        %6772 = vmatpush1.bf16.msra.mxu0 %v6707
        %6773 = vmatprep.subr.bf16.mxu0 %v6710
        %6774 = vmatpush1.bf16.msra.mxu0 %v6709
        %6775 = vmatprep.subr.bf16.mxu0 %v6712
        %6776 = vmatpush1.bf16.msra.mxu0 %v6711
        %6777 = vmatprep.mubr.bf16.mxu0 %v6522
        %6778 = vmatmul.mubr.bf16.gmra.mrb[0].mxu0 %v6521
        %v6779 = vpop.f32.mrb[0].mxu0
        %v6780 = vadd.f32 0.0, %v6779
        %v6781 = vpop.f32.mrb[0].mxu0
        %v6782 = vadd.f32 0.0, %v6781
        %v6783 = vpop.f32.mrb[0].mxu0
        %v6784 = vadd.f32 0.0, %v6783
        %v6785 = vpop.f32.mrb[0].mxu0
        %v6786 = vadd.f32 0.0, %v6785
        %6787 = vmatprep.mubr.bf16.mxu0 %v6524
        %6788 = vmatmul.mubr.bf16.gmra.mrb[0].mxu0 %v6523
        %v6789 = vpop.f32.mrb[0].mxu0
        %v6790 = vadd.f32 0.0, %v6789
        %v6791 = vpop.f32.mrb[0].mxu0
        %v6792 = vadd.f32 0.0, %v6791
        %v6793 = vpop.f32.mrb[0].mxu0
        %v6794 = vadd.f32 0.0, %v6793
        %v6795 = vpop.f32.mrb[0].mxu0
        %v6796 = vadd.f32 0.0, %v6795
        %6797 = vmatprep.mubr.bf16.mxu0 %v6526
        %6798 = vmatmul.mubr.bf16.gmra.mrb[0].mxu0 %v6525
        %v6799 = vpop.f32.mrb[0].mxu0
        %v6800 = vadd.f32 0.0, %v6799
        %v6801 = vpop.f32.mrb[0].mxu0
        %v6802 = vadd.f32 0.0, %v6801
        %v6803 = vpop.f32.mrb[0].mxu0
        %v6804 = vadd.f32 0.0, %v6803
        %v6805 = vpop.f32.mrb[0].mxu0
        %v6806 = vadd.f32 0.0, %v6805
        %6807 = vmatprep.mubr.bf16.mxu0 %v6528
        %6808 = vmatmul.mubr.bf16.gmra.mrb[0].mxu0 %v6527
        %v6809 = vpop.f32.mrb[0].mxu0
        %v6810 = vadd.f32 0.0, %v6809
        %v6811 = vpop.f32.mrb[0].mxu0
        %v6812 = vadd.f32 0.0, %v6811
        %v6813 = vpop.f32.mrb[0].mxu0
        %v6814 = vadd.f32 0.0, %v6813
        %v6815 = vpop.f32.mrb[0].mxu0
        %v6816 = vadd.f32 0.0, %v6815
        %6817 = vmatprep.mubr.bf16.mxu0 %v6530
        %6818 = vmatmul.mubr.bf16.gmra.mrb[0].mxu0 %v6529
        %v6819 = vpop.f32.mrb[0].mxu0
        %v6820 = vadd.f32 0.0, %v6819
        %v6821 = vpop.f32.mrb[0].mxu0
        %v6822 = vadd.f32 0.0, %v6821
        %v6823 = vpop.f32.mrb[0].mxu0
        %v6824 = vadd.f32 0.0, %v6823
        %v6825 = vpop.f32.mrb[0].mxu0
        %v6826 = vadd.f32 0.0, %v6825
        %6827 = vmatprep.mubr.bf16.mxu0 %v6532
        %6828 = vmatmul.mubr.bf16.gmra.mrb[0].mxu0 %v6531
        %v6829 = vpop.f32.mrb[0].mxu0
        %v6830 = vadd.f32 0.0, %v6829
        %v6831 = vpop.f32.mrb[0].mxu0
        %v6832 = vadd.f32 0.0, %v6831
        %v6833 = vpop.f32.mrb[0].mxu0
        %v6834 = vadd.f32 0.0, %v6833
        %v6835 = vpop.f32.mrb[0].mxu0
        %v6836 = vadd.f32 0.0, %v6835
        %6837 = vmatprep.mubr.bf16.mxu0 %v6534
        %6838 = vmatmul.mubr.bf16.gmra.mrb[0].mxu0 %v6533
        %v6839 = vpop.f32.mrb[0].mxu0
        %v6840 = vadd.f32 0.0, %v6839
        %v6841 = vpop.f32.mrb[0].mxu0
        %v6842 = vadd.f32 0.0, %v6841
        %v6843 = vpop.f32.mrb[0].mxu0
        %v6844 = vadd.f32 0.0, %v6843
        %v6845 = vpop.f32.mrb[0].mxu0
        %v6846 = vadd.f32 0.0, %v6845
        %6847 = vmatprep.mubr.bf16.mxu0 %v6536
        %6848 = vmatmul.mubr.bf16.gmra.mrb[0].mxu0 %v6535
        %v6849 = vpop.f32.mrb[0].mxu0
        %v6850 = vadd.f32 0.0, %v6849
        %v6851 = vpop.f32.mrb[0].mxu0
        %v6852 = vadd.f32 0.0, %v6851
        %v6853 = vpop.f32.mrb[0].mxu0
        %v6854 = vadd.f32 0.0, %v6853
        %v6855 = vpop.f32.mrb[0].mxu0
        %v6856 = vadd.f32 0.0, %v6855
        %6857 = vmatprep.mubr.bf16.mxu0 %v6538
        %6858 = vmatmul.mubr.bf16.gmra.mrb[0].mxu0 %v6537
        %v6859 = vpop.f32.mrb[0].mxu0
        %v6860 = vadd.f32 0.0, %v6859
        %v6861 = vpop.f32.mrb[0].mxu0
        %v6862 = vadd.f32 0.0, %v6861
        %v6863 = vpop.f32.mrb[0].mxu0
        %v6864 = vadd.f32 0.0, %v6863
        %v6865 = vpop.f32.mrb[0].mxu0
        %v6866 = vadd.f32 0.0, %v6865
        %6867 = vmatprep.mubr.bf16.mxu0 %v6540
        %6868 = vmatmul.mubr.bf16.gmra.mrb[0].mxu0 %v6539
        %v6869 = vpop.f32.mrb[0].mxu0
        %v6870 = vadd.f32 0.0, %v6869
        %v6871 = vpop.f32.mrb[0].mxu0
        %v6872 = vadd.f32 0.0, %v6871
        %v6873 = vpop.f32.mrb[0].mxu0
        %v6874 = vadd.f32 0.0, %v6873
        %v6875 = vpop.f32.mrb[0].mxu0
        %v6876 = vadd.f32 0.0, %v6875
        %6877 = vmatprep.mubr.bf16.mxu0 %v6542
        %6878 = vmatmul.mubr.bf16.gmra.mrb[0].mxu0 %v6541
        %v6879 = vpop.f32.mrb[0].mxu0
        %v6880 = vadd.f32 0.0, %v6879
        %v6881 = vpop.f32.mrb[0].mxu0
        %v6882 = vadd.f32 0.0, %v6881
        %v6883 = vpop.f32.mrb[0].mxu0
        %v6884 = vadd.f32 0.0, %v6883
        %v6885 = vpop.f32.mrb[0].mxu0
        %v6886 = vadd.f32 0.0, %v6885
        %6887 = vmatprep.mubr.bf16.mxu0 %v6544
        %6888 = vmatmul.mubr.bf16.gmra.mrb[0].mxu0 %v6543
        %v6889 = vpop.f32.mrb[0].mxu0
        %v6890 = vadd.f32 0.0, %v6889
        %v6891 = vpop.f32.mrb[0].mxu0
        %v6892 = vadd.f32 0.0, %v6891
        %v6893 = vpop.f32.mrb[0].mxu0
        %v6894 = vadd.f32 0.0, %v6893
        %v6895 = vpop.f32.mrb[0].mxu0
        %v6896 = vadd.f32 0.0, %v6895
        %6897 = vmatprep.mubr.bf16.mxu0 %v6546
        %6898 = vmatmul.mubr.bf16.gmra.mrb[0].mxu0 %v6545
        %v6899 = vpop.f32.mrb[0].mxu0
        %v6900 = vadd.f32 0.0, %v6899
        %v6901 = vpop.f32.mrb[0].mxu0
        %v6902 = vadd.f32 0.0, %v6901
        %v6903 = vpop.f32.mrb[0].mxu0
        %v6904 = vadd.f32 0.0, %v6903
        %v6905 = vpop.f32.mrb[0].mxu0
        %v6906 = vadd.f32 0.0, %v6905
        %6907 = vmatprep.mubr.bf16.mxu0 %v6548
        %6908 = vmatmul.mubr.bf16.gmra.mrb[0].mxu0 %v6547
        %v6909 = vpop.f32.mrb[0].mxu0
        %v6910 = vadd.f32 0.0, %v6909
        %v6911 = vpop.f32.mrb[0].mxu0
        %v6912 = vadd.f32 0.0, %v6911
        %v6913 = vpop.f32.mrb[0].mxu0
        %v6914 = vadd.f32 0.0, %v6913
        %v6915 = vpop.f32.mrb[0].mxu0
        %v6916 = vadd.f32 0.0, %v6915
        %6917 = vmatprep.mubr.bf16.mxu0 %v6550
        %6918 = vmatmul.mubr.bf16.gmra.mrb[0].mxu0 %v6549
        %v6919 = vpop.f32.mrb[0].mxu0
        %v6920 = vadd.f32 0.0, %v6919
        %v6921 = vpop.f32.mrb[0].mxu0
        %v6922 = vadd.f32 0.0, %v6921
        %v6923 = vpop.f32.mrb[0].mxu0
        %v6924 = vadd.f32 0.0, %v6923
        %v6925 = vpop.f32.mrb[0].mxu0
        %v6926 = vadd.f32 0.0, %v6925
        %6927 = vmatprep.mubr.bf16.mxu0 %v6552
        %6928 = vmatmul.mubr.bf16.gmra.mrb[0].mxu0 %v6551
        %v6929 = vpop.f32.mrb[0].mxu0
        %v6930 = vadd.f32 0.0, %v6929
        %v6931 = vpop.f32.mrb[0].mxu0
        %v6932 = vadd.f32 0.0, %v6931
        %v6933 = vpop.f32.mrb[0].mxu0
        %v6934 = vadd.f32 0.0, %v6933
        %v6935 = vpop.f32.mrb[0].mxu0
        %v6936 = vadd.f32 0.0, %v6935
        %6937 = vdwg.mxu0
        %v6938 = vadd.f32 %v6295, %v6780
        %v6939 = vadd.f32 %v6296, %v6782
        %v6940 = vadd.f32 %v6297, %v6784
        %v6941 = vadd.f32 %v6298, %v6786
        %v6942 = vadd.f32 %v6299, %v6790
        %v6943 = vadd.f32 %v6300, %v6792
        %v6944 = vadd.f32 %v6301, %v6794
        %v6945 = vadd.f32 %v6302, %v6796
        %v6946 = vadd.f32 %v6303, %v6800
        %v6947 = vadd.f32 %v6304, %v6802
        %v6948 = vadd.f32 %v6305, %v6804
        %v6949 = vadd.f32 %v6306, %v6806
        %v6950 = vadd.f32 %v6307, %v6810
        %v6951 = vadd.f32 %v6308, %v6812
        %v6952 = vadd.f32 %v6309, %v6814
        %v6953 = vadd.f32 %v6310, %v6816
        %v6954 = vadd.f32 %v6311, %v6820
        %v6955 = vadd.f32 %v6312, %v6822
        %v6956 = vadd.f32 %v6313, %v6824
        %v6957 = vadd.f32 %v6314, %v6826
        %v6958 = vadd.f32 %v6315, %v6830
        %v6959 = vadd.f32 %v6316, %v6832
        %v6960 = vadd.f32 %v6317, %v6834
        %v6961 = vadd.f32 %v6318, %v6836
        %v6962 = vadd.f32 %v6319, %v6840
        %v6963 = vadd.f32 %v6320, %v6842
        %v6964 = vadd.f32 %v6321, %v6844
        %v6965 = vadd.f32 %v6322, %v6846
        %v6966 = vadd.f32 %v6323, %v6850
        %v6967 = vadd.f32 %v6324, %v6852
        %v6968 = vadd.f32 %v6325, %v6854
        %v6969 = vadd.f32 %v6326, %v6856
        %v6970 = vadd.f32 %v6327, %v6860
        %v6971 = vadd.f32 %v6328, %v6862
        %v6972 = vadd.f32 %v6329, %v6864
        %v6973 = vadd.f32 %v6330, %v6866
        %v6974 = vadd.f32 %v6331, %v6870
        %v6975 = vadd.f32 %v6332, %v6872
        %v6976 = vadd.f32 %v6333, %v6874
        %v6977 = vadd.f32 %v6334, %v6876
        %v6978 = vadd.f32 %v6335, %v6880
        %v6979 = vadd.f32 %v6336, %v6882
        %v6980 = vadd.f32 %v6337, %v6884
        %v6981 = vadd.f32 %v6338, %v6886
        %v6982 = vadd.f32 %v6339, %v6890
        %v6983 = vadd.f32 %v6340, %v6892
        %v6984 = vadd.f32 %v6341, %v6894
        %v6985 = vadd.f32 %v6342, %v6896
        %v6986 = vadd.f32 %v6343, %v6900
        %v6987 = vadd.f32 %v6344, %v6902
        %v6988 = vadd.f32 %v6345, %v6904
        %v6989 = vadd.f32 %v6346, %v6906
        %v6990 = vadd.f32 %v6347, %v6910
        %v6991 = vadd.f32 %v6348, %v6912
        %v6992 = vadd.f32 %v6349, %v6914
        %v6993 = vadd.f32 %v6350, %v6916
        %v6994 = vadd.f32 %v6351, %v6920
        %v6995 = vadd.f32 %v6352, %v6922
        %v6996 = vadd.f32 %v6353, %v6924
        %v6997 = vadd.f32 %v6354, %v6926
        %v6998 = vadd.f32 %v6355, %v6930
        %v6999 = vadd.f32 %v6356, %v6932
        %v7000 = vadd.f32 %v6357, %v6934
        %v7001 = vadd.f32 %v6358, %v6936
        %v7002 = vld [vmem:[%s6359] sm:$0xff]
        %v7003 = vld [vmem:[%s6359 + $0x8] sm:$0xff]
        %v7004 = vld [vmem:[%s6359 + $0x10] sm:$0x11]
        %v7005 = vld [vmem:[%s6359 + $0x18] sm:$0xff]
        %v7006 = vld [vmem:[%s6359 + $0x20] sm:$0xff]
        %v7007 = vld [vmem:[%s6359 + $0x28] sm:$0x11]
        %v7008 = vld [vmem:[%s6359 + $0x30] sm:$0xff]
        %v7009 = vld [vmem:[%s6359 + $0x38] sm:$0xff]
        %v7010 = vld [vmem:[%s6359 + $0x40] sm:$0x11]
        %v7011 = vld [vmem:[%s6359 + $0x48] sm:$0xff]
        %v7012 = vld [vmem:[%s6359 + $0x50] sm:$0xff]
        %v7013 = vld [vmem:[%s6359 + $0x58] sm:$0x11]
        %v7014 = vld [vmem:[%s6359 + $0x60] sm:$0xff]
        %v7015 = vld [vmem:[%s6359 + $0x68] sm:$0xff]
        %v7016 = vld [vmem:[%s6359 + $0x70] sm:$0x11]
        %v7017 = vld [vmem:[%s6359 + $0x78] sm:$0xff]
        %v7018 = vld [vmem:[%s6359 + $0x80] sm:$0xff]
        %v7019 = vld [vmem:[%s6359 + $0x88] sm:$0x11]
        %v7020 = vld [vmem:[%s6359 + $0x90] sm:$0xff]
        %v7021 = vld [vmem:[%s6359 + $0x98] sm:$0xff]
        %v7022 = vld [vmem:[%s6359 + $0xa0] sm:$0x11]
        %v7023 = vld [vmem:[%s6359 + $0xa8] sm:$0xff]
        %v7024 = vld [vmem:[%s6359 + $0xb0] sm:$0xff]
        %v7025 = vld [vmem:[%s6359 + $0xb8] sm:$0x11]
        %v7026 = vld [vmem:[%s6359 + $0xc0] sm:$0xff]
        %v7027 = vld [vmem:[%s6359 + $0xc8] sm:$0xff]
        %v7028 = vld [vmem:[%s6359 + $0xd0] sm:$0x11]
        %v7029 = vld [vmem:[%s6359 + $0xd8] sm:$0xff]
        %v7030 = vld [vmem:[%s6359 + $0xe0] sm:$0xff]
        %v7031 = vld [vmem:[%s6359 + $0xe8] sm:$0x11]
        %v7032 = vld [vmem:[%s6359 + $0xf0] sm:$0xff]
        %v7033 = vld [vmem:[%s6359 + $0xf8] sm:$0xff]
        %v7034 = vld [vmem:[%s6359 + $0x100] sm:$0x11]
        %v7035 = vld [vmem:[%s6359 + $0x108] sm:$0xff]
        %v7036 = vld [vmem:[%s6359 + $0x110] sm:$0xff]
        %v7037 = vld [vmem:[%s6359 + $0x118] sm:$0x11]
        %v7038 = vld [vmem:[%s6359 + $0x120] sm:$0xff]
        %v7039 = vld [vmem:[%s6359 + $0x128] sm:$0xff]
        %v7040 = vld [vmem:[%s6359 + $0x130] sm:$0x11]
        %v7041 = vld [vmem:[%s6359 + $0x138] sm:$0xff]
        %v7042 = vld [vmem:[%s6359 + $0x140] sm:$0xff]
        %v7043 = vld [vmem:[%s6359 + $0x148] sm:$0x11]
        %v7044 = vld [vmem:[%s6359 + $0x150] sm:$0xff]
        %v7045 = vld [vmem:[%s6359 + $0x158] sm:$0xff]
        %v7046 = vld [vmem:[%s6359 + $0x160] sm:$0x11]
        %v7047 = vld [vmem:[%s6359 + $0x168] sm:$0xff]
        %v7048 = vld [vmem:[%s6359 + $0x170] sm:$0xff]
        %v7049 = vld [vmem:[%s6359 + $0x178] sm:$0x11]
        %v7051 = vshrl.u32 %v7002, 16
        %v7053 = vrot.slane %v7051, 4
        %v7054 = vshll.u32 %v7002, 16
        %v7056 = vrot.slane %v7054, 5
        %v7057 = vor.u32 %v7053, %v7056
        %v7058 = vrot.slane %v7057, 4
        %v7060 = vshll.u32 %v7003, 16
        %v7062 = vrot.slane %v7060, 5
        %v7063 = vsel %vm1799, %v7058, %v7062
        %v7064 = vshrl.u32 %v7003, 16
        %v7066 = vrot.slane %v7064, 4
        %v7067 = vor.u32 %v7066, %v7062
        %v7068 = vrot.slane %v7067, 4
        %v7070 = vshll.u32 %v7004, 16
        %v7072 = vrot.slane %v7070, 5
        %v7073 = vsel %vm1799, %v7068, %v7072
        %v7075 = vshrl.u32 %v7005, 16
        %v7077 = vrot.slane %v7075, 4
        %v7078 = vshll.u32 %v7005, 16
        %v7080 = vrot.slane %v7078, 5
        %v7081 = vor.u32 %v7077, %v7080
        %v7082 = vrot.slane %v7081, 4
        %v7084 = vshll.u32 %v7006, 16
        %v7086 = vrot.slane %v7084, 5
        %v7087 = vsel %vm1799, %v7082, %v7086
        %v7088 = vshrl.u32 %v7006, 16
        %v7090 = vrot.slane %v7088, 4
        %v7091 = vor.u32 %v7090, %v7086
        %v7092 = vrot.slane %v7091, 4
        %v7094 = vshll.u32 %v7007, 16
        %v7096 = vrot.slane %v7094, 5
        %v7097 = vsel %vm1799, %v7092, %v7096
        %v7099 = vshrl.u32 %v7008, 16
        %v7101 = vrot.slane %v7099, 4
        %v7102 = vshll.u32 %v7008, 16
        %v7104 = vrot.slane %v7102, 5
        %v7105 = vor.u32 %v7101, %v7104
        %v7106 = vrot.slane %v7105, 4
        %v7108 = vshll.u32 %v7009, 16
        %v7110 = vrot.slane %v7108, 5
        %v7111 = vsel %vm1799, %v7106, %v7110
        %v7112 = vshrl.u32 %v7009, 16
        %v7114 = vrot.slane %v7112, 4
        %v7115 = vor.u32 %v7114, %v7110
        %v7116 = vrot.slane %v7115, 4
        %v7118 = vshll.u32 %v7010, 16
        %v7120 = vrot.slane %v7118, 5
        %v7121 = vsel %vm1799, %v7116, %v7120
        %v7123 = vshrl.u32 %v7011, 16
        %v7125 = vrot.slane %v7123, 4
        %v7126 = vshll.u32 %v7011, 16
        %v7128 = vrot.slane %v7126, 5
        %v7129 = vor.u32 %v7125, %v7128
        %v7130 = vrot.slane %v7129, 4
        %v7132 = vshll.u32 %v7012, 16
        %v7134 = vrot.slane %v7132, 5
        %v7135 = vsel %vm1799, %v7130, %v7134
        %v7136 = vshrl.u32 %v7012, 16
        %v7138 = vrot.slane %v7136, 4
        %v7139 = vor.u32 %v7138, %v7134
        %v7140 = vrot.slane %v7139, 4
        %v7142 = vshll.u32 %v7013, 16
        %v7144 = vrot.slane %v7142, 5
        %v7145 = vsel %vm1799, %v7140, %v7144
        %v7147 = vshrl.u32 %v7014, 16
        %v7149 = vrot.slane %v7147, 4
        %v7150 = vshll.u32 %v7014, 16
        %v7152 = vrot.slane %v7150, 5
        %v7153 = vor.u32 %v7149, %v7152
        %v7154 = vrot.slane %v7153, 4
        %v7156 = vshll.u32 %v7015, 16
        %v7158 = vrot.slane %v7156, 5
        %v7159 = vsel %vm1799, %v7154, %v7158
        %v7160 = vshrl.u32 %v7015, 16
        %v7162 = vrot.slane %v7160, 4
        %v7163 = vor.u32 %v7162, %v7158
        %v7164 = vrot.slane %v7163, 4
        %v7166 = vshll.u32 %v7016, 16
        %v7168 = vrot.slane %v7166, 5
        %v7169 = vsel %vm1799, %v7164, %v7168
        %v7171 = vshrl.u32 %v7017, 16
        %v7173 = vrot.slane %v7171, 4
        %v7174 = vshll.u32 %v7017, 16
        %v7176 = vrot.slane %v7174, 5
        %v7177 = vor.u32 %v7173, %v7176
        %v7178 = vrot.slane %v7177, 4
        %v7180 = vshll.u32 %v7018, 16
        %v7182 = vrot.slane %v7180, 5
        %v7183 = vsel %vm1799, %v7178, %v7182
        %v7184 = vshrl.u32 %v7018, 16
        %v7186 = vrot.slane %v7184, 4
        %v7187 = vor.u32 %v7186, %v7182
        %v7188 = vrot.slane %v7187, 4
        %v7190 = vshll.u32 %v7019, 16
        %v7192 = vrot.slane %v7190, 5
        %v7193 = vsel %vm1799, %v7188, %v7192
        %v7195 = vshrl.u32 %v7020, 16
        %v7197 = vrot.slane %v7195, 4
        %v7198 = vshll.u32 %v7020, 16
        %v7200 = vrot.slane %v7198, 5
        %v7201 = vor.u32 %v7197, %v7200
        %v7202 = vrot.slane %v7201, 4
        %v7204 = vshll.u32 %v7021, 16
        %v7206 = vrot.slane %v7204, 5
        %v7207 = vsel %vm1799, %v7202, %v7206
        %v7208 = vshrl.u32 %v7021, 16
        %v7210 = vrot.slane %v7208, 4
        %v7211 = vor.u32 %v7210, %v7206
        %v7212 = vrot.slane %v7211, 4
        %v7214 = vshll.u32 %v7022, 16
        %v7216 = vrot.slane %v7214, 5
        %v7217 = vsel %vm1799, %v7212, %v7216
        %v7219 = vshrl.u32 %v7023, 16
        %v7221 = vrot.slane %v7219, 4
        %v7222 = vshll.u32 %v7023, 16
        %v7224 = vrot.slane %v7222, 5
        %v7225 = vor.u32 %v7221, %v7224
        %v7226 = vrot.slane %v7225, 4
        %v7228 = vshll.u32 %v7024, 16
        %v7230 = vrot.slane %v7228, 5
        %v7231 = vsel %vm1799, %v7226, %v7230
        %v7232 = vshrl.u32 %v7024, 16
        %v7234 = vrot.slane %v7232, 4
        %v7235 = vor.u32 %v7234, %v7230
        %v7236 = vrot.slane %v7235, 4
        %v7238 = vshll.u32 %v7025, 16
        %v7240 = vrot.slane %v7238, 5
        %v7241 = vsel %vm1799, %v7236, %v7240
        %v7243 = vshrl.u32 %v7026, 16
        %v7245 = vrot.slane %v7243, 4
        %v7246 = vshll.u32 %v7026, 16
        %v7248 = vrot.slane %v7246, 5
        %v7249 = vor.u32 %v7245, %v7248
        %v7250 = vrot.slane %v7249, 4
        %v7252 = vshll.u32 %v7027, 16
        %v7254 = vrot.slane %v7252, 5
        %v7255 = vsel %vm1799, %v7250, %v7254
        %v7256 = vshrl.u32 %v7027, 16
        %v7258 = vrot.slane %v7256, 4
        %v7259 = vor.u32 %v7258, %v7254
        %v7260 = vrot.slane %v7259, 4
        %v7262 = vshll.u32 %v7028, 16
        %v7264 = vrot.slane %v7262, 5
        %v7265 = vsel %vm1799, %v7260, %v7264
        %v7267 = vshrl.u32 %v7029, 16
        %v7269 = vrot.slane %v7267, 4
        %v7270 = vshll.u32 %v7029, 16
        %v7272 = vrot.slane %v7270, 5
        %v7273 = vor.u32 %v7269, %v7272
        %v7274 = vrot.slane %v7273, 4
        %v7276 = vshll.u32 %v7030, 16
        %v7278 = vrot.slane %v7276, 5
        %v7279 = vsel %vm1799, %v7274, %v7278
        %v7280 = vshrl.u32 %v7030, 16
        %v7282 = vrot.slane %v7280, 4
        %v7283 = vor.u32 %v7282, %v7278
        %v7284 = vrot.slane %v7283, 4
        %v7286 = vshll.u32 %v7031, 16
        %v7288 = vrot.slane %v7286, 5
        %v7289 = vsel %vm1799, %v7284, %v7288
        %v7291 = vshrl.u32 %v7032, 16
        %v7293 = vrot.slane %v7291, 4
        %v7294 = vshll.u32 %v7032, 16
        %v7296 = vrot.slane %v7294, 5
        %v7297 = vor.u32 %v7293, %v7296
        %v7298 = vrot.slane %v7297, 4
        %v7300 = vshll.u32 %v7033, 16
        %v7302 = vrot.slane %v7300, 5
        %v7303 = vsel %vm1799, %v7298, %v7302
        %v7304 = vshrl.u32 %v7033, 16
        %v7306 = vrot.slane %v7304, 4
        %v7307 = vor.u32 %v7306, %v7302
        %v7308 = vrot.slane %v7307, 4
        %v7310 = vshll.u32 %v7034, 16
        %v7312 = vrot.slane %v7310, 5
        %v7313 = vsel %vm1799, %v7308, %v7312
        %v7315 = vshrl.u32 %v7035, 16
        %v7317 = vrot.slane %v7315, 4
        %v7318 = vshll.u32 %v7035, 16
        %v7320 = vrot.slane %v7318, 5
        %v7321 = vor.u32 %v7317, %v7320
        %v7322 = vrot.slane %v7321, 4
        %v7324 = vshll.u32 %v7036, 16
        %v7326 = vrot.slane %v7324, 5
        %v7327 = vsel %vm1799, %v7322, %v7326
        %v7328 = vshrl.u32 %v7036, 16
        %v7330 = vrot.slane %v7328, 4
        %v7331 = vor.u32 %v7330, %v7326
        %v7332 = vrot.slane %v7331, 4
        %v7334 = vshll.u32 %v7037, 16
        %v7336 = vrot.slane %v7334, 5
        %v7337 = vsel %vm1799, %v7332, %v7336
        %v7339 = vshrl.u32 %v7038, 16
        %v7341 = vrot.slane %v7339, 4
        %v7342 = vshll.u32 %v7038, 16
        %v7344 = vrot.slane %v7342, 5
        %v7345 = vor.u32 %v7341, %v7344
        %v7346 = vrot.slane %v7345, 4
        %v7348 = vshll.u32 %v7039, 16
        %v7350 = vrot.slane %v7348, 5
        %v7351 = vsel %vm1799, %v7346, %v7350
        %v7352 = vshrl.u32 %v7039, 16
        %v7354 = vrot.slane %v7352, 4
        %v7355 = vor.u32 %v7354, %v7350
        %v7356 = vrot.slane %v7355, 4
        %v7358 = vshll.u32 %v7040, 16
        %v7360 = vrot.slane %v7358, 5
        %v7361 = vsel %vm1799, %v7356, %v7360
        %v7363 = vshrl.u32 %v7041, 16
        %v7365 = vrot.slane %v7363, 4
        %v7366 = vshll.u32 %v7041, 16
        %v7368 = vrot.slane %v7366, 5
        %v7369 = vor.u32 %v7365, %v7368
        %v7370 = vrot.slane %v7369, 4
        %v7372 = vshll.u32 %v7042, 16
        %v7374 = vrot.slane %v7372, 5
        %v7375 = vsel %vm1799, %v7370, %v7374
        %v7376 = vshrl.u32 %v7042, 16
        %v7378 = vrot.slane %v7376, 4
        %v7379 = vor.u32 %v7378, %v7374
        %v7380 = vrot.slane %v7379, 4
        %v7382 = vshll.u32 %v7043, 16
        %v7384 = vrot.slane %v7382, 5
        %v7385 = vsel %vm1799, %v7380, %v7384
        %v7387 = vshrl.u32 %v7044, 16
        %v7389 = vrot.slane %v7387, 4
        %v7390 = vshll.u32 %v7044, 16
        %v7392 = vrot.slane %v7390, 5
        %v7393 = vor.u32 %v7389, %v7392
        %v7394 = vrot.slane %v7393, 4
        %v7396 = vshll.u32 %v7045, 16
        %v7398 = vrot.slane %v7396, 5
        %v7399 = vsel %vm1799, %v7394, %v7398
        %v7400 = vshrl.u32 %v7045, 16
        %v7402 = vrot.slane %v7400, 4
        %v7403 = vor.u32 %v7402, %v7398
        %v7404 = vrot.slane %v7403, 4
        %v7406 = vshll.u32 %v7046, 16
        %v7408 = vrot.slane %v7406, 5
        %v7409 = vsel %vm1799, %v7404, %v7408
        %v7411 = vshrl.u32 %v7047, 16
        %v7413 = vrot.slane %v7411, 4
        %v7414 = vshll.u32 %v7047, 16
        %v7416 = vrot.slane %v7414, 5
        %v7417 = vor.u32 %v7413, %v7416
        %v7418 = vrot.slane %v7417, 4
        %v7420 = vshll.u32 %v7048, 16
        %v7422 = vrot.slane %v7420, 5
        %v7423 = vsel %vm1799, %v7418, %v7422
        %v7424 = vshrl.u32 %v7048, 16
        %v7426 = vrot.slane %v7424, 4
        %v7427 = vor.u32 %v7426, %v7422
        %v7428 = vrot.slane %v7427, 4
        %v7430 = vshll.u32 %v7049, 16
        %v7432 = vrot.slane %v7430, 5
        %v7433 = vsel %vm1799, %v7428, %v7432
        %s7434 = scalar_lea.vmem [#allocation9], 1792
        %v7435 = vld [vmem:[%s7434] sm:$0xff]
        %v7436 = vld [vmem:[%s7434 + $0x8] sm:$0xff]
        %v7437 = vld [vmem:[%s7434 + $0x10] sm:$0xff]
        %v7438 = vld [vmem:[%s7434 + $0x18] sm:$0xff]
        %v7439 = vld [vmem:[%s7434 + $0x20] sm:$0xff]
        %v7440 = vld [vmem:[%s7434 + $0x28] sm:$0xff]
        %v7441 = vld [vmem:[%s7434 + $0x30] sm:$0xff]
        %v7442 = vld [vmem:[%s7434 + $0x38] sm:$0xff]
        %v7443 = vld [vmem:[%s7434 + $0x40] sm:$0xff]
        %v7444 = vld [vmem:[%s7434 + $0x48] sm:$0xff]
        %v7445 = vld [vmem:[%s7434 + $0x50] sm:$0xff]
        %v7446 = vld [vmem:[%s7434 + $0x58] sm:$0xff]
        %v7447 = vld [vmem:[%s7434 + $0x60] sm:$0xff]
        %v7448 = vld [vmem:[%s7434 + $0x68] sm:$0xff]
        %v7449 = vld [vmem:[%s7434 + $0x70] sm:$0xff]
        %v7450 = vld [vmem:[%s7434 + $0x78] sm:$0xff]
        %v7451 = vld [vmem:[%s7434 + $0x80] sm:$0xff]
        %v7452 = vld [vmem:[%s7434 + $0x88] sm:$0xff]
        %v7453 = vld [vmem:[%s7434 + $0x90] sm:$0xff]
        %v7454 = vld [vmem:[%s7434 + $0x98] sm:$0xff]
        %v7455 = vld [vmem:[%s7434 + $0xa0] sm:$0xff]
        %v7456 = vld [vmem:[%s7434 + $0xa8] sm:$0xff]
        %v7457 = vld [vmem:[%s7434 + $0xb0] sm:$0xff]
        %v7458 = vld [vmem:[%s7434 + $0xb8] sm:$0xff]
        %v7459 = vld [vmem:[%s7434 + $0xc0] sm:$0xff]
        %v7460 = vld [vmem:[%s7434 + $0xc8] sm:$0xff]
        %v7461 = vld [vmem:[%s7434 + $0xd0] sm:$0xff]
        %v7462 = vld [vmem:[%s7434 + $0xd8] sm:$0xff]
        %v7463 = vld [vmem:[%s7434 + $0xe0] sm:$0xff]
        %v7464 = vld [vmem:[%s7434 + $0xe8] sm:$0xff]
        %v7465 = vld [vmem:[%s7434 + $0xf0] sm:$0xff]
        %v7466 = vld [vmem:[%s7434 + $0xf8] sm:$0xff]
        %v7467 = vunpack.c.l.b16 %v7063
        %v7468 = vunpack.c.h.b16 %v7063
        %v7469 = vunpack.c.l.b16 %v7073
        %v7470 = vunpack.c.h.b16 %v7073
        %v7471 = vunpack.c.l.b16 %v7087
        %v7472 = vunpack.c.h.b16 %v7087
        %v7473 = vunpack.c.l.b16 %v7097
        %v7474 = vunpack.c.h.b16 %v7097
        %v7475 = vunpack.c.l.b16 %v7111
        %v7476 = vunpack.c.h.b16 %v7111
        %v7477 = vunpack.c.l.b16 %v7121
        %v7478 = vunpack.c.h.b16 %v7121
        %v7479 = vunpack.c.l.b16 %v7135
        %v7480 = vunpack.c.h.b16 %v7135
        %v7481 = vunpack.c.l.b16 %v7145
        %v7482 = vunpack.c.h.b16 %v7145
        %v7483 = vunpack.c.l.b16 %v7159
        %v7484 = vunpack.c.h.b16 %v7159
        %v7485 = vunpack.c.l.b16 %v7169
        %v7486 = vunpack.c.h.b16 %v7169
        %v7487 = vunpack.c.l.b16 %v7183
        %v7488 = vunpack.c.h.b16 %v7183
        %v7489 = vunpack.c.l.b16 %v7193
        %v7490 = vunpack.c.h.b16 %v7193
        %v7491 = vunpack.c.l.b16 %v7207
        %v7492 = vunpack.c.h.b16 %v7207
        %v7493 = vunpack.c.l.b16 %v7217
        %v7494 = vunpack.c.h.b16 %v7217
        %v7495 = vunpack.c.l.b16 %v7231
        %v7496 = vunpack.c.h.b16 %v7231
        %v7497 = vunpack.c.l.b16 %v7241
        %v7498 = vunpack.c.h.b16 %v7241
        %v7499 = vunpack.c.l.b16 %v7255
        %v7500 = vunpack.c.h.b16 %v7255
        %v7501 = vunpack.c.l.b16 %v7265
        %v7502 = vunpack.c.h.b16 %v7265
        %v7503 = vunpack.c.l.b16 %v7279
        %v7504 = vunpack.c.h.b16 %v7279
        %v7505 = vunpack.c.l.b16 %v7289
        %v7506 = vunpack.c.h.b16 %v7289
        %v7507 = vunpack.c.l.b16 %v7303
        %v7508 = vunpack.c.h.b16 %v7303
        %v7509 = vunpack.c.l.b16 %v7313
        %v7510 = vunpack.c.h.b16 %v7313
        %v7511 = vunpack.c.l.b16 %v7327
        %v7512 = vunpack.c.h.b16 %v7327
        %v7513 = vunpack.c.l.b16 %v7337
        %v7514 = vunpack.c.h.b16 %v7337
        %v7515 = vunpack.c.l.b16 %v7351
        %v7516 = vunpack.c.h.b16 %v7351
        %v7517 = vunpack.c.l.b16 %v7361
        %v7518 = vunpack.c.h.b16 %v7361
        %v7519 = vunpack.c.l.b16 %v7375
        %v7520 = vunpack.c.h.b16 %v7375
        %v7521 = vunpack.c.l.b16 %v7385
        %v7522 = vunpack.c.h.b16 %v7385
        %v7523 = vunpack.c.l.b16 %v7399
        %v7524 = vunpack.c.h.b16 %v7399
        %v7525 = vunpack.c.l.b16 %v7409
        %v7526 = vunpack.c.h.b16 %v7409
        %v7527 = vunpack.c.l.b16 %v7423
        %v7528 = vunpack.c.h.b16 %v7423
        %v7529 = vunpack.c.l.b16 %v7433
        %v7530 = vunpack.c.h.b16 %v7433
        %v7531 = vpack.c.b16 %v7469, %v7467
        %v7532 = vpack.c.b16 %v7470, %v7468
        %v7533 = vpack.c.b16 %v7473, %v7471
        %v7534 = vpack.c.b16 %v7474, %v7472
        %v7535 = vpack.c.b16 %v7477, %v7475
        %v7536 = vpack.c.b16 %v7478, %v7476
        %v7537 = vpack.c.b16 %v7481, %v7479
        %v7538 = vpack.c.b16 %v7482, %v7480
        %v7539 = vpack.c.b16 %v7485, %v7483
        %v7540 = vpack.c.b16 %v7486, %v7484
        %v7541 = vpack.c.b16 %v7489, %v7487
        %v7542 = vpack.c.b16 %v7490, %v7488
        %v7543 = vpack.c.b16 %v7493, %v7491
        %v7544 = vpack.c.b16 %v7494, %v7492
        %v7545 = vpack.c.b16 %v7497, %v7495
        %v7546 = vpack.c.b16 %v7498, %v7496
        %v7547 = vpack.c.b16 %v7501, %v7499
        %v7548 = vpack.c.b16 %v7502, %v7500
        %v7549 = vpack.c.b16 %v7505, %v7503
        %v7550 = vpack.c.b16 %v7506, %v7504
        %v7551 = vpack.c.b16 %v7509, %v7507
        %v7552 = vpack.c.b16 %v7510, %v7508
        %v7553 = vpack.c.b16 %v7513, %v7511
        %v7554 = vpack.c.b16 %v7514, %v7512
        %v7555 = vpack.c.b16 %v7517, %v7515
        %v7556 = vpack.c.b16 %v7518, %v7516
        %v7557 = vpack.c.b16 %v7521, %v7519
        %v7558 = vpack.c.b16 %v7522, %v7520
        %v7559 = vpack.c.b16 %v7525, %v7523
        %v7560 = vpack.c.b16 %v7526, %v7524
        %v7561 = vpack.c.b16 %v7529, %v7527
        %v7562 = vpack.c.b16 %v7530, %v7528
        %v7627 = vunpack.c.l.b16 %v7435
        %v7628 = vunpack.c.h.b16 %v7435
        %v7629 = vunpack.c.l.b16 %v7436
        %v7630 = vunpack.c.h.b16 %v7436
        %v7631 = vunpack.c.l.b16 %v7437
        %v7632 = vunpack.c.h.b16 %v7437
        %v7633 = vunpack.c.l.b16 %v7438
        %v7634 = vunpack.c.h.b16 %v7438
        %v7635 = vunpack.c.l.b16 %v7439
        %v7636 = vunpack.c.h.b16 %v7439
        %v7637 = vunpack.c.l.b16 %v7440
        %v7638 = vunpack.c.h.b16 %v7440
        %v7639 = vunpack.c.l.b16 %v7441
        %v7640 = vunpack.c.h.b16 %v7441
        %v7641 = vunpack.c.l.b16 %v7442
        %v7642 = vunpack.c.h.b16 %v7442
        %v7643 = vunpack.c.l.b16 %v7443
        %v7644 = vunpack.c.h.b16 %v7443
        %v7645 = vunpack.c.l.b16 %v7444
        %v7646 = vunpack.c.h.b16 %v7444
        %v7647 = vunpack.c.l.b16 %v7445
        %v7648 = vunpack.c.h.b16 %v7445
        %v7649 = vunpack.c.l.b16 %v7446
        %v7650 = vunpack.c.h.b16 %v7446
        %v7651 = vunpack.c.l.b16 %v7447
        %v7652 = vunpack.c.h.b16 %v7447
        %v7653 = vunpack.c.l.b16 %v7448
        %v7654 = vunpack.c.h.b16 %v7448
        %v7655 = vunpack.c.l.b16 %v7449
        %v7656 = vunpack.c.h.b16 %v7449
        %v7657 = vunpack.c.l.b16 %v7450
        %v7658 = vunpack.c.h.b16 %v7450
        %v7659 = vunpack.c.l.b16 %v7451
        %v7660 = vunpack.c.h.b16 %v7451
        %v7661 = vunpack.c.l.b16 %v7452
        %v7662 = vunpack.c.h.b16 %v7452
        %v7663 = vunpack.c.l.b16 %v7453
        %v7664 = vunpack.c.h.b16 %v7453
        %v7665 = vunpack.c.l.b16 %v7454
        %v7666 = vunpack.c.h.b16 %v7454
        %v7667 = vunpack.c.l.b16 %v7455
        %v7668 = vunpack.c.h.b16 %v7455
        %v7669 = vunpack.c.l.b16 %v7456
        %v7670 = vunpack.c.h.b16 %v7456
        %v7671 = vunpack.c.l.b16 %v7457
        %v7672 = vunpack.c.h.b16 %v7457
        %v7673 = vunpack.c.l.b16 %v7458
        %v7674 = vunpack.c.h.b16 %v7458
        %v7675 = vunpack.c.l.b16 %v7459
        %v7676 = vunpack.c.h.b16 %v7459
        %v7677 = vunpack.c.l.b16 %v7460
        %v7678 = vunpack.c.h.b16 %v7460
        %v7679 = vunpack.c.l.b16 %v7461
        %v7680 = vunpack.c.h.b16 %v7461
        %v7681 = vunpack.c.l.b16 %v7462
        %v7682 = vunpack.c.h.b16 %v7462
        %v7683 = vunpack.c.l.b16 %v7463
        %v7684 = vunpack.c.h.b16 %v7463
        %v7685 = vunpack.c.l.b16 %v7464
        %v7686 = vunpack.c.h.b16 %v7464
        %v7687 = vunpack.c.l.b16 %v7465
        %v7688 = vunpack.c.h.b16 %v7465
        %v7689 = vunpack.c.l.b16 %v7466
        %v7690 = vunpack.c.h.b16 %v7466
        %v7691 = vpack.c.b16 %v7629, %v7627
        %v7692 = vpack.c.b16 %v7630, %v7628
        %v7693 = vpack.c.b16 %v7633, %v7631
        %v7694 = vpack.c.b16 %v7634, %v7632
        %v7695 = vpack.c.b16 %v7637, %v7635
        %v7696 = vpack.c.b16 %v7638, %v7636
        %v7697 = vpack.c.b16 %v7641, %v7639
        %v7698 = vpack.c.b16 %v7642, %v7640
        %v7699 = vpack.c.b16 %v7645, %v7643
        %v7700 = vpack.c.b16 %v7646, %v7644
        %v7701 = vpack.c.b16 %v7649, %v7647
        %v7702 = vpack.c.b16 %v7650, %v7648
        %v7703 = vpack.c.b16 %v7653, %v7651
        %v7704 = vpack.c.b16 %v7654, %v7652
        %v7705 = vpack.c.b16 %v7657, %v7655
        %v7706 = vpack.c.b16 %v7658, %v7656
        %v7707 = vpack.c.b16 %v7661, %v7659
        %v7708 = vpack.c.b16 %v7662, %v7660
        %v7709 = vpack.c.b16 %v7665, %v7663
        %v7710 = vpack.c.b16 %v7666, %v7664
        %v7711 = vpack.c.b16 %v7669, %v7667
        %v7712 = vpack.c.b16 %v7670, %v7668
        %v7713 = vpack.c.b16 %v7673, %v7671
        %v7714 = vpack.c.b16 %v7674, %v7672
        %v7715 = vpack.c.b16 %v7677, %v7675
        %v7716 = vpack.c.b16 %v7678, %v7676
        %v7717 = vpack.c.b16 %v7681, %v7679
        %v7718 = vpack.c.b16 %v7682, %v7680
        %v7719 = vpack.c.b16 %v7685, %v7683
        %v7720 = vpack.c.b16 %v7686, %v7684
        %v7721 = vpack.c.b16 %v7689, %v7687
        %v7722 = vpack.c.b16 %v7690, %v7688
        %7755 = vmatprep.subr.bf16.mxu0 %v7692
        %7756 = vmatpush1.bf16.msra.mxu0 %v7691
        %7757 = vmatprep.subr.bf16.mxu0 %v7694
        %7758 = vmatpush1.bf16.msra.mxu0 %v7693
        %7759 = vmatprep.subr.bf16.mxu0 %v7696
        %7760 = vmatpush1.bf16.msra.mxu0 %v7695
        %7761 = vmatprep.subr.bf16.mxu0 %v7698
        %7762 = vmatpush1.bf16.msra.mxu0 %v7697
        %7763 = vmatprep.subr.bf16.mxu0 %v7700
        %7764 = vmatpush1.bf16.msra.mxu0 %v7699
        %7765 = vmatprep.subr.bf16.mxu0 %v7702
        %7766 = vmatpush1.bf16.msra.mxu0 %v7701
        %7767 = vmatprep.subr.bf16.mxu0 %v7704
        %7768 = vmatpush1.bf16.msra.mxu0 %v7703
        %7769 = vmatprep.subr.bf16.mxu0 %v7706
        %7770 = vmatpush1.bf16.msra.mxu0 %v7705
        %7771 = vmatprep.subr.bf16.mxu0 %v7708
        %7772 = vmatpush1.bf16.msra.mxu0 %v7707
        %7773 = vmatprep.subr.bf16.mxu0 %v7710
        %7774 = vmatpush1.bf16.msra.mxu0 %v7709
        %7775 = vmatprep.subr.bf16.mxu0 %v7712
        %7776 = vmatpush1.bf16.msra.mxu0 %v7711
        %7777 = vmatprep.subr.bf16.mxu0 %v7714
        %7778 = vmatpush1.bf16.msra.mxu0 %v7713
        %7779 = vmatprep.subr.bf16.mxu0 %v7716
        %7780 = vmatpush1.bf16.msra.mxu0 %v7715
        %7781 = vmatprep.subr.bf16.mxu0 %v7718
        %7782 = vmatpush1.bf16.msra.mxu0 %v7717
        %7783 = vmatprep.subr.bf16.mxu0 %v7720
        %7784 = vmatpush1.bf16.msra.mxu0 %v7719
        %7785 = vmatprep.subr.bf16.mxu0 %v7722
        %7786 = vmatpush1.bf16.msra.mxu0 %v7721
        %7787 = vmatprep.mubr.bf16.mxu0 %v7532
        %7788 = vmatmul.mubr.bf16.gmra.mrb[0].mxu0 %v7531
        %v7789 = vpop.f32.mrb[0].mxu0
        %v7790 = vadd.f32 0.0, %v7789
        %v7791 = vpop.f32.mrb[0].mxu0
        %v7792 = vadd.f32 0.0, %v7791
        %v7793 = vpop.f32.mrb[0].mxu0
        %v7794 = vadd.f32 0.0, %v7793
        %v7795 = vpop.f32.mrb[0].mxu0
        %v7796 = vadd.f32 0.0, %v7795
        %7797 = vmatprep.mubr.bf16.mxu0 %v7534
        %7798 = vmatmul.mubr.bf16.gmra.mrb[0].mxu0 %v7533
        %v7799 = vpop.f32.mrb[0].mxu0
        %v7800 = vadd.f32 0.0, %v7799
        %v7801 = vpop.f32.mrb[0].mxu0
        %v7802 = vadd.f32 0.0, %v7801
        %v7803 = vpop.f32.mrb[0].mxu0
        %v7804 = vadd.f32 0.0, %v7803
        %v7805 = vpop.f32.mrb[0].mxu0
        %v7806 = vadd.f32 0.0, %v7805
        %7807 = vmatprep.mubr.bf16.mxu0 %v7536
        %7808 = vmatmul.mubr.bf16.gmra.mrb[0].mxu0 %v7535
        %v7809 = vpop.f32.mrb[0].mxu0
        %v7810 = vadd.f32 0.0, %v7809
        %v7811 = vpop.f32.mrb[0].mxu0
        %v7812 = vadd.f32 0.0, %v7811
        %v7813 = vpop.f32.mrb[0].mxu0
        %v7814 = vadd.f32 0.0, %v7813
        %v7815 = vpop.f32.mrb[0].mxu0
        %v7816 = vadd.f32 0.0, %v7815
        %7817 = vmatprep.mubr.bf16.mxu0 %v7538
        %7818 = vmatmul.mubr.bf16.gmra.mrb[0].mxu0 %v7537
        %v7819 = vpop.f32.mrb[0].mxu0
        %v7820 = vadd.f32 0.0, %v7819
        %v7821 = vpop.f32.mrb[0].mxu0
        %v7822 = vadd.f32 0.0, %v7821
        %v7823 = vpop.f32.mrb[0].mxu0
        %v7824 = vadd.f32 0.0, %v7823
        %v7825 = vpop.f32.mrb[0].mxu0
        %v7826 = vadd.f32 0.0, %v7825
        %7827 = vmatprep.mubr.bf16.mxu0 %v7540
        %7828 = vmatmul.mubr.bf16.gmra.mrb[0].mxu0 %v7539
        %v7829 = vpop.f32.mrb[0].mxu0
        %v7830 = vadd.f32 0.0, %v7829
        %v7831 = vpop.f32.mrb[0].mxu0
        %v7832 = vadd.f32 0.0, %v7831
        %v7833 = vpop.f32.mrb[0].mxu0
        %v7834 = vadd.f32 0.0, %v7833
        %v7835 = vpop.f32.mrb[0].mxu0
        %v7836 = vadd.f32 0.0, %v7835
        %7837 = vmatprep.mubr.bf16.mxu0 %v7542
        %7838 = vmatmul.mubr.bf16.gmra.mrb[0].mxu0 %v7541
        %v7839 = vpop.f32.mrb[0].mxu0
        %v7840 = vadd.f32 0.0, %v7839
        %v7841 = vpop.f32.mrb[0].mxu0
        %v7842 = vadd.f32 0.0, %v7841
        %v7843 = vpop.f32.mrb[0].mxu0
        %v7844 = vadd.f32 0.0, %v7843
        %v7845 = vpop.f32.mrb[0].mxu0
        %v7846 = vadd.f32 0.0, %v7845
        %7847 = vmatprep.mubr.bf16.mxu0 %v7544
        %7848 = vmatmul.mubr.bf16.gmra.mrb[0].mxu0 %v7543
        %v7849 = vpop.f32.mrb[0].mxu0
        %v7850 = vadd.f32 0.0, %v7849
        %v7851 = vpop.f32.mrb[0].mxu0
        %v7852 = vadd.f32 0.0, %v7851
        %v7853 = vpop.f32.mrb[0].mxu0
        %v7854 = vadd.f32 0.0, %v7853
        %v7855 = vpop.f32.mrb[0].mxu0
        %v7856 = vadd.f32 0.0, %v7855
        %7857 = vmatprep.mubr.bf16.mxu0 %v7546
        %7858 = vmatmul.mubr.bf16.gmra.mrb[0].mxu0 %v7545
        %v7859 = vpop.f32.mrb[0].mxu0
        %v7860 = vadd.f32 0.0, %v7859
        %v7861 = vpop.f32.mrb[0].mxu0
        %v7862 = vadd.f32 0.0, %v7861
        %v7863 = vpop.f32.mrb[0].mxu0
        %v7864 = vadd.f32 0.0, %v7863
        %v7865 = vpop.f32.mrb[0].mxu0
        %v7866 = vadd.f32 0.0, %v7865
        %7867 = vmatprep.mubr.bf16.mxu0 %v7548
        %7868 = vmatmul.mubr.bf16.gmra.mrb[0].mxu0 %v7547
        %v7869 = vpop.f32.mrb[0].mxu0
        %v7870 = vadd.f32 0.0, %v7869
        %v7871 = vpop.f32.mrb[0].mxu0
        %v7872 = vadd.f32 0.0, %v7871
        %v7873 = vpop.f32.mrb[0].mxu0
        %v7874 = vadd.f32 0.0, %v7873
        %v7875 = vpop.f32.mrb[0].mxu0
        %v7876 = vadd.f32 0.0, %v7875
        %7877 = vmatprep.mubr.bf16.mxu0 %v7550
        %7878 = vmatmul.mubr.bf16.gmra.mrb[0].mxu0 %v7549
        %v7879 = vpop.f32.mrb[0].mxu0
        %v7880 = vadd.f32 0.0, %v7879
        %v7881 = vpop.f32.mrb[0].mxu0
        %v7882 = vadd.f32 0.0, %v7881
        %v7883 = vpop.f32.mrb[0].mxu0
        %v7884 = vadd.f32 0.0, %v7883
        %v7885 = vpop.f32.mrb[0].mxu0
        %v7886 = vadd.f32 0.0, %v7885
        %7887 = vmatprep.mubr.bf16.mxu0 %v7552
        %7888 = vmatmul.mubr.bf16.gmra.mrb[0].mxu0 %v7551
        %v7889 = vpop.f32.mrb[0].mxu0
        %v7890 = vadd.f32 0.0, %v7889
        %v7891 = vpop.f32.mrb[0].mxu0
        %v7892 = vadd.f32 0.0, %v7891
        %v7893 = vpop.f32.mrb[0].mxu0
        %v7894 = vadd.f32 0.0, %v7893
        %v7895 = vpop.f32.mrb[0].mxu0
        %v7896 = vadd.f32 0.0, %v7895
        %7897 = vmatprep.mubr.bf16.mxu0 %v7554
        %7898 = vmatmul.mubr.bf16.gmra.mrb[0].mxu0 %v7553
        %v7899 = vpop.f32.mrb[0].mxu0
        %v7900 = vadd.f32 0.0, %v7899
        %v7901 = vpop.f32.mrb[0].mxu0
        %v7902 = vadd.f32 0.0, %v7901
        %v7903 = vpop.f32.mrb[0].mxu0
        %v7904 = vadd.f32 0.0, %v7903
        %v7905 = vpop.f32.mrb[0].mxu0
        %v7906 = vadd.f32 0.0, %v7905
        %7907 = vmatprep.mubr.bf16.mxu0 %v7556
        %7908 = vmatmul.mubr.bf16.gmra.mrb[0].mxu0 %v7555
        %v7909 = vpop.f32.mrb[0].mxu0
        %v7910 = vadd.f32 0.0, %v7909
        %v7911 = vpop.f32.mrb[0].mxu0
        %v7912 = vadd.f32 0.0, %v7911
        %v7913 = vpop.f32.mrb[0].mxu0
        %v7914 = vadd.f32 0.0, %v7913
        %v7915 = vpop.f32.mrb[0].mxu0
        %v7916 = vadd.f32 0.0, %v7915
        %7917 = vmatprep.mubr.bf16.mxu0 %v7558
        %7918 = vmatmul.mubr.bf16.gmra.mrb[0].mxu0 %v7557
        %v7919 = vpop.f32.mrb[0].mxu0
        %v7920 = vadd.f32 0.0, %v7919
        %v7921 = vpop.f32.mrb[0].mxu0
        %v7922 = vadd.f32 0.0, %v7921
        %v7923 = vpop.f32.mrb[0].mxu0
        %v7924 = vadd.f32 0.0, %v7923
        %v7925 = vpop.f32.mrb[0].mxu0
        %v7926 = vadd.f32 0.0, %v7925
        %7927 = vmatprep.mubr.bf16.mxu0 %v7560
        %7928 = vmatmul.mubr.bf16.gmra.mrb[0].mxu0 %v7559
        %v7929 = vpop.f32.mrb[0].mxu0
        %v7930 = vadd.f32 0.0, %v7929
        %v7931 = vpop.f32.mrb[0].mxu0
        %v7932 = vadd.f32 0.0, %v7931
        %v7933 = vpop.f32.mrb[0].mxu0
        %v7934 = vadd.f32 0.0, %v7933
        %v7935 = vpop.f32.mrb[0].mxu0
        %v7936 = vadd.f32 0.0, %v7935
        %7937 = vmatprep.mubr.bf16.mxu0 %v7562
        %7938 = vmatmul.mubr.bf16.gmra.mrb[0].mxu0 %v7561
        %v7939 = vpop.f32.mrb[0].mxu0
        %v7940 = vadd.f32 0.0, %v7939
        %v7941 = vpop.f32.mrb[0].mxu0
        %v7942 = vadd.f32 0.0, %v7941
        %v7943 = vpop.f32.mrb[0].mxu0
        %v7944 = vadd.f32 0.0, %v7943
        %v7945 = vpop.f32.mrb[0].mxu0
        %v7946 = vadd.f32 0.0, %v7945
        %7947 = vdwg.mxu0
        %v7948 = vadd.f32 %v6938, %v7790
        %v7949 = vadd.f32 %v6939, %v7792
        %v7950 = vadd.f32 %v6940, %v7794
        %v7951 = vadd.f32 %v6941, %v7796
        %v7952 = vadd.f32 %v6942, %v7800
        %v7953 = vadd.f32 %v6943, %v7802
        %v7954 = vadd.f32 %v6944, %v7804
        %v7955 = vadd.f32 %v6945, %v7806
        %v7956 = vadd.f32 %v6946, %v7810
        %v7957 = vadd.f32 %v6947, %v7812
        %v7958 = vadd.f32 %v6948, %v7814
        %v7959 = vadd.f32 %v6949, %v7816
        %v7960 = vadd.f32 %v6950, %v7820
        %v7961 = vadd.f32 %v6951, %v7822
        %v7962 = vadd.f32 %v6952, %v7824
        %v7963 = vadd.f32 %v6953, %v7826
        %v7964 = vadd.f32 %v6954, %v7830
        %v7965 = vadd.f32 %v6955, %v7832
        %v7966 = vadd.f32 %v6956, %v7834
        %v7967 = vadd.f32 %v6957, %v7836
        %v7968 = vadd.f32 %v6958, %v7840
        %v7969 = vadd.f32 %v6959, %v7842
        %v7970 = vadd.f32 %v6960, %v7844
        %v7971 = vadd.f32 %v6961, %v7846
        %v7972 = vadd.f32 %v6962, %v7850
        %v7973 = vadd.f32 %v6963, %v7852
        %v7974 = vadd.f32 %v6964, %v7854
        %v7975 = vadd.f32 %v6965, %v7856
        %v7976 = vadd.f32 %v6966, %v7860
        %v7977 = vadd.f32 %v6967, %v7862
        %v7978 = vadd.f32 %v6968, %v7864
        %v7979 = vadd.f32 %v6969, %v7866
        %v7980 = vadd.f32 %v6970, %v7870
        %v7981 = vadd.f32 %v6971, %v7872
        %v7982 = vadd.f32 %v6972, %v7874
        %v7983 = vadd.f32 %v6973, %v7876
        %v7984 = vadd.f32 %v6974, %v7880
        %v7985 = vadd.f32 %v6975, %v7882
        %v7986 = vadd.f32 %v6976, %v7884
        %v7987 = vadd.f32 %v6977, %v7886
        %v7988 = vadd.f32 %v6978, %v7890
        %v7989 = vadd.f32 %v6979, %v7892
        %v7990 = vadd.f32 %v6980, %v7894
        %v7991 = vadd.f32 %v6981, %v7896
        %v7992 = vadd.f32 %v6982, %v7900
        %v7993 = vadd.f32 %v6983, %v7902
        %v7994 = vadd.f32 %v6984, %v7904
        %v7995 = vadd.f32 %v6985, %v7906
        %v7996 = vadd.f32 %v6986, %v7910
        %v7997 = vadd.f32 %v6987, %v7912
        %v7998 = vadd.f32 %v6988, %v7914
        %v7999 = vadd.f32 %v6989, %v7916
        %v8000 = vadd.f32 %v6990, %v7920
        %v8001 = vadd.f32 %v6991, %v7922
        %v8002 = vadd.f32 %v6992, %v7924
        %v8003 = vadd.f32 %v6993, %v7926
        %v8004 = vadd.f32 %v6994, %v7930
        %v8005 = vadd.f32 %v6995, %v7932
        %v8006 = vadd.f32 %v6996, %v7934
        %v8007 = vadd.f32 %v6997, %v7936
        %v8008 = vadd.f32 %v6998, %v7940
        %v8009 = vadd.f32 %v6999, %v7942
        %v8010 = vadd.f32 %v7000, %v7944
        %v8011 = vadd.f32 %v7001, %v7946
        %v8012 = vld [vmem:[%s6359] sm:$0xee]
        %v8013 = vld [vmem:[%s6359 + $0x18] sm:$0xee]
        %v8014 = vld [vmem:[%s6359 + $0x30] sm:$0xee]
        %v8015 = vld [vmem:[%s6359 + $0x48] sm:$0xee]
        %v8016 = vld [vmem:[%s6359 + $0x60] sm:$0xee]
        %v8017 = vld [vmem:[%s6359 + $0x78] sm:$0xee]
        %v8018 = vld [vmem:[%s6359 + $0x90] sm:$0xee]
        %v8019 = vld [vmem:[%s6359 + $0xa8] sm:$0xee]
        %v8020 = vld [vmem:[%s6359 + $0xc0] sm:$0xee]
        %v8021 = vld [vmem:[%s6359 + $0xd8] sm:$0xee]
        %v8022 = vld [vmem:[%s6359 + $0xf0] sm:$0xee]
        %v8023 = vld [vmem:[%s6359 + $0x108] sm:$0xee]
        %v8024 = vld [vmem:[%s6359 + $0x120] sm:$0xee]
        %v8025 = vld [vmem:[%s6359 + $0x138] sm:$0xee]
        %v8026 = vld [vmem:[%s6359 + $0x150] sm:$0xee]
        %v8027 = vld [vmem:[%s6359 + $0x168] sm:$0xee]
        %v8076 = vrot.slane %v8012, 5
        %v8077 = vrot.slane %v8076, 4
        %v8078 = vrot.slane %v7003, 5
        %v8079 = vsel %vm3261, %v8077, %v8078
        %v8080 = vrot.slane %v8078, 4
        %v8081 = vrot.slane %v7004, 5
        %v8082 = vsel %vm3261, %v8080, %v8081
        %v8083 = vrot.slane %v8013, 5
        %v8084 = vrot.slane %v8083, 4
        %v8085 = vrot.slane %v7006, 5
        %v8086 = vsel %vm3261, %v8084, %v8085
        %v8087 = vrot.slane %v8085, 4
        %v8088 = vrot.slane %v7007, 5
        %v8089 = vsel %vm3261, %v8087, %v8088
        %v8090 = vrot.slane %v8014, 5
        %v8091 = vrot.slane %v8090, 4
        %v8092 = vrot.slane %v7009, 5
        %v8093 = vsel %vm3261, %v8091, %v8092
        %v8094 = vrot.slane %v8092, 4
        %v8095 = vrot.slane %v7010, 5
        %v8096 = vsel %vm3261, %v8094, %v8095
        %v8097 = vrot.slane %v8015, 5
        %v8098 = vrot.slane %v8097, 4
        %v8099 = vrot.slane %v7012, 5
        %v8100 = vsel %vm3261, %v8098, %v8099
        %v8101 = vrot.slane %v8099, 4
        %v8102 = vrot.slane %v7013, 5
        %v8103 = vsel %vm3261, %v8101, %v8102
        %v8104 = vrot.slane %v8016, 5
        %v8105 = vrot.slane %v8104, 4
        %v8106 = vrot.slane %v7015, 5
        %v8107 = vsel %vm3261, %v8105, %v8106
        %v8108 = vrot.slane %v8106, 4
        %v8109 = vrot.slane %v7016, 5
        %v8110 = vsel %vm3261, %v8108, %v8109
        %v8111 = vrot.slane %v8017, 5
        %v8112 = vrot.slane %v8111, 4
        %v8113 = vrot.slane %v7018, 5
        %v8114 = vsel %vm3261, %v8112, %v8113
        %v8115 = vrot.slane %v8113, 4
        %v8116 = vrot.slane %v7019, 5
        %v8117 = vsel %vm3261, %v8115, %v8116
        %v8118 = vrot.slane %v8018, 5
        %v8119 = vrot.slane %v8118, 4
        %v8120 = vrot.slane %v7021, 5
        %v8121 = vsel %vm3261, %v8119, %v8120
        %v8122 = vrot.slane %v8120, 4
        %v8123 = vrot.slane %v7022, 5
        %v8124 = vsel %vm3261, %v8122, %v8123
        %v8125 = vrot.slane %v8019, 5
        %v8126 = vrot.slane %v8125, 4
        %v8127 = vrot.slane %v7024, 5
        %v8128 = vsel %vm3261, %v8126, %v8127
        %v8129 = vrot.slane %v8127, 4
        %v8130 = vrot.slane %v7025, 5
        %v8131 = vsel %vm3261, %v8129, %v8130
        %v8132 = vrot.slane %v8020, 5
        %v8133 = vrot.slane %v8132, 4
        %v8134 = vrot.slane %v7027, 5
        %v8135 = vsel %vm3261, %v8133, %v8134
        %v8136 = vrot.slane %v8134, 4
        %v8137 = vrot.slane %v7028, 5
        %v8138 = vsel %vm3261, %v8136, %v8137
        %v8139 = vrot.slane %v8021, 5
        %v8140 = vrot.slane %v8139, 4
        %v8141 = vrot.slane %v7030, 5
        %v8142 = vsel %vm3261, %v8140, %v8141
        %v8143 = vrot.slane %v8141, 4
        %v8144 = vrot.slane %v7031, 5
        %v8145 = vsel %vm3261, %v8143, %v8144
        %v8146 = vrot.slane %v8022, 5
        %v8147 = vrot.slane %v8146, 4
        %v8148 = vrot.slane %v7033, 5
        %v8149 = vsel %vm3261, %v8147, %v8148
        %v8150 = vrot.slane %v8148, 4
        %v8151 = vrot.slane %v7034, 5
        %v8152 = vsel %vm3261, %v8150, %v8151
        %v8153 = vrot.slane %v8023, 5
        %v8154 = vrot.slane %v8153, 4
        %v8155 = vrot.slane %v7036, 5
        %v8156 = vsel %vm3261, %v8154, %v8155
        %v8157 = vrot.slane %v8155, 4
        %v8158 = vrot.slane %v7037, 5
        %v8159 = vsel %vm3261, %v8157, %v8158
        %v8160 = vrot.slane %v8024, 5
        %v8161 = vrot.slane %v8160, 4
        %v8162 = vrot.slane %v7039, 5
        %v8163 = vsel %vm3261, %v8161, %v8162
        %v8164 = vrot.slane %v8162, 4
        %v8165 = vrot.slane %v7040, 5
        %v8166 = vsel %vm3261, %v8164, %v8165
        %v8167 = vrot.slane %v8025, 5
        %v8168 = vrot.slane %v8167, 4
        %v8169 = vrot.slane %v7042, 5
        %v8170 = vsel %vm3261, %v8168, %v8169
        %v8171 = vrot.slane %v8169, 4
        %v8172 = vrot.slane %v7043, 5
        %v8173 = vsel %vm3261, %v8171, %v8172
        %v8174 = vrot.slane %v8026, 5
        %v8175 = vrot.slane %v8174, 4
        %v8176 = vrot.slane %v7045, 5
        %v8177 = vsel %vm3261, %v8175, %v8176
        %v8178 = vrot.slane %v8176, 4
        %v8179 = vrot.slane %v7046, 5
        %v8180 = vsel %vm3261, %v8178, %v8179
        %v8181 = vrot.slane %v8027, 5
        %v8182 = vrot.slane %v8181, 4
        %v8183 = vrot.slane %v7048, 5
        %v8184 = vsel %vm3261, %v8182, %v8183
        %v8185 = vrot.slane %v8183, 4
        %v8186 = vrot.slane %v7049, 5
        %v8187 = vsel %vm3261, %v8185, %v8186
        %s8188 = scalar_lea.vmem [#allocation9], 2048
        %v8189 = vld [vmem:[%s8188] sm:$0xff]
        %v8190 = vld [vmem:[%s8188 + $0x8] sm:$0xff]
        %v8191 = vld [vmem:[%s8188 + $0x10] sm:$0xff]
        %v8192 = vld [vmem:[%s8188 + $0x18] sm:$0xff]
        %v8193 = vld [vmem:[%s8188 + $0x20] sm:$0xff]
        %v8194 = vld [vmem:[%s8188 + $0x28] sm:$0xff]
        %v8195 = vld [vmem:[%s8188 + $0x30] sm:$0xff]
        %v8196 = vld [vmem:[%s8188 + $0x38] sm:$0xff]
        %v8197 = vld [vmem:[%s8188 + $0x40] sm:$0xff]
        %v8198 = vld [vmem:[%s8188 + $0x48] sm:$0xff]
        %v8199 = vld [vmem:[%s8188 + $0x50] sm:$0xff]
        %v8200 = vld [vmem:[%s8188 + $0x58] sm:$0xff]
        %v8201 = vld [vmem:[%s8188 + $0x60] sm:$0xff]
        %v8202 = vld [vmem:[%s8188 + $0x68] sm:$0xff]
        %v8203 = vld [vmem:[%s8188 + $0x70] sm:$0xff]
        %v8204 = vld [vmem:[%s8188 + $0x78] sm:$0xff]
        %v8205 = vld [vmem:[%s8188 + $0x80] sm:$0xff]
        %v8206 = vld [vmem:[%s8188 + $0x88] sm:$0xff]
        %v8207 = vld [vmem:[%s8188 + $0x90] sm:$0xff]
        %v8208 = vld [vmem:[%s8188 + $0x98] sm:$0xff]
        %v8209 = vld [vmem:[%s8188 + $0xa0] sm:$0xff]
        %v8210 = vld [vmem:[%s8188 + $0xa8] sm:$0xff]
        %v8211 = vld [vmem:[%s8188 + $0xb0] sm:$0xff]
        %v8212 = vld [vmem:[%s8188 + $0xb8] sm:$0xff]
        %v8213 = vld [vmem:[%s8188 + $0xc0] sm:$0xff]
        %v8214 = vld [vmem:[%s8188 + $0xc8] sm:$0xff]
        %v8215 = vld [vmem:[%s8188 + $0xd0] sm:$0xff]
        %v8216 = vld [vmem:[%s8188 + $0xd8] sm:$0xff]
        %v8217 = vld [vmem:[%s8188 + $0xe0] sm:$0xff]
        %v8218 = vld [vmem:[%s8188 + $0xe8] sm:$0xff]
        %v8219 = vld [vmem:[%s8188 + $0xf0] sm:$0xff]
        %v8220 = vld [vmem:[%s8188 + $0xf8] sm:$0xff]
        %v8221 = vunpack.c.l.b16 %v8079
        %v8222 = vunpack.c.h.b16 %v8079
        %v8223 = vunpack.c.l.b16 %v8082
        %v8224 = vunpack.c.h.b16 %v8082
        %v8225 = vunpack.c.l.b16 %v8086
        %v8226 = vunpack.c.h.b16 %v8086
        %v8227 = vunpack.c.l.b16 %v8089
        %v8228 = vunpack.c.h.b16 %v8089
        %v8229 = vunpack.c.l.b16 %v8093
        %v8230 = vunpack.c.h.b16 %v8093
        %v8231 = vunpack.c.l.b16 %v8096
        %v8232 = vunpack.c.h.b16 %v8096
        %v8233 = vunpack.c.l.b16 %v8100
        %v8234 = vunpack.c.h.b16 %v8100
        %v8235 = vunpack.c.l.b16 %v8103
        %v8236 = vunpack.c.h.b16 %v8103
        %v8237 = vunpack.c.l.b16 %v8107
        %v8238 = vunpack.c.h.b16 %v8107
        %v8239 = vunpack.c.l.b16 %v8110
        %v8240 = vunpack.c.h.b16 %v8110
        %v8241 = vunpack.c.l.b16 %v8114
        %v8242 = vunpack.c.h.b16 %v8114
        %v8243 = vunpack.c.l.b16 %v8117
        %v8244 = vunpack.c.h.b16 %v8117
        %v8245 = vunpack.c.l.b16 %v8121
        %v8246 = vunpack.c.h.b16 %v8121
        %v8247 = vunpack.c.l.b16 %v8124
        %v8248 = vunpack.c.h.b16 %v8124
        %v8249 = vunpack.c.l.b16 %v8128
        %v8250 = vunpack.c.h.b16 %v8128
        %v8251 = vunpack.c.l.b16 %v8131
        %v8252 = vunpack.c.h.b16 %v8131
        %v8253 = vunpack.c.l.b16 %v8135
        %v8254 = vunpack.c.h.b16 %v8135
        %v8255 = vunpack.c.l.b16 %v8138
        %v8256 = vunpack.c.h.b16 %v8138
        %v8257 = vunpack.c.l.b16 %v8142
        %v8258 = vunpack.c.h.b16 %v8142
        %v8259 = vunpack.c.l.b16 %v8145
        %v8260 = vunpack.c.h.b16 %v8145
        %v8261 = vunpack.c.l.b16 %v8149
        %v8262 = vunpack.c.h.b16 %v8149
        %v8263 = vunpack.c.l.b16 %v8152
        %v8264 = vunpack.c.h.b16 %v8152
        %v8265 = vunpack.c.l.b16 %v8156
        %v8266 = vunpack.c.h.b16 %v8156
        %v8267 = vunpack.c.l.b16 %v8159
        %v8268 = vunpack.c.h.b16 %v8159
        %v8269 = vunpack.c.l.b16 %v8163
        %v8270 = vunpack.c.h.b16 %v8163
        %v8271 = vunpack.c.l.b16 %v8166
        %v8272 = vunpack.c.h.b16 %v8166
        %v8273 = vunpack.c.l.b16 %v8170
        %v8274 = vunpack.c.h.b16 %v8170
        %v8275 = vunpack.c.l.b16 %v8173
        %v8276 = vunpack.c.h.b16 %v8173
        %v8277 = vunpack.c.l.b16 %v8177
        %v8278 = vunpack.c.h.b16 %v8177
        %v8279 = vunpack.c.l.b16 %v8180
        %v8280 = vunpack.c.h.b16 %v8180
        %v8281 = vunpack.c.l.b16 %v8184
        %v8282 = vunpack.c.h.b16 %v8184
        %v8283 = vunpack.c.l.b16 %v8187
        %v8284 = vunpack.c.h.b16 %v8187
        %v8285 = vpack.c.b16 %v8223, %v8221
        %v8286 = vpack.c.b16 %v8224, %v8222
        %v8287 = vpack.c.b16 %v8227, %v8225
        %v8288 = vpack.c.b16 %v8228, %v8226
        %v8289 = vpack.c.b16 %v8231, %v8229
        %v8290 = vpack.c.b16 %v8232, %v8230
        %v8291 = vpack.c.b16 %v8235, %v8233
        %v8292 = vpack.c.b16 %v8236, %v8234
        %v8293 = vpack.c.b16 %v8239, %v8237
        %v8294 = vpack.c.b16 %v8240, %v8238
        %v8295 = vpack.c.b16 %v8243, %v8241
        %v8296 = vpack.c.b16 %v8244, %v8242
        %v8297 = vpack.c.b16 %v8247, %v8245
        %v8298 = vpack.c.b16 %v8248, %v8246
        %v8299 = vpack.c.b16 %v8251, %v8249
        %v8300 = vpack.c.b16 %v8252, %v8250
        %v8301 = vpack.c.b16 %v8255, %v8253
        %v8302 = vpack.c.b16 %v8256, %v8254
        %v8303 = vpack.c.b16 %v8259, %v8257
        %v8304 = vpack.c.b16 %v8260, %v8258
        %v8305 = vpack.c.b16 %v8263, %v8261
        %v8306 = vpack.c.b16 %v8264, %v8262
        %v8307 = vpack.c.b16 %v8267, %v8265
        %v8308 = vpack.c.b16 %v8268, %v8266
        %v8309 = vpack.c.b16 %v8271, %v8269
        %v8310 = vpack.c.b16 %v8272, %v8270
        %v8311 = vpack.c.b16 %v8275, %v8273
        %v8312 = vpack.c.b16 %v8276, %v8274
        %v8313 = vpack.c.b16 %v8279, %v8277
        %v8314 = vpack.c.b16 %v8280, %v8278
        %v8315 = vpack.c.b16 %v8283, %v8281
        %v8316 = vpack.c.b16 %v8284, %v8282
        %v8381 = vunpack.c.l.b16 %v8189
        %v8382 = vunpack.c.h.b16 %v8189
        %v8383 = vunpack.c.l.b16 %v8190
        %v8384 = vunpack.c.h.b16 %v8190
        %v8385 = vunpack.c.l.b16 %v8191
        %v8386 = vunpack.c.h.b16 %v8191
        %v8387 = vunpack.c.l.b16 %v8192
        %v8388 = vunpack.c.h.b16 %v8192
        %v8389 = vunpack.c.l.b16 %v8193
        %v8390 = vunpack.c.h.b16 %v8193
        %v8391 = vunpack.c.l.b16 %v8194
        %v8392 = vunpack.c.h.b16 %v8194
        %v8393 = vunpack.c.l.b16 %v8195
        %v8394 = vunpack.c.h.b16 %v8195
        %v8395 = vunpack.c.l.b16 %v8196
        %v8396 = vunpack.c.h.b16 %v8196
        %v8397 = vunpack.c.l.b16 %v8197
        %v8398 = vunpack.c.h.b16 %v8197
        %v8399 = vunpack.c.l.b16 %v8198
        %v8400 = vunpack.c.h.b16 %v8198
        %v8401 = vunpack.c.l.b16 %v8199
        %v8402 = vunpack.c.h.b16 %v8199
        %v8403 = vunpack.c.l.b16 %v8200
        %v8404 = vunpack.c.h.b16 %v8200
        %v8405 = vunpack.c.l.b16 %v8201
        %v8406 = vunpack.c.h.b16 %v8201
        %v8407 = vunpack.c.l.b16 %v8202
        %v8408 = vunpack.c.h.b16 %v8202
        %v8409 = vunpack.c.l.b16 %v8203
        %v8410 = vunpack.c.h.b16 %v8203
        %v8411 = vunpack.c.l.b16 %v8204
        %v8412 = vunpack.c.h.b16 %v8204
        %v8413 = vunpack.c.l.b16 %v8205
        %v8414 = vunpack.c.h.b16 %v8205
        %v8415 = vunpack.c.l.b16 %v8206
        %v8416 = vunpack.c.h.b16 %v8206
        %v8417 = vunpack.c.l.b16 %v8207
        %v8418 = vunpack.c.h.b16 %v8207
        %v8419 = vunpack.c.l.b16 %v8208
        %v8420 = vunpack.c.h.b16 %v8208
        %v8421 = vunpack.c.l.b16 %v8209
        %v8422 = vunpack.c.h.b16 %v8209
        %v8423 = vunpack.c.l.b16 %v8210
        %v8424 = vunpack.c.h.b16 %v8210
        %v8425 = vunpack.c.l.b16 %v8211
        %v8426 = vunpack.c.h.b16 %v8211
        %v8427 = vunpack.c.l.b16 %v8212
        %v8428 = vunpack.c.h.b16 %v8212
        %v8429 = vunpack.c.l.b16 %v8213
        %v8430 = vunpack.c.h.b16 %v8213
        %v8431 = vunpack.c.l.b16 %v8214
        %v8432 = vunpack.c.h.b16 %v8214
        %v8433 = vunpack.c.l.b16 %v8215
        %v8434 = vunpack.c.h.b16 %v8215
        %v8435 = vunpack.c.l.b16 %v8216
        %v8436 = vunpack.c.h.b16 %v8216
        %v8437 = vunpack.c.l.b16 %v8217
        %v8438 = vunpack.c.h.b16 %v8217
        %v8439 = vunpack.c.l.b16 %v8218
        %v8440 = vunpack.c.h.b16 %v8218
        %v8441 = vunpack.c.l.b16 %v8219
        %v8442 = vunpack.c.h.b16 %v8219
        %v8443 = vunpack.c.l.b16 %v8220
        %v8444 = vunpack.c.h.b16 %v8220
        %v8445 = vpack.c.b16 %v8383, %v8381
        %v8446 = vpack.c.b16 %v8384, %v8382
        %v8447 = vpack.c.b16 %v8387, %v8385
        %v8448 = vpack.c.b16 %v8388, %v8386
        %v8449 = vpack.c.b16 %v8391, %v8389
        %v8450 = vpack.c.b16 %v8392, %v8390
        %v8451 = vpack.c.b16 %v8395, %v8393
        %v8452 = vpack.c.b16 %v8396, %v8394
        %v8453 = vpack.c.b16 %v8399, %v8397
        %v8454 = vpack.c.b16 %v8400, %v8398
        %v8455 = vpack.c.b16 %v8403, %v8401
        %v8456 = vpack.c.b16 %v8404, %v8402
        %v8457 = vpack.c.b16 %v8407, %v8405
        %v8458 = vpack.c.b16 %v8408, %v8406
        %v8459 = vpack.c.b16 %v8411, %v8409
        %v8460 = vpack.c.b16 %v8412, %v8410
        %v8461 = vpack.c.b16 %v8415, %v8413
        %v8462 = vpack.c.b16 %v8416, %v8414
        %v8463 = vpack.c.b16 %v8419, %v8417
        %v8464 = vpack.c.b16 %v8420, %v8418
        %v8465 = vpack.c.b16 %v8423, %v8421
        %v8466 = vpack.c.b16 %v8424, %v8422
        %v8467 = vpack.c.b16 %v8427, %v8425
        %v8468 = vpack.c.b16 %v8428, %v8426
        %v8469 = vpack.c.b16 %v8431, %v8429
        %v8470 = vpack.c.b16 %v8432, %v8430
        %v8471 = vpack.c.b16 %v8435, %v8433
        %v8472 = vpack.c.b16 %v8436, %v8434
        %v8473 = vpack.c.b16 %v8439, %v8437
        %v8474 = vpack.c.b16 %v8440, %v8438
        %v8475 = vpack.c.b16 %v8443, %v8441
        %v8476 = vpack.c.b16 %v8444, %v8442
        %8509 = vmatprep.subr.bf16.mxu0 %v8446
        %8510 = vmatpush1.bf16.msra.mxu0 %v8445
        %8511 = vmatprep.subr.bf16.mxu0 %v8448
        %8512 = vmatpush1.bf16.msra.mxu0 %v8447
        %8513 = vmatprep.subr.bf16.mxu0 %v8450
        %8514 = vmatpush1.bf16.msra.mxu0 %v8449
        %8515 = vmatprep.subr.bf16.mxu0 %v8452
        %8516 = vmatpush1.bf16.msra.mxu0 %v8451
        %8517 = vmatprep.subr.bf16.mxu0 %v8454
        %8518 = vmatpush1.bf16.msra.mxu0 %v8453
        %8519 = vmatprep.subr.bf16.mxu0 %v8456
        %8520 = vmatpush1.bf16.msra.mxu0 %v8455
        %8521 = vmatprep.subr.bf16.mxu0 %v8458
        %8522 = vmatpush1.bf16.msra.mxu0 %v8457
        %8523 = vmatprep.subr.bf16.mxu0 %v8460
        %8524 = vmatpush1.bf16.msra.mxu0 %v8459
        %8525 = vmatprep.subr.bf16.mxu0 %v8462
        %8526 = vmatpush1.bf16.msra.mxu0 %v8461
        %8527 = vmatprep.subr.bf16.mxu0 %v8464
        %8528 = vmatpush1.bf16.msra.mxu0 %v8463
        %8529 = vmatprep.subr.bf16.mxu0 %v8466
        %8530 = vmatpush1.bf16.msra.mxu0 %v8465
        %8531 = vmatprep.subr.bf16.mxu0 %v8468
        %8532 = vmatpush1.bf16.msra.mxu0 %v8467
        %8533 = vmatprep.subr.bf16.mxu0 %v8470
        %8534 = vmatpush1.bf16.msra.mxu0 %v8469
        %8535 = vmatprep.subr.bf16.mxu0 %v8472
        %8536 = vmatpush1.bf16.msra.mxu0 %v8471
        %8537 = vmatprep.subr.bf16.mxu0 %v8474
        %8538 = vmatpush1.bf16.msra.mxu0 %v8473
        %8539 = vmatprep.subr.bf16.mxu0 %v8476
        %8540 = vmatpush1.bf16.msra.mxu0 %v8475
        %8541 = vmatprep.mubr.bf16.mxu0 %v8286
        %8542 = vmatmul.mubr.bf16.gmra.mrb[0].mxu0 %v8285
        %v8543 = vpop.f32.mrb[0].mxu0
        %v8544 = vadd.f32 0.0, %v8543
        %v8545 = vpop.f32.mrb[0].mxu0
        %v8546 = vadd.f32 0.0, %v8545
        %v8547 = vpop.f32.mrb[0].mxu0
        %v8548 = vadd.f32 0.0, %v8547
        %v8549 = vpop.f32.mrb[0].mxu0
        %v8550 = vadd.f32 0.0, %v8549
        %8551 = vmatprep.mubr.bf16.mxu0 %v8288
        %8552 = vmatmul.mubr.bf16.gmra.mrb[0].mxu0 %v8287
        %v8553 = vpop.f32.mrb[0].mxu0
        %v8554 = vadd.f32 0.0, %v8553
        %v8555 = vpop.f32.mrb[0].mxu0
        %v8556 = vadd.f32 0.0, %v8555
        %v8557 = vpop.f32.mrb[0].mxu0
        %v8558 = vadd.f32 0.0, %v8557
        %v8559 = vpop.f32.mrb[0].mxu0
        %v8560 = vadd.f32 0.0, %v8559
        %8561 = vmatprep.mubr.bf16.mxu0 %v8290
        %8562 = vmatmul.mubr.bf16.gmra.mrb[0].mxu0 %v8289
        %v8563 = vpop.f32.mrb[0].mxu0
        %v8564 = vadd.f32 0.0, %v8563
        %v8565 = vpop.f32.mrb[0].mxu0
        %v8566 = vadd.f32 0.0, %v8565
        %v8567 = vpop.f32.mrb[0].mxu0
        %v8568 = vadd.f32 0.0, %v8567
        %v8569 = vpop.f32.mrb[0].mxu0
        %v8570 = vadd.f32 0.0, %v8569
        %8571 = vmatprep.mubr.bf16.mxu0 %v8292
        %8572 = vmatmul.mubr.bf16.gmra.mrb[0].mxu0 %v8291
        %v8573 = vpop.f32.mrb[0].mxu0
        %v8574 = vadd.f32 0.0, %v8573
        %v8575 = vpop.f32.mrb[0].mxu0
        %v8576 = vadd.f32 0.0, %v8575
        %v8577 = vpop.f32.mrb[0].mxu0
        %v8578 = vadd.f32 0.0, %v8577
        %v8579 = vpop.f32.mrb[0].mxu0
        %v8580 = vadd.f32 0.0, %v8579
        %8581 = vmatprep.mubr.bf16.mxu0 %v8294
        %8582 = vmatmul.mubr.bf16.gmra.mrb[0].mxu0 %v8293
        %v8583 = vpop.f32.mrb[0].mxu0
        %v8584 = vadd.f32 0.0, %v8583
        %v8585 = vpop.f32.mrb[0].mxu0
        %v8586 = vadd.f32 0.0, %v8585
        %v8587 = vpop.f32.mrb[0].mxu0
        %v8588 = vadd.f32 0.0, %v8587
        %v8589 = vpop.f32.mrb[0].mxu0
        %v8590 = vadd.f32 0.0, %v8589
        %8591 = vmatprep.mubr.bf16.mxu0 %v8296
        %8592 = vmatmul.mubr.bf16.gmra.mrb[0].mxu0 %v8295
        %v8593 = vpop.f32.mrb[0].mxu0
        %v8594 = vadd.f32 0.0, %v8593
        %v8595 = vpop.f32.mrb[0].mxu0
        %v8596 = vadd.f32 0.0, %v8595
        %v8597 = vpop.f32.mrb[0].mxu0
        %v8598 = vadd.f32 0.0, %v8597
        %v8599 = vpop.f32.mrb[0].mxu0
        %v8600 = vadd.f32 0.0, %v8599
        %8601 = vmatprep.mubr.bf16.mxu0 %v8298
        %8602 = vmatmul.mubr.bf16.gmra.mrb[0].mxu0 %v8297
        %v8603 = vpop.f32.mrb[0].mxu0
        %v8604 = vadd.f32 0.0, %v8603
        %v8605 = vpop.f32.mrb[0].mxu0
        %v8606 = vadd.f32 0.0, %v8605
        %v8607 = vpop.f32.mrb[0].mxu0
        %v8608 = vadd.f32 0.0, %v8607
        %v8609 = vpop.f32.mrb[0].mxu0
        %v8610 = vadd.f32 0.0, %v8609
        %8611 = vmatprep.mubr.bf16.mxu0 %v8300
        %8612 = vmatmul.mubr.bf16.gmra.mrb[0].mxu0 %v8299
        %v8613 = vpop.f32.mrb[0].mxu0
        %v8614 = vadd.f32 0.0, %v8613
        %v8615 = vpop.f32.mrb[0].mxu0
        %v8616 = vadd.f32 0.0, %v8615
        %v8617 = vpop.f32.mrb[0].mxu0
        %v8618 = vadd.f32 0.0, %v8617
        %v8619 = vpop.f32.mrb[0].mxu0
        %v8620 = vadd.f32 0.0, %v8619
        %8621 = vmatprep.mubr.bf16.mxu0 %v8302
        %8622 = vmatmul.mubr.bf16.gmra.mrb[0].mxu0 %v8301
        %v8623 = vpop.f32.mrb[0].mxu0
        %v8624 = vadd.f32 0.0, %v8623
        %v8625 = vpop.f32.mrb[0].mxu0
        %v8626 = vadd.f32 0.0, %v8625
        %v8627 = vpop.f32.mrb[0].mxu0
        %v8628 = vadd.f32 0.0, %v8627
        %v8629 = vpop.f32.mrb[0].mxu0
        %v8630 = vadd.f32 0.0, %v8629
        %8631 = vmatprep.mubr.bf16.mxu0 %v8304
        %8632 = vmatmul.mubr.bf16.gmra.mrb[0].mxu0 %v8303
        %v8633 = vpop.f32.mrb[0].mxu0
        %v8634 = vadd.f32 0.0, %v8633
        %v8635 = vpop.f32.mrb[0].mxu0
        %v8636 = vadd.f32 0.0, %v8635
        %v8637 = vpop.f32.mrb[0].mxu0
        %v8638 = vadd.f32 0.0, %v8637
        %v8639 = vpop.f32.mrb[0].mxu0
        %v8640 = vadd.f32 0.0, %v8639
        %8641 = vmatprep.mubr.bf16.mxu0 %v8306
        %8642 = vmatmul.mubr.bf16.gmra.mrb[0].mxu0 %v8305
        %v8643 = vpop.f32.mrb[0].mxu0
        %v8644 = vadd.f32 0.0, %v8643
        %v8645 = vpop.f32.mrb[0].mxu0
        %v8646 = vadd.f32 0.0, %v8645
        %v8647 = vpop.f32.mrb[0].mxu0
        %v8648 = vadd.f32 0.0, %v8647
        %v8649 = vpop.f32.mrb[0].mxu0
        %v8650 = vadd.f32 0.0, %v8649
        %8651 = vmatprep.mubr.bf16.mxu0 %v8308
        %8652 = vmatmul.mubr.bf16.gmra.mrb[0].mxu0 %v8307
        %v8653 = vpop.f32.mrb[0].mxu0
        %v8654 = vadd.f32 0.0, %v8653
        %v8655 = vpop.f32.mrb[0].mxu0
        %v8656 = vadd.f32 0.0, %v8655
        %v8657 = vpop.f32.mrb[0].mxu0
        %v8658 = vadd.f32 0.0, %v8657
        %v8659 = vpop.f32.mrb[0].mxu0
        %v8660 = vadd.f32 0.0, %v8659
        %8661 = vmatprep.mubr.bf16.mxu0 %v8310
        %8662 = vmatmul.mubr.bf16.gmra.mrb[0].mxu0 %v8309
        %v8663 = vpop.f32.mrb[0].mxu0
        %v8664 = vadd.f32 0.0, %v8663
        %v8665 = vpop.f32.mrb[0].mxu0
        %v8666 = vadd.f32 0.0, %v8665
        %v8667 = vpop.f32.mrb[0].mxu0
        %v8668 = vadd.f32 0.0, %v8667
        %v8669 = vpop.f32.mrb[0].mxu0
        %v8670 = vadd.f32 0.0, %v8669
        %8671 = vmatprep.mubr.bf16.mxu0 %v8312
        %8672 = vmatmul.mubr.bf16.gmra.mrb[0].mxu0 %v8311
        %v8673 = vpop.f32.mrb[0].mxu0
        %v8674 = vadd.f32 0.0, %v8673
        %v8675 = vpop.f32.mrb[0].mxu0
        %v8676 = vadd.f32 0.0, %v8675
        %v8677 = vpop.f32.mrb[0].mxu0
        %v8678 = vadd.f32 0.0, %v8677
        %v8679 = vpop.f32.mrb[0].mxu0
        %v8680 = vadd.f32 0.0, %v8679
        %8681 = vmatprep.mubr.bf16.mxu0 %v8314
        %8682 = vmatmul.mubr.bf16.gmra.mrb[0].mxu0 %v8313
        %v8683 = vpop.f32.mrb[0].mxu0
        %v8684 = vadd.f32 0.0, %v8683
        %v8685 = vpop.f32.mrb[0].mxu0
        %v8686 = vadd.f32 0.0, %v8685
        %v8687 = vpop.f32.mrb[0].mxu0
        %v8688 = vadd.f32 0.0, %v8687
        %v8689 = vpop.f32.mrb[0].mxu0
        %v8690 = vadd.f32 0.0, %v8689
        %8691 = vmatprep.mubr.bf16.mxu0 %v8316
        %8692 = vmatmul.mubr.bf16.gmra.mrb[0].mxu0 %v8315
        %v8693 = vpop.f32.mrb[0].mxu0
        %v8694 = vadd.f32 0.0, %v8693
        %v8695 = vpop.f32.mrb[0].mxu0
        %v8696 = vadd.f32 0.0, %v8695
        %v8697 = vpop.f32.mrb[0].mxu0
        %v8698 = vadd.f32 0.0, %v8697
        %v8699 = vpop.f32.mrb[0].mxu0
        %v8700 = vadd.f32 0.0, %v8699
        %8701 = vdwg.mxu0
        %v8702 = vadd.f32 %v7948, %v8544
        %v8703 = vadd.f32 %v7949, %v8546
        %v8704 = vadd.f32 %v7950, %v8548
        %v8705 = vadd.f32 %v7951, %v8550
        %v8706 = vadd.f32 %v7952, %v8554
        %v8707 = vadd.f32 %v7953, %v8556
        %v8708 = vadd.f32 %v7954, %v8558
        %v8709 = vadd.f32 %v7955, %v8560
        %v8710 = vadd.f32 %v7956, %v8564
        %v8711 = vadd.f32 %v7957, %v8566
        %v8712 = vadd.f32 %v7958, %v8568
        %v8713 = vadd.f32 %v7959, %v8570
        %v8714 = vadd.f32 %v7960, %v8574
        %v8715 = vadd.f32 %v7961, %v8576
        %v8716 = vadd.f32 %v7962, %v8578
        %v8717 = vadd.f32 %v7963, %v8580
        %v8718 = vadd.f32 %v7964, %v8584
        %v8719 = vadd.f32 %v7965, %v8586
        %v8720 = vadd.f32 %v7966, %v8588
        %v8721 = vadd.f32 %v7967, %v8590
        %v8722 = vadd.f32 %v7968, %v8594
        %v8723 = vadd.f32 %v7969, %v8596
        %v8724 = vadd.f32 %v7970, %v8598
        %v8725 = vadd.f32 %v7971, %v8600
        %v8726 = vadd.f32 %v7972, %v8604
        %v8727 = vadd.f32 %v7973, %v8606
        %v8728 = vadd.f32 %v7974, %v8608
        %v8729 = vadd.f32 %v7975, %v8610
        %v8730 = vadd.f32 %v7976, %v8614
        %v8731 = vadd.f32 %v7977, %v8616
        %v8732 = vadd.f32 %v7978, %v8618
        %v8733 = vadd.f32 %v7979, %v8620
        %v8734 = vadd.f32 %v7980, %v8624
        %v8735 = vadd.f32 %v7981, %v8626
        %v8736 = vadd.f32 %v7982, %v8628
        %v8737 = vadd.f32 %v7983, %v8630
        %v8738 = vadd.f32 %v7984, %v8634
        %v8739 = vadd.f32 %v7985, %v8636
        %v8740 = vadd.f32 %v7986, %v8638
        %v8741 = vadd.f32 %v7987, %v8640
        %v8742 = vadd.f32 %v7988, %v8644
        %v8743 = vadd.f32 %v7989, %v8646
        %v8744 = vadd.f32 %v7990, %v8648
        %v8745 = vadd.f32 %v7991, %v8650
        %v8746 = vadd.f32 %v7992, %v8654
        %v8747 = vadd.f32 %v7993, %v8656
        %v8748 = vadd.f32 %v7994, %v8658
        %v8749 = vadd.f32 %v7995, %v8660
        %v8750 = vadd.f32 %v7996, %v8664
        %v8751 = vadd.f32 %v7997, %v8666
        %v8752 = vadd.f32 %v7998, %v8668
        %v8753 = vadd.f32 %v7999, %v8670
        %v8754 = vadd.f32 %v8000, %v8674
        %v8755 = vadd.f32 %v8001, %v8676
        %v8756 = vadd.f32 %v8002, %v8678
        %v8757 = vadd.f32 %v8003, %v8680
        %v8758 = vadd.f32 %v8004, %v8684
        %v8759 = vadd.f32 %v8005, %v8686
        %v8760 = vadd.f32 %v8006, %v8688
        %v8761 = vadd.f32 %v8007, %v8690
        %v8762 = vadd.f32 %v8008, %v8694
        %v8763 = vadd.f32 %v8009, %v8696
        %v8764 = vadd.f32 %v8010, %v8698
        %v8765 = vadd.f32 %v8011, %v8700
        %v8766 = vld [vmem:[#allocation11] sm:$0x3]
        %v8768 = vlaneseq
        %v8769 = vshrl.u32 %v8768, 7
        %v8770 = vsub.s32 0, %v8769
        %v8771 = vrot.slane %v8766, %v8770
        %v8772 = vlaneseq
        %v8773 = vshrl.u32 %v8772, 7
        %v8774 = vsub.s32 1, %v8773
        %v8775 = vrot.slane %v8766, %v8774
        %v8778 = vadd.f32 %v8702, %v8771
        %v8779 = vadd.f32 %v8703, %v8775
        %v8780 = vadd.f32 %v8704, %v8771
        %v8781 = vadd.f32 %v8705, %v8775
        %v8782 = vadd.f32 %v8706, %v8771
        %v8783 = vadd.f32 %v8707, %v8775
        %v8784 = vadd.f32 %v8708, %v8771
        %v8785 = vadd.f32 %v8709, %v8775
        %v8786 = vadd.f32 %v8710, %v8771
        %v8787 = vadd.f32 %v8711, %v8775
        %v8788 = vadd.f32 %v8712, %v8771
        %v8789 = vadd.f32 %v8713, %v8775
        %v8790 = vadd.f32 %v8714, %v8771
        %v8791 = vadd.f32 %v8715, %v8775
        %v8792 = vadd.f32 %v8716, %v8771
        %v8793 = vadd.f32 %v8717, %v8775
        %v8794 = vadd.f32 %v8718, %v8771
        %v8795 = vadd.f32 %v8719, %v8775
        %v8796 = vadd.f32 %v8720, %v8771
        %v8797 = vadd.f32 %v8721, %v8775
        %v8798 = vadd.f32 %v8722, %v8771
        %v8799 = vadd.f32 %v8723, %v8775
        %v8800 = vadd.f32 %v8724, %v8771
        %v8801 = vadd.f32 %v8725, %v8775
        %v8802 = vadd.f32 %v8726, %v8771
        %v8803 = vadd.f32 %v8727, %v8775
        %v8804 = vadd.f32 %v8728, %v8771
        %v8805 = vadd.f32 %v8729, %v8775
        %v8806 = vadd.f32 %v8730, %v8771
        %v8807 = vadd.f32 %v8731, %v8775
        %v8808 = vadd.f32 %v8732, %v8771
        %v8809 = vadd.f32 %v8733, %v8775
        %v8810 = vadd.f32 %v8734, %v8771
        %v8811 = vadd.f32 %v8735, %v8775
        %v8812 = vadd.f32 %v8736, %v8771
        %v8813 = vadd.f32 %v8737, %v8775
        %v8814 = vadd.f32 %v8738, %v8771
        %v8815 = vadd.f32 %v8739, %v8775
        %v8816 = vadd.f32 %v8740, %v8771
        %v8817 = vadd.f32 %v8741, %v8775
        %v8818 = vadd.f32 %v8742, %v8771
        %v8819 = vadd.f32 %v8743, %v8775
        %v8820 = vadd.f32 %v8744, %v8771
        %v8821 = vadd.f32 %v8745, %v8775
        %v8822 = vadd.f32 %v8746, %v8771
        %v8823 = vadd.f32 %v8747, %v8775
        %v8824 = vadd.f32 %v8748, %v8771
        %v8825 = vadd.f32 %v8749, %v8775
        %v8826 = vadd.f32 %v8750, %v8771
        %v8827 = vadd.f32 %v8751, %v8775
        %v8828 = vadd.f32 %v8752, %v8771
        %v8829 = vadd.f32 %v8753, %v8775
        %v8830 = vadd.f32 %v8754, %v8771
        %v8831 = vadd.f32 %v8755, %v8775
        %v8832 = vadd.f32 %v8756, %v8771
        %v8833 = vadd.f32 %v8757, %v8775
        %v8834 = vadd.f32 %v8758, %v8771
        %v8835 = vadd.f32 %v8759, %v8775
        %v8836 = vadd.f32 %v8760, %v8771
        %v8837 = vadd.f32 %v8761, %v8775
        %v8838 = vadd.f32 %v8762, %v8771
        %v8839 = vadd.f32 %v8763, %v8775
        %v8840 = vadd.f32 %v8764, %v8771
        %v8841 = vadd.f32 %v8765, %v8775
        %v8842 = vmax.f32 %v8778, 0.0
        %v8843 = vmax.f32 %v8779, 0.0
        %v8844 = vmax.f32 %v8780, 0.0
        %v8845 = vmax.f32 %v8781, 0.0
        %v8846 = vmax.f32 %v8782, 0.0
        %v8847 = vmax.f32 %v8783, 0.0
        %v8848 = vmax.f32 %v8784, 0.0
        %v8849 = vmax.f32 %v8785, 0.0
        %v8850 = vmax.f32 %v8786, 0.0
        %v8851 = vmax.f32 %v8787, 0.0
        %v8852 = vmax.f32 %v8788, 0.0
        %v8853 = vmax.f32 %v8789, 0.0
        %v8854 = vmax.f32 %v8790, 0.0
        %v8855 = vmax.f32 %v8791, 0.0
        %v8856 = vmax.f32 %v8792, 0.0
        %v8857 = vmax.f32 %v8793, 0.0
        %v8858 = vmax.f32 %v8794, 0.0
        %v8859 = vmax.f32 %v8795, 0.0
        %v8860 = vmax.f32 %v8796, 0.0
        %v8861 = vmax.f32 %v8797, 0.0
        %v8862 = vmax.f32 %v8798, 0.0
        %v8863 = vmax.f32 %v8799, 0.0
        %v8864 = vmax.f32 %v8800, 0.0
        %v8865 = vmax.f32 %v8801, 0.0
        %v8866 = vmax.f32 %v8802, 0.0
        %v8867 = vmax.f32 %v8803, 0.0
        %v8868 = vmax.f32 %v8804, 0.0
        %v8869 = vmax.f32 %v8805, 0.0
        %v8870 = vmax.f32 %v8806, 0.0
        %v8871 = vmax.f32 %v8807, 0.0
        %v8872 = vmax.f32 %v8808, 0.0
        %v8873 = vmax.f32 %v8809, 0.0
        %v8874 = vmax.f32 %v8810, 0.0
        %v8875 = vmax.f32 %v8811, 0.0
        %v8876 = vmax.f32 %v8812, 0.0
        %v8877 = vmax.f32 %v8813, 0.0
        %v8878 = vmax.f32 %v8814, 0.0
        %v8879 = vmax.f32 %v8815, 0.0
        %v8880 = vmax.f32 %v8816, 0.0
        %v8881 = vmax.f32 %v8817, 0.0
        %v8882 = vmax.f32 %v8818, 0.0
        %v8883 = vmax.f32 %v8819, 0.0
        %v8884 = vmax.f32 %v8820, 0.0
        %v8885 = vmax.f32 %v8821, 0.0
        %v8886 = vmax.f32 %v8822, 0.0
        %v8887 = vmax.f32 %v8823, 0.0
        %v8888 = vmax.f32 %v8824, 0.0
        %v8889 = vmax.f32 %v8825, 0.0
        %v8890 = vmax.f32 %v8826, 0.0
        %v8891 = vmax.f32 %v8827, 0.0
        %v8892 = vmax.f32 %v8828, 0.0
        %v8893 = vmax.f32 %v8829, 0.0
        %v8894 = vmax.f32 %v8830, 0.0
        %v8895 = vmax.f32 %v8831, 0.0
        %v8896 = vmax.f32 %v8832, 0.0
        %v8897 = vmax.f32 %v8833, 0.0
        %v8898 = vmax.f32 %v8834, 0.0
        %v8899 = vmax.f32 %v8835, 0.0
        %v8900 = vmax.f32 %v8836, 0.0
        %v8901 = vmax.f32 %v8837, 0.0
        %v8902 = vmax.f32 %v8838, 0.0
        %v8903 = vmax.f32 %v8839, 0.0
        %v8904 = vmax.f32 %v8840, 0.0
        %v8905 = vmax.f32 %v8841, 0.0
        %v8906 = vpack.c.bf16 %v8844, %v8842
        %v8907 = vpack.c.bf16 %v8845, %v8843
        %v8908 = vpack.c.bf16 %v8848, %v8846
        %v8909 = vpack.c.bf16 %v8849, %v8847
        %v8910 = vpack.c.bf16 %v8852, %v8850
        %v8911 = vpack.c.bf16 %v8853, %v8851
        %v8912 = vpack.c.bf16 %v8856, %v8854
        %v8913 = vpack.c.bf16 %v8857, %v8855
        %v8914 = vpack.c.bf16 %v8860, %v8858
        %v8915 = vpack.c.bf16 %v8861, %v8859
        %v8916 = vpack.c.bf16 %v8864, %v8862
        %v8917 = vpack.c.bf16 %v8865, %v8863
        %v8918 = vpack.c.bf16 %v8868, %v8866
        %v8919 = vpack.c.bf16 %v8869, %v8867
        %v8920 = vpack.c.bf16 %v8872, %v8870
        %v8921 = vpack.c.bf16 %v8873, %v8871
        %v8922 = vpack.c.bf16 %v8876, %v8874
        %v8923 = vpack.c.bf16 %v8877, %v8875
        %v8924 = vpack.c.bf16 %v8880, %v8878
        %v8925 = vpack.c.bf16 %v8881, %v8879
        %v8926 = vpack.c.bf16 %v8884, %v8882
        %v8927 = vpack.c.bf16 %v8885, %v8883
        %v8928 = vpack.c.bf16 %v8888, %v8886
        %v8929 = vpack.c.bf16 %v8889, %v8887
        %v8930 = vpack.c.bf16 %v8892, %v8890
        %v8931 = vpack.c.bf16 %v8893, %v8891
        %v8932 = vpack.c.bf16 %v8896, %v8894
        %v8933 = vpack.c.bf16 %v8897, %v8895
        %v8934 = vpack.c.bf16 %v8900, %v8898
        %v8935 = vpack.c.bf16 %v8901, %v8899
        %v8936 = vpack.c.bf16 %v8904, %v8902
        %v8937 = vpack.c.bf16 %v8905, %v8903
        %v8938 = vld [vmem:[#allocation12] sm:$0xf]
        %v8939 = vld [vmem:[#allocation12 + $0x4] sm:$0xf]
        %v8940 = vld [vmem:[#allocation12 + $0x8] sm:$0xf]
        %v8941 = vld [vmem:[#allocation12 + $0xc] sm:$0xf]
        %v8942 = vld [vmem:[#allocation12 + $0x10] sm:$0xf]
        %v8943 = vld [vmem:[#allocation12 + $0x14] sm:$0xf]
        %v8944 = vld [vmem:[#allocation12 + $0x18] sm:$0xf]
        %v8945 = vld [vmem:[#allocation12 + $0x1c] sm:$0xf]
        %v8946 = vld [vmem:[#allocation12 + $0x20] sm:$0xf]
        %v8947 = vld [vmem:[#allocation12 + $0x24] sm:$0xf]
        %v8948 = vld [vmem:[#allocation12 + $0x28] sm:$0xf]
        %v8949 = vld [vmem:[#allocation12 + $0x2c] sm:$0xf]
        %v8950 = vld [vmem:[#allocation12 + $0x30] sm:$0xf]
        %v8951 = vld [vmem:[#allocation12 + $0x34] sm:$0xf]
        %v8952 = vld [vmem:[#allocation12 + $0x38] sm:$0xf]
        %v8953 = vld [vmem:[#allocation12 + $0x3c] sm:$0xf]
        %v8954 = vld [vmem:[#allocation12 + $0x40] sm:$0xf]
        %v8955 = vld [vmem:[#allocation12 + $0x44] sm:$0xf]
        %v8956 = vld [vmem:[#allocation12 + $0x48] sm:$0xf]
        %v8957 = vld [vmem:[#allocation12 + $0x4c] sm:$0xf]
        %v8958 = vld [vmem:[#allocation12 + $0x50] sm:$0xf]
        %v8959 = vld [vmem:[#allocation12 + $0x54] sm:$0xf]
        %v8960 = vld [vmem:[#allocation12 + $0x58] sm:$0xf]
        %v8961 = vld [vmem:[#allocation12 + $0x5c] sm:$0xf]
        %v8962 = vld [vmem:[#allocation12 + $0x60] sm:$0xf]
        %v8963 = vld [vmem:[#allocation12 + $0x64] sm:$0xf]
        %v8964 = vld [vmem:[#allocation12 + $0x68] sm:$0xf]
        %v8965 = vld [vmem:[#allocation12 + $0x6c] sm:$0xf]
        %v8966 = vld [vmem:[#allocation12 + $0x70] sm:$0xf]
        %v8967 = vld [vmem:[#allocation12 + $0x74] sm:$0xf]
        %v8968 = vld [vmem:[#allocation12 + $0x78] sm:$0xf]
        %v8969 = vld [vmem:[#allocation12 + $0x7c] sm:$0xf]
        %v8970 = vld [vmem:[#allocation14] sm:$0x1]
        %v8972 = vlaneseq
        %v8973 = vshrl.u32 %v8972, 7
        %v8974 = vsub.s32 0, %v8973
        %v8975 = vrot.slane %v8970, %v8974
        %v9009 = vunpack.c.l.b16 %v8938
        %v9010 = vunpack.c.l.b16 %v8939
        %v9011 = vunpack.c.l.b16 %v8940
        %v9012 = vunpack.c.l.b16 %v8941
        %v9013 = vunpack.c.l.b16 %v8942
        %v9014 = vunpack.c.l.b16 %v8943
        %v9015 = vunpack.c.l.b16 %v8944
        %v9016 = vunpack.c.l.b16 %v8945
        %v9017 = vunpack.c.l.b16 %v8946
        %v9018 = vunpack.c.l.b16 %v8947
        %v9019 = vunpack.c.l.b16 %v8948
        %v9020 = vunpack.c.l.b16 %v8949
        %v9021 = vunpack.c.l.b16 %v8950
        %v9022 = vunpack.c.l.b16 %v8951
        %v9023 = vunpack.c.l.b16 %v8952
        %v9024 = vunpack.c.l.b16 %v8953
        %v9025 = vunpack.c.l.b16 %v8954
        %v9026 = vunpack.c.l.b16 %v8955
        %v9027 = vunpack.c.l.b16 %v8956
        %v9028 = vunpack.c.l.b16 %v8957
        %v9029 = vunpack.c.l.b16 %v8958
        %v9030 = vunpack.c.l.b16 %v8959
        %v9031 = vunpack.c.l.b16 %v8960
        %v9032 = vunpack.c.l.b16 %v8961
        %v9033 = vunpack.c.l.b16 %v8962
        %v9034 = vunpack.c.l.b16 %v8963
        %v9035 = vunpack.c.l.b16 %v8964
        %v9036 = vunpack.c.l.b16 %v8965
        %v9037 = vunpack.c.l.b16 %v8966
        %v9038 = vunpack.c.l.b16 %v8967
        %v9039 = vunpack.c.l.b16 %v8968
        %v9040 = vunpack.c.l.b16 %v8969
        %v9041 = vpack.c.b16 %v9010, %v9009
        %v9042 = vpack.c.b16 %v9012, %v9011
        %v9043 = vpack.c.b16 %v9014, %v9013
        %v9044 = vpack.c.b16 %v9016, %v9015
        %v9045 = vpack.c.b16 %v9018, %v9017
        %v9046 = vpack.c.b16 %v9020, %v9019
        %v9047 = vpack.c.b16 %v9022, %v9021
        %v9048 = vpack.c.b16 %v9024, %v9023
        %v9049 = vpack.c.b16 %v9026, %v9025
        %v9050 = vpack.c.b16 %v9028, %v9027
        %v9051 = vpack.c.b16 %v9030, %v9029
        %v9052 = vpack.c.b16 %v9032, %v9031
        %v9053 = vpack.c.b16 %v9034, %v9033
        %v9054 = vpack.c.b16 %v9036, %v9035
        %v9055 = vpack.c.b16 %v9038, %v9037
        %v9056 = vpack.c.b16 %v9040, %v9039
        %9073 = vmatprep.subr.bf16.mxu0 0
        %9074 = vmatpush1.bf16.msra.mxu0 %v9041
        %9075 = vmatprep.subr.bf16.mxu0 0
        %9076 = vmatpush1.bf16.msra.mxu0 %v9042
        %9077 = vmatprep.subr.bf16.mxu0 0
        %9078 = vmatpush1.bf16.msra.mxu0 %v9043
        %9079 = vmatprep.subr.bf16.mxu0 0
        %9080 = vmatpush1.bf16.msra.mxu0 %v9044
        %9081 = vmatprep.subr.bf16.mxu0 0
        %9082 = vmatpush1.bf16.msra.mxu0 %v9045
        %9083 = vmatprep.subr.bf16.mxu0 0
        %9084 = vmatpush1.bf16.msra.mxu0 %v9046
        %9085 = vmatprep.subr.bf16.mxu0 0
        %9086 = vmatpush1.bf16.msra.mxu0 %v9047
        %9087 = vmatprep.subr.bf16.mxu0 0
        %9088 = vmatpush1.bf16.msra.mxu0 %v9048
        %9089 = vmatprep.subr.bf16.mxu0 0
        %9090 = vmatpush1.bf16.msra.mxu0 %v9049
        %9091 = vmatprep.subr.bf16.mxu0 0
        %9092 = vmatpush1.bf16.msra.mxu0 %v9050
        %9093 = vmatprep.subr.bf16.mxu0 0
        %9094 = vmatpush1.bf16.msra.mxu0 %v9051
        %9095 = vmatprep.subr.bf16.mxu0 0
        %9096 = vmatpush1.bf16.msra.mxu0 %v9052
        %9097 = vmatprep.subr.bf16.mxu0 0
        %9098 = vmatpush1.bf16.msra.mxu0 %v9053
        %9099 = vmatprep.subr.bf16.mxu0 0
        %9100 = vmatpush1.bf16.msra.mxu0 %v9054
        %9101 = vmatprep.subr.bf16.mxu0 0
        %9102 = vmatpush1.bf16.msra.mxu0 %v9055
        %9103 = vmatprep.subr.bf16.mxu0 0
        %9104 = vmatpush1.bf16.msra.mxu0 %v9056
        %9105 = vmatprep.mubr.bf16.mxu0 %v8907
        %9106 = vmatmul.mubr.bf16.gmra.mrb[0].mxu0 %v8906
        %v9107 = vpop.f32.mrb[0].mxu0
        %v9108 = vadd.f32 %v8975, %v9107
        %v9109 = vpop.f32.mrb[0].mxu0
        %v9110 = vpop.f32.mrb[0].mxu0
        %v9111 = vadd.f32 %v8975, %v9110
        %v9112 = vpop.f32.mrb[0].mxu0
        %9113 = vmatprep.mubr.bf16.mxu0 %v8909
        %9114 = vmatmul.mubr.bf16.gmra.mrb[0].mxu0 %v8908
        %v9115 = vpop.f32.mrb[0].mxu0
        %v9116 = vadd.f32 %v8975, %v9115
        %v9117 = vpop.f32.mrb[0].mxu0
        %v9118 = vpop.f32.mrb[0].mxu0
        %v9119 = vadd.f32 %v8975, %v9118
        %v9120 = vpop.f32.mrb[0].mxu0
        %9121 = vmatprep.mubr.bf16.mxu0 %v8911
        %9122 = vmatmul.mubr.bf16.gmra.mrb[0].mxu0 %v8910
        %v9123 = vpop.f32.mrb[0].mxu0
        %v9124 = vadd.f32 %v8975, %v9123
        %v9125 = vpop.f32.mrb[0].mxu0
        %v9126 = vpop.f32.mrb[0].mxu0
        %v9127 = vadd.f32 %v8975, %v9126
        %v9128 = vpop.f32.mrb[0].mxu0
        %9129 = vmatprep.mubr.bf16.mxu0 %v8913
        %9130 = vmatmul.mubr.bf16.gmra.mrb[0].mxu0 %v8912
        %v9131 = vpop.f32.mrb[0].mxu0
        %v9132 = vadd.f32 %v8975, %v9131
        %v9133 = vpop.f32.mrb[0].mxu0
        %v9134 = vpop.f32.mrb[0].mxu0
        %v9135 = vadd.f32 %v8975, %v9134
        %v9136 = vpop.f32.mrb[0].mxu0
        %9137 = vmatprep.mubr.bf16.mxu0 %v8915
        %9138 = vmatmul.mubr.bf16.gmra.mrb[0].mxu0 %v8914
        %v9139 = vpop.f32.mrb[0].mxu0
        %v9140 = vadd.f32 %v8975, %v9139
        %v9141 = vpop.f32.mrb[0].mxu0
        %v9142 = vpop.f32.mrb[0].mxu0
        %v9143 = vadd.f32 %v8975, %v9142
        %v9144 = vpop.f32.mrb[0].mxu0
        %9145 = vmatprep.mubr.bf16.mxu0 %v8917
        %9146 = vmatmul.mubr.bf16.gmra.mrb[0].mxu0 %v8916
        %v9147 = vpop.f32.mrb[0].mxu0
        %v9148 = vadd.f32 %v8975, %v9147
        %v9149 = vpop.f32.mrb[0].mxu0
        %v9150 = vpop.f32.mrb[0].mxu0
        %v9151 = vadd.f32 %v8975, %v9150
        %v9152 = vpop.f32.mrb[0].mxu0
        %9153 = vmatprep.mubr.bf16.mxu0 %v8919
        %9154 = vmatmul.mubr.bf16.gmra.mrb[0].mxu0 %v8918
        %v9155 = vpop.f32.mrb[0].mxu0
        %v9156 = vadd.f32 %v8975, %v9155
        %v9157 = vpop.f32.mrb[0].mxu0
        %v9158 = vpop.f32.mrb[0].mxu0
        %v9159 = vadd.f32 %v8975, %v9158
        %v9160 = vpop.f32.mrb[0].mxu0
        %9161 = vmatprep.mubr.bf16.mxu0 %v8921
        %9162 = vmatmul.mubr.bf16.gmra.mrb[0].mxu0 %v8920
        %v9163 = vpop.f32.mrb[0].mxu0
        %v9164 = vadd.f32 %v8975, %v9163
        %v9165 = vpop.f32.mrb[0].mxu0
        %v9166 = vpop.f32.mrb[0].mxu0
        %v9167 = vadd.f32 %v8975, %v9166
        %v9168 = vpop.f32.mrb[0].mxu0
        %9169 = vmatprep.mubr.bf16.mxu0 %v8923
        %9170 = vmatmul.mubr.bf16.gmra.mrb[0].mxu0 %v8922
        %v9171 = vpop.f32.mrb[0].mxu0
        %v9172 = vadd.f32 %v8975, %v9171
        %v9173 = vpop.f32.mrb[0].mxu0
        %v9174 = vpop.f32.mrb[0].mxu0
        %v9175 = vadd.f32 %v8975, %v9174
        %v9176 = vpop.f32.mrb[0].mxu0
        %9177 = vmatprep.mubr.bf16.mxu0 %v8925
        %9178 = vmatmul.mubr.bf16.gmra.mrb[0].mxu0 %v8924
        %v9179 = vpop.f32.mrb[0].mxu0
        %v9180 = vadd.f32 %v8975, %v9179
        %v9181 = vpop.f32.mrb[0].mxu0
        %v9182 = vpop.f32.mrb[0].mxu0
        %v9183 = vadd.f32 %v8975, %v9182
        %v9184 = vpop.f32.mrb[0].mxu0
        %9185 = vmatprep.mubr.bf16.mxu0 %v8927
        %9186 = vmatmul.mubr.bf16.gmra.mrb[0].mxu0 %v8926
        %v9187 = vpop.f32.mrb[0].mxu0
        %v9188 = vadd.f32 %v8975, %v9187
        %v9189 = vpop.f32.mrb[0].mxu0
        %v9190 = vpop.f32.mrb[0].mxu0
        %v9191 = vadd.f32 %v8975, %v9190
        %v9192 = vpop.f32.mrb[0].mxu0
        %9193 = vmatprep.mubr.bf16.mxu0 %v8929
        %9194 = vmatmul.mubr.bf16.gmra.mrb[0].mxu0 %v8928
        %v9195 = vpop.f32.mrb[0].mxu0
        %v9196 = vadd.f32 %v8975, %v9195
        %v9197 = vpop.f32.mrb[0].mxu0
        %v9198 = vpop.f32.mrb[0].mxu0
        %v9199 = vadd.f32 %v8975, %v9198
        %v9200 = vpop.f32.mrb[0].mxu0
        %9201 = vmatprep.mubr.bf16.mxu0 %v8931
        %9202 = vmatmul.mubr.bf16.gmra.mrb[0].mxu0 %v8930
        %v9203 = vpop.f32.mrb[0].mxu0
        %v9204 = vadd.f32 %v8975, %v9203
        %v9205 = vpop.f32.mrb[0].mxu0
        %v9206 = vpop.f32.mrb[0].mxu0
        %v9207 = vadd.f32 %v8975, %v9206
        %v9208 = vpop.f32.mrb[0].mxu0
        %9209 = vmatprep.mubr.bf16.mxu0 %v8933
        %9210 = vmatmul.mubr.bf16.gmra.mrb[0].mxu0 %v8932
        %v9211 = vpop.f32.mrb[0].mxu0
        %v9212 = vadd.f32 %v8975, %v9211
        %v9213 = vpop.f32.mrb[0].mxu0
        %v9214 = vpop.f32.mrb[0].mxu0
        %v9215 = vadd.f32 %v8975, %v9214
        %v9216 = vpop.f32.mrb[0].mxu0
        %9217 = vmatprep.mubr.bf16.mxu0 %v8935
        %9218 = vmatmul.mubr.bf16.gmra.mrb[0].mxu0 %v8934
        %v9219 = vpop.f32.mrb[0].mxu0
        %v9220 = vadd.f32 %v8975, %v9219
        %v9221 = vpop.f32.mrb[0].mxu0
        %v9222 = vpop.f32.mrb[0].mxu0
        %v9223 = vadd.f32 %v8975, %v9222
        %v9224 = vpop.f32.mrb[0].mxu0
        %9225 = vmatprep.mubr.bf16.mxu0 %v8937
        %9226 = vmatmul.mubr.bf16.gmra.mrb[0].mxu0 %v8936
        %v9227 = vpop.f32.mrb[0].mxu0
        %v9228 = vadd.f32 %v8975, %v9227
        %v9229 = vpop.f32.mrb[0].mxu0
        %v9230 = vpop.f32.mrb[0].mxu0
        %v9231 = vadd.f32 %v8975, %v9230
        %v9232 = vpop.f32.mrb[0].mxu0
        %9233 = vdwg.mxu0
        %9234 = vst [vmem:[%s395] sm:$0xff] %v9108
        %9235 = vst [vmem:[%s395 + $0x8] sm:$0xff] %v9111
        %9236 = vst [vmem:[%s395 + $0x10] sm:$0xff] %v9116
        %9237 = vst [vmem:[%s395 + $0x18] sm:$0xff] %v9119
        %9238 = vst [vmem:[%s395 + $0x20] sm:$0xff] %v9124
        %9239 = vst [vmem:[%s395 + $0x28] sm:$0xff] %v9127
        %9240 = vst [vmem:[%s395 + $0x30] sm:$0xff] %v9132
        %9241 = vst [vmem:[%s395 + $0x38] sm:$0xff] %v9135
        %9242 = vst [vmem:[%s395 + $0x40] sm:$0xff] %v9140
        %9243 = vst [vmem:[%s395 + $0x48] sm:$0xff] %v9143
        %9244 = vst [vmem:[%s395 + $0x50] sm:$0xff] %v9148
        %9245 = vst [vmem:[%s395 + $0x58] sm:$0xff] %v9151
        %9246 = vst [vmem:[%s395 + $0x60] sm:$0xff] %v9156
        %9247 = vst [vmem:[%s395 + $0x68] sm:$0xff] %v9159
        %9248 = vst [vmem:[%s395 + $0x70] sm:$0xff] %v9164
        %9249 = vst [vmem:[%s395 + $0x78] sm:$0xff] %v9167
        %9250 = vst [vmem:[%s395 + $0x80] sm:$0xff] %v9172
        %9251 = vst [vmem:[%s395 + $0x88] sm:$0xff] %v9175
        %9252 = vst [vmem:[%s395 + $0x90] sm:$0xff] %v9180
        %9253 = vst [vmem:[%s395 + $0x98] sm:$0xff] %v9183
        %9254 = vst [vmem:[%s395 + $0xa0] sm:$0xff] %v9188
        %9255 = vst [vmem:[%s395 + $0xa8] sm:$0xff] %v9191
        %9256 = vst [vmem:[%s395 + $0xb0] sm:$0xff] %v9196
        %9257 = vst [vmem:[%s395 + $0xb8] sm:$0xff] %v9199
        %9258 = vst [vmem:[%s395 + $0xc0] sm:$0xff] %v9204
        %9259 = vst [vmem:[%s395 + $0xc8] sm:$0xff] %v9207
        %9260 = vst [vmem:[%s395 + $0xd0] sm:$0xff] %v9212
        %9261 = vst [vmem:[%s395 + $0xd8] sm:$0xff] %v9215
        %9262 = vst [vmem:[%s395 + $0xe0] sm:$0xff] %v9220
        %9263 = vst [vmem:[%s395 + $0xe8] sm:$0xff] %v9223
        %9264 = vst [vmem:[%s395 + $0xf0] sm:$0xff] %v9228
        %9265 = vst [vmem:[%s395 + $0xf8] sm:$0xff] %v9231
        %s9266 = sand.u32 %s203, 1
        %s9267 = scalar_lea.sflag [#allocation5], %s9266
        %s9268 = sand.u32 %s203, 1
        %s9269 = smul.addr %s9268, 256
        %s9270 = scalar_lea.vmem [#allocation15], %s9269
        // Predicated region
        $region81: #{tpu_custom_call.1} parent=47 // pred_check
          %p9271 = pneg %p213
        $region82: #{tpu_custom_call.1} parent=47 // pred_check_branch
          %9273 = sbr.rel (%p9271) target = $region84
        $region83: #{tpu_custom_call.1} parent=47 // pred_region
          %s9274 = smul.u32 16, %s32
          %s9276 = ssub.s32 4096, 4096
          %9277 = vsyncadd %s9267, %s9276
          %s9278 = smul.addr %s9274, 2
          %s9279 = smul.addr %s31, 32
          %s9280 = sadd.s32 %s9278, %s9279
          %s9281 = smul.addr %s9280, 128
          %s9282 = scalar_lea.hbm %s7, %s9281
          %s9283 = sshll.u32 %s9270, 4
          %s9284 = int_to_ptr.vmem [resolvable:$true] %s9283
          %9289 = dma.vmem_to_hbm [thread:$0]  %s9284, 4096, %s9282, %s9267, 128, 128, 8
        $region84: #{tpu_custom_call.1} parent=47 // pred_fallthru
          _
      $region48: #{tpu_custom_call.1} parent=5 // pred_fallthru
        _
      %p9290 = scmp.le.s32.totalorder 2, %s22
      // Predicated region
      $region85: #{tpu_custom_call.1} parent=5 // pred_check
        %p9291 = pneg %p9290
      $region86: #{tpu_custom_call.1} parent=5 // pred_check_branch
        %9293 = sbr.rel (%p9291) target = $region88
      $region87: #{tpu_custom_call.1} parent=5 // pred_region
        %s9294 = ssub.s32 %s22, 2
        // Predicated region
        $region89: #{tpu_custom_call.1} parent=87 // pred_check
          %p9295 = pneg %p219
        $region90: #{tpu_custom_call.1} parent=87 // pred_check_branch
          %9297 = sbr.rel (%p9295) target = $region92
        $region91: #{tpu_custom_call.1} parent=87 // pred_region
          %s9298 = sand.u32 %s204, 1
          %s9299 = scalar_lea.sflag [#allocation5], %s9298
          %s9300 = sand.u32 %s204, 1
          %s9301 = smul.addr %s9300, 256
          %s9302 = scalar_lea.vmem [#allocation15], %s9301
          %9303 = dma.done %s9299, 4096
        $region92: #{tpu_custom_call.1} parent=87 // pred_fallthru
          _
      $region88: #{tpu_custom_call.1} parent=5 // pred_fallthru
        _
    $region6: #{tpu_custom_call.1} parent=1 // loop_footer
      %s26 = sadd.s32 1, %s22
    $region7: #{tpu_custom_call.1} parent=1 // loop_footer_branch
      %21 = sbr.rel target = $region3
    $region8: #{tpu_custom_call.1} parent=1 // loop_exit
      _
    %9304 = vsyncpa [#allocation4], 1
    %s9305 = scalar_lea.sflag [#allocation4], 1
    %9306 = vsyncpa %s9305, 1
    %9307 = vsyncpa [#allocation7], 1
    %9308 = vsyncpa [#allocation10], 1
    %9309 = vsyncpa [#allocation13], 1
    %9310 = vsyncpa [#allocation5], 1
    %s9311 = scalar_lea.sflag [#allocation5], 1
    %9312 = vsyncpa %s9311, 1

</llo_original>
